<compile_context>
chip_gen: v5e
topology: v5e:2x2
jax: 0.10.0
libtpu: 0.0.40
codegen_flags: <defaults>
</compile_context>

<pallas_src>
import jax
import jax.numpy as jnp
import numpy as np
from jax.experimental import pallas as pl
from jax.experimental.pallas import tpu as pltpu


def _lower_conv_weights(w, w_img, pad, dtype=jnp.bfloat16):
    """Lower HWIO conv weights to per-kernel-row Toeplitz GEMM matrices.

    Returns T of shape (KH, w_img*Cin, w_img*Cout) with
      T[kh, wp*Cin + ci, wo*Cout + co] = w[kh, wp - wo + pad, ci, co]
    when 0 <= wp - wo + pad < KW, else 0.  Horizontal 'same' padding is
    implicit (out-of-range taps would multiply zeros, so they are dropped);
    vertical padding is handled by zero halo rows in VMEM scratch.
    """
    w = np.asarray(w, np.float32)
    kh_n, kw_n, cin, cout = w.shape
    t = np.zeros((kh_n, w_img * cin, w_img * cout), np.float32)
    for kh in range(kh_n):
        for wo in range(w_img):
            for kw in range(kw_n):
                wp = wo + kw - pad
                if 0 <= wp < w_img:
                    t[kh, wp * cin:(wp + 1) * cin,
                      wo * cout:(wo + 1) * cout] = w[kh, kw]
    return jnp.asarray(t, dtype)


def _tile_bias(b, w_img):
    # bias_tiled[0, wo*Cout + co] = b[co]
    return jnp.tile(jnp.asarray(b, jnp.float32), w_img)[None, :]


def espcn_pallas(x_nchw, params):
    """x_nchw: (N, 1, H, W) f32 -> (N, 1, 3H, 3W) f32 (torch ESPCN forward)."""
    w1, b1, w2, b2, w3, b3 = params
    n, _, h, w = x_nchw.shape
    c1, c2, c3 = w1.shape[-1], w2.shape[-1], w3.shape[-1]   # 64, 32, 9
    r = 3

    # One-time weight preparation (would be cached with the checkpoint).
    t1 = _lower_conv_weights(w1, w, pad=2)        # (5, W,     W*64) bf16
    t2 = _lower_conv_weights(w2, w, pad=1)        # (3, W*64,  W*32) bf16
    t3 = _lower_conv_weights(w3, w, pad=1)        # (3, W*32,  W*9 ) bf16
    b1t, b2t, b3t = _tile_bias(b1, w), _tile_bias(b2, w), _tile_bias(b3, w)

    x = x_nchw[:, 0, :, :]                        # squeeze Cin=1: (N, H, W)

    def kernel(x_ref, t1_ref, b1_ref, t2_ref, b2_ref, t3_ref, b3_ref,
               o_ref, r0_ref, r1_ref, r2_ref):
        f32, bf16 = jnp.float32, jnp.bfloat16

        # Zero the vertical halo rows every step (cheap) so each grid step is
        # fully independent -> safe with a 'parallel' batch axis on 2-TC chips.
        r0_ref[0:2, :] = jnp.zeros((2, w), f32)
        r0_ref[h + 2:h + 4, :] = jnp.zeros((2, w), f32)
        r1_ref[0:1, :] = jnp.zeros((1, w * c1), f32)
        r1_ref[h + 1:h + 2, :] = jnp.zeros((1, w * c1), f32)
        r2_ref[0:1, :] = jnp.zeros((1, w * c2), f32)
        r2_ref[h + 1:h + 2, :] = jnp.zeros((1, w * c2), f32)

        # ---- conv1 (5x5, 1->64) + tanh ----
        r0_ref[2:2 + h, :] = x_ref[0]              # in-VMEM row padding
        acc = b1_ref[...]
        for kh in range(5):
            acc = acc + jnp.dot(r0_ref[kh:kh + h, :].astype(bf16),
                                t1_ref[kh], preferred_element_type=f32)
        h1 = jnp.tanh(acc)                         # (H, W*64) f32, stays in VMEM

        # ---- conv2 (3x3, 64->32) + tanh ----
        r1_ref[1:1 + h, :] = h1
        acc = b2_ref[...]
        for kh in range(3):
            acc = acc + jnp.dot(r1_ref[kh:kh + h, :].astype(bf16),
                                t2_ref[kh], preferred_element_type=f32)
        h2 = jnp.tanh(acc)                         # (H, W*32) f32, stays in VMEM

        # ---- conv3 (3x3, 32->9), no activation ----
        r2_ref[1:1 + h, :] = h2
        acc = b3_ref[...]
        for kh in range(3):
            acc = acc + jnp.dot(r2_ref[kh:kh + h, :].astype(bf16),
                                t3_ref[kh], preferred_element_type=f32)
        o_ref[0] = acc.astype(o_ref.dtype)         # (H, W*9): 144-lane store

    out_flat = pl.pallas_call(
        kernel,
        out_shape=jax.ShapeDtypeStruct((n, h, w * c3), jnp.float32),
        grid=(n,),
        in_specs=[
            pl.BlockSpec((1, h, w), lambda i: (i, 0, 0)),
            pl.BlockSpec((5, w, w * c1), lambda i: (0, 0, 0)),
            pl.BlockSpec((1, w * c1), lambda i: (0, 0)),
            pl.BlockSpec((3, w * c1, w * c2), lambda i: (0, 0, 0)),
            pl.BlockSpec((1, w * c2), lambda i: (0, 0)),
            pl.BlockSpec((3, w * c2, w * c3), lambda i: (0, 0, 0)),
            pl.BlockSpec((1, w * c3), lambda i: (0, 0)),
        ],
        out_specs=pl.BlockSpec((1, h, w * c3), lambda i: (i, 0, 0)),
        scratch_shapes=[
            pltpu.VMEM((h + 4, w), jnp.float32),        # row-padded input
            pltpu.VMEM((h + 2, w * c1), jnp.float32),   # row-padded h1
            pltpu.VMEM((h + 2, w * c2), jnp.float32),   # row-padded h2
        ],
        compiler_params=pltpu.CompilerParams(
            dimension_semantics=("parallel",),
            vmem_limit_bytes=32 * 1024 * 1024),
    )(x, t1, b1t, t2, b2t, t3, b3t)

    # out_flat[i, y, x*9 + (a*3 + b)] is the conv3 output in NHWC-flat form;
    # torch.pixel_shuffle(3) is now a pure reshape/transpose (no NCHW pass).
    y = out_flat.reshape(n, h, w, r, r)
    y = jnp.transpose(y, (0, 1, 3, 2, 4))          # (N, H, r, W, r)
    return y.reshape(n, 1, h * r, w * r)


# ----------------------- reference & test harness ---------------------------

def _pixel_shuffle_nchw(x, r):
    n, crr, h, w = x.shape
    c = crr // (r * r)
    x = x.reshape(n, c, r, r, h, w)
    x = jnp.transpose(x, (0, 1, 4, 2, 5, 3))
    return x.reshape(n, c, h * r, w * r)


def espcn_reference(x_nchw, params):
    """Pure-JAX (f32 lax conv) reference."""
    w1, b1, w2, b2, w3, b3 = params
    dn = ("NHWC", "HWIO", "NHWC")
    x = jnp.transpose(x_nchw, (0, 2, 3, 1))

    def conv(v, wgt, bias, pad):
        y = jax.lax.conv_general_dilated(
            v, wgt, window_strides=(1, 1),
            padding=((pad, pad), (pad, pad)), dimension_numbers=dn)
        return y + bias[None, None, None, :]

    h1 = jnp.tanh(conv(x, w1, b1, 2))
    h2 = jnp.tanh(conv(h1, w2, b2, 1))
    h3 = conv(h2, w3, b3, 1)
    return _pixel_shuffle_nchw(jnp.transpose(h3, (0, 3, 1, 2)), 3)


def init_params(key):
    k1, k2, k3, k4, k5, k6 = jax.random.split(key, 6)
    w1 = jax.random.normal(k1, (5, 5, 1, 64), jnp.float32) * 0.1
    b1 = jax.random.normal(k2, (64,), jnp.float32) * 0.01
    w2 = jax.random.normal(k3, (3, 3, 64, 32), jnp.float32) * 0.05
    b2 = jax.random.normal(k4, (32,), jnp.float32) * 0.01
    w3 = jax.random.normal(k5, (3, 3, 32, 9), jnp.float32) * 0.05
    b3 = jax.random.normal(k6, (9,), jnp.float32) * 0.01
    return (w1, b1, w2, b2, w3, b3)


if __name__ == "__main__":
    key = jax.random.PRNGKey(0)
    kx, kp = jax.random.split(key)
    N, C, H, W = 2, 1, 16, 16
    x = jax.random.normal(kx, (N, C, H, W), jnp.float32)
    params = init_params(kp)

    out = jax.block_until_ready(espcn_pallas(x, params))
    assert out.shape == (N, 1, H * 3, W * 3), out.shape

    ref = jax.block_until_ready(espcn_reference(x, params))
    # bf16 MXU operands (f32 accumulation) -> tolerance looser than pure f32.
    assert jnp.allclose(out, ref, atol=5e-2, rtol=5e-2), float(
        jnp.max(jnp.abs(out - ref)))

    print("KERNEL_OK")
</pallas_src>

<mosaic_0001>
module attributes {stable_mosaic.version = 11 : i64} {
  func.func @kernel(%arg0: i32, %arg1: memref<1x16x16xf32, #tpu.memory_space<vmem>>, %arg2: memref<5x16x1024xbf16, #tpu.memory_space<vmem>>, %arg3: memref<1x1024xf32, #tpu.memory_space<vmem>>, %arg4: memref<3x1024x512xbf16, #tpu.memory_space<vmem>>, %arg5: memref<1x512xf32, #tpu.memory_space<vmem>>, %arg6: memref<3x512x144xbf16, #tpu.memory_space<vmem>>, %arg7: memref<1x144xf32, #tpu.memory_space<vmem>>, %arg8: memref<1x16x144xf32, #tpu.memory_space<vmem>>, %arg9: memref<20x16xf32, #tpu.memory_space<vmem>>, %arg10: memref<18x1024xf32, #tpu.memory_space<vmem>>, %arg11: memref<18x512xf32, #tpu.memory_space<vmem>>) attributes {dimension_semantics = [#tpu.dimension_semantics<parallel>], iteration_bounds = array<i64: 2>, scalar_prefetch = 0 : i64, scratch_operands = 3 : i64, tpu.core_type = #tpu.core_type<tc>, window_params = [{transform_indices = @transform_0, window_bounds = array<i64: 1, 16, 16>}, {pipeline_mode = #tpu.pipeline_mode<synchronous>, transform_indices = @transform_1, window_bounds = array<i64: 5, 16, 1024>}, {pipeline_mode = #tpu.pipeline_mode<synchronous>, transform_indices = @transform_2, window_bounds = array<i64: 1, 1024>}, {pipeline_mode = #tpu.pipeline_mode<synchronous>, transform_indices = @transform_3, window_bounds = array<i64: 3, 1024, 512>}, {pipeline_mode = #tpu.pipeline_mode<synchronous>, transform_indices = @transform_4, window_bounds = array<i64: 1, 512>}, {pipeline_mode = #tpu.pipeline_mode<synchronous>, transform_indices = @transform_5, window_bounds = array<i64: 3, 512, 144>}, {pipeline_mode = #tpu.pipeline_mode<synchronous>, transform_indices = @transform_6, window_bounds = array<i64: 1, 144>}, {transform_indices = @transform_7, window_bounds = array<i64: 1, 16, 144>}]} {
    %cst = arith.constant 0.000000e+00 : f32
    %0 = vector.broadcast %cst : f32 to vector<2x16xf32>
    %c0 = arith.constant 0 : index
    %c0_0 = arith.constant 0 : index
    %1 = vector.load %arg9[%c0, %c0_0] : memref<20x16xf32, #tpu.memory_space<vmem>>, vector<2x16xf32>
    tpu.vector_store %arg9[%c0, %c0_0], %0 {strides = array<i32>} : memref<20x16xf32, #tpu.memory_space<vmem>>, vector<2x16xf32>,
    %cst_1 = arith.constant 0.000000e+00 : f32
    %2 = vector.broadcast %cst_1 : f32 to vector<2x16xf32>
    %c18 = arith.constant 18 : index
    %c0_2 = arith.constant 0 : index
    %3 = vector.load %arg9[%c18, %c0_2] : memref<20x16xf32, #tpu.memory_space<vmem>>, vector<2x16xf32>
    tpu.vector_store %arg9[%c18, %c0_2], %2 {strides = array<i32>} : memref<20x16xf32, #tpu.memory_space<vmem>>, vector<2x16xf32>,
    %cst_3 = arith.constant 0.000000e+00 : f32
    %4 = vector.broadcast %cst_3 : f32 to vector<1x1024xf32>
    %c0_4 = arith.constant 0 : index
    %c0_5 = arith.constant 0 : index
    %5 = vector.load %arg10[%c0_4, %c0_5] : memref<18x1024xf32, #tpu.memory_space<vmem>>, vector<1x1024xf32>
    tpu.vector_store %arg10[%c0_4, %c0_5], %4 {strides = array<i32>} : memref<18x1024xf32, #tpu.memory_space<vmem>>, vector<1x1024xf32>,
    %cst_6 = arith.constant 0.000000e+00 : f32
    %6 = vector.broadcast %cst_6 : f32 to vector<1x1024xf32>
    %c17 = arith.constant 17 : index
    %c0_7 = arith.constant 0 : index
    %7 = vector.load %arg10[%c17, %c0_7] : memref<18x1024xf32, #tpu.memory_space<vmem>>, vector<1x1024xf32>
    tpu.vector_store %arg10[%c17, %c0_7], %6 {strides = array<i32>} : memref<18x1024xf32, #tpu.memory_space<vmem>>, vector<1x1024xf32>,
    %cst_8 = arith.constant 0.000000e+00 : f32
    %8 = vector.broadcast %cst_8 : f32 to vector<1x512xf32>
    %c0_9 = arith.constant 0 : index
    %c0_10 = arith.constant 0 : index
    %9 = vector.load %arg11[%c0_9, %c0_10] : memref<18x512xf32, #tpu.memory_space<vmem>>, vector<1x512xf32>
    tpu.vector_store %arg11[%c0_9, %c0_10], %8 {strides = array<i32>} : memref<18x512xf32, #tpu.memory_space<vmem>>, vector<1x512xf32>,
    %cst_11 = arith.constant 0.000000e+00 : f32
    %10 = vector.broadcast %cst_11 : f32 to vector<1x512xf32>
    %c17_12 = arith.constant 17 : index
    %c0_13 = arith.constant 0 : index
    %11 = vector.load %arg11[%c17_12, %c0_13] : memref<18x512xf32, #tpu.memory_space<vmem>>, vector<1x512xf32>
    tpu.vector_store %arg11[%c17_12, %c0_13], %10 {strides = array<i32>} : memref<18x512xf32, #tpu.memory_space<vmem>>, vector<1x512xf32>,
    %c0_14 = arith.constant 0 : index
    %c0_15 = arith.constant 0 : index
    %c0_16 = arith.constant 0 : index
    %12 = vector.load %arg1[%c0_14, %c0_15, %c0_16] : memref<1x16x16xf32, #tpu.memory_space<vmem>>, vector<1x16x16xf32>
    %13 = vector.shape_cast %12 : vector<1x16x16xf32> to vector<16x16xf32>
    %c2 = arith.constant 2 : index
    %c0_17 = arith.constant 0 : index
    %14 = vector.load %arg9[%c2, %c0_17] : memref<20x16xf32, #tpu.memory_space<vmem>>, vector<16x16xf32>
    tpu.vector_store %arg9[%c2, %c0_17], %13 {strides = array<i32>} : memref<20x16xf32, #tpu.memory_space<vmem>>, vector<16x16xf32>,
    %c0_18 = arith.constant 0 : index
    %c0_19 = arith.constant 0 : index
    %15 = vector.load %arg3[%c0_18, %c0_19] : memref<1x1024xf32, #tpu.memory_space<vmem>>, vector<1x1024xf32>
    %c0_20 = arith.constant 0 : index
    %c0_21 = arith.constant 0 : index
    %16 = vector.load %arg9[%c0_20, %c0_21] : memref<20x16xf32, #tpu.memory_space<vmem>>, vector<16x16xf32>
    %17 = arith.truncf %16 : vector<16x16xf32> to vector<16x16xbf16>
    %c0_22 = arith.constant 0 : index
    %c0_23 = arith.constant 0 : index
    %c0_24 = arith.constant 0 : index
    %18 = vector.load %arg2[%c0_22, %c0_23, %c0_24] : memref<5x16x1024xbf16, #tpu.memory_space<vmem>>, vector<1x16x1024xbf16>
    %19 = vector.shape_cast %18 : vector<1x16x1024xbf16> to vector<16x1024xbf16>
    %cst_25 = arith.constant dense<0.000000e+00> : vector<16x1024xf32>
    %20 = tpu.matmul %17, %19, %cst_25 {dimension_numbers = #tpu.dot_dimension_numbers<[1], [0], [0], [1], [0, 0, 1, 1], [], []>} : vector<16x16xbf16>, vector<16x1024xbf16>, vector<16x1024xf32> -> vector<16x1024xf32>
    %21 = vector.broadcast %15 : vector<1x1024xf32> to vector<16x1024xf32>
    %22 = arith.addf %21, %20 : vector<16x1024xf32>
    %c1 = arith.constant 1 : index
    %c0_26 = arith.constant 0 : index
    %23 = vector.load %arg9[%c1, %c0_26] : memref<20x16xf32, #tpu.memory_space<vmem>>, vector<16x16xf32>
    %24 = arith.truncf %23 : vector<16x16xf32> to vector<16x16xbf16>
    %c1_27 = arith.constant 1 : index
    %c0_28 = arith.constant 0 : index
    %c0_29 = arith.constant 0 : index
    %25 = vector.load %arg2[%c1_27, %c0_28, %c0_29] : memref<5x16x1024xbf16, #tpu.memory_space<vmem>>, vector<1x16x1024xbf16>
    %26 = vector.shape_cast %25 : vector<1x16x1024xbf16> to vector<16x1024xbf16>
    %cst_30 = arith.constant dense<0.000000e+00> : vector<16x1024xf32>
    %27 = tpu.matmul %24, %26, %cst_30 {dimension_numbers = #tpu.dot_dimension_numbers<[1], [0], [0], [1], [0, 0, 1, 1], [], []>} : vector<16x16xbf16>, vector<16x1024xbf16>, vector<16x1024xf32> -> vector<16x1024xf32>
    %28 = arith.addf %22, %27 : vector<16x1024xf32>
    %c2_31 = arith.constant 2 : index
    %c0_32 = arith.constant 0 : index
    %29 = vector.load %arg9[%c2_31, %c0_32] : memref<20x16xf32, #tpu.memory_space<vmem>>, vector<16x16xf32>
    %30 = arith.truncf %29 : vector<16x16xf32> to vector<16x16xbf16>
    %c2_33 = arith.constant 2 : index
    %c0_34 = arith.constant 0 : index
    %c0_35 = arith.constant 0 : index
    %31 = vector.load %arg2[%c2_33, %c0_34, %c0_35] : memref<5x16x1024xbf16, #tpu.memory_space<vmem>>, vector<1x16x1024xbf16>
    %32 = vector.shape_cast %31 : vector<1x16x1024xbf16> to vector<16x1024xbf16>
    %cst_36 = arith.constant dense<0.000000e+00> : vector<16x1024xf32>
    %33 = tpu.matmul %30, %32, %cst_36 {dimension_numbers = #tpu.dot_dimension_numbers<[1], [0], [0], [1], [0, 0, 1, 1], [], []>} : vector<16x16xbf16>, vector<16x1024xbf16>, vector<16x1024xf32> -> vector<16x1024xf32>
    %34 = arith.addf %28, %33 : vector<16x1024xf32>
    %c3 = arith.constant 3 : index
    %c0_37 = arith.constant 0 : index
    %35 = vector.load %arg9[%c3, %c0_37] : memref<20x16xf32, #tpu.memory_space<vmem>>, vector<16x16xf32>
    %36 = arith.truncf %35 : vector<16x16xf32> to vector<16x16xbf16>
    %c3_38 = arith.constant 3 : index
    %c0_39 = arith.constant 0 : index
    %c0_40 = arith.constant 0 : index
    %37 = vector.load %arg2[%c3_38, %c0_39, %c0_40] : memref<5x16x1024xbf16, #tpu.memory_space<vmem>>, vector<1x16x1024xbf16>
    %38 = vector.shape_cast %37 : vector<1x16x1024xbf16> to vector<16x1024xbf16>
    %cst_41 = arith.constant dense<0.000000e+00> : vector<16x1024xf32>
    %39 = tpu.matmul %36, %38, %cst_41 {dimension_numbers = #tpu.dot_dimension_numbers<[1], [0], [0], [1], [0, 0, 1, 1], [], []>} : vector<16x16xbf16>, vector<16x1024xbf16>, vector<16x1024xf32> -> vector<16x1024xf32>
    %40 = arith.addf %34, %39 : vector<16x1024xf32>
    %c4 = arith.constant 4 : index
    %c0_42 = arith.constant 0 : index
    %41 = vector.load %arg9[%c4, %c0_42] : memref<20x16xf32, #tpu.memory_space<vmem>>, vector<16x16xf32>
    %42 = arith.truncf %41 : vector<16x16xf32> to vector<16x16xbf16>
    %c4_43 = arith.constant 4 : index
    %c0_44 = arith.constant 0 : index
    %c0_45 = arith.constant 0 : index
    %43 = vector.load %arg2[%c4_43, %c0_44, %c0_45] : memref<5x16x1024xbf16, #tpu.memory_space<vmem>>, vector<1x16x1024xbf16>
    %44 = vector.shape_cast %43 : vector<1x16x1024xbf16> to vector<16x1024xbf16>
    %cst_46 = arith.constant dense<0.000000e+00> : vector<16x1024xf32>
    %45 = tpu.matmul %42, %44, %cst_46 {dimension_numbers = #tpu.dot_dimension_numbers<[1], [0], [0], [1], [0, 0, 1, 1], [], []>} : vector<16x16xbf16>, vector<16x1024xbf16>, vector<16x1024xf32> -> vector<16x1024xf32>
    %46 = arith.addf %40, %45 : vector<16x1024xf32>
    %47 = math.tanh %46 : vector<16x1024xf32>
    %c1_47 = arith.constant 1 : index
    %c0_48 = arith.constant 0 : index
    %48 = vector.load %arg10[%c1_47, %c0_48] : memref<18x1024xf32, #tpu.memory_space<vmem>>, vector<16x1024xf32>
    tpu.vector_store %arg10[%c1_47, %c0_48], %47 {strides = array<i32>} : memref<18x1024xf32, #tpu.memory_space<vmem>>, vector<16x1024xf32>,
    %c0_49 = arith.constant 0 : index
    %c0_50 = arith.constant 0 : index
    %49 = vector.load %arg5[%c0_49, %c0_50] : memref<1x512xf32, #tpu.memory_space<vmem>>, vector<1x512xf32>
    %c0_51 = arith.constant 0 : index
    %c0_52 = arith.constant 0 : index
    %50 = vector.load %arg10[%c0_51, %c0_52] : memref<18x1024xf32, #tpu.memory_space<vmem>>, vector<16x1024xf32>
    %51 = arith.truncf %50 : vector<16x1024xf32> to vector<16x1024xbf16>
    %c0_53 = arith.constant 0 : index
    %c0_54 = arith.constant 0 : index
    %c0_55 = arith.constant 0 : index
    %52 = vector.load %arg4[%c0_53, %c0_54, %c0_55] : memref<3x1024x512xbf16, #tpu.memory_space<vmem>>, vector<1x1024x512xbf16>
    %53 = vector.shape_cast %52 : vector<1x1024x512xbf16> to vector<1024x512xbf16>
    %cst_56 = arith.constant dense<0.000000e+00> : vector<16x512xf32>
    %54 = tpu.matmul %51, %53, %cst_56 {dimension_numbers = #tpu.dot_dimension_numbers<[1], [0], [0], [1], [0, 0, 1, 1], [], []>} : vector<16x1024xbf16>, vector<1024x512xbf16>, vector<16x512xf32> -> vector<16x512xf32>
    %55 = vector.broadcast %49 : vector<1x512xf32> to vector<16x512xf32>
    %56 = arith.addf %55, %54 : vector<16x512xf32>
    %c1_57 = arith.constant 1 : index
    %c0_58 = arith.constant 0 : index
    %57 = vector.load %arg10[%c1_57, %c0_58] : memref<18x1024xf32, #tpu.memory_space<vmem>>, vector<16x1024xf32>
    %58 = arith.truncf %57 : vector<16x1024xf32> to vector<16x1024xbf16>
    %c1_59 = arith.constant 1 : index
    %c0_60 = arith.constant 0 : index
    %c0_61 = arith.constant 0 : index
    %59 = vector.load %arg4[%c1_59, %c0_60, %c0_61] : memref<3x1024x512xbf16, #tpu.memory_space<vmem>>, vector<1x1024x512xbf16>
    %60 = vector.shape_cast %59 : vector<1x1024x512xbf16> to vector<1024x512xbf16>
    %cst_62 = arith.constant dense<0.000000e+00> : vector<16x512xf32>
    %61 = tpu.matmul %58, %60, %cst_62 {dimension_numbers = #tpu.dot_dimension_numbers<[1], [0], [0], [1], [0, 0, 1, 1], [], []>} : vector<16x1024xbf16>, vector<1024x512xbf16>, vector<16x512xf32> -> vector<16x512xf32>
    %62 = arith.addf %56, %61 : vector<16x512xf32>
    %c2_63 = arith.constant 2 : index
    %c0_64 = arith.constant 0 : index
    %63 = vector.load %arg10[%c2_63, %c0_64] : memref<18x1024xf32, #tpu.memory_space<vmem>>, vector<16x1024xf32>
    %64 = arith.truncf %63 : vector<16x1024xf32> to vector<16x1024xbf16>
    %c2_65 = arith.constant 2 : index
    %c0_66 = arith.constant 0 : index
    %c0_67 = arith.constant 0 : index
    %65 = vector.load %arg4[%c2_65, %c0_66, %c0_67] : memref<3x1024x512xbf16, #tpu.memory_space<vmem>>, vector<1x1024x512xbf16>
    %66 = vector.shape_cast %65 : vector<1x1024x512xbf16> to vector<1024x512xbf16>
    %cst_68 = arith.constant dense<0.000000e+00> : vector<16x512xf32>
    %67 = tpu.matmul %64, %66, %cst_68 {dimension_numbers = #tpu.dot_dimension_numbers<[1], [0], [0], [1], [0, 0, 1, 1], [], []>} : vector<16x1024xbf16>, vector<1024x512xbf16>, vector<16x512xf32> -> vector<16x512xf32>
    %68 = arith.addf %62, %67 : vector<16x512xf32>
    %69 = math.tanh %68 : vector<16x512xf32>
    %c1_69 = arith.constant 1 : index
    %c0_70 = arith.constant 0 : index
    %70 = vector.load %arg11[%c1_69, %c0_70] : memref<18x512xf32, #tpu.memory_space<vmem>>, vector<16x512xf32>
    tpu.vector_store %arg11[%c1_69, %c0_70], %69 {strides = array<i32>} : memref<18x512xf32, #tpu.memory_space<vmem>>, vector<16x512xf32>,
    %c0_71 = arith.constant 0 : index
    %c0_72 = arith.constant 0 : index
    %71 = vector.load %arg7[%c0_71, %c0_72] : memref<1x144xf32, #tpu.memory_space<vmem>>, vector<1x144xf32>
    %c0_73 = arith.constant 0 : index
    %c0_74 = arith.constant 0 : index
    %72 = vector.load %arg11[%c0_73, %c0_74] : memref<18x512xf32, #tpu.memory_space<vmem>>, vector<16x512xf32>
    %73 = arith.truncf %72 : vector<16x512xf32> to vector<16x512xbf16>
    %c0_75 = arith.constant 0 : index
    %c0_76 = arith.constant 0 : index
    %c0_77 = arith.constant 0 : index
    %74 = vector.load %arg6[%c0_75, %c0_76, %c0_77] : memref<3x512x144xbf16, #tpu.memory_space<vmem>>, vector<1x512x144xbf16>
    %75 = vector.shape_cast %74 : vector<1x512x144xbf16> to vector<512x144xbf16>
    %cst_78 = arith.constant dense<0.000000e+00> : vector<16x144xf32>
    %76 = tpu.matmul %73, %75, %cst_78 {dimension_numbers = #tpu.dot_dimension_numbers<[1], [0], [0], [1], [0, 0, 1, 1], [], []>} : vector<16x512xbf16>, vector<512x144xbf16>, vector<16x144xf32> -> vector<16x144xf32>
    %77 = vector.broadcast %71 : vector<1x144xf32> to vector<16x144xf32>
    %78 = arith.addf %77, %76 : vector<16x144xf32>
    %c1_79 = arith.constant 1 : index
    %c0_80 = arith.constant 0 : index
    %79 = vector.load %arg11[%c1_79, %c0_80] : memref<18x512xf32, #tpu.memory_space<vmem>>, vector<16x512xf32>
    %80 = arith.truncf %79 : vector<16x512xf32> to vector<16x512xbf16>
    %c1_81 = arith.constant 1 : index
    %c0_82 = arith.constant 0 : index
    %c0_83 = arith.constant 0 : index
    %81 = vector.load %arg6[%c1_81, %c0_82, %c0_83] : memref<3x512x144xbf16, #tpu.memory_space<vmem>>, vector<1x512x144xbf16>
    %82 = vector.shape_cast %81 : vector<1x512x144xbf16> to vector<512x144xbf16>
    %cst_84 = arith.constant dense<0.000000e+00> : vector<16x144xf32>
    %83 = tpu.matmul %80, %82, %cst_84 {dimension_numbers = #tpu.dot_dimension_numbers<[1], [0], [0], [1], [0, 0, 1, 1], [], []>} : vector<16x512xbf16>, vector<512x144xbf16>, vector<16x144xf32> -> vector<16x144xf32>
    %84 = arith.addf %78, %83 : vector<16x144xf32>
    %c2_85 = arith.constant 2 : index
    %c0_86 = arith.constant 0 : index
    %85 = vector.load %arg11[%c2_85, %c0_86] : memref<18x512xf32, #tpu.memory_space<vmem>>, vector<16x512xf32>
    %86 = arith.truncf %85 : vector<16x512xf32> to vector<16x512xbf16>
    %c2_87 = arith.constant 2 : index
    %c0_88 = arith.constant 0 : index
    %c0_89 = arith.constant 0 : index
    %87 = vector.load %arg6[%c2_87, %c0_88, %c0_89] : memref<3x512x144xbf16, #tpu.memory_space<vmem>>, vector<1x512x144xbf16>
    %88 = vector.shape_cast %87 : vector<1x512x144xbf16> to vector<512x144xbf16>
    %cst_90 = arith.constant dense<0.000000e+00> : vector<16x144xf32>
    %89 = tpu.matmul %86, %88, %cst_90 {dimension_numbers = #tpu.dot_dimension_numbers<[1], [0], [0], [1], [0, 0, 1, 1], [], []>} : vector<16x512xbf16>, vector<512x144xbf16>, vector<16x144xf32> -> vector<16x144xf32>
    %90 = arith.addf %84, %89 : vector<16x144xf32>
    %c0_91 = arith.constant 0 : index
    %c0_92 = arith.constant 0 : index
    %c0_93 = arith.constant 0 : index
    %91 = vector.load %arg8[%c0_91, %c0_92, %c0_93] : memref<1x16x144xf32, #tpu.memory_space<vmem>>, vector<1x16x144xf32>
    %92 = vector.shape_cast %91 : vector<1x16x144xf32> to vector<16x144xf32>
    %93 = vector.shape_cast %90 : vector<16x144xf32> to vector<1x16x144xf32>
    tpu.vector_store %arg8[%c0_91, %c0_92, %c0_93], %93 {strides = array<i32>} : memref<1x16x144xf32, #tpu.memory_space<vmem>>, vector<1x16x144xf32>,
    return
  }
  func.func @transform_0(%arg0: i32) -> (i32, i32, i32) {
    %c0_i32 = arith.constant 0 : i32
    %c0_i32_0 = arith.constant 0 : i32
    %c0_i32_1 = arith.constant 0 : i32
    return %arg0, %c0_i32, %c0_i32_0 : i32, i32, i32
  }
  func.func @transform_1(%arg0: i32) -> (i32, i32, i32) {
    %c0_i32 = arith.constant 0 : i32
    %c0_i32_0 = arith.constant 0 : i32
    %c0_i32_1 = arith.constant 0 : i32
    %c0_i32_2 = arith.constant 0 : i32
    return %c0_i32, %c0_i32_0, %c0_i32_1 : i32, i32, i32
  }
  func.func @transform_2(%arg0: i32) -> (i32, i32) {
    %c0_i32 = arith.constant 0 : i32
    %c0_i32_0 = arith.constant 0 : i32
    %c0_i32_1 = arith.constant 0 : i32
    return %c0_i32, %c0_i32_0 : i32, i32
  }
  func.func @transform_3(%arg0: i32) -> (i32, i32, i32) {
    %c0_i32 = arith.constant 0 : i32
    %c0_i32_0 = arith.constant 0 : i32
    %c0_i32_1 = arith.constant 0 : i32
    %c0_i32_2 = arith.constant 0 : i32
    return %c0_i32, %c0_i32_0, %c0_i32_1 : i32, i32, i32
  }
  func.func @transform_4(%arg0: i32) -> (i32, i32) {
    %c0_i32 = arith.constant 0 : i32
    %c0_i32_0 = arith.constant 0 : i32
    %c0_i32_1 = arith.constant 0 : i32
    return %c0_i32, %c0_i32_0 : i32, i32
  }
  func.func @transform_5(%arg0: i32) -> (i32, i32, i32) {
    %c0_i32 = arith.constant 0 : i32
    %c0_i32_0 = arith.constant 0 : i32
    %c0_i32_1 = arith.constant 0 : i32
    %c0_i32_2 = arith.constant 0 : i32
    return %c0_i32, %c0_i32_0, %c0_i32_1 : i32, i32, i32
  }
  func.func @transform_6(%arg0: i32) -> (i32, i32) {
    %c0_i32 = arith.constant 0 : i32
    %c0_i32_0 = arith.constant 0 : i32
    %c0_i32_1 = arith.constant 0 : i32
    return %c0_i32, %c0_i32_0 : i32, i32
  }
  func.func @transform_7(%arg0: i32) -> (i32, i32, i32) {
    %c0_i32 = arith.constant 0 : i32
    %c0_i32_0 = arith.constant 0 : i32
    %c0_i32_1 = arith.constant 0 : i32
    return %arg0, %c0_i32, %c0_i32_0 : i32, i32, i32
  }
}

</mosaic_0001>

<llo_original>
// kernel: tpu_custom_call.1
$region0: #{tpu_custom_call.1}
  #allocation0 [shape = 'u32[]', space=smem, size = 0x4, offset = 0x4, fixed_abs, tag = 'smem constant byte address 0x4 - core index']
  #allocation1 [shape = 'u32[72,128]{1,0:T(1,128)}', space=vmem, size = 0x9000, scoped, tag = 'internal scratch']
  #allocation2 [shape = 'f32[20,16]{1,0:T(8,128)}', space=vmem, size = 0x3000, scoped, tag = 'scratch operand']
  #allocation3 [shape = 'f32[18,1024]{1,0:T(8,128)}', space=vmem, size = 0x18000, scoped, tag = 'scratch operand']
  #allocation4 [shape = 'f32[18,512]{1,0:T(8,128)}', space=vmem, size = 0xc000, scoped, tag = 'scratch operand']
  %s0 = inlined_call_operand.hbm [shape: f32[2,16,16], index: 0, kind: input, shape index: {}]
  %s1 = inlined_call_operand.hbm [shape: bf16[5,16,1024], index: 1, kind: input, shape index: {}]
  %s2 = inlined_call_operand.hbm [shape: f32[1,1024], index: 2, kind: input, shape index: {}]
  %s3 = inlined_call_operand.hbm [shape: bf16[3,1024,512], index: 3, kind: input, shape index: {}]
  %s4 = inlined_call_operand.hbm [shape: f32[1,512], index: 4, kind: input, shape index: {}]
  %s5 = inlined_call_operand.vmem [shape: bf16[3,512,144], index: 5, kind: input, shape index: {}]
  %s6 = inlined_call_operand.hbm [shape: f32[1,144], index: 6, kind: input, shape index: {}]
  %s7 = inlined_call_operand.hbm [shape: f32[2,16,144], index: 7, kind: output, shape index: {}]
  %s8 = sld [smem:[#allocation0]]
  $region85: #{tpu_custom_call.1} parent=0
    _
  %s10 = ssub.s32 1, %s8
  %s11 = scalar_select 0, %s10, %s8
  $region1: #{tpu_custom_call.1} parent=0
    #allocation5 [shape = 'u8[16384]{0}', space=vmem, size = 0x4000, scoped, tag = 'input window, operand 0']
    #allocation6 [shape = 's32[2]{0}', space=sflag, size = 0x8, scoped, tag = 'scoped memory for tpu_custom_call.1']
    #allocation7 [shape = 's32[2]{0}', space=sflag, size = 0x8, scoped, tag = 'scoped memory for tpu_custom_call.1']
    #allocation8 [shape = 'u8[163840]{0}', space=vmem, size = 0x28000, scoped, tag = 'input window, operand 1, single buffered']
    #allocation9 [shape = 's32[1]{0}', space=sflag, size = 0x4, scoped, tag = 'scoped memory for tpu_custom_call.1']
    #allocation10 [shape = 'u8[4096]{0}', space=vmem, size = 0x1000, scoped, tag = 'input window, operand 2, single buffered']
    #allocation11 [shape = 'u8[3145728]{0}', space=vmem, size = 0x300000, scoped, tag = 'input window, operand 3, single buffered']
    #allocation12 [shape = 's32[1]{0}', space=sflag, size = 0x4, scoped, tag = 'scoped memory for tpu_custom_call.1']
    #allocation13 [shape = 'u8[2048]{0}', space=vmem, size = 0x800, scoped, tag = 'input window, operand 4, single buffered']
    #allocation14 [shape = 'u8[1024]{0}', space=vmem, size = 0x400, scoped, tag = 'input window, operand 6, single buffered']
    #allocation15 [shape = 's32[1]{0}', space=sflag, size = 0x4, scoped, tag = 'scoped memory for tpu_custom_call.1']
    #allocation16 [shape = 'u8[32768]{0}', space=vmem, size = 0x8000, scoped, tag = 'output window, operand 0']
    %12 = vsyncpa [#allocation6], 0
    %s13 = scalar_lea.sflag [#allocation6], 1
    %14 = vsyncpa %s13, 0
    %15 = vsyncpa [#allocation9], 0
    %16 = vsyncpa [#allocation12], 0
    %17 = vsyncpa [#allocation15], 0
    %18 = vsyncpa [#allocation7], 0
    %s19 = scalar_lea.sflag [#allocation7], 1
    %20 = vsyncpa %s19, 0
    loop: start=0, step=1, limit=4
    $region2: #{tpu_custom_call.1} parent=1 // loop_pre_header
      _
    $region3: #{tpu_custom_call.1} parent=1 // loop_header
      %s22 = sphi 0, %s26
      %p23 = scmp.ge.s32.totalorder %s22, 4
      %s32 = sphi 0, %s34
      %s35 = sphi 0, %s32
      %s36 = sphi 0, %s35
      %s52 = sphi 0, %s36
      %s56 = sphi 0, %s56
      %s58 = sphi 0, %s56
      %s59 = sphi 0, %s58
      %s73 = sphi 0, %s59
      %s77 = sphi 0, %s77
      %s79 = sphi 0, %s77
      %s80 = sphi 0, %s79
      %s94 = sphi 0, %s80
      %s98 = sphi 0, %s98
      %s100 = sphi 0, %s98
      %s101 = sphi 0, %s100
      %s115 = sphi 0, %s101
      %s119 = sphi 0, %s119
      %s121 = sphi 0, %s119
      %s122 = sphi 0, %s121
      %s136 = sphi 0, %s122
      %s140 = sphi 0, %s140
      %s142 = sphi 0, %s140
      %s143 = sphi 0, %s142
      %s157 = sphi 0, %s143
      %s161 = sphi 0, %s161
      %s163 = sphi 0, %s161
      %s164 = sphi 0, %s163
      %s178 = sphi 0, %s164
      %s184 = sphi 0, %s186
      %s187 = sphi 0, %s184
      %s188 = sphi 0, %s187
      %s204 = sphi 0, %s188
    $region4: #{tpu_custom_call.1} parent=1 // loop_header_branch
      %25 = sbr.rel (%p23) target = $region8
    $region5: #{tpu_custom_call.1} parent=1 // loop_body
      %s27 = ssub.s32 %s22, 1
      %s28 = ssub.s32 %s22, 2
      %s29 = sadd.s32 %s22, 1
      %s30 = ssub.s32 %s22, %s29
      %p31 = scmp.eq.s32.totalorder %s30, 0
      %s33 = sadd.s32 %s32, 1
      %s34 = scalar_select %p31, %s32, %s33
      %p37 = pneg %p31
      %p38 = scmp.eq.s32.totalorder %s22, 1
      %p39 = por %p37, %p38
      %p40 = scmp.ne.s32.totalorder %s32, %s35
      %p41 = scmp.eq.s32.totalorder %s22, 0
      %p42 = por %p40, %p41
      %p43 = scmp.ne.s32.totalorder %s32, %s35
      %p44 = scmp.eq.s32.totalorder %s27, 1
      %p45 = por %p43, %p44
      %p46 = scmp.ne.s32.totalorder %s35, %s36
      %p47 = scmp.eq.s32.totalorder %s27, 0
      %p48 = por %p46, %p47
      %p49 = scmp.ne.s32.totalorder %s35, %s36
      %p50 = scmp.eq.s32.totalorder %s28, 1
      %p51 = por %p49, %p50
      %p53 = scmp.ne.s32.totalorder %s36, %s52
      %p54 = scmp.eq.s32.totalorder %s28, 0
      %p55 = por %p53, %p54
      %s57 = sadd.s32 %s56, 1
      %p60 = scmp.eq.s32.totalorder %s22, 1
      %p61 = scmp.ne.s32.totalorder %s56, %s58
      %p62 = scmp.eq.s32.totalorder %s22, 0
      %p63 = por %p61, %p62
      %p64 = scmp.ne.s32.totalorder %s56, %s58
      %p65 = scmp.eq.s32.totalorder %s27, 1
      %p66 = por %p64, %p65
      %p67 = scmp.ne.s32.totalorder %s58, %s59
      %p68 = scmp.eq.s32.totalorder %s27, 0
      %p69 = por %p67, %p68
      %p70 = scmp.ne.s32.totalorder %s58, %s59
      %p71 = scmp.eq.s32.totalorder %s28, 1
      %p72 = por %p70, %p71
      %p74 = scmp.ne.s32.totalorder %s59, %s73
      %p75 = scmp.eq.s32.totalorder %s28, 0
      %p76 = por %p74, %p75
      %s78 = sadd.s32 %s77, 1
      %p81 = scmp.eq.s32.totalorder %s22, 1
      %p82 = scmp.ne.s32.totalorder %s77, %s79
      %p83 = scmp.eq.s32.totalorder %s22, 0
      %p84 = por %p82, %p83
      %p85 = scmp.ne.s32.totalorder %s77, %s79
      %p86 = scmp.eq.s32.totalorder %s27, 1
      %p87 = por %p85, %p86
      %p88 = scmp.ne.s32.totalorder %s79, %s80
      %p89 = scmp.eq.s32.totalorder %s27, 0
      %p90 = por %p88, %p89
      %p91 = scmp.ne.s32.totalorder %s79, %s80
      %p92 = scmp.eq.s32.totalorder %s28, 1
      %p93 = por %p91, %p92
      %p95 = scmp.ne.s32.totalorder %s80, %s94
      %p96 = scmp.eq.s32.totalorder %s28, 0
      %p97 = por %p95, %p96
      %s99 = sadd.s32 %s98, 1
      %p102 = scmp.eq.s32.totalorder %s22, 1
      %p103 = scmp.ne.s32.totalorder %s98, %s100
      %p104 = scmp.eq.s32.totalorder %s22, 0
      %p105 = por %p103, %p104
      %p106 = scmp.ne.s32.totalorder %s98, %s100
      %p107 = scmp.eq.s32.totalorder %s27, 1
      %p108 = por %p106, %p107
      %p109 = scmp.ne.s32.totalorder %s100, %s101
      %p110 = scmp.eq.s32.totalorder %s27, 0
      %p111 = por %p109, %p110
      %p112 = scmp.ne.s32.totalorder %s100, %s101
      %p113 = scmp.eq.s32.totalorder %s28, 1
      %p114 = por %p112, %p113
      %p116 = scmp.ne.s32.totalorder %s101, %s115
      %p117 = scmp.eq.s32.totalorder %s28, 0
      %p118 = por %p116, %p117
      %s120 = sadd.s32 %s119, 1
      %p123 = scmp.eq.s32.totalorder %s22, 1
      %p124 = scmp.ne.s32.totalorder %s119, %s121
      %p125 = scmp.eq.s32.totalorder %s22, 0
      %p126 = por %p124, %p125
      %p127 = scmp.ne.s32.totalorder %s119, %s121
      %p128 = scmp.eq.s32.totalorder %s27, 1
      %p129 = por %p127, %p128
      %p130 = scmp.ne.s32.totalorder %s121, %s122
      %p131 = scmp.eq.s32.totalorder %s27, 0
      %p132 = por %p130, %p131
      %p133 = scmp.ne.s32.totalorder %s121, %s122
      %p134 = scmp.eq.s32.totalorder %s28, 1
      %p135 = por %p133, %p134
      %p137 = scmp.ne.s32.totalorder %s122, %s136
      %p138 = scmp.eq.s32.totalorder %s28, 0
      %p139 = por %p137, %p138
      %s141 = sadd.s32 %s140, 1
      %p144 = scmp.eq.s32.totalorder %s22, 1
      %p145 = scmp.ne.s32.totalorder %s140, %s142
      %p146 = scmp.eq.s32.totalorder %s22, 0
      %p147 = por %p145, %p146
      %p148 = scmp.ne.s32.totalorder %s140, %s142
      %p149 = scmp.eq.s32.totalorder %s27, 1
      %p150 = por %p148, %p149
      %p151 = scmp.ne.s32.totalorder %s142, %s143
      %p152 = scmp.eq.s32.totalorder %s27, 0
      %p153 = por %p151, %p152
      %p154 = scmp.ne.s32.totalorder %s142, %s143
      %p155 = scmp.eq.s32.totalorder %s28, 1
      %p156 = por %p154, %p155
      %p158 = scmp.ne.s32.totalorder %s143, %s157
      %p159 = scmp.eq.s32.totalorder %s28, 0
      %p160 = por %p158, %p159
      %s162 = sadd.s32 %s161, 1
      %p165 = scmp.eq.s32.totalorder %s22, 1
      %p166 = scmp.ne.s32.totalorder %s161, %s163
      %p167 = scmp.eq.s32.totalorder %s22, 0
      %p168 = por %p166, %p167
      %p169 = scmp.ne.s32.totalorder %s161, %s163
      %p170 = scmp.eq.s32.totalorder %s27, 1
      %p171 = por %p169, %p170
      %p172 = scmp.ne.s32.totalorder %s163, %s164
      %p173 = scmp.eq.s32.totalorder %s27, 0
      %p174 = por %p172, %p173
      %p175 = scmp.ne.s32.totalorder %s163, %s164
      %p176 = scmp.eq.s32.totalorder %s28, 1
      %p177 = por %p175, %p176
      %p179 = scmp.ne.s32.totalorder %s164, %s178
      %p180 = scmp.eq.s32.totalorder %s28, 0
      %p181 = por %p179, %p180
      %s182 = ssub.s32 %s22, %s29
      %p183 = scmp.eq.s32.totalorder %s182, 0
      %s185 = sadd.s32 %s184, 1
      %s186 = scalar_select %p183, %s184, %s185
      %p189 = pneg %p183
      %p190 = scmp.eq.s32.totalorder %s22, 1
      %p191 = por %p189, %p190
      %p192 = scmp.ne.s32.totalorder %s184, %s187
      %p193 = scmp.eq.s32.totalorder %s22, 0
      %p194 = por %p192, %p193
      %p195 = scmp.ne.s32.totalorder %s184, %s187
      %p196 = scmp.eq.s32.totalorder %s27, 1
      %p197 = por %p195, %p196
      %p198 = scmp.ne.s32.totalorder %s187, %s188
      %p199 = scmp.eq.s32.totalorder %s27, 0
      %p200 = por %p198, %p199
      %p201 = scmp.ne.s32.totalorder %s187, %s188
      %p202 = scmp.eq.s32.totalorder %s28, 1
      %p203 = por %p201, %p202
      %p205 = scmp.ne.s32.totalorder %s188, %s204
      %p206 = scmp.eq.s32.totalorder %s28, 0
      %p207 = por %p205, %p206
      %p208 = scmp.le.s32.totalorder 1, %s22
      %p209 = scmp.lt.s32.totalorder %s22, 3
      %p210 = pnand %p208, %p209
      %p211 = pneg %p210
      // Predicated region
      $region9: #{tpu_custom_call.1} parent=5 // pred_check
        _
      $region10: #{tpu_custom_call.1} parent=5 // pred_check_branch
        %213 = sbr.rel (%p210) target = $region12
      $region11: #{tpu_custom_call.1} parent=5 // pred_region
        %s214 = ssub.s32 %s22, 1
        // Predicated region
        $region13: #{tpu_custom_call.1} parent=11 // pred_check
          %p215 = pneg %p69
        $region14: #{tpu_custom_call.1} parent=11 // pred_check_branch
          %217 = sbr.rel (%p215) target = $region16
        $region15: #{tpu_custom_call.1} parent=11 // pred_region
          %219 = vsyncadd [#allocation9], 0
          %s220 = sshll.u32 %s1, 4
          %s221 = int_to_ptr.hbm [resolvable:$true] %s220
          %s222 = sshll.u32 [#allocation8], 4
          %s223 = int_to_ptr.vmem [resolvable:$true] %s222
          %228 = dma.hbm_to_vmem [thread:$0]  %s221, 5120, %s223, [#allocation9], 512, 512, 32
        $region16: #{tpu_custom_call.1} parent=11 // pred_fallthru
          _
        // Predicated region
        $region17: #{tpu_custom_call.1} parent=11 // pred_check
          %p229 = pneg %p90
        $region18: #{tpu_custom_call.1} parent=11 // pred_check_branch
          %231 = sbr.rel (%p229) target = $region20
        $region19: #{tpu_custom_call.1} parent=11 // pred_region
          %233 = vsyncadd [#allocation9], 0
          %s235 = sshll.u32 %s2, 4
          %s236 = int_to_ptr.hbm [resolvable:$true] %s235
          %s237 = sshll.u32 [#allocation10], 4
          %s238 = int_to_ptr.vmem [resolvable:$true] %s237
          %240 = dma.hbm_to_vmem [thread:$0]  %s236, 128, %s238, [#allocation9]
        $region20: #{tpu_custom_call.1} parent=11 // pred_fallthru
          _
        // Predicated region
        $region21: #{tpu_custom_call.1} parent=11 // pred_check
          %p241 = pneg %p111
        $region22: #{tpu_custom_call.1} parent=11 // pred_check_branch
          %243 = sbr.rel (%p241) target = $region24
        $region23: #{tpu_custom_call.1} parent=11 // pred_region
          %245 = vsyncadd [#allocation12], 0
          %s246 = sshll.u32 %s3, 4
          %s247 = int_to_ptr.hbm [resolvable:$true] %s246
          %s248 = sshll.u32 [#allocation11], 4
          %s249 = int_to_ptr.vmem [resolvable:$true] %s248
          %254 = dma.hbm_to_vmem [thread:$0]  %s247, 98304, %s249, [#allocation12], 256, 256, 16
        $region24: #{tpu_custom_call.1} parent=11 // pred_fallthru
          _
        // Predicated region
        $region25: #{tpu_custom_call.1} parent=11 // pred_check
          %p255 = pneg %p132
        $region26: #{tpu_custom_call.1} parent=11 // pred_check_branch
          %257 = sbr.rel (%p255) target = $region28
        $region27: #{tpu_custom_call.1} parent=11 // pred_region
          %259 = vsyncadd [#allocation12], 0
          %s261 = sshll.u32 %s4, 4
          %s262 = int_to_ptr.hbm [resolvable:$true] %s261
          %s263 = sshll.u32 [#allocation13], 4
          %s264 = int_to_ptr.vmem [resolvable:$true] %s263
          %266 = dma.hbm_to_vmem [thread:$0]  %s262, 64, %s264, [#allocation12]
        $region28: #{tpu_custom_call.1} parent=11 // pred_fallthru
          _
        // Predicated region
        $region29: #{tpu_custom_call.1} parent=11 // pred_check
          %p267 = pneg %p153
        $region30: #{tpu_custom_call.1} parent=11 // pred_check_branch
          %269 = sbr.rel (%p267) target = $region32
        $region31: #{tpu_custom_call.1} parent=11 // pred_region
          _
        $region32: #{tpu_custom_call.1} parent=11 // pred_fallthru
          _
        // Predicated region
        $region33: #{tpu_custom_call.1} parent=11 // pred_check
          %p270 = pneg %p174
        $region34: #{tpu_custom_call.1} parent=11 // pred_check_branch
          %272 = sbr.rel (%p270) target = $region36
        $region35: #{tpu_custom_call.1} parent=11 // pred_region
          %274 = vsyncadd [#allocation15], 0
          %s276 = sshll.u32 %s6, 4
          %s277 = int_to_ptr.hbm [resolvable:$true] %s276
          %s278 = sshll.u32 [#allocation14], 4
          %s279 = int_to_ptr.vmem [resolvable:$true] %s278
          %281 = dma.hbm_to_vmem [thread:$0]  %s277, 32, %s279, [#allocation15]
        $region36: #{tpu_custom_call.1} parent=11 // pred_fallthru
          _
      $region12: #{tpu_custom_call.1} parent=5 // pred_fallthru
        _
      %p282 = scmp.lt.s32.totalorder %s22, 2
      // Predicated region
      $region37: #{tpu_custom_call.1} parent=5 // pred_check
        %p283 = pneg %p282
      $region38: #{tpu_custom_call.1} parent=5 // pred_check_branch
        %285 = sbr.rel (%p283) target = $region40
      $region39: #{tpu_custom_call.1} parent=5 // pred_region
        // Predicated region
        $region41: #{tpu_custom_call.1} parent=39 // pred_check
          %p286 = pneg %p42
        $region42: #{tpu_custom_call.1} parent=39 // pred_check_branch
          %288 = sbr.rel (%p286) target = $region44
        $region43: #{tpu_custom_call.1} parent=39 // pred_region
          %s289 = sand.u32 %s32, 1
          %s290 = scalar_lea.sflag [#allocation6], %s289
          %s291 = sand.u32 %s32, 1
          %s292 = smul.addr %s291, 16
          %s293 = scalar_lea.vmem [#allocation5], %s292
          %295 = vsyncadd %s290, 0
          %s296 = smul.addr %s22, 2
          %s297 = smul.addr %s296, 8
          %s298 = scalar_lea.hbm %s0, %s297
          %s299 = sshll.u32 %s298, 4
          %s300 = int_to_ptr.hbm [resolvable:$true] %s299
          %s301 = sshll.u32 %s293, 4
          %s302 = int_to_ptr.vmem [resolvable:$true] %s301
          %307 = dma.hbm_to_vmem [thread:$0]  %s300, 256, %s302, %s290, 128, 128, 8
        $region44: #{tpu_custom_call.1} parent=39 // pred_fallthru
          _
      $region40: #{tpu_custom_call.1} parent=5 // pred_fallthru
        _
      %p308 = scmp.le.s32.totalorder 1, %s22
      %p309 = scmp.lt.s32.totalorder %s22, 3
      %p310 = pnand %p308, %p309
      %p311 = pneg %p310
      // Predicated region
      $region45: #{tpu_custom_call.1} parent=5 // pred_check
        _
      $region46: #{tpu_custom_call.1} parent=5 // pred_check_branch
        %313 = sbr.rel (%p310) target = $region48
      $region47: #{tpu_custom_call.1} parent=5 // pred_region
        %s314 = ssub.s32 %s22, 1
        %s315 = sand.u32 %s35, 1
        %s316 = scalar_lea.sflag [#allocation6], %s315
        %s317 = sand.u32 %s35, 1
        %s318 = smul.addr %s317, 16
        %s319 = scalar_lea.vmem [#allocation5], %s318
        // Predicated region
        $region49: #{tpu_custom_call.1} parent=47 // pred_check
          %p320 = pneg %p48
        $region50: #{tpu_custom_call.1} parent=47 // pred_check_branch
          %322 = sbr.rel (%p320) target = $region52
        $region51: #{tpu_custom_call.1} parent=47 // pred_region
          %324 = dma.done %s316, 256
        $region52: #{tpu_custom_call.1} parent=47 // pred_fallthru
          _
        // Predicated region
        $region53: #{tpu_custom_call.1} parent=47 // pred_check
          %p325 = pneg %p69
        $region54: #{tpu_custom_call.1} parent=47 // pred_check_branch
          %327 = sbr.rel (%p325) target = $region56
        $region55: #{tpu_custom_call.1} parent=47 // pred_region
          %329 = dma.done [#allocation9], 5120
        $region56: #{tpu_custom_call.1} parent=47 // pred_fallthru
          _
        // Predicated region
        $region57: #{tpu_custom_call.1} parent=47 // pred_check
          %p330 = pneg %p90
        $region58: #{tpu_custom_call.1} parent=47 // pred_check_branch
          %332 = sbr.rel (%p330) target = $region60
        $region59: #{tpu_custom_call.1} parent=47 // pred_region
          %334 = dma.done [#allocation9], 128
        $region60: #{tpu_custom_call.1} parent=47 // pred_fallthru
          _
        // Predicated region
        $region61: #{tpu_custom_call.1} parent=47 // pred_check
          %p335 = pneg %p111
        $region62: #{tpu_custom_call.1} parent=47 // pred_check_branch
          %337 = sbr.rel (%p335) target = $region64
        $region63: #{tpu_custom_call.1} parent=47 // pred_region
          %339 = dma.done [#allocation12], 98304
        $region64: #{tpu_custom_call.1} parent=47 // pred_fallthru
          _
        // Predicated region
        $region65: #{tpu_custom_call.1} parent=47 // pred_check
          %p340 = pneg %p132
        $region66: #{tpu_custom_call.1} parent=47 // pred_check_branch
          %342 = sbr.rel (%p340) target = $region68
        $region67: #{tpu_custom_call.1} parent=47 // pred_region
          %344 = dma.done [#allocation12], 64
        $region68: #{tpu_custom_call.1} parent=47 // pred_fallthru
          _
        // Predicated region
        $region69: #{tpu_custom_call.1} parent=47 // pred_check
          %p345 = pneg %p174
        $region70: #{tpu_custom_call.1} parent=47 // pred_check_branch
          %347 = sbr.rel (%p345) target = $region72
        $region71: #{tpu_custom_call.1} parent=47 // pred_region
          %349 = dma.done [#allocation15], 32
        $region72: #{tpu_custom_call.1} parent=47 // pred_fallthru
          _
        %s350 = sand.u32 %s35, 1
        %s351 = scalar_lea.sflag [#allocation6], %s350
        %s352 = sand.u32 %s35, 1
        %s353 = smul.addr %s352, 16
        %s354 = scalar_lea.vmem [#allocation5], %s353
        %p355 = pneg %p48
        %p356 = pneg %p45
        %p357 = pneg %p69
        %p358 = pneg %p66
        %p359 = pneg %p90
        %p360 = pneg %p87
        %p361 = pneg %p111
        %p362 = pneg %p108
        %p363 = pneg %p132
        %p364 = pneg %p129
        %p365 = pneg %p153
        %p366 = pneg %p150
        %p367 = pneg %p174
        %p368 = pneg %p171
        %p369 = pneg %p200
        %p370 = pneg %p197
        %s371 = sand.u32 %s187, 1
        %s372 = scalar_lea.sflag [#allocation7], %s371
        %s373 = sand.u32 %s187, 1
        %s374 = smul.addr %s373, 32
        %s375 = scalar_lea.vmem [#allocation16], %s374
        %vm377 = vcmask 123904
        %378 = vst.msk [vmem:[#allocation2] sm:$0x3] %vm377, 0.0
        %379 = vst.msk [vmem:[#allocation2 + $0x12] sm:$0x3] %vm377, 0.0
        %380 = vst [vmem:[#allocation3] ss:$8 sm:$0xf] 0.0
        %381 = vst [vmem:[#allocation3] ss:$8 sm:$0xf0] 0.0
        %s382 = scalar_lea.vmem [#allocation3], 129
        %383 = vst [vmem:[%s382] ss:$8 sm:$0xf] 0.0
        %384 = vst [vmem:[%s382] ss:$8 sm:$0xf0] 0.0
        %v385 = vlaneseq
        %vm386 = vcmp.ge.s32.totalorder %v385, 0
        %vm387 = vcmp.lt.s32.totalorder %v385, 512
        %vm388 = vmand %vm386, %vm387
        %389 = vst.msk [vmem:[#allocation4] ss:$8 sm:$0xf] %vm388, 0.0
        %390 = vst.msk [vmem:[#allocation4] ss:$8 sm:$0x0] %vm388, 0.0
        %s391 = scalar_lea.vmem [#allocation4], 65
        %392 = vst.msk [vmem:[%s391] ss:$8 sm:$0xf] %vm388, 0.0
        %393 = vst.msk [vmem:[%s391] ss:$8 sm:$0x0] %vm388, 0.0
        %v394 = vld [vmem:[%s319] sm:$0xff]
        %v395 = vld [vmem:[%s319 + $0x8] sm:$0xff]
        %vm396 = vcmask 130048
        %397 = vst.msk [vmem:[#allocation2 + $0x2] sm:$0xff] %vm396, %v394
        %398 = vst.msk [vmem:[#allocation2 + $0xa] sm:$0xff] %vm396, %v395
        %v399 = vld [vmem:[#allocation10] sm:$0xff]
        %v400 = vld [vmem:[#allocation2] sm:$0xff]
        %v401 = vld [vmem:[#allocation2 + $0x8] sm:$0xff]
        %v402 = vpack.c.bf16 %v401, %v400
        %v403 = vld [vmem:[#allocation8] sm:$0xff]
        %v404 = vld [vmem:[#allocation8 + $0x8] sm:$0xff]
        %v405 = vld [vmem:[#allocation8 + $0x10] sm:$0xff]
        %v406 = vld [vmem:[#allocation8 + $0x18] sm:$0xff]
        %v407 = vld [vmem:[#allocation8 + $0x20] sm:$0xff]
        %v408 = vld [vmem:[#allocation8 + $0x28] sm:$0xff]
        %v409 = vld [vmem:[#allocation8 + $0x30] sm:$0xff]
        %v410 = vld [vmem:[#allocation8 + $0x38] sm:$0xff]
        %v419 = vunpack.c.l.b16 %v403
        %v420 = vunpack.c.h.b16 %v403
        %v421 = vunpack.c.l.b16 %v404
        %v422 = vunpack.c.h.b16 %v404
        %v423 = vunpack.c.l.b16 %v405
        %v424 = vunpack.c.h.b16 %v405
        %v425 = vunpack.c.l.b16 %v406
        %v426 = vunpack.c.h.b16 %v406
        %v427 = vunpack.c.l.b16 %v407
        %v428 = vunpack.c.h.b16 %v407
        %v429 = vunpack.c.l.b16 %v408
        %v430 = vunpack.c.h.b16 %v408
        %v431 = vunpack.c.l.b16 %v409
        %v432 = vunpack.c.h.b16 %v409
        %v433 = vunpack.c.l.b16 %v410
        %v434 = vunpack.c.h.b16 %v410
        %v435 = vpack.c.b16 %v427, %v419
        %v436 = vpack.c.b16 %v428, %v420
        %v437 = vpack.c.b16 %v429, %v421
        %v438 = vpack.c.b16 %v430, %v422
        %v439 = vpack.c.b16 %v431, %v423
        %v440 = vpack.c.b16 %v432, %v424
        %v441 = vpack.c.b16 %v433, %v425
        %v442 = vpack.c.b16 %v434, %v426
        %v452 = vsel %vm396, %v402, 0
        %454 = vmatpush.bf16.msra.mxu0 0
        %455 = vmatpush.bf16.msra.mxu0 0
        %456 = vmatpush.bf16.msra.mxu0 0
        %457 = vmatpush.bf16.msra.mxu0 0
        %458 = vmatpush.bf16.msra.mxu0 0
        %459 = vmatpush.bf16.msra.mxu0 0
        %460 = vmatpush.bf16.msra.mxu0 0
        %461 = vmatpush.bf16.msra.mxu0 %v435
        %462 = vmatmul.bf16.gmra.mxu0 %v452
        %v463 = vpop.f32.mrf.mxu0
        %v464 = vadd.f32 0.0, %v463
        %v465 = vpop.f32.mrf.mxu0
        %v466 = vadd.f32 0.0, %v465
        %467 = vdwg.mxu0
        %468 = vmatpush.bf16.msra.mxu0 0
        %469 = vmatpush.bf16.msra.mxu0 0
        %470 = vmatpush.bf16.msra.mxu0 0
        %471 = vmatpush.bf16.msra.mxu0 0
        %472 = vmatpush.bf16.msra.mxu0 0
        %473 = vmatpush.bf16.msra.mxu0 0
        %474 = vmatpush.bf16.msra.mxu0 0
        %475 = vmatpush.bf16.msra.mxu0 %v436
        %476 = vmatmul.bf16.gmra.mxu0 %v452
        %v477 = vpop.f32.mrf.mxu0
        %v478 = vadd.f32 0.0, %v477
        %v479 = vpop.f32.mrf.mxu0
        %v480 = vadd.f32 0.0, %v479
        %481 = vdwg.mxu0
        %482 = vmatpush.bf16.msra.mxu0 0
        %483 = vmatpush.bf16.msra.mxu0 0
        %484 = vmatpush.bf16.msra.mxu0 0
        %485 = vmatpush.bf16.msra.mxu0 0
        %486 = vmatpush.bf16.msra.mxu0 0
        %487 = vmatpush.bf16.msra.mxu0 0
        %488 = vmatpush.bf16.msra.mxu0 0
        %489 = vmatpush.bf16.msra.mxu0 %v437
        %490 = vmatmul.bf16.gmra.mxu0 %v452
        %v491 = vpop.f32.mrf.mxu0
        %v492 = vadd.f32 0.0, %v491
        %v493 = vpop.f32.mrf.mxu0
        %v494 = vadd.f32 0.0, %v493
        %495 = vdwg.mxu0
        %496 = vmatpush.bf16.msra.mxu0 0
        %497 = vmatpush.bf16.msra.mxu0 0
        %498 = vmatpush.bf16.msra.mxu0 0
        %499 = vmatpush.bf16.msra.mxu0 0
        %500 = vmatpush.bf16.msra.mxu0 0
        %501 = vmatpush.bf16.msra.mxu0 0
        %502 = vmatpush.bf16.msra.mxu0 0
        %503 = vmatpush.bf16.msra.mxu0 %v438
        %504 = vmatmul.bf16.gmra.mxu0 %v452
        %v505 = vpop.f32.mrf.mxu0
        %v506 = vadd.f32 0.0, %v505
        %v507 = vpop.f32.mrf.mxu0
        %v508 = vadd.f32 0.0, %v507
        %509 = vdwg.mxu0
        %510 = vmatpush.bf16.msra.mxu0 0
        %511 = vmatpush.bf16.msra.mxu0 0
        %512 = vmatpush.bf16.msra.mxu0 0
        %513 = vmatpush.bf16.msra.mxu0 0
        %514 = vmatpush.bf16.msra.mxu0 0
        %515 = vmatpush.bf16.msra.mxu0 0
        %516 = vmatpush.bf16.msra.mxu0 0
        %517 = vmatpush.bf16.msra.mxu0 %v439
        %518 = vmatmul.bf16.gmra.mxu0 %v452
        %v519 = vpop.f32.mrf.mxu0
        %v520 = vadd.f32 0.0, %v519
        %v521 = vpop.f32.mrf.mxu0
        %v522 = vadd.f32 0.0, %v521
        %523 = vdwg.mxu0
        %524 = vmatpush.bf16.msra.mxu0 0
        %525 = vmatpush.bf16.msra.mxu0 0
        %526 = vmatpush.bf16.msra.mxu0 0
        %527 = vmatpush.bf16.msra.mxu0 0
        %528 = vmatpush.bf16.msra.mxu0 0
        %529 = vmatpush.bf16.msra.mxu0 0
        %530 = vmatpush.bf16.msra.mxu0 0
        %531 = vmatpush.bf16.msra.mxu0 %v440
        %532 = vmatmul.bf16.gmra.mxu0 %v452
        %v533 = vpop.f32.mrf.mxu0
        %v534 = vadd.f32 0.0, %v533
        %v535 = vpop.f32.mrf.mxu0
        %v536 = vadd.f32 0.0, %v535
        %537 = vdwg.mxu0
        %538 = vmatpush.bf16.msra.mxu0 0
        %539 = vmatpush.bf16.msra.mxu0 0
        %540 = vmatpush.bf16.msra.mxu0 0
        %541 = vmatpush.bf16.msra.mxu0 0
        %542 = vmatpush.bf16.msra.mxu0 0
        %543 = vmatpush.bf16.msra.mxu0 0
        %544 = vmatpush.bf16.msra.mxu0 0
        %545 = vmatpush.bf16.msra.mxu0 %v441
        %546 = vmatmul.bf16.gmra.mxu0 %v452
        %v547 = vpop.f32.mrf.mxu0
        %v548 = vadd.f32 0.0, %v547
        %v549 = vpop.f32.mrf.mxu0
        %v550 = vadd.f32 0.0, %v549
        %551 = vdwg.mxu0
        %552 = vmatpush.bf16.msra.mxu0 0
        %553 = vmatpush.bf16.msra.mxu0 0
        %554 = vmatpush.bf16.msra.mxu0 0
        %555 = vmatpush.bf16.msra.mxu0 0
        %556 = vmatpush.bf16.msra.mxu0 0
        %557 = vmatpush.bf16.msra.mxu0 0
        %558 = vmatpush.bf16.msra.mxu0 0
        %559 = vmatpush.bf16.msra.mxu0 %v442
        %560 = vmatmul.bf16.gmra.mxu0 %v452
        %v561 = vpop.f32.mrf.mxu0
        %v562 = vadd.f32 0.0, %v561
        %v563 = vpop.f32.mrf.mxu0
        %v564 = vadd.f32 0.0, %v563
        %565 = vdwg.mxu0
        %v567 = vperm.slane %v399, 0
        %v568 = vperm.slane %v399, 1
        %v569 = vperm.slane %v399, 2
        %v570 = vperm.slane %v399, 3
        %v571 = vperm.slane %v399, 4
        %v572 = vperm.slane %v399, 5
        %v573 = vperm.slane %v399, 6
        %v574 = vperm.slane %v399, 7
        %v583 = vadd.f32 %v567, %v464
        %v584 = vadd.f32 %v568, %v478
        %v585 = vadd.f32 %v569, %v492
        %v586 = vadd.f32 %v570, %v506
        %v587 = vadd.f32 %v571, %v520
        %v588 = vadd.f32 %v572, %v534
        %v589 = vadd.f32 %v573, %v548
        %v590 = vadd.f32 %v574, %v562
        %v591 = vadd.f32 %v567, %v466
        %v592 = vadd.f32 %v568, %v480
        %v593 = vadd.f32 %v569, %v494
        %v594 = vadd.f32 %v570, %v508
        %v595 = vadd.f32 %v571, %v522
        %v596 = vadd.f32 %v572, %v536
        %v597 = vadd.f32 %v573, %v550
        %v598 = vadd.f32 %v574, %v564
        %v599 = vld [vmem:[#allocation2 + $0x1] sm:$0xff]
        %v600 = vld [vmem:[#allocation2 + $0x9] sm:$0xff]
        %v601 = vpack.c.bf16 %v600, %v599
        %s602 = scalar_lea.vmem [#allocation8], 64
        %v603 = vld [vmem:[%s602] sm:$0xff]
        %v604 = vld [vmem:[%s602 + $0x8] sm:$0xff]
        %v605 = vld [vmem:[%s602 + $0x10] sm:$0xff]
        %v606 = vld [vmem:[%s602 + $0x18] sm:$0xff]
        %v607 = vld [vmem:[%s602 + $0x20] sm:$0xff]
        %v608 = vld [vmem:[%s602 + $0x28] sm:$0xff]
        %v609 = vld [vmem:[%s602 + $0x30] sm:$0xff]
        %v610 = vld [vmem:[%s602 + $0x38] sm:$0xff]
        %v619 = vunpack.c.l.b16 %v603
        %v620 = vunpack.c.h.b16 %v603
        %v621 = vunpack.c.l.b16 %v604
        %v622 = vunpack.c.h.b16 %v604
        %v623 = vunpack.c.l.b16 %v605
        %v624 = vunpack.c.h.b16 %v605
        %v625 = vunpack.c.l.b16 %v606
        %v626 = vunpack.c.h.b16 %v606
        %v627 = vunpack.c.l.b16 %v607
        %v628 = vunpack.c.h.b16 %v607
        %v629 = vunpack.c.l.b16 %v608
        %v630 = vunpack.c.h.b16 %v608
        %v631 = vunpack.c.l.b16 %v609
        %v632 = vunpack.c.h.b16 %v609
        %v633 = vunpack.c.l.b16 %v610
        %v634 = vunpack.c.h.b16 %v610
        %v635 = vpack.c.b16 %v627, %v619
        %v636 = vpack.c.b16 %v628, %v620
        %v637 = vpack.c.b16 %v629, %v621
        %v638 = vpack.c.b16 %v630, %v622
        %v639 = vpack.c.b16 %v631, %v623
        %v640 = vpack.c.b16 %v632, %v624
        %v641 = vpack.c.b16 %v633, %v625
        %v642 = vpack.c.b16 %v634, %v626
        %v652 = vsel %vm396, %v601, 0
        %654 = vmatpush.bf16.msra.mxu0 0
        %655 = vmatpush.bf16.msra.mxu0 0
        %656 = vmatpush.bf16.msra.mxu0 0
        %657 = vmatpush.bf16.msra.mxu0 0
        %658 = vmatpush.bf16.msra.mxu0 0
        %659 = vmatpush.bf16.msra.mxu0 0
        %660 = vmatpush.bf16.msra.mxu0 0
        %661 = vmatpush.bf16.msra.mxu0 %v635
        %662 = vmatmul.bf16.gmra.mxu0 %v652
        %v663 = vpop.f32.mrf.mxu0
        %v664 = vadd.f32 0.0, %v663
        %v665 = vpop.f32.mrf.mxu0
        %v666 = vadd.f32 0.0, %v665
        %667 = vdwg.mxu0
        %668 = vmatpush.bf16.msra.mxu0 0
        %669 = vmatpush.bf16.msra.mxu0 0
        %670 = vmatpush.bf16.msra.mxu0 0
        %671 = vmatpush.bf16.msra.mxu0 0
        %672 = vmatpush.bf16.msra.mxu0 0
        %673 = vmatpush.bf16.msra.mxu0 0
        %674 = vmatpush.bf16.msra.mxu0 0
        %675 = vmatpush.bf16.msra.mxu0 %v636
        %676 = vmatmul.bf16.gmra.mxu0 %v652
        %v677 = vpop.f32.mrf.mxu0
        %v678 = vadd.f32 0.0, %v677
        %v679 = vpop.f32.mrf.mxu0
        %v680 = vadd.f32 0.0, %v679
        %681 = vdwg.mxu0
        %682 = vmatpush.bf16.msra.mxu0 0
        %683 = vmatpush.bf16.msra.mxu0 0
        %684 = vmatpush.bf16.msra.mxu0 0
        %685 = vmatpush.bf16.msra.mxu0 0
        %686 = vmatpush.bf16.msra.mxu0 0
        %687 = vmatpush.bf16.msra.mxu0 0
        %688 = vmatpush.bf16.msra.mxu0 0
        %689 = vmatpush.bf16.msra.mxu0 %v637
        %690 = vmatmul.bf16.gmra.mxu0 %v652
        %v691 = vpop.f32.mrf.mxu0
        %v692 = vadd.f32 0.0, %v691
        %v693 = vpop.f32.mrf.mxu0
        %v694 = vadd.f32 0.0, %v693
        %695 = vdwg.mxu0
        %696 = vmatpush.bf16.msra.mxu0 0
        %697 = vmatpush.bf16.msra.mxu0 0
        %698 = vmatpush.bf16.msra.mxu0 0
        %699 = vmatpush.bf16.msra.mxu0 0
        %700 = vmatpush.bf16.msra.mxu0 0
        %701 = vmatpush.bf16.msra.mxu0 0
        %702 = vmatpush.bf16.msra.mxu0 0
        %703 = vmatpush.bf16.msra.mxu0 %v638
        %704 = vmatmul.bf16.gmra.mxu0 %v652
        %v705 = vpop.f32.mrf.mxu0
        %v706 = vadd.f32 0.0, %v705
        %v707 = vpop.f32.mrf.mxu0
        %v708 = vadd.f32 0.0, %v707
        %709 = vdwg.mxu0
        %710 = vmatpush.bf16.msra.mxu0 0
        %711 = vmatpush.bf16.msra.mxu0 0
        %712 = vmatpush.bf16.msra.mxu0 0
        %713 = vmatpush.bf16.msra.mxu0 0
        %714 = vmatpush.bf16.msra.mxu0 0
        %715 = vmatpush.bf16.msra.mxu0 0
        %716 = vmatpush.bf16.msra.mxu0 0
        %717 = vmatpush.bf16.msra.mxu0 %v639
        %718 = vmatmul.bf16.gmra.mxu0 %v652
        %v719 = vpop.f32.mrf.mxu0
        %v720 = vadd.f32 0.0, %v719
        %v721 = vpop.f32.mrf.mxu0
        %v722 = vadd.f32 0.0, %v721
        %723 = vdwg.mxu0
        %724 = vmatpush.bf16.msra.mxu0 0
        %725 = vmatpush.bf16.msra.mxu0 0
        %726 = vmatpush.bf16.msra.mxu0 0
        %727 = vmatpush.bf16.msra.mxu0 0
        %728 = vmatpush.bf16.msra.mxu0 0
        %729 = vmatpush.bf16.msra.mxu0 0
        %730 = vmatpush.bf16.msra.mxu0 0
        %731 = vmatpush.bf16.msra.mxu0 %v640
        %732 = vmatmul.bf16.gmra.mxu0 %v652
        %v733 = vpop.f32.mrf.mxu0
        %v734 = vadd.f32 0.0, %v733
        %v735 = vpop.f32.mrf.mxu0
        %v736 = vadd.f32 0.0, %v735
        %737 = vdwg.mxu0
        %738 = vmatpush.bf16.msra.mxu0 0
        %739 = vmatpush.bf16.msra.mxu0 0
        %740 = vmatpush.bf16.msra.mxu0 0
        %741 = vmatpush.bf16.msra.mxu0 0
        %742 = vmatpush.bf16.msra.mxu0 0
        %743 = vmatpush.bf16.msra.mxu0 0
        %744 = vmatpush.bf16.msra.mxu0 0
        %745 = vmatpush.bf16.msra.mxu0 %v641
        %746 = vmatmul.bf16.gmra.mxu0 %v652
        %v747 = vpop.f32.mrf.mxu0
        %v748 = vadd.f32 0.0, %v747
        %v749 = vpop.f32.mrf.mxu0
        %v750 = vadd.f32 0.0, %v749
        %751 = vdwg.mxu0
        %752 = vmatpush.bf16.msra.mxu0 0
        %753 = vmatpush.bf16.msra.mxu0 0
        %754 = vmatpush.bf16.msra.mxu0 0
        %755 = vmatpush.bf16.msra.mxu0 0
        %756 = vmatpush.bf16.msra.mxu0 0
        %757 = vmatpush.bf16.msra.mxu0 0
        %758 = vmatpush.bf16.msra.mxu0 0
        %759 = vmatpush.bf16.msra.mxu0 %v642
        %760 = vmatmul.bf16.gmra.mxu0 %v652
        %v761 = vpop.f32.mrf.mxu0
        %v762 = vadd.f32 0.0, %v761
        %v763 = vpop.f32.mrf.mxu0
        %v764 = vadd.f32 0.0, %v763
        %765 = vdwg.mxu0
        %v766 = vadd.f32 %v583, %v664
        %v767 = vadd.f32 %v584, %v678
        %v768 = vadd.f32 %v585, %v692
        %v769 = vadd.f32 %v586, %v706
        %v770 = vadd.f32 %v587, %v720
        %v771 = vadd.f32 %v588, %v734
        %v772 = vadd.f32 %v589, %v748
        %v773 = vadd.f32 %v590, %v762
        %v774 = vadd.f32 %v591, %v666
        %v775 = vadd.f32 %v592, %v680
        %v776 = vadd.f32 %v593, %v694
        %v777 = vadd.f32 %v594, %v708
        %v778 = vadd.f32 %v595, %v722
        %v779 = vadd.f32 %v596, %v736
        %v780 = vadd.f32 %v597, %v750
        %v781 = vadd.f32 %v598, %v764
        %v782 = vld [vmem:[#allocation2 + $0x2] sm:$0xff]
        %v783 = vld [vmem:[#allocation2 + $0xa] sm:$0xff]
        %v784 = vpack.c.bf16 %v783, %v782
        %s785 = scalar_lea.vmem [#allocation8], 128
        %v786 = vld [vmem:[%s785] sm:$0xff]
        %v787 = vld [vmem:[%s785 + $0x8] sm:$0xff]
        %v788 = vld [vmem:[%s785 + $0x10] sm:$0xff]
        %v789 = vld [vmem:[%s785 + $0x18] sm:$0xff]
        %v790 = vld [vmem:[%s785 + $0x20] sm:$0xff]
        %v791 = vld [vmem:[%s785 + $0x28] sm:$0xff]
        %v792 = vld [vmem:[%s785 + $0x30] sm:$0xff]
        %v793 = vld [vmem:[%s785 + $0x38] sm:$0xff]
        %v802 = vunpack.c.l.b16 %v786
        %v803 = vunpack.c.h.b16 %v786
        %v804 = vunpack.c.l.b16 %v787
        %v805 = vunpack.c.h.b16 %v787
        %v806 = vunpack.c.l.b16 %v788
        %v807 = vunpack.c.h.b16 %v788
        %v808 = vunpack.c.l.b16 %v789
        %v809 = vunpack.c.h.b16 %v789
        %v810 = vunpack.c.l.b16 %v790
        %v811 = vunpack.c.h.b16 %v790
        %v812 = vunpack.c.l.b16 %v791
        %v813 = vunpack.c.h.b16 %v791
        %v814 = vunpack.c.l.b16 %v792
        %v815 = vunpack.c.h.b16 %v792
        %v816 = vunpack.c.l.b16 %v793
        %v817 = vunpack.c.h.b16 %v793
        %v818 = vpack.c.b16 %v810, %v802
        %v819 = vpack.c.b16 %v811, %v803
        %v820 = vpack.c.b16 %v812, %v804
        %v821 = vpack.c.b16 %v813, %v805
        %v822 = vpack.c.b16 %v814, %v806
        %v823 = vpack.c.b16 %v815, %v807
        %v824 = vpack.c.b16 %v816, %v808
        %v825 = vpack.c.b16 %v817, %v809
        %v835 = vsel %vm396, %v784, 0
        %837 = vmatpush.bf16.msra.mxu0 0
        %838 = vmatpush.bf16.msra.mxu0 0
        %839 = vmatpush.bf16.msra.mxu0 0
        %840 = vmatpush.bf16.msra.mxu0 0
        %841 = vmatpush.bf16.msra.mxu0 0
        %842 = vmatpush.bf16.msra.mxu0 0
        %843 = vmatpush.bf16.msra.mxu0 0
        %844 = vmatpush.bf16.msra.mxu0 %v818
        %845 = vmatmul.bf16.gmra.mxu0 %v835
        %v846 = vpop.f32.mrf.mxu0
        %v847 = vadd.f32 0.0, %v846
        %v848 = vpop.f32.mrf.mxu0
        %v849 = vadd.f32 0.0, %v848
        %850 = vdwg.mxu0
        %851 = vmatpush.bf16.msra.mxu0 0
        %852 = vmatpush.bf16.msra.mxu0 0
        %853 = vmatpush.bf16.msra.mxu0 0
        %854 = vmatpush.bf16.msra.mxu0 0
        %855 = vmatpush.bf16.msra.mxu0 0
        %856 = vmatpush.bf16.msra.mxu0 0
        %857 = vmatpush.bf16.msra.mxu0 0
        %858 = vmatpush.bf16.msra.mxu0 %v819
        %859 = vmatmul.bf16.gmra.mxu0 %v835
        %v860 = vpop.f32.mrf.mxu0
        %v861 = vadd.f32 0.0, %v860
        %v862 = vpop.f32.mrf.mxu0
        %v863 = vadd.f32 0.0, %v862
        %864 = vdwg.mxu0
        %865 = vmatpush.bf16.msra.mxu0 0
        %866 = vmatpush.bf16.msra.mxu0 0
        %867 = vmatpush.bf16.msra.mxu0 0
        %868 = vmatpush.bf16.msra.mxu0 0
        %869 = vmatpush.bf16.msra.mxu0 0
        %870 = vmatpush.bf16.msra.mxu0 0
        %871 = vmatpush.bf16.msra.mxu0 0
        %872 = vmatpush.bf16.msra.mxu0 %v820
        %873 = vmatmul.bf16.gmra.mxu0 %v835
        %v874 = vpop.f32.mrf.mxu0
        %v875 = vadd.f32 0.0, %v874
        %v876 = vpop.f32.mrf.mxu0
        %v877 = vadd.f32 0.0, %v876
        %878 = vdwg.mxu0
        %879 = vmatpush.bf16.msra.mxu0 0
        %880 = vmatpush.bf16.msra.mxu0 0
        %881 = vmatpush.bf16.msra.mxu0 0
        %882 = vmatpush.bf16.msra.mxu0 0
        %883 = vmatpush.bf16.msra.mxu0 0
        %884 = vmatpush.bf16.msra.mxu0 0
        %885 = vmatpush.bf16.msra.mxu0 0
        %886 = vmatpush.bf16.msra.mxu0 %v821
        %887 = vmatmul.bf16.gmra.mxu0 %v835
        %v888 = vpop.f32.mrf.mxu0
        %v889 = vadd.f32 0.0, %v888
        %v890 = vpop.f32.mrf.mxu0
        %v891 = vadd.f32 0.0, %v890
        %892 = vdwg.mxu0
        %893 = vmatpush.bf16.msra.mxu0 0
        %894 = vmatpush.bf16.msra.mxu0 0
        %895 = vmatpush.bf16.msra.mxu0 0
        %896 = vmatpush.bf16.msra.mxu0 0
        %897 = vmatpush.bf16.msra.mxu0 0
        %898 = vmatpush.bf16.msra.mxu0 0
        %899 = vmatpush.bf16.msra.mxu0 0
        %900 = vmatpush.bf16.msra.mxu0 %v822
        %901 = vmatmul.bf16.gmra.mxu0 %v835
        %v902 = vpop.f32.mrf.mxu0
        %v903 = vadd.f32 0.0, %v902
        %v904 = vpop.f32.mrf.mxu0
        %v905 = vadd.f32 0.0, %v904
        %906 = vdwg.mxu0
        %907 = vmatpush.bf16.msra.mxu0 0
        %908 = vmatpush.bf16.msra.mxu0 0
        %909 = vmatpush.bf16.msra.mxu0 0
        %910 = vmatpush.bf16.msra.mxu0 0
        %911 = vmatpush.bf16.msra.mxu0 0
        %912 = vmatpush.bf16.msra.mxu0 0
        %913 = vmatpush.bf16.msra.mxu0 0
        %914 = vmatpush.bf16.msra.mxu0 %v823
        %915 = vmatmul.bf16.gmra.mxu0 %v835
        %v916 = vpop.f32.mrf.mxu0
        %v917 = vadd.f32 0.0, %v916
        %v918 = vpop.f32.mrf.mxu0
        %v919 = vadd.f32 0.0, %v918
        %920 = vdwg.mxu0
        %921 = vmatpush.bf16.msra.mxu0 0
        %922 = vmatpush.bf16.msra.mxu0 0
        %923 = vmatpush.bf16.msra.mxu0 0
        %924 = vmatpush.bf16.msra.mxu0 0
        %925 = vmatpush.bf16.msra.mxu0 0
        %926 = vmatpush.bf16.msra.mxu0 0
        %927 = vmatpush.bf16.msra.mxu0 0
        %928 = vmatpush.bf16.msra.mxu0 %v824
        %929 = vmatmul.bf16.gmra.mxu0 %v835
        %v930 = vpop.f32.mrf.mxu0
        %v931 = vadd.f32 0.0, %v930
        %v932 = vpop.f32.mrf.mxu0
        %v933 = vadd.f32 0.0, %v932
        %934 = vdwg.mxu0
        %935 = vmatpush.bf16.msra.mxu0 0
        %936 = vmatpush.bf16.msra.mxu0 0
        %937 = vmatpush.bf16.msra.mxu0 0
        %938 = vmatpush.bf16.msra.mxu0 0
        %939 = vmatpush.bf16.msra.mxu0 0
        %940 = vmatpush.bf16.msra.mxu0 0
        %941 = vmatpush.bf16.msra.mxu0 0
        %942 = vmatpush.bf16.msra.mxu0 %v825
        %943 = vmatmul.bf16.gmra.mxu0 %v835
        %v944 = vpop.f32.mrf.mxu0
        %v945 = vadd.f32 0.0, %v944
        %v946 = vpop.f32.mrf.mxu0
        %v947 = vadd.f32 0.0, %v946
        %948 = vdwg.mxu0
        %v949 = vadd.f32 %v766, %v847
        %v950 = vadd.f32 %v767, %v861
        %v951 = vadd.f32 %v768, %v875
        %v952 = vadd.f32 %v769, %v889
        %v953 = vadd.f32 %v770, %v903
        %v954 = vadd.f32 %v771, %v917
        %v955 = vadd.f32 %v772, %v931
        %v956 = vadd.f32 %v773, %v945
        %v957 = vadd.f32 %v774, %v849
        %v958 = vadd.f32 %v775, %v863
        %v959 = vadd.f32 %v776, %v877
        %v960 = vadd.f32 %v777, %v891
        %v961 = vadd.f32 %v778, %v905
        %v962 = vadd.f32 %v779, %v919
        %v963 = vadd.f32 %v780, %v933
        %v964 = vadd.f32 %v781, %v947
        %v965 = vld [vmem:[#allocation2 + $0x3] sm:$0xff]
        %v966 = vld [vmem:[#allocation2 + $0xb] sm:$0xff]
        %v967 = vpack.c.bf16 %v966, %v965
        %s968 = scalar_lea.vmem [#allocation8], 192
        %v969 = vld [vmem:[%s968] sm:$0xff]
        %v970 = vld [vmem:[%s968 + $0x8] sm:$0xff]
        %v971 = vld [vmem:[%s968 + $0x10] sm:$0xff]
        %v972 = vld [vmem:[%s968 + $0x18] sm:$0xff]
        %v973 = vld [vmem:[%s968 + $0x20] sm:$0xff]
        %v974 = vld [vmem:[%s968 + $0x28] sm:$0xff]
        %v975 = vld [vmem:[%s968 + $0x30] sm:$0xff]
        %v976 = vld [vmem:[%s968 + $0x38] sm:$0xff]
        %v985 = vunpack.c.l.b16 %v969
        %v986 = vunpack.c.h.b16 %v969
        %v987 = vunpack.c.l.b16 %v970
        %v988 = vunpack.c.h.b16 %v970
        %v989 = vunpack.c.l.b16 %v971
        %v990 = vunpack.c.h.b16 %v971
        %v991 = vunpack.c.l.b16 %v972
        %v992 = vunpack.c.h.b16 %v972
        %v993 = vunpack.c.l.b16 %v973
        %v994 = vunpack.c.h.b16 %v973
        %v995 = vunpack.c.l.b16 %v974
        %v996 = vunpack.c.h.b16 %v974
        %v997 = vunpack.c.l.b16 %v975
        %v998 = vunpack.c.h.b16 %v975
        %v999 = vunpack.c.l.b16 %v976
        %v1000 = vunpack.c.h.b16 %v976
        %v1001 = vpack.c.b16 %v993, %v985
        %v1002 = vpack.c.b16 %v994, %v986
        %v1003 = vpack.c.b16 %v995, %v987
        %v1004 = vpack.c.b16 %v996, %v988
        %v1005 = vpack.c.b16 %v997, %v989
        %v1006 = vpack.c.b16 %v998, %v990
        %v1007 = vpack.c.b16 %v999, %v991
        %v1008 = vpack.c.b16 %v1000, %v992
        %v1018 = vsel %vm396, %v967, 0
        %1020 = vmatpush.bf16.msra.mxu0 0
        %1021 = vmatpush.bf16.msra.mxu0 0
        %1022 = vmatpush.bf16.msra.mxu0 0
        %1023 = vmatpush.bf16.msra.mxu0 0
        %1024 = vmatpush.bf16.msra.mxu0 0
        %1025 = vmatpush.bf16.msra.mxu0 0
        %1026 = vmatpush.bf16.msra.mxu0 0
        %1027 = vmatpush.bf16.msra.mxu0 %v1001
        %1028 = vmatmul.bf16.gmra.mxu0 %v1018
        %v1029 = vpop.f32.mrf.mxu0
        %v1030 = vadd.f32 0.0, %v1029
        %v1031 = vpop.f32.mrf.mxu0
        %v1032 = vadd.f32 0.0, %v1031
        %1033 = vdwg.mxu0
        %1034 = vmatpush.bf16.msra.mxu0 0
        %1035 = vmatpush.bf16.msra.mxu0 0
        %1036 = vmatpush.bf16.msra.mxu0 0
        %1037 = vmatpush.bf16.msra.mxu0 0
        %1038 = vmatpush.bf16.msra.mxu0 0
        %1039 = vmatpush.bf16.msra.mxu0 0
        %1040 = vmatpush.bf16.msra.mxu0 0
        %1041 = vmatpush.bf16.msra.mxu0 %v1002
        %1042 = vmatmul.bf16.gmra.mxu0 %v1018
        %v1043 = vpop.f32.mrf.mxu0
        %v1044 = vadd.f32 0.0, %v1043
        %v1045 = vpop.f32.mrf.mxu0
        %v1046 = vadd.f32 0.0, %v1045
        %1047 = vdwg.mxu0
        %1048 = vmatpush.bf16.msra.mxu0 0
        %1049 = vmatpush.bf16.msra.mxu0 0
        %1050 = vmatpush.bf16.msra.mxu0 0
        %1051 = vmatpush.bf16.msra.mxu0 0
        %1052 = vmatpush.bf16.msra.mxu0 0
        %1053 = vmatpush.bf16.msra.mxu0 0
        %1054 = vmatpush.bf16.msra.mxu0 0
        %1055 = vmatpush.bf16.msra.mxu0 %v1003
        %1056 = vmatmul.bf16.gmra.mxu0 %v1018
        %v1057 = vpop.f32.mrf.mxu0
        %v1058 = vadd.f32 0.0, %v1057
        %v1059 = vpop.f32.mrf.mxu0
        %v1060 = vadd.f32 0.0, %v1059
        %1061 = vdwg.mxu0
        %1062 = vmatpush.bf16.msra.mxu0 0
        %1063 = vmatpush.bf16.msra.mxu0 0
        %1064 = vmatpush.bf16.msra.mxu0 0
        %1065 = vmatpush.bf16.msra.mxu0 0
        %1066 = vmatpush.bf16.msra.mxu0 0
        %1067 = vmatpush.bf16.msra.mxu0 0
        %1068 = vmatpush.bf16.msra.mxu0 0
        %1069 = vmatpush.bf16.msra.mxu0 %v1004
        %1070 = vmatmul.bf16.gmra.mxu0 %v1018
        %v1071 = vpop.f32.mrf.mxu0
        %v1072 = vadd.f32 0.0, %v1071
        %v1073 = vpop.f32.mrf.mxu0
        %v1074 = vadd.f32 0.0, %v1073
        %1075 = vdwg.mxu0
        %1076 = vmatpush.bf16.msra.mxu0 0
        %1077 = vmatpush.bf16.msra.mxu0 0
        %1078 = vmatpush.bf16.msra.mxu0 0
        %1079 = vmatpush.bf16.msra.mxu0 0
        %1080 = vmatpush.bf16.msra.mxu0 0
        %1081 = vmatpush.bf16.msra.mxu0 0
        %1082 = vmatpush.bf16.msra.mxu0 0
        %1083 = vmatpush.bf16.msra.mxu0 %v1005
        %1084 = vmatmul.bf16.gmra.mxu0 %v1018
        %v1085 = vpop.f32.mrf.mxu0
        %v1086 = vadd.f32 0.0, %v1085
        %v1087 = vpop.f32.mrf.mxu0
        %v1088 = vadd.f32 0.0, %v1087
        %1089 = vdwg.mxu0
        %1090 = vmatpush.bf16.msra.mxu0 0
        %1091 = vmatpush.bf16.msra.mxu0 0
        %1092 = vmatpush.bf16.msra.mxu0 0
        %1093 = vmatpush.bf16.msra.mxu0 0
        %1094 = vmatpush.bf16.msra.mxu0 0
        %1095 = vmatpush.bf16.msra.mxu0 0
        %1096 = vmatpush.bf16.msra.mxu0 0
        %1097 = vmatpush.bf16.msra.mxu0 %v1006
        %1098 = vmatmul.bf16.gmra.mxu0 %v1018
        %v1099 = vpop.f32.mrf.mxu0
        %v1100 = vadd.f32 0.0, %v1099
        %v1101 = vpop.f32.mrf.mxu0
        %v1102 = vadd.f32 0.0, %v1101
        %1103 = vdwg.mxu0
        %1104 = vmatpush.bf16.msra.mxu0 0
        %1105 = vmatpush.bf16.msra.mxu0 0
        %1106 = vmatpush.bf16.msra.mxu0 0
        %1107 = vmatpush.bf16.msra.mxu0 0
        %1108 = vmatpush.bf16.msra.mxu0 0
        %1109 = vmatpush.bf16.msra.mxu0 0
        %1110 = vmatpush.bf16.msra.mxu0 0
        %1111 = vmatpush.bf16.msra.mxu0 %v1007
        %1112 = vmatmul.bf16.gmra.mxu0 %v1018
        %v1113 = vpop.f32.mrf.mxu0
        %v1114 = vadd.f32 0.0, %v1113
        %v1115 = vpop.f32.mrf.mxu0
        %v1116 = vadd.f32 0.0, %v1115
        %1117 = vdwg.mxu0
        %1118 = vmatpush.bf16.msra.mxu0 0
        %1119 = vmatpush.bf16.msra.mxu0 0
        %1120 = vmatpush.bf16.msra.mxu0 0
        %1121 = vmatpush.bf16.msra.mxu0 0
        %1122 = vmatpush.bf16.msra.mxu0 0
        %1123 = vmatpush.bf16.msra.mxu0 0
        %1124 = vmatpush.bf16.msra.mxu0 0
        %1125 = vmatpush.bf16.msra.mxu0 %v1008
        %1126 = vmatmul.bf16.gmra.mxu0 %v1018
        %v1127 = vpop.f32.mrf.mxu0
        %v1128 = vadd.f32 0.0, %v1127
        %v1129 = vpop.f32.mrf.mxu0
        %v1130 = vadd.f32 0.0, %v1129
        %1131 = vdwg.mxu0
        %v1132 = vadd.f32 %v949, %v1030
        %v1133 = vadd.f32 %v950, %v1044
        %v1134 = vadd.f32 %v951, %v1058
        %v1135 = vadd.f32 %v952, %v1072
        %v1136 = vadd.f32 %v953, %v1086
        %v1137 = vadd.f32 %v954, %v1100
        %v1138 = vadd.f32 %v955, %v1114
        %v1139 = vadd.f32 %v956, %v1128
        %v1140 = vadd.f32 %v957, %v1032
        %v1141 = vadd.f32 %v958, %v1046
        %v1142 = vadd.f32 %v959, %v1060
        %v1143 = vadd.f32 %v960, %v1074
        %v1144 = vadd.f32 %v961, %v1088
        %v1145 = vadd.f32 %v962, %v1102
        %v1146 = vadd.f32 %v963, %v1116
        %v1147 = vadd.f32 %v964, %v1130
        %v1148 = vld [vmem:[#allocation2 + $0x4] sm:$0xff]
        %v1149 = vld [vmem:[#allocation2 + $0xc] sm:$0xff]
        %v1150 = vpack.c.bf16 %v1149, %v1148
        %s1151 = scalar_lea.vmem [#allocation8], 256
        %v1152 = vld [vmem:[%s1151] sm:$0xff]
        %v1153 = vld [vmem:[%s1151 + $0x8] sm:$0xff]
        %v1154 = vld [vmem:[%s1151 + $0x10] sm:$0xff]
        %v1155 = vld [vmem:[%s1151 + $0x18] sm:$0xff]
        %v1156 = vld [vmem:[%s1151 + $0x20] sm:$0xff]
        %v1157 = vld [vmem:[%s1151 + $0x28] sm:$0xff]
        %v1158 = vld [vmem:[%s1151 + $0x30] sm:$0xff]
        %v1159 = vld [vmem:[%s1151 + $0x38] sm:$0xff]
        %v1168 = vunpack.c.l.b16 %v1152
        %v1169 = vunpack.c.h.b16 %v1152
        %v1170 = vunpack.c.l.b16 %v1153
        %v1171 = vunpack.c.h.b16 %v1153
        %v1172 = vunpack.c.l.b16 %v1154
        %v1173 = vunpack.c.h.b16 %v1154
        %v1174 = vunpack.c.l.b16 %v1155
        %v1175 = vunpack.c.h.b16 %v1155
        %v1176 = vunpack.c.l.b16 %v1156
        %v1177 = vunpack.c.h.b16 %v1156
        %v1178 = vunpack.c.l.b16 %v1157
        %v1179 = vunpack.c.h.b16 %v1157
        %v1180 = vunpack.c.l.b16 %v1158
        %v1181 = vunpack.c.h.b16 %v1158
        %v1182 = vunpack.c.l.b16 %v1159
        %v1183 = vunpack.c.h.b16 %v1159
        %v1184 = vpack.c.b16 %v1176, %v1168
        %v1185 = vpack.c.b16 %v1177, %v1169
        %v1186 = vpack.c.b16 %v1178, %v1170
        %v1187 = vpack.c.b16 %v1179, %v1171
        %v1188 = vpack.c.b16 %v1180, %v1172
        %v1189 = vpack.c.b16 %v1181, %v1173
        %v1190 = vpack.c.b16 %v1182, %v1174
        %v1191 = vpack.c.b16 %v1183, %v1175
        %v1201 = vsel %vm396, %v1150, 0
        %1203 = vmatpush.bf16.msra.mxu0 0
        %1204 = vmatpush.bf16.msra.mxu0 0
        %1205 = vmatpush.bf16.msra.mxu0 0
        %1206 = vmatpush.bf16.msra.mxu0 0
        %1207 = vmatpush.bf16.msra.mxu0 0
        %1208 = vmatpush.bf16.msra.mxu0 0
        %1209 = vmatpush.bf16.msra.mxu0 0
        %1210 = vmatpush.bf16.msra.mxu0 %v1184
        %1211 = vmatmul.bf16.gmra.mxu0 %v1201
        %v1212 = vpop.f32.mrf.mxu0
        %v1213 = vadd.f32 0.0, %v1212
        %v1214 = vpop.f32.mrf.mxu0
        %v1215 = vadd.f32 0.0, %v1214
        %1216 = vdwg.mxu0
        %1217 = vmatpush.bf16.msra.mxu0 0
        %1218 = vmatpush.bf16.msra.mxu0 0
        %1219 = vmatpush.bf16.msra.mxu0 0
        %1220 = vmatpush.bf16.msra.mxu0 0
        %1221 = vmatpush.bf16.msra.mxu0 0
        %1222 = vmatpush.bf16.msra.mxu0 0
        %1223 = vmatpush.bf16.msra.mxu0 0
        %1224 = vmatpush.bf16.msra.mxu0 %v1185
        %1225 = vmatmul.bf16.gmra.mxu0 %v1201
        %v1226 = vpop.f32.mrf.mxu0
        %v1227 = vadd.f32 0.0, %v1226
        %v1228 = vpop.f32.mrf.mxu0
        %v1229 = vadd.f32 0.0, %v1228
        %1230 = vdwg.mxu0
        %1231 = vmatpush.bf16.msra.mxu0 0
        %1232 = vmatpush.bf16.msra.mxu0 0
        %1233 = vmatpush.bf16.msra.mxu0 0
        %1234 = vmatpush.bf16.msra.mxu0 0
        %1235 = vmatpush.bf16.msra.mxu0 0
        %1236 = vmatpush.bf16.msra.mxu0 0
        %1237 = vmatpush.bf16.msra.mxu0 0
        %1238 = vmatpush.bf16.msra.mxu0 %v1186
        %1239 = vmatmul.bf16.gmra.mxu0 %v1201
        %v1240 = vpop.f32.mrf.mxu0
        %v1241 = vadd.f32 0.0, %v1240
        %v1242 = vpop.f32.mrf.mxu0
        %v1243 = vadd.f32 0.0, %v1242
        %1244 = vdwg.mxu0
        %1245 = vmatpush.bf16.msra.mxu0 0
        %1246 = vmatpush.bf16.msra.mxu0 0
        %1247 = vmatpush.bf16.msra.mxu0 0
        %1248 = vmatpush.bf16.msra.mxu0 0
        %1249 = vmatpush.bf16.msra.mxu0 0
        %1250 = vmatpush.bf16.msra.mxu0 0
        %1251 = vmatpush.bf16.msra.mxu0 0
        %1252 = vmatpush.bf16.msra.mxu0 %v1187
        %1253 = vmatmul.bf16.gmra.mxu0 %v1201
        %v1254 = vpop.f32.mrf.mxu0
        %v1255 = vadd.f32 0.0, %v1254
        %v1256 = vpop.f32.mrf.mxu0
        %v1257 = vadd.f32 0.0, %v1256
        %1258 = vdwg.mxu0
        %1259 = vmatpush.bf16.msra.mxu0 0
        %1260 = vmatpush.bf16.msra.mxu0 0
        %1261 = vmatpush.bf16.msra.mxu0 0
        %1262 = vmatpush.bf16.msra.mxu0 0
        %1263 = vmatpush.bf16.msra.mxu0 0
        %1264 = vmatpush.bf16.msra.mxu0 0
        %1265 = vmatpush.bf16.msra.mxu0 0
        %1266 = vmatpush.bf16.msra.mxu0 %v1188
        %1267 = vmatmul.bf16.gmra.mxu0 %v1201
        %v1268 = vpop.f32.mrf.mxu0
        %v1269 = vadd.f32 0.0, %v1268
        %v1270 = vpop.f32.mrf.mxu0
        %v1271 = vadd.f32 0.0, %v1270
        %1272 = vdwg.mxu0
        %1273 = vmatpush.bf16.msra.mxu0 0
        %1274 = vmatpush.bf16.msra.mxu0 0
        %1275 = vmatpush.bf16.msra.mxu0 0
        %1276 = vmatpush.bf16.msra.mxu0 0
        %1277 = vmatpush.bf16.msra.mxu0 0
        %1278 = vmatpush.bf16.msra.mxu0 0
        %1279 = vmatpush.bf16.msra.mxu0 0
        %1280 = vmatpush.bf16.msra.mxu0 %v1189
        %1281 = vmatmul.bf16.gmra.mxu0 %v1201
        %v1282 = vpop.f32.mrf.mxu0
        %v1283 = vadd.f32 0.0, %v1282
        %v1284 = vpop.f32.mrf.mxu0
        %v1285 = vadd.f32 0.0, %v1284
        %1286 = vdwg.mxu0
        %1287 = vmatpush.bf16.msra.mxu0 0
        %1288 = vmatpush.bf16.msra.mxu0 0
        %1289 = vmatpush.bf16.msra.mxu0 0
        %1290 = vmatpush.bf16.msra.mxu0 0
        %1291 = vmatpush.bf16.msra.mxu0 0
        %1292 = vmatpush.bf16.msra.mxu0 0
        %1293 = vmatpush.bf16.msra.mxu0 0
        %1294 = vmatpush.bf16.msra.mxu0 %v1190
        %1295 = vmatmul.bf16.gmra.mxu0 %v1201
        %v1296 = vpop.f32.mrf.mxu0
        %v1297 = vadd.f32 0.0, %v1296
        %v1298 = vpop.f32.mrf.mxu0
        %v1299 = vadd.f32 0.0, %v1298
        %1300 = vdwg.mxu0
        %1301 = vmatpush.bf16.msra.mxu0 0
        %1302 = vmatpush.bf16.msra.mxu0 0
        %1303 = vmatpush.bf16.msra.mxu0 0
        %1304 = vmatpush.bf16.msra.mxu0 0
        %1305 = vmatpush.bf16.msra.mxu0 0
        %1306 = vmatpush.bf16.msra.mxu0 0
        %1307 = vmatpush.bf16.msra.mxu0 0
        %1308 = vmatpush.bf16.msra.mxu0 %v1191
        %1309 = vmatmul.bf16.gmra.mxu0 %v1201
        %v1310 = vpop.f32.mrf.mxu0
        %v1311 = vadd.f32 0.0, %v1310
        %v1312 = vpop.f32.mrf.mxu0
        %v1313 = vadd.f32 0.0, %v1312
        %1314 = vdwg.mxu0
        %v1315 = vadd.f32 %v1132, %v1213
        %v1316 = vadd.f32 %v1133, %v1227
        %v1317 = vadd.f32 %v1134, %v1241
        %v1318 = vadd.f32 %v1135, %v1255
        %v1319 = vadd.f32 %v1136, %v1269
        %v1320 = vadd.f32 %v1137, %v1283
        %v1321 = vadd.f32 %v1138, %v1297
        %v1322 = vadd.f32 %v1139, %v1311
        %v1323 = vadd.f32 %v1140, %v1215
        %v1324 = vadd.f32 %v1141, %v1229
        %v1325 = vadd.f32 %v1142, %v1243
        %v1326 = vadd.f32 %v1143, %v1257
        %v1327 = vadd.f32 %v1144, %v1271
        %v1328 = vadd.f32 %v1145, %v1285
        %v1329 = vadd.f32 %v1146, %v1299
        %v1330 = vadd.f32 %v1147, %v1313
        %v1331 = vtanh.pop %v1315
        %v1332 = vtanh.pop %v1316
        %v1333 = vtanh.pop %v1317
        %v1334 = vtanh.pop %v1318
        %v1335 = vtanh.pop %v1319
        %v1336 = vtanh.pop %v1320
        %v1337 = vtanh.pop %v1321
        %v1338 = vtanh.pop %v1322
        %v1339 = vtanh.pop %v1323
        %v1340 = vtanh.pop %v1324
        %v1341 = vtanh.pop %v1325
        %v1342 = vtanh.pop %v1326
        %v1343 = vtanh.pop %v1327
        %v1344 = vtanh.pop %v1328
        %v1345 = vtanh.pop %v1329
        %v1346 = vtanh.pop %v1330
        %vm1363 = vcmask 1040384
        %v1364 = vrot.slane %v1331, 7
        %v1365 = vrot.slane %v1332, 7
        %v1366 = vrot.slane %v1333, 7
        %v1367 = vrot.slane %v1334, 7
        %v1368 = vrot.slane %v1335, 7
        %v1369 = vrot.slane %v1336, 7
        %v1370 = vrot.slane %v1337, 7
        %v1371 = vrot.slane %v1338, 7
        %v1372 = vrot.slane %v1339, 7
        %v1373 = vsel %vm1363, %v1364, %v1372
        %v1374 = vrot.slane %v1340, 7
        %v1375 = vsel %vm1363, %v1365, %v1374
        %v1376 = vrot.slane %v1341, 7
        %v1377 = vsel %vm1363, %v1366, %v1376
        %v1378 = vrot.slane %v1342, 7
        %v1379 = vsel %vm1363, %v1367, %v1378
        %v1380 = vrot.slane %v1343, 7
        %v1381 = vsel %vm1363, %v1368, %v1380
        %v1382 = vrot.slane %v1344, 7
        %v1383 = vsel %vm1363, %v1369, %v1382
        %v1384 = vrot.slane %v1345, 7
        %v1385 = vsel %vm1363, %v1370, %v1384
        %v1386 = vrot.slane %v1346, 7
        %v1387 = vsel %vm1363, %v1371, %v1386
        %1412 = vst [vmem:[#allocation3] sm:$0xfe] %v1364
        %1413 = vst [vmem:[#allocation3 + $0x8] sm:$0xfe] %v1365
        %1414 = vst [vmem:[#allocation3 + $0x10] sm:$0xfe] %v1366
        %1415 = vst [vmem:[#allocation3 + $0x18] sm:$0xfe] %v1367
        %1416 = vst [vmem:[#allocation3 + $0x20] sm:$0xfe] %v1368
        %1417 = vst [vmem:[#allocation3 + $0x28] sm:$0xfe] %v1369
        %1418 = vst [vmem:[#allocation3 + $0x30] sm:$0xfe] %v1370
        %1419 = vst [vmem:[#allocation3 + $0x38] sm:$0xfe] %v1371
        %1420 = vst [vmem:[#allocation3 + $0x40] sm:$0xff] %v1373
        %1421 = vst [vmem:[#allocation3 + $0x48] sm:$0xff] %v1375
        %1422 = vst [vmem:[#allocation3 + $0x50] sm:$0xff] %v1377
        %1423 = vst [vmem:[#allocation3 + $0x58] sm:$0xff] %v1379
        %1424 = vst [vmem:[#allocation3 + $0x60] sm:$0xff] %v1381
        %1425 = vst [vmem:[#allocation3 + $0x68] sm:$0xff] %v1383
        %1426 = vst [vmem:[#allocation3 + $0x70] sm:$0xff] %v1385
        %1427 = vst [vmem:[#allocation3 + $0x78] sm:$0xff] %v1387
        %1428 = vst [vmem:[#allocation3 + $0x80] sm:$0x1] %v1372
        %1429 = vst [vmem:[#allocation3 + $0x88] sm:$0x1] %v1374
        %1430 = vst [vmem:[#allocation3 + $0x90] sm:$0x1] %v1376
        %1431 = vst [vmem:[#allocation3 + $0x98] sm:$0x1] %v1378
        %1432 = vst [vmem:[#allocation3 + $0xa0] sm:$0x1] %v1380
        %1433 = vst [vmem:[#allocation3 + $0xa8] sm:$0x1] %v1382
        %1434 = vst [vmem:[#allocation3 + $0xb0] sm:$0x1] %v1384
        %1435 = vst [vmem:[#allocation3 + $0xb8] sm:$0x1] %v1386
        %v1436 = vld [vmem:[#allocation13] sm:$0xf]
        %v1437 = vld [vmem:[#allocation3] sm:$0xff]
        %v1438 = vld [vmem:[#allocation3 + $0x8] sm:$0xff]
        %v1439 = vld [vmem:[#allocation3 + $0x10] sm:$0xff]
        %v1440 = vld [vmem:[#allocation3 + $0x18] sm:$0xff]
        %v1441 = vld [vmem:[#allocation3 + $0x20] sm:$0xff]
        %v1442 = vld [vmem:[#allocation3 + $0x28] sm:$0xff]
        %v1443 = vld [vmem:[#allocation3 + $0x30] sm:$0xff]
        %v1444 = vld [vmem:[#allocation3 + $0x38] sm:$0xff]
        %v1445 = vld [vmem:[#allocation3 + $0x40] sm:$0xff]
        %v1446 = vld [vmem:[#allocation3 + $0x48] sm:$0xff]
        %v1447 = vld [vmem:[#allocation3 + $0x50] sm:$0xff]
        %v1448 = vld [vmem:[#allocation3 + $0x58] sm:$0xff]
        %v1449 = vld [vmem:[#allocation3 + $0x60] sm:$0xff]
        %v1450 = vld [vmem:[#allocation3 + $0x68] sm:$0xff]
        %v1451 = vld [vmem:[#allocation3 + $0x70] sm:$0xff]
        %v1452 = vld [vmem:[#allocation3 + $0x78] sm:$0xff]
        %v1453 = vpack.c.bf16 %v1445, %v1437
        %v1454 = vpack.c.bf16 %v1446, %v1438
        %v1455 = vpack.c.bf16 %v1447, %v1439
        %v1456 = vpack.c.bf16 %v1448, %v1440
        %v1457 = vpack.c.bf16 %v1449, %v1441
        %v1458 = vpack.c.bf16 %v1450, %v1442
        %v1459 = vpack.c.bf16 %v1451, %v1443
        %v1460 = vpack.c.bf16 %v1452, %v1444
        %v1461 = vld [vmem:[#allocation11] sm:$0xff]
        %v1462 = vld [vmem:[#allocation11 + $0x8] sm:$0xff]
        %v1463 = vld [vmem:[#allocation11 + $0x10] sm:$0xff]
        %v1464 = vld [vmem:[#allocation11 + $0x18] sm:$0xff]
        %v1465 = vld [vmem:[#allocation11 + $0x20] sm:$0xff]
        %v1466 = vld [vmem:[#allocation11 + $0x28] sm:$0xff]
        %v1467 = vld [vmem:[#allocation11 + $0x30] sm:$0xff]
        %v1468 = vld [vmem:[#allocation11 + $0x38] sm:$0xff]
        %v1469 = vld [vmem:[#allocation11 + $0x40] sm:$0xff]
        %v1470 = vld [vmem:[#allocation11 + $0x48] sm:$0xff]
        %v1471 = vld [vmem:[#allocation11 + $0x50] sm:$0xff]
        %v1472 = vld [vmem:[#allocation11 + $0x58] sm:$0xff]
        %v1473 = vld [vmem:[#allocation11 + $0x60] sm:$0xff]
        %v1474 = vld [vmem:[#allocation11 + $0x68] sm:$0xff]
        %v1475 = vld [vmem:[#allocation11 + $0x70] sm:$0xff]
        %v1476 = vld [vmem:[#allocation11 + $0x78] sm:$0xff]
        %v1477 = vld [vmem:[#allocation11 + $0x80] sm:$0xff]
        %v1478 = vld [vmem:[#allocation11 + $0x88] sm:$0xff]
        %v1479 = vld [vmem:[#allocation11 + $0x90] sm:$0xff]
        %v1480 = vld [vmem:[#allocation11 + $0x98] sm:$0xff]
        %v1481 = vld [vmem:[#allocation11 + $0xa0] sm:$0xff]
        %v1482 = vld [vmem:[#allocation11 + $0xa8] sm:$0xff]
        %v1483 = vld [vmem:[#allocation11 + $0xb0] sm:$0xff]
        %v1484 = vld [vmem:[#allocation11 + $0xb8] sm:$0xff]
        %v1485 = vld [vmem:[#allocation11 + $0xc0] sm:$0xff]
        %v1486 = vld [vmem:[#allocation11 + $0xc8] sm:$0xff]
        %v1487 = vld [vmem:[#allocation11 + $0xd0] sm:$0xff]
        %v1488 = vld [vmem:[#allocation11 + $0xd8] sm:$0xff]
        %v1489 = vld [vmem:[#allocation11 + $0xe0] sm:$0xff]
        %v1490 = vld [vmem:[#allocation11 + $0xe8] sm:$0xff]
        %v1491 = vld [vmem:[#allocation11 + $0xf0] sm:$0xff]
        %v1492 = vld [vmem:[#allocation11 + $0xf8] sm:$0xff]
        %v1493 = vld [vmem:[#allocation11 + $0x100] sm:$0xff]
        %v1494 = vld [vmem:[#allocation11 + $0x108] sm:$0xff]
        %v1495 = vld [vmem:[#allocation11 + $0x110] sm:$0xff]
        %v1496 = vld [vmem:[#allocation11 + $0x118] sm:$0xff]
        %v1497 = vld [vmem:[#allocation11 + $0x120] sm:$0xff]
        %v1498 = vld [vmem:[#allocation11 + $0x128] sm:$0xff]
        %v1499 = vld [vmem:[#allocation11 + $0x130] sm:$0xff]
        %v1500 = vld [vmem:[#allocation11 + $0x138] sm:$0xff]
        %v1501 = vld [vmem:[#allocation11 + $0x140] sm:$0xff]
        %v1502 = vld [vmem:[#allocation11 + $0x148] sm:$0xff]
        %v1503 = vld [vmem:[#allocation11 + $0x150] sm:$0xff]
        %v1504 = vld [vmem:[#allocation11 + $0x158] sm:$0xff]
        %v1505 = vld [vmem:[#allocation11 + $0x160] sm:$0xff]
        %v1506 = vld [vmem:[#allocation11 + $0x168] sm:$0xff]
        %v1507 = vld [vmem:[#allocation11 + $0x170] sm:$0xff]
        %v1508 = vld [vmem:[#allocation11 + $0x178] sm:$0xff]
        %v1509 = vld [vmem:[#allocation11 + $0x180] sm:$0xff]
        %v1510 = vld [vmem:[#allocation11 + $0x188] sm:$0xff]
        %v1511 = vld [vmem:[#allocation11 + $0x190] sm:$0xff]
        %v1512 = vld [vmem:[#allocation11 + $0x198] sm:$0xff]
        %v1513 = vld [vmem:[#allocation11 + $0x1a0] sm:$0xff]
        %v1514 = vld [vmem:[#allocation11 + $0x1a8] sm:$0xff]
        %v1515 = vld [vmem:[#allocation11 + $0x1b0] sm:$0xff]
        %v1516 = vld [vmem:[#allocation11 + $0x1b8] sm:$0xff]
        %v1517 = vld [vmem:[#allocation11 + $0x1c0] sm:$0xff]
        %v1518 = vld [vmem:[#allocation11 + $0x1c8] sm:$0xff]
        %v1519 = vld [vmem:[#allocation11 + $0x1d0] sm:$0xff]
        %v1520 = vld [vmem:[#allocation11 + $0x1d8] sm:$0xff]
        %v1521 = vld [vmem:[#allocation11 + $0x1e0] sm:$0xff]
        %v1522 = vld [vmem:[#allocation11 + $0x1e8] sm:$0xff]
        %v1523 = vld [vmem:[#allocation11 + $0x1f0] sm:$0xff]
        %v1524 = vld [vmem:[#allocation11 + $0x1f8] sm:$0xff]
        %v1525 = vld [vmem:[#allocation11 + $0x200] sm:$0xff]
        %v1526 = vld [vmem:[#allocation11 + $0x208] sm:$0xff]
        %v1527 = vld [vmem:[#allocation11 + $0x210] sm:$0xff]
        %v1528 = vld [vmem:[#allocation11 + $0x218] sm:$0xff]
        %v1529 = vld [vmem:[#allocation11 + $0x220] sm:$0xff]
        %v1530 = vld [vmem:[#allocation11 + $0x228] sm:$0xff]
        %v1531 = vld [vmem:[#allocation11 + $0x230] sm:$0xff]
        %v1532 = vld [vmem:[#allocation11 + $0x238] sm:$0xff]
        %v1533 = vld [vmem:[#allocation11 + $0x240] sm:$0xff]
        %v1534 = vld [vmem:[#allocation11 + $0x248] sm:$0xff]
        %v1535 = vld [vmem:[#allocation11 + $0x250] sm:$0xff]
        %v1536 = vld [vmem:[#allocation11 + $0x258] sm:$0xff]
        %v1537 = vld [vmem:[#allocation11 + $0x260] sm:$0xff]
        %v1538 = vld [vmem:[#allocation11 + $0x268] sm:$0xff]
        %v1539 = vld [vmem:[#allocation11 + $0x270] sm:$0xff]
        %v1540 = vld [vmem:[#allocation11 + $0x278] sm:$0xff]
        %v1541 = vld [vmem:[#allocation11 + $0x280] sm:$0xff]
        %v1542 = vld [vmem:[#allocation11 + $0x288] sm:$0xff]
        %v1543 = vld [vmem:[#allocation11 + $0x290] sm:$0xff]
        %v1544 = vld [vmem:[#allocation11 + $0x298] sm:$0xff]
        %v1545 = vld [vmem:[#allocation11 + $0x2a0] sm:$0xff]
        %v1546 = vld [vmem:[#allocation11 + $0x2a8] sm:$0xff]
        %v1547 = vld [vmem:[#allocation11 + $0x2b0] sm:$0xff]
        %v1548 = vld [vmem:[#allocation11 + $0x2b8] sm:$0xff]
        %v1549 = vld [vmem:[#allocation11 + $0x2c0] sm:$0xff]
        %v1550 = vld [vmem:[#allocation11 + $0x2c8] sm:$0xff]
        %v1551 = vld [vmem:[#allocation11 + $0x2d0] sm:$0xff]
        %v1552 = vld [vmem:[#allocation11 + $0x2d8] sm:$0xff]
        %v1553 = vld [vmem:[#allocation11 + $0x2e0] sm:$0xff]
        %v1554 = vld [vmem:[#allocation11 + $0x2e8] sm:$0xff]
        %v1555 = vld [vmem:[#allocation11 + $0x2f0] sm:$0xff]
        %v1556 = vld [vmem:[#allocation11 + $0x2f8] sm:$0xff]
        %v1557 = vld [vmem:[#allocation11 + $0x300] sm:$0xff]
        %v1558 = vld [vmem:[#allocation11 + $0x308] sm:$0xff]
        %v1559 = vld [vmem:[#allocation11 + $0x310] sm:$0xff]
        %v1560 = vld [vmem:[#allocation11 + $0x318] sm:$0xff]
        %v1561 = vld [vmem:[#allocation11 + $0x320] sm:$0xff]
        %v1562 = vld [vmem:[#allocation11 + $0x328] sm:$0xff]
        %v1563 = vld [vmem:[#allocation11 + $0x330] sm:$0xff]
        %v1564 = vld [vmem:[#allocation11 + $0x338] sm:$0xff]
        %v1565 = vld [vmem:[#allocation11 + $0x340] sm:$0xff]
        %v1566 = vld [vmem:[#allocation11 + $0x348] sm:$0xff]
        %v1567 = vld [vmem:[#allocation11 + $0x350] sm:$0xff]
        %v1568 = vld [vmem:[#allocation11 + $0x358] sm:$0xff]
        %v1569 = vld [vmem:[#allocation11 + $0x360] sm:$0xff]
        %v1570 = vld [vmem:[#allocation11 + $0x368] sm:$0xff]
        %v1571 = vld [vmem:[#allocation11 + $0x370] sm:$0xff]
        %v1572 = vld [vmem:[#allocation11 + $0x378] sm:$0xff]
        %v1573 = vld [vmem:[#allocation11 + $0x380] sm:$0xff]
        %v1574 = vld [vmem:[#allocation11 + $0x388] sm:$0xff]
        %v1575 = vld [vmem:[#allocation11 + $0x390] sm:$0xff]
        %v1576 = vld [vmem:[#allocation11 + $0x398] sm:$0xff]
        %v1577 = vld [vmem:[#allocation11 + $0x3a0] sm:$0xff]
        %v1578 = vld [vmem:[#allocation11 + $0x3a8] sm:$0xff]
        %v1579 = vld [vmem:[#allocation11 + $0x3b0] sm:$0xff]
        %v1580 = vld [vmem:[#allocation11 + $0x3b8] sm:$0xff]
        %v1581 = vld [vmem:[#allocation11 + $0x3c0] sm:$0xff]
        %v1582 = vld [vmem:[#allocation11 + $0x3c8] sm:$0xff]
        %v1583 = vld [vmem:[#allocation11 + $0x3d0] sm:$0xff]
        %v1584 = vld [vmem:[#allocation11 + $0x3d8] sm:$0xff]
        %v1585 = vld [vmem:[#allocation11 + $0x3e0] sm:$0xff]
        %v1586 = vld [vmem:[#allocation11 + $0x3e8] sm:$0xff]
        %v1587 = vld [vmem:[#allocation11 + $0x3f0] sm:$0xff]
        %v1588 = vld [vmem:[#allocation11 + $0x3f8] sm:$0xff]
        %v1589 = vld [vmem:[#allocation11 + $0x400] sm:$0xff]
        %v1590 = vld [vmem:[#allocation11 + $0x408] sm:$0xff]
        %v1591 = vld [vmem:[#allocation11 + $0x410] sm:$0xff]
        %v1592 = vld [vmem:[#allocation11 + $0x418] sm:$0xff]
        %v1593 = vld [vmem:[#allocation11 + $0x420] sm:$0xff]
        %v1594 = vld [vmem:[#allocation11 + $0x428] sm:$0xff]
        %v1595 = vld [vmem:[#allocation11 + $0x430] sm:$0xff]
        %v1596 = vld [vmem:[#allocation11 + $0x438] sm:$0xff]
        %v1597 = vld [vmem:[#allocation11 + $0x440] sm:$0xff]
        %v1598 = vld [vmem:[#allocation11 + $0x448] sm:$0xff]
        %v1599 = vld [vmem:[#allocation11 + $0x450] sm:$0xff]
        %v1600 = vld [vmem:[#allocation11 + $0x458] sm:$0xff]
        %v1601 = vld [vmem:[#allocation11 + $0x460] sm:$0xff]
        %v1602 = vld [vmem:[#allocation11 + $0x468] sm:$0xff]
        %v1603 = vld [vmem:[#allocation11 + $0x470] sm:$0xff]
        %v1604 = vld [vmem:[#allocation11 + $0x478] sm:$0xff]
        %v1605 = vld [vmem:[#allocation11 + $0x480] sm:$0xff]
        %v1606 = vld [vmem:[#allocation11 + $0x488] sm:$0xff]
        %v1607 = vld [vmem:[#allocation11 + $0x490] sm:$0xff]
        %v1608 = vld [vmem:[#allocation11 + $0x498] sm:$0xff]
        %v1609 = vld [vmem:[#allocation11 + $0x4a0] sm:$0xff]
        %v1610 = vld [vmem:[#allocation11 + $0x4a8] sm:$0xff]
        %v1611 = vld [vmem:[#allocation11 + $0x4b0] sm:$0xff]
        %v1612 = vld [vmem:[#allocation11 + $0x4b8] sm:$0xff]
        %v1613 = vld [vmem:[#allocation11 + $0x4c0] sm:$0xff]
        %v1614 = vld [vmem:[#allocation11 + $0x4c8] sm:$0xff]
        %v1615 = vld [vmem:[#allocation11 + $0x4d0] sm:$0xff]
        %v1616 = vld [vmem:[#allocation11 + $0x4d8] sm:$0xff]
        %v1617 = vld [vmem:[#allocation11 + $0x4e0] sm:$0xff]
        %v1618 = vld [vmem:[#allocation11 + $0x4e8] sm:$0xff]
        %v1619 = vld [vmem:[#allocation11 + $0x4f0] sm:$0xff]
        %v1620 = vld [vmem:[#allocation11 + $0x4f8] sm:$0xff]
        %v1621 = vld [vmem:[#allocation11 + $0x500] sm:$0xff]
        %v1622 = vld [vmem:[#allocation11 + $0x508] sm:$0xff]
        %v1623 = vld [vmem:[#allocation11 + $0x510] sm:$0xff]
        %v1624 = vld [vmem:[#allocation11 + $0x518] sm:$0xff]
        %v1625 = vld [vmem:[#allocation11 + $0x520] sm:$0xff]
        %v1626 = vld [vmem:[#allocation11 + $0x528] sm:$0xff]
        %v1627 = vld [vmem:[#allocation11 + $0x530] sm:$0xff]
        %v1628 = vld [vmem:[#allocation11 + $0x538] sm:$0xff]
        %v1629 = vld [vmem:[#allocation11 + $0x540] sm:$0xff]
        %v1630 = vld [vmem:[#allocation11 + $0x548] sm:$0xff]
        %v1631 = vld [vmem:[#allocation11 + $0x550] sm:$0xff]
        %v1632 = vld [vmem:[#allocation11 + $0x558] sm:$0xff]
        %v1633 = vld [vmem:[#allocation11 + $0x560] sm:$0xff]
        %v1634 = vld [vmem:[#allocation11 + $0x568] sm:$0xff]
        %v1635 = vld [vmem:[#allocation11 + $0x570] sm:$0xff]
        %v1636 = vld [vmem:[#allocation11 + $0x578] sm:$0xff]
        %v1637 = vld [vmem:[#allocation11 + $0x580] sm:$0xff]
        %v1638 = vld [vmem:[#allocation11 + $0x588] sm:$0xff]
        %v1639 = vld [vmem:[#allocation11 + $0x590] sm:$0xff]
        %v1640 = vld [vmem:[#allocation11 + $0x598] sm:$0xff]
        %v1641 = vld [vmem:[#allocation11 + $0x5a0] sm:$0xff]
        %v1642 = vld [vmem:[#allocation11 + $0x5a8] sm:$0xff]
        %v1643 = vld [vmem:[#allocation11 + $0x5b0] sm:$0xff]
        %v1644 = vld [vmem:[#allocation11 + $0x5b8] sm:$0xff]
        %v1645 = vld [vmem:[#allocation11 + $0x5c0] sm:$0xff]
        %v1646 = vld [vmem:[#allocation11 + $0x5c8] sm:$0xff]
        %v1647 = vld [vmem:[#allocation11 + $0x5d0] sm:$0xff]
        %v1648 = vld [vmem:[#allocation11 + $0x5d8] sm:$0xff]
        %v1649 = vld [vmem:[#allocation11 + $0x5e0] sm:$0xff]
        %v1650 = vld [vmem:[#allocation11 + $0x5e8] sm:$0xff]
        %v1651 = vld [vmem:[#allocation11 + $0x5f0] sm:$0xff]
        %v1652 = vld [vmem:[#allocation11 + $0x5f8] sm:$0xff]
        %v1653 = vld [vmem:[#allocation11 + $0x600] sm:$0xff]
        %v1654 = vld [vmem:[#allocation11 + $0x608] sm:$0xff]
        %v1655 = vld [vmem:[#allocation11 + $0x610] sm:$0xff]
        %v1656 = vld [vmem:[#allocation11 + $0x618] sm:$0xff]
        %v1657 = vld [vmem:[#allocation11 + $0x620] sm:$0xff]
        %v1658 = vld [vmem:[#allocation11 + $0x628] sm:$0xff]
        %v1659 = vld [vmem:[#allocation11 + $0x630] sm:$0xff]
        %v1660 = vld [vmem:[#allocation11 + $0x638] sm:$0xff]
        %v1661 = vld [vmem:[#allocation11 + $0x640] sm:$0xff]
        %v1662 = vld [vmem:[#allocation11 + $0x648] sm:$0xff]
        %v1663 = vld [vmem:[#allocation11 + $0x650] sm:$0xff]
        %v1664 = vld [vmem:[#allocation11 + $0x658] sm:$0xff]
        %v1665 = vld [vmem:[#allocation11 + $0x660] sm:$0xff]
        %v1666 = vld [vmem:[#allocation11 + $0x668] sm:$0xff]
        %v1667 = vld [vmem:[#allocation11 + $0x670] sm:$0xff]
        %v1668 = vld [vmem:[#allocation11 + $0x678] sm:$0xff]
        %v1669 = vld [vmem:[#allocation11 + $0x680] sm:$0xff]
        %v1670 = vld [vmem:[#allocation11 + $0x688] sm:$0xff]
        %v1671 = vld [vmem:[#allocation11 + $0x690] sm:$0xff]
        %v1672 = vld [vmem:[#allocation11 + $0x698] sm:$0xff]
        %v1673 = vld [vmem:[#allocation11 + $0x6a0] sm:$0xff]
        %v1674 = vld [vmem:[#allocation11 + $0x6a8] sm:$0xff]
        %v1675 = vld [vmem:[#allocation11 + $0x6b0] sm:$0xff]
        %v1676 = vld [vmem:[#allocation11 + $0x6b8] sm:$0xff]
        %v1677 = vld [vmem:[#allocation11 + $0x6c0] sm:$0xff]
        %v1678 = vld [vmem:[#allocation11 + $0x6c8] sm:$0xff]
        %v1679 = vld [vmem:[#allocation11 + $0x6d0] sm:$0xff]
        %v1680 = vld [vmem:[#allocation11 + $0x6d8] sm:$0xff]
        %v1681 = vld [vmem:[#allocation11 + $0x6e0] sm:$0xff]
        %v1682 = vld [vmem:[#allocation11 + $0x6e8] sm:$0xff]
        %v1683 = vld [vmem:[#allocation11 + $0x6f0] sm:$0xff]
        %v1684 = vld [vmem:[#allocation11 + $0x6f8] sm:$0xff]
        %v1685 = vld [vmem:[#allocation11 + $0x700] sm:$0xff]
        %v1686 = vld [vmem:[#allocation11 + $0x708] sm:$0xff]
        %v1687 = vld [vmem:[#allocation11 + $0x710] sm:$0xff]
        %v1688 = vld [vmem:[#allocation11 + $0x718] sm:$0xff]
        %v1689 = vld [vmem:[#allocation11 + $0x720] sm:$0xff]
        %v1690 = vld [vmem:[#allocation11 + $0x728] sm:$0xff]
        %v1691 = vld [vmem:[#allocation11 + $0x730] sm:$0xff]
        %v1692 = vld [vmem:[#allocation11 + $0x738] sm:$0xff]
        %v1693 = vld [vmem:[#allocation11 + $0x740] sm:$0xff]
        %v1694 = vld [vmem:[#allocation11 + $0x748] sm:$0xff]
        %v1695 = vld [vmem:[#allocation11 + $0x750] sm:$0xff]
        %v1696 = vld [vmem:[#allocation11 + $0x758] sm:$0xff]
        %v1697 = vld [vmem:[#allocation11 + $0x760] sm:$0xff]
        %v1698 = vld [vmem:[#allocation11 + $0x768] sm:$0xff]
        %v1699 = vld [vmem:[#allocation11 + $0x770] sm:$0xff]
        %v1700 = vld [vmem:[#allocation11 + $0x778] sm:$0xff]
        %v1701 = vld [vmem:[#allocation11 + $0x780] sm:$0xff]
        %v1702 = vld [vmem:[#allocation11 + $0x788] sm:$0xff]
        %v1703 = vld [vmem:[#allocation11 + $0x790] sm:$0xff]
        %v1704 = vld [vmem:[#allocation11 + $0x798] sm:$0xff]
        %v1705 = vld [vmem:[#allocation11 + $0x7a0] sm:$0xff]
        %v1706 = vld [vmem:[#allocation11 + $0x7a8] sm:$0xff]
        %v1707 = vld [vmem:[#allocation11 + $0x7b0] sm:$0xff]
        %v1708 = vld [vmem:[#allocation11 + $0x7b8] sm:$0xff]
        %v1709 = vld [vmem:[#allocation11 + $0x7c0] sm:$0xff]
        %v1710 = vld [vmem:[#allocation11 + $0x7c8] sm:$0xff]
        %v1711 = vld [vmem:[#allocation11 + $0x7d0] sm:$0xff]
        %v1712 = vld [vmem:[#allocation11 + $0x7d8] sm:$0xff]
        %v1713 = vld [vmem:[#allocation11 + $0x7e0] sm:$0xff]
        %v1714 = vld [vmem:[#allocation11 + $0x7e8] sm:$0xff]
        %v1715 = vld [vmem:[#allocation11 + $0x7f0] sm:$0xff]
        %v1716 = vld [vmem:[#allocation11 + $0x7f8] sm:$0xff]
        %v1973 = vunpack.c.l.b16 %v1461
        %v1974 = vunpack.c.h.b16 %v1461
        %v1975 = vunpack.c.l.b16 %v1462
        %v1976 = vunpack.c.h.b16 %v1462
        %v1977 = vunpack.c.l.b16 %v1463
        %v1978 = vunpack.c.h.b16 %v1463
        %v1979 = vunpack.c.l.b16 %v1464
        %v1980 = vunpack.c.h.b16 %v1464
        %v1981 = vunpack.c.l.b16 %v1465
        %v1982 = vunpack.c.h.b16 %v1465
        %v1983 = vunpack.c.l.b16 %v1466
        %v1984 = vunpack.c.h.b16 %v1466
        %v1985 = vunpack.c.l.b16 %v1467
        %v1986 = vunpack.c.h.b16 %v1467
        %v1987 = vunpack.c.l.b16 %v1468
        %v1988 = vunpack.c.h.b16 %v1468
        %v1989 = vunpack.c.l.b16 %v1469
        %v1990 = vunpack.c.h.b16 %v1469
        %v1991 = vunpack.c.l.b16 %v1470
        %v1992 = vunpack.c.h.b16 %v1470
        %v1993 = vunpack.c.l.b16 %v1471
        %v1994 = vunpack.c.h.b16 %v1471
        %v1995 = vunpack.c.l.b16 %v1472
        %v1996 = vunpack.c.h.b16 %v1472
        %v1997 = vunpack.c.l.b16 %v1473
        %v1998 = vunpack.c.h.b16 %v1473
        %v1999 = vunpack.c.l.b16 %v1474
        %v2000 = vunpack.c.h.b16 %v1474
        %v2001 = vunpack.c.l.b16 %v1475
        %v2002 = vunpack.c.h.b16 %v1475
        %v2003 = vunpack.c.l.b16 %v1476
        %v2004 = vunpack.c.h.b16 %v1476
        %v2005 = vunpack.c.l.b16 %v1477
        %v2006 = vunpack.c.h.b16 %v1477
        %v2007 = vunpack.c.l.b16 %v1478
        %v2008 = vunpack.c.h.b16 %v1478
        %v2009 = vunpack.c.l.b16 %v1479
        %v2010 = vunpack.c.h.b16 %v1479
        %v2011 = vunpack.c.l.b16 %v1480
        %v2012 = vunpack.c.h.b16 %v1480
        %v2013 = vunpack.c.l.b16 %v1481
        %v2014 = vunpack.c.h.b16 %v1481
        %v2015 = vunpack.c.l.b16 %v1482
        %v2016 = vunpack.c.h.b16 %v1482
        %v2017 = vunpack.c.l.b16 %v1483
        %v2018 = vunpack.c.h.b16 %v1483
        %v2019 = vunpack.c.l.b16 %v1484
        %v2020 = vunpack.c.h.b16 %v1484
        %v2021 = vunpack.c.l.b16 %v1485
        %v2022 = vunpack.c.h.b16 %v1485
        %v2023 = vunpack.c.l.b16 %v1486
        %v2024 = vunpack.c.h.b16 %v1486
        %v2025 = vunpack.c.l.b16 %v1487
        %v2026 = vunpack.c.h.b16 %v1487
        %v2027 = vunpack.c.l.b16 %v1488
        %v2028 = vunpack.c.h.b16 %v1488
        %v2029 = vunpack.c.l.b16 %v1489
        %v2030 = vunpack.c.h.b16 %v1489
        %v2031 = vunpack.c.l.b16 %v1490
        %v2032 = vunpack.c.h.b16 %v1490
        %v2033 = vunpack.c.l.b16 %v1491
        %v2034 = vunpack.c.h.b16 %v1491
        %v2035 = vunpack.c.l.b16 %v1492
        %v2036 = vunpack.c.h.b16 %v1492
        %v2037 = vunpack.c.l.b16 %v1493
        %v2038 = vunpack.c.h.b16 %v1493
        %v2039 = vunpack.c.l.b16 %v1494
        %v2040 = vunpack.c.h.b16 %v1494
        %v2041 = vunpack.c.l.b16 %v1495
        %v2042 = vunpack.c.h.b16 %v1495
        %v2043 = vunpack.c.l.b16 %v1496
        %v2044 = vunpack.c.h.b16 %v1496
        %v2045 = vunpack.c.l.b16 %v1497
        %v2046 = vunpack.c.h.b16 %v1497
        %v2047 = vunpack.c.l.b16 %v1498
        %v2048 = vunpack.c.h.b16 %v1498
        %v2049 = vunpack.c.l.b16 %v1499
        %v2050 = vunpack.c.h.b16 %v1499
        %v2051 = vunpack.c.l.b16 %v1500
        %v2052 = vunpack.c.h.b16 %v1500
        %v2053 = vunpack.c.l.b16 %v1501
        %v2054 = vunpack.c.h.b16 %v1501
        %v2055 = vunpack.c.l.b16 %v1502
        %v2056 = vunpack.c.h.b16 %v1502
        %v2057 = vunpack.c.l.b16 %v1503
        %v2058 = vunpack.c.h.b16 %v1503
        %v2059 = vunpack.c.l.b16 %v1504
        %v2060 = vunpack.c.h.b16 %v1504
        %v2061 = vunpack.c.l.b16 %v1505
        %v2062 = vunpack.c.h.b16 %v1505
        %v2063 = vunpack.c.l.b16 %v1506
        %v2064 = vunpack.c.h.b16 %v1506
        %v2065 = vunpack.c.l.b16 %v1507
        %v2066 = vunpack.c.h.b16 %v1507
        %v2067 = vunpack.c.l.b16 %v1508
        %v2068 = vunpack.c.h.b16 %v1508
        %v2069 = vunpack.c.l.b16 %v1509
        %v2070 = vunpack.c.h.b16 %v1509
        %v2071 = vunpack.c.l.b16 %v1510
        %v2072 = vunpack.c.h.b16 %v1510
        %v2073 = vunpack.c.l.b16 %v1511
        %v2074 = vunpack.c.h.b16 %v1511
        %v2075 = vunpack.c.l.b16 %v1512
        %v2076 = vunpack.c.h.b16 %v1512
        %v2077 = vunpack.c.l.b16 %v1513
        %v2078 = vunpack.c.h.b16 %v1513
        %v2079 = vunpack.c.l.b16 %v1514
        %v2080 = vunpack.c.h.b16 %v1514
        %v2081 = vunpack.c.l.b16 %v1515
        %v2082 = vunpack.c.h.b16 %v1515
        %v2083 = vunpack.c.l.b16 %v1516
        %v2084 = vunpack.c.h.b16 %v1516
        %v2085 = vunpack.c.l.b16 %v1517
        %v2086 = vunpack.c.h.b16 %v1517
        %v2087 = vunpack.c.l.b16 %v1518
        %v2088 = vunpack.c.h.b16 %v1518
        %v2089 = vunpack.c.l.b16 %v1519
        %v2090 = vunpack.c.h.b16 %v1519
        %v2091 = vunpack.c.l.b16 %v1520
        %v2092 = vunpack.c.h.b16 %v1520
        %v2093 = vunpack.c.l.b16 %v1521
        %v2094 = vunpack.c.h.b16 %v1521
        %v2095 = vunpack.c.l.b16 %v1522
        %v2096 = vunpack.c.h.b16 %v1522
        %v2097 = vunpack.c.l.b16 %v1523
        %v2098 = vunpack.c.h.b16 %v1523
        %v2099 = vunpack.c.l.b16 %v1524
        %v2100 = vunpack.c.h.b16 %v1524
        %v2101 = vunpack.c.l.b16 %v1525
        %v2102 = vunpack.c.h.b16 %v1525
        %v2103 = vunpack.c.l.b16 %v1526
        %v2104 = vunpack.c.h.b16 %v1526
        %v2105 = vunpack.c.l.b16 %v1527
        %v2106 = vunpack.c.h.b16 %v1527
        %v2107 = vunpack.c.l.b16 %v1528
        %v2108 = vunpack.c.h.b16 %v1528
        %v2109 = vunpack.c.l.b16 %v1529
        %v2110 = vunpack.c.h.b16 %v1529
        %v2111 = vunpack.c.l.b16 %v1530
        %v2112 = vunpack.c.h.b16 %v1530
        %v2113 = vunpack.c.l.b16 %v1531
        %v2114 = vunpack.c.h.b16 %v1531
        %v2115 = vunpack.c.l.b16 %v1532
        %v2116 = vunpack.c.h.b16 %v1532
        %v2117 = vunpack.c.l.b16 %v1533
        %v2118 = vunpack.c.h.b16 %v1533
        %v2119 = vunpack.c.l.b16 %v1534
        %v2120 = vunpack.c.h.b16 %v1534
        %v2121 = vunpack.c.l.b16 %v1535
        %v2122 = vunpack.c.h.b16 %v1535
        %v2123 = vunpack.c.l.b16 %v1536
        %v2124 = vunpack.c.h.b16 %v1536
        %v2125 = vunpack.c.l.b16 %v1537
        %v2126 = vunpack.c.h.b16 %v1537
        %v2127 = vunpack.c.l.b16 %v1538
        %v2128 = vunpack.c.h.b16 %v1538
        %v2129 = vunpack.c.l.b16 %v1539
        %v2130 = vunpack.c.h.b16 %v1539
        %v2131 = vunpack.c.l.b16 %v1540
        %v2132 = vunpack.c.h.b16 %v1540
        %v2133 = vunpack.c.l.b16 %v1541
        %v2134 = vunpack.c.h.b16 %v1541
        %v2135 = vunpack.c.l.b16 %v1542
        %v2136 = vunpack.c.h.b16 %v1542
        %v2137 = vunpack.c.l.b16 %v1543
        %v2138 = vunpack.c.h.b16 %v1543
        %v2139 = vunpack.c.l.b16 %v1544
        %v2140 = vunpack.c.h.b16 %v1544
        %v2141 = vunpack.c.l.b16 %v1545
        %v2142 = vunpack.c.h.b16 %v1545
        %v2143 = vunpack.c.l.b16 %v1546
        %v2144 = vunpack.c.h.b16 %v1546
        %v2145 = vunpack.c.l.b16 %v1547
        %v2146 = vunpack.c.h.b16 %v1547
        %v2147 = vunpack.c.l.b16 %v1548
        %v2148 = vunpack.c.h.b16 %v1548
        %v2149 = vunpack.c.l.b16 %v1549
        %v2150 = vunpack.c.h.b16 %v1549
        %v2151 = vunpack.c.l.b16 %v1550
        %v2152 = vunpack.c.h.b16 %v1550
        %v2153 = vunpack.c.l.b16 %v1551
        %v2154 = vunpack.c.h.b16 %v1551
        %v2155 = vunpack.c.l.b16 %v1552
        %v2156 = vunpack.c.h.b16 %v1552
        %v2157 = vunpack.c.l.b16 %v1553
        %v2158 = vunpack.c.h.b16 %v1553
        %v2159 = vunpack.c.l.b16 %v1554
        %v2160 = vunpack.c.h.b16 %v1554
        %v2161 = vunpack.c.l.b16 %v1555
        %v2162 = vunpack.c.h.b16 %v1555
        %v2163 = vunpack.c.l.b16 %v1556
        %v2164 = vunpack.c.h.b16 %v1556
        %v2165 = vunpack.c.l.b16 %v1557
        %v2166 = vunpack.c.h.b16 %v1557
        %v2167 = vunpack.c.l.b16 %v1558
        %v2168 = vunpack.c.h.b16 %v1558
        %v2169 = vunpack.c.l.b16 %v1559
        %v2170 = vunpack.c.h.b16 %v1559
        %v2171 = vunpack.c.l.b16 %v1560
        %v2172 = vunpack.c.h.b16 %v1560
        %v2173 = vunpack.c.l.b16 %v1561
        %v2174 = vunpack.c.h.b16 %v1561
        %v2175 = vunpack.c.l.b16 %v1562
        %v2176 = vunpack.c.h.b16 %v1562
        %v2177 = vunpack.c.l.b16 %v1563
        %v2178 = vunpack.c.h.b16 %v1563
        %v2179 = vunpack.c.l.b16 %v1564
        %v2180 = vunpack.c.h.b16 %v1564
        %v2181 = vunpack.c.l.b16 %v1565
        %v2182 = vunpack.c.h.b16 %v1565
        %v2183 = vunpack.c.l.b16 %v1566
        %v2184 = vunpack.c.h.b16 %v1566
        %v2185 = vunpack.c.l.b16 %v1567
        %v2186 = vunpack.c.h.b16 %v1567
        %v2187 = vunpack.c.l.b16 %v1568
        %v2188 = vunpack.c.h.b16 %v1568
        %v2189 = vunpack.c.l.b16 %v1569
        %v2190 = vunpack.c.h.b16 %v1569
        %v2191 = vunpack.c.l.b16 %v1570
        %v2192 = vunpack.c.h.b16 %v1570
        %v2193 = vunpack.c.l.b16 %v1571
        %v2194 = vunpack.c.h.b16 %v1571
        %v2195 = vunpack.c.l.b16 %v1572
        %v2196 = vunpack.c.h.b16 %v1572
        %v2197 = vunpack.c.l.b16 %v1573
        %v2198 = vunpack.c.h.b16 %v1573
        %v2199 = vunpack.c.l.b16 %v1574
        %v2200 = vunpack.c.h.b16 %v1574
        %v2201 = vunpack.c.l.b16 %v1575
        %v2202 = vunpack.c.h.b16 %v1575
        %v2203 = vunpack.c.l.b16 %v1576
        %v2204 = vunpack.c.h.b16 %v1576
        %v2205 = vunpack.c.l.b16 %v1577
        %v2206 = vunpack.c.h.b16 %v1577
        %v2207 = vunpack.c.l.b16 %v1578
        %v2208 = vunpack.c.h.b16 %v1578
        %v2209 = vunpack.c.l.b16 %v1579
        %v2210 = vunpack.c.h.b16 %v1579
        %v2211 = vunpack.c.l.b16 %v1580
        %v2212 = vunpack.c.h.b16 %v1580
        %v2213 = vunpack.c.l.b16 %v1581
        %v2214 = vunpack.c.h.b16 %v1581
        %v2215 = vunpack.c.l.b16 %v1582
        %v2216 = vunpack.c.h.b16 %v1582
        %v2217 = vunpack.c.l.b16 %v1583
        %v2218 = vunpack.c.h.b16 %v1583
        %v2219 = vunpack.c.l.b16 %v1584
        %v2220 = vunpack.c.h.b16 %v1584
        %v2221 = vunpack.c.l.b16 %v1585
        %v2222 = vunpack.c.h.b16 %v1585
        %v2223 = vunpack.c.l.b16 %v1586
        %v2224 = vunpack.c.h.b16 %v1586
        %v2225 = vunpack.c.l.b16 %v1587
        %v2226 = vunpack.c.h.b16 %v1587
        %v2227 = vunpack.c.l.b16 %v1588
        %v2228 = vunpack.c.h.b16 %v1588
        %v2229 = vunpack.c.l.b16 %v1589
        %v2230 = vunpack.c.h.b16 %v1589
        %v2231 = vunpack.c.l.b16 %v1590
        %v2232 = vunpack.c.h.b16 %v1590
        %v2233 = vunpack.c.l.b16 %v1591
        %v2234 = vunpack.c.h.b16 %v1591
        %v2235 = vunpack.c.l.b16 %v1592
        %v2236 = vunpack.c.h.b16 %v1592
        %v2237 = vunpack.c.l.b16 %v1593
        %v2238 = vunpack.c.h.b16 %v1593
        %v2239 = vunpack.c.l.b16 %v1594
        %v2240 = vunpack.c.h.b16 %v1594
        %v2241 = vunpack.c.l.b16 %v1595
        %v2242 = vunpack.c.h.b16 %v1595
        %v2243 = vunpack.c.l.b16 %v1596
        %v2244 = vunpack.c.h.b16 %v1596
        %v2245 = vunpack.c.l.b16 %v1597
        %v2246 = vunpack.c.h.b16 %v1597
        %v2247 = vunpack.c.l.b16 %v1598
        %v2248 = vunpack.c.h.b16 %v1598
        %v2249 = vunpack.c.l.b16 %v1599
        %v2250 = vunpack.c.h.b16 %v1599
        %v2251 = vunpack.c.l.b16 %v1600
        %v2252 = vunpack.c.h.b16 %v1600
        %v2253 = vunpack.c.l.b16 %v1601
        %v2254 = vunpack.c.h.b16 %v1601
        %v2255 = vunpack.c.l.b16 %v1602
        %v2256 = vunpack.c.h.b16 %v1602
        %v2257 = vunpack.c.l.b16 %v1603
        %v2258 = vunpack.c.h.b16 %v1603
        %v2259 = vunpack.c.l.b16 %v1604
        %v2260 = vunpack.c.h.b16 %v1604
        %v2261 = vunpack.c.l.b16 %v1605
        %v2262 = vunpack.c.h.b16 %v1605
        %v2263 = vunpack.c.l.b16 %v1606
        %v2264 = vunpack.c.h.b16 %v1606
        %v2265 = vunpack.c.l.b16 %v1607
        %v2266 = vunpack.c.h.b16 %v1607
        %v2267 = vunpack.c.l.b16 %v1608
        %v2268 = vunpack.c.h.b16 %v1608
        %v2269 = vunpack.c.l.b16 %v1609
        %v2270 = vunpack.c.h.b16 %v1609
        %v2271 = vunpack.c.l.b16 %v1610
        %v2272 = vunpack.c.h.b16 %v1610
        %v2273 = vunpack.c.l.b16 %v1611
        %v2274 = vunpack.c.h.b16 %v1611
        %v2275 = vunpack.c.l.b16 %v1612
        %v2276 = vunpack.c.h.b16 %v1612
        %v2277 = vunpack.c.l.b16 %v1613
        %v2278 = vunpack.c.h.b16 %v1613
        %v2279 = vunpack.c.l.b16 %v1614
        %v2280 = vunpack.c.h.b16 %v1614
        %v2281 = vunpack.c.l.b16 %v1615
        %v2282 = vunpack.c.h.b16 %v1615
        %v2283 = vunpack.c.l.b16 %v1616
        %v2284 = vunpack.c.h.b16 %v1616
        %v2285 = vunpack.c.l.b16 %v1617
        %v2286 = vunpack.c.h.b16 %v1617
        %v2287 = vunpack.c.l.b16 %v1618
        %v2288 = vunpack.c.h.b16 %v1618
        %v2289 = vunpack.c.l.b16 %v1619
        %v2290 = vunpack.c.h.b16 %v1619
        %v2291 = vunpack.c.l.b16 %v1620
        %v2292 = vunpack.c.h.b16 %v1620
        %v2293 = vunpack.c.l.b16 %v1621
        %v2294 = vunpack.c.h.b16 %v1621
        %v2295 = vunpack.c.l.b16 %v1622
        %v2296 = vunpack.c.h.b16 %v1622
        %v2297 = vunpack.c.l.b16 %v1623
        %v2298 = vunpack.c.h.b16 %v1623
        %v2299 = vunpack.c.l.b16 %v1624
        %v2300 = vunpack.c.h.b16 %v1624
        %v2301 = vunpack.c.l.b16 %v1625
        %v2302 = vunpack.c.h.b16 %v1625
        %v2303 = vunpack.c.l.b16 %v1626
        %v2304 = vunpack.c.h.b16 %v1626
        %v2305 = vunpack.c.l.b16 %v1627
        %v2306 = vunpack.c.h.b16 %v1627
        %v2307 = vunpack.c.l.b16 %v1628
        %v2308 = vunpack.c.h.b16 %v1628
        %v2309 = vunpack.c.l.b16 %v1629
        %v2310 = vunpack.c.h.b16 %v1629
        %v2311 = vunpack.c.l.b16 %v1630
        %v2312 = vunpack.c.h.b16 %v1630
        %v2313 = vunpack.c.l.b16 %v1631
        %v2314 = vunpack.c.h.b16 %v1631
        %v2315 = vunpack.c.l.b16 %v1632
        %v2316 = vunpack.c.h.b16 %v1632
        %v2317 = vunpack.c.l.b16 %v1633
        %v2318 = vunpack.c.h.b16 %v1633
        %v2319 = vunpack.c.l.b16 %v1634
        %v2320 = vunpack.c.h.b16 %v1634
        %v2321 = vunpack.c.l.b16 %v1635
        %v2322 = vunpack.c.h.b16 %v1635
        %v2323 = vunpack.c.l.b16 %v1636
        %v2324 = vunpack.c.h.b16 %v1636
        %v2325 = vunpack.c.l.b16 %v1637
        %v2326 = vunpack.c.h.b16 %v1637
        %v2327 = vunpack.c.l.b16 %v1638
        %v2328 = vunpack.c.h.b16 %v1638
        %v2329 = vunpack.c.l.b16 %v1639
        %v2330 = vunpack.c.h.b16 %v1639
        %v2331 = vunpack.c.l.b16 %v1640
        %v2332 = vunpack.c.h.b16 %v1640
        %v2333 = vunpack.c.l.b16 %v1641
        %v2334 = vunpack.c.h.b16 %v1641
        %v2335 = vunpack.c.l.b16 %v1642
        %v2336 = vunpack.c.h.b16 %v1642
        %v2337 = vunpack.c.l.b16 %v1643
        %v2338 = vunpack.c.h.b16 %v1643
        %v2339 = vunpack.c.l.b16 %v1644
        %v2340 = vunpack.c.h.b16 %v1644
        %v2341 = vunpack.c.l.b16 %v1645
        %v2342 = vunpack.c.h.b16 %v1645
        %v2343 = vunpack.c.l.b16 %v1646
        %v2344 = vunpack.c.h.b16 %v1646
        %v2345 = vunpack.c.l.b16 %v1647
        %v2346 = vunpack.c.h.b16 %v1647
        %v2347 = vunpack.c.l.b16 %v1648
        %v2348 = vunpack.c.h.b16 %v1648
        %v2349 = vunpack.c.l.b16 %v1649
        %v2350 = vunpack.c.h.b16 %v1649
        %v2351 = vunpack.c.l.b16 %v1650
        %v2352 = vunpack.c.h.b16 %v1650
        %v2353 = vunpack.c.l.b16 %v1651
        %v2354 = vunpack.c.h.b16 %v1651
        %v2355 = vunpack.c.l.b16 %v1652
        %v2356 = vunpack.c.h.b16 %v1652
        %v2357 = vunpack.c.l.b16 %v1653
        %v2358 = vunpack.c.h.b16 %v1653
        %v2359 = vunpack.c.l.b16 %v1654
        %v2360 = vunpack.c.h.b16 %v1654
        %v2361 = vunpack.c.l.b16 %v1655
        %v2362 = vunpack.c.h.b16 %v1655
        %v2363 = vunpack.c.l.b16 %v1656
        %v2364 = vunpack.c.h.b16 %v1656
        %v2365 = vunpack.c.l.b16 %v1657
        %v2366 = vunpack.c.h.b16 %v1657
        %v2367 = vunpack.c.l.b16 %v1658
        %v2368 = vunpack.c.h.b16 %v1658
        %v2369 = vunpack.c.l.b16 %v1659
        %v2370 = vunpack.c.h.b16 %v1659
        %v2371 = vunpack.c.l.b16 %v1660
        %v2372 = vunpack.c.h.b16 %v1660
        %v2373 = vunpack.c.l.b16 %v1661
        %v2374 = vunpack.c.h.b16 %v1661
        %v2375 = vunpack.c.l.b16 %v1662
        %v2376 = vunpack.c.h.b16 %v1662
        %v2377 = vunpack.c.l.b16 %v1663
        %v2378 = vunpack.c.h.b16 %v1663
        %v2379 = vunpack.c.l.b16 %v1664
        %v2380 = vunpack.c.h.b16 %v1664
        %v2381 = vunpack.c.l.b16 %v1665
        %v2382 = vunpack.c.h.b16 %v1665
        %v2383 = vunpack.c.l.b16 %v1666
        %v2384 = vunpack.c.h.b16 %v1666
        %v2385 = vunpack.c.l.b16 %v1667
        %v2386 = vunpack.c.h.b16 %v1667
        %v2387 = vunpack.c.l.b16 %v1668
        %v2388 = vunpack.c.h.b16 %v1668
        %v2389 = vunpack.c.l.b16 %v1669
        %v2390 = vunpack.c.h.b16 %v1669
        %v2391 = vunpack.c.l.b16 %v1670
        %v2392 = vunpack.c.h.b16 %v1670
        %v2393 = vunpack.c.l.b16 %v1671
        %v2394 = vunpack.c.h.b16 %v1671
        %v2395 = vunpack.c.l.b16 %v1672
        %v2396 = vunpack.c.h.b16 %v1672
        %v2397 = vunpack.c.l.b16 %v1673
        %v2398 = vunpack.c.h.b16 %v1673
        %v2399 = vunpack.c.l.b16 %v1674
        %v2400 = vunpack.c.h.b16 %v1674
        %v2401 = vunpack.c.l.b16 %v1675
        %v2402 = vunpack.c.h.b16 %v1675
        %v2403 = vunpack.c.l.b16 %v1676
        %v2404 = vunpack.c.h.b16 %v1676
        %v2405 = vunpack.c.l.b16 %v1677
        %v2406 = vunpack.c.h.b16 %v1677
        %v2407 = vunpack.c.l.b16 %v1678
        %v2408 = vunpack.c.h.b16 %v1678
        %v2409 = vunpack.c.l.b16 %v1679
        %v2410 = vunpack.c.h.b16 %v1679
        %v2411 = vunpack.c.l.b16 %v1680
        %v2412 = vunpack.c.h.b16 %v1680
        %v2413 = vunpack.c.l.b16 %v1681
        %v2414 = vunpack.c.h.b16 %v1681
        %v2415 = vunpack.c.l.b16 %v1682
        %v2416 = vunpack.c.h.b16 %v1682
        %v2417 = vunpack.c.l.b16 %v1683
        %v2418 = vunpack.c.h.b16 %v1683
        %v2419 = vunpack.c.l.b16 %v1684
        %v2420 = vunpack.c.h.b16 %v1684
        %v2421 = vunpack.c.l.b16 %v1685
        %v2422 = vunpack.c.h.b16 %v1685
        %v2423 = vunpack.c.l.b16 %v1686
        %v2424 = vunpack.c.h.b16 %v1686
        %v2425 = vunpack.c.l.b16 %v1687
        %v2426 = vunpack.c.h.b16 %v1687
        %v2427 = vunpack.c.l.b16 %v1688
        %v2428 = vunpack.c.h.b16 %v1688
        %v2429 = vunpack.c.l.b16 %v1689
        %v2430 = vunpack.c.h.b16 %v1689
        %v2431 = vunpack.c.l.b16 %v1690
        %v2432 = vunpack.c.h.b16 %v1690
        %v2433 = vunpack.c.l.b16 %v1691
        %v2434 = vunpack.c.h.b16 %v1691
        %v2435 = vunpack.c.l.b16 %v1692
        %v2436 = vunpack.c.h.b16 %v1692
        %v2437 = vunpack.c.l.b16 %v1693
        %v2438 = vunpack.c.h.b16 %v1693
        %v2439 = vunpack.c.l.b16 %v1694
        %v2440 = vunpack.c.h.b16 %v1694
        %v2441 = vunpack.c.l.b16 %v1695
        %v2442 = vunpack.c.h.b16 %v1695
        %v2443 = vunpack.c.l.b16 %v1696
        %v2444 = vunpack.c.h.b16 %v1696
        %v2445 = vunpack.c.l.b16 %v1697
        %v2446 = vunpack.c.h.b16 %v1697
        %v2447 = vunpack.c.l.b16 %v1698
        %v2448 = vunpack.c.h.b16 %v1698
        %v2449 = vunpack.c.l.b16 %v1699
        %v2450 = vunpack.c.h.b16 %v1699
        %v2451 = vunpack.c.l.b16 %v1700
        %v2452 = vunpack.c.h.b16 %v1700
        %v2453 = vunpack.c.l.b16 %v1701
        %v2454 = vunpack.c.h.b16 %v1701
        %v2455 = vunpack.c.l.b16 %v1702
        %v2456 = vunpack.c.h.b16 %v1702
        %v2457 = vunpack.c.l.b16 %v1703
        %v2458 = vunpack.c.h.b16 %v1703
        %v2459 = vunpack.c.l.b16 %v1704
        %v2460 = vunpack.c.h.b16 %v1704
        %v2461 = vunpack.c.l.b16 %v1705
        %v2462 = vunpack.c.h.b16 %v1705
        %v2463 = vunpack.c.l.b16 %v1706
        %v2464 = vunpack.c.h.b16 %v1706
        %v2465 = vunpack.c.l.b16 %v1707
        %v2466 = vunpack.c.h.b16 %v1707
        %v2467 = vunpack.c.l.b16 %v1708
        %v2468 = vunpack.c.h.b16 %v1708
        %v2469 = vunpack.c.l.b16 %v1709
        %v2470 = vunpack.c.h.b16 %v1709
        %v2471 = vunpack.c.l.b16 %v1710
        %v2472 = vunpack.c.h.b16 %v1710
        %v2473 = vunpack.c.l.b16 %v1711
        %v2474 = vunpack.c.h.b16 %v1711
        %v2475 = vunpack.c.l.b16 %v1712
        %v2476 = vunpack.c.h.b16 %v1712
        %v2477 = vunpack.c.l.b16 %v1713
        %v2478 = vunpack.c.h.b16 %v1713
        %v2479 = vunpack.c.l.b16 %v1714
        %v2480 = vunpack.c.h.b16 %v1714
        %v2481 = vunpack.c.l.b16 %v1715
        %v2482 = vunpack.c.h.b16 %v1715
        %v2483 = vunpack.c.l.b16 %v1716
        %v2484 = vunpack.c.h.b16 %v1716
        %v2485 = vpack.c.b16 %v1977, %v1973
        %v2486 = vpack.c.b16 %v1978, %v1974
        %v2487 = vpack.c.b16 %v1979, %v1975
        %v2488 = vpack.c.b16 %v1980, %v1976
        %v2489 = vpack.c.b16 %v1985, %v1981
        %v2490 = vpack.c.b16 %v1986, %v1982
        %v2491 = vpack.c.b16 %v1987, %v1983
        %v2492 = vpack.c.b16 %v1988, %v1984
        %v2493 = vpack.c.b16 %v1993, %v1989
        %v2494 = vpack.c.b16 %v1994, %v1990
        %v2495 = vpack.c.b16 %v1995, %v1991
        %v2496 = vpack.c.b16 %v1996, %v1992
        %v2497 = vpack.c.b16 %v2001, %v1997
        %v2498 = vpack.c.b16 %v2002, %v1998
        %v2499 = vpack.c.b16 %v2003, %v1999
        %v2500 = vpack.c.b16 %v2004, %v2000
        %v2501 = vpack.c.b16 %v2009, %v2005
        %v2502 = vpack.c.b16 %v2010, %v2006
        %v2503 = vpack.c.b16 %v2011, %v2007
        %v2504 = vpack.c.b16 %v2012, %v2008
        %v2505 = vpack.c.b16 %v2017, %v2013
        %v2506 = vpack.c.b16 %v2018, %v2014
        %v2507 = vpack.c.b16 %v2019, %v2015
        %v2508 = vpack.c.b16 %v2020, %v2016
        %v2509 = vpack.c.b16 %v2025, %v2021
        %v2510 = vpack.c.b16 %v2026, %v2022
        %v2511 = vpack.c.b16 %v2027, %v2023
        %v2512 = vpack.c.b16 %v2028, %v2024
        %v2513 = vpack.c.b16 %v2033, %v2029
        %v2514 = vpack.c.b16 %v2034, %v2030
        %v2515 = vpack.c.b16 %v2035, %v2031
        %v2516 = vpack.c.b16 %v2036, %v2032
        %v2517 = vpack.c.b16 %v2041, %v2037
        %v2518 = vpack.c.b16 %v2042, %v2038
        %v2519 = vpack.c.b16 %v2043, %v2039
        %v2520 = vpack.c.b16 %v2044, %v2040
        %v2521 = vpack.c.b16 %v2049, %v2045
        %v2522 = vpack.c.b16 %v2050, %v2046
        %v2523 = vpack.c.b16 %v2051, %v2047
        %v2524 = vpack.c.b16 %v2052, %v2048
        %v2525 = vpack.c.b16 %v2057, %v2053
        %v2526 = vpack.c.b16 %v2058, %v2054
        %v2527 = vpack.c.b16 %v2059, %v2055
        %v2528 = vpack.c.b16 %v2060, %v2056
        %v2529 = vpack.c.b16 %v2065, %v2061
        %v2530 = vpack.c.b16 %v2066, %v2062
        %v2531 = vpack.c.b16 %v2067, %v2063
        %v2532 = vpack.c.b16 %v2068, %v2064
        %v2533 = vpack.c.b16 %v2073, %v2069
        %v2534 = vpack.c.b16 %v2074, %v2070
        %v2535 = vpack.c.b16 %v2075, %v2071
        %v2536 = vpack.c.b16 %v2076, %v2072
        %v2537 = vpack.c.b16 %v2081, %v2077
        %v2538 = vpack.c.b16 %v2082, %v2078
        %v2539 = vpack.c.b16 %v2083, %v2079
        %v2540 = vpack.c.b16 %v2084, %v2080
        %v2541 = vpack.c.b16 %v2089, %v2085
        %v2542 = vpack.c.b16 %v2090, %v2086
        %v2543 = vpack.c.b16 %v2091, %v2087
        %v2544 = vpack.c.b16 %v2092, %v2088
        %v2545 = vpack.c.b16 %v2097, %v2093
        %v2546 = vpack.c.b16 %v2098, %v2094
        %v2547 = vpack.c.b16 %v2099, %v2095
        %v2548 = vpack.c.b16 %v2100, %v2096
        %v2549 = vpack.c.b16 %v2105, %v2101
        %v2550 = vpack.c.b16 %v2106, %v2102
        %v2551 = vpack.c.b16 %v2107, %v2103
        %v2552 = vpack.c.b16 %v2108, %v2104
        %v2553 = vpack.c.b16 %v2113, %v2109
        %v2554 = vpack.c.b16 %v2114, %v2110
        %v2555 = vpack.c.b16 %v2115, %v2111
        %v2556 = vpack.c.b16 %v2116, %v2112
        %v2557 = vpack.c.b16 %v2121, %v2117
        %v2558 = vpack.c.b16 %v2122, %v2118
        %v2559 = vpack.c.b16 %v2123, %v2119
        %v2560 = vpack.c.b16 %v2124, %v2120
        %v2561 = vpack.c.b16 %v2129, %v2125
        %v2562 = vpack.c.b16 %v2130, %v2126
        %v2563 = vpack.c.b16 %v2131, %v2127
        %v2564 = vpack.c.b16 %v2132, %v2128
        %v2565 = vpack.c.b16 %v2137, %v2133
        %v2566 = vpack.c.b16 %v2138, %v2134
        %v2567 = vpack.c.b16 %v2139, %v2135
        %v2568 = vpack.c.b16 %v2140, %v2136
        %v2569 = vpack.c.b16 %v2145, %v2141
        %v2570 = vpack.c.b16 %v2146, %v2142
        %v2571 = vpack.c.b16 %v2147, %v2143
        %v2572 = vpack.c.b16 %v2148, %v2144
        %v2573 = vpack.c.b16 %v2153, %v2149
        %v2574 = vpack.c.b16 %v2154, %v2150
        %v2575 = vpack.c.b16 %v2155, %v2151
        %v2576 = vpack.c.b16 %v2156, %v2152
        %v2577 = vpack.c.b16 %v2161, %v2157
        %v2578 = vpack.c.b16 %v2162, %v2158
        %v2579 = vpack.c.b16 %v2163, %v2159
        %v2580 = vpack.c.b16 %v2164, %v2160
        %v2581 = vpack.c.b16 %v2169, %v2165
        %v2582 = vpack.c.b16 %v2170, %v2166
        %v2583 = vpack.c.b16 %v2171, %v2167
        %v2584 = vpack.c.b16 %v2172, %v2168
        %v2585 = vpack.c.b16 %v2177, %v2173
        %v2586 = vpack.c.b16 %v2178, %v2174
        %v2587 = vpack.c.b16 %v2179, %v2175
        %v2588 = vpack.c.b16 %v2180, %v2176
        %v2589 = vpack.c.b16 %v2185, %v2181
        %v2590 = vpack.c.b16 %v2186, %v2182
        %v2591 = vpack.c.b16 %v2187, %v2183
        %v2592 = vpack.c.b16 %v2188, %v2184
        %v2593 = vpack.c.b16 %v2193, %v2189
        %v2594 = vpack.c.b16 %v2194, %v2190
        %v2595 = vpack.c.b16 %v2195, %v2191
        %v2596 = vpack.c.b16 %v2196, %v2192
        %v2597 = vpack.c.b16 %v2201, %v2197
        %v2598 = vpack.c.b16 %v2202, %v2198
        %v2599 = vpack.c.b16 %v2203, %v2199
        %v2600 = vpack.c.b16 %v2204, %v2200
        %v2601 = vpack.c.b16 %v2209, %v2205
        %v2602 = vpack.c.b16 %v2210, %v2206
        %v2603 = vpack.c.b16 %v2211, %v2207
        %v2604 = vpack.c.b16 %v2212, %v2208
        %v2605 = vpack.c.b16 %v2217, %v2213
        %v2606 = vpack.c.b16 %v2218, %v2214
        %v2607 = vpack.c.b16 %v2219, %v2215
        %v2608 = vpack.c.b16 %v2220, %v2216
        %v2609 = vpack.c.b16 %v2225, %v2221
        %v2610 = vpack.c.b16 %v2226, %v2222
        %v2611 = vpack.c.b16 %v2227, %v2223
        %v2612 = vpack.c.b16 %v2228, %v2224
        %v2613 = vpack.c.b16 %v2233, %v2229
        %v2614 = vpack.c.b16 %v2234, %v2230
        %v2615 = vpack.c.b16 %v2235, %v2231
        %v2616 = vpack.c.b16 %v2236, %v2232
        %v2617 = vpack.c.b16 %v2241, %v2237
        %v2618 = vpack.c.b16 %v2242, %v2238
        %v2619 = vpack.c.b16 %v2243, %v2239
        %v2620 = vpack.c.b16 %v2244, %v2240
        %v2621 = vpack.c.b16 %v2249, %v2245
        %v2622 = vpack.c.b16 %v2250, %v2246
        %v2623 = vpack.c.b16 %v2251, %v2247
        %v2624 = vpack.c.b16 %v2252, %v2248
        %v2625 = vpack.c.b16 %v2257, %v2253
        %v2626 = vpack.c.b16 %v2258, %v2254
        %v2627 = vpack.c.b16 %v2259, %v2255
        %v2628 = vpack.c.b16 %v2260, %v2256
        %v2629 = vpack.c.b16 %v2265, %v2261
        %v2630 = vpack.c.b16 %v2266, %v2262
        %v2631 = vpack.c.b16 %v2267, %v2263
        %v2632 = vpack.c.b16 %v2268, %v2264
        %v2633 = vpack.c.b16 %v2273, %v2269
        %v2634 = vpack.c.b16 %v2274, %v2270
        %v2635 = vpack.c.b16 %v2275, %v2271
        %v2636 = vpack.c.b16 %v2276, %v2272
        %v2637 = vpack.c.b16 %v2281, %v2277
        %v2638 = vpack.c.b16 %v2282, %v2278
        %v2639 = vpack.c.b16 %v2283, %v2279
        %v2640 = vpack.c.b16 %v2284, %v2280
        %v2641 = vpack.c.b16 %v2289, %v2285
        %v2642 = vpack.c.b16 %v2290, %v2286
        %v2643 = vpack.c.b16 %v2291, %v2287
        %v2644 = vpack.c.b16 %v2292, %v2288
        %v2645 = vpack.c.b16 %v2297, %v2293
        %v2646 = vpack.c.b16 %v2298, %v2294
        %v2647 = vpack.c.b16 %v2299, %v2295
        %v2648 = vpack.c.b16 %v2300, %v2296
        %v2649 = vpack.c.b16 %v2305, %v2301
        %v2650 = vpack.c.b16 %v2306, %v2302
        %v2651 = vpack.c.b16 %v2307, %v2303
        %v2652 = vpack.c.b16 %v2308, %v2304
        %v2653 = vpack.c.b16 %v2313, %v2309
        %v2654 = vpack.c.b16 %v2314, %v2310
        %v2655 = vpack.c.b16 %v2315, %v2311
        %v2656 = vpack.c.b16 %v2316, %v2312
        %v2657 = vpack.c.b16 %v2321, %v2317
        %v2658 = vpack.c.b16 %v2322, %v2318
        %v2659 = vpack.c.b16 %v2323, %v2319
        %v2660 = vpack.c.b16 %v2324, %v2320
        %v2661 = vpack.c.b16 %v2329, %v2325
        %v2662 = vpack.c.b16 %v2330, %v2326
        %v2663 = vpack.c.b16 %v2331, %v2327
        %v2664 = vpack.c.b16 %v2332, %v2328
        %v2665 = vpack.c.b16 %v2337, %v2333
        %v2666 = vpack.c.b16 %v2338, %v2334
        %v2667 = vpack.c.b16 %v2339, %v2335
        %v2668 = vpack.c.b16 %v2340, %v2336
        %v2669 = vpack.c.b16 %v2345, %v2341
        %v2670 = vpack.c.b16 %v2346, %v2342
        %v2671 = vpack.c.b16 %v2347, %v2343
        %v2672 = vpack.c.b16 %v2348, %v2344
        %v2673 = vpack.c.b16 %v2353, %v2349
        %v2674 = vpack.c.b16 %v2354, %v2350
        %v2675 = vpack.c.b16 %v2355, %v2351
        %v2676 = vpack.c.b16 %v2356, %v2352
        %v2677 = vpack.c.b16 %v2361, %v2357
        %v2678 = vpack.c.b16 %v2362, %v2358
        %v2679 = vpack.c.b16 %v2363, %v2359
        %v2680 = vpack.c.b16 %v2364, %v2360
        %v2681 = vpack.c.b16 %v2369, %v2365
        %v2682 = vpack.c.b16 %v2370, %v2366
        %v2683 = vpack.c.b16 %v2371, %v2367
        %v2684 = vpack.c.b16 %v2372, %v2368
        %v2685 = vpack.c.b16 %v2377, %v2373
        %v2686 = vpack.c.b16 %v2378, %v2374
        %v2687 = vpack.c.b16 %v2379, %v2375
        %v2688 = vpack.c.b16 %v2380, %v2376
        %v2689 = vpack.c.b16 %v2385, %v2381
        %v2690 = vpack.c.b16 %v2386, %v2382
        %v2691 = vpack.c.b16 %v2387, %v2383
        %v2692 = vpack.c.b16 %v2388, %v2384
        %v2693 = vpack.c.b16 %v2393, %v2389
        %v2694 = vpack.c.b16 %v2394, %v2390
        %v2695 = vpack.c.b16 %v2395, %v2391
        %v2696 = vpack.c.b16 %v2396, %v2392
        %v2697 = vpack.c.b16 %v2401, %v2397
        %v2698 = vpack.c.b16 %v2402, %v2398
        %v2699 = vpack.c.b16 %v2403, %v2399
        %v2700 = vpack.c.b16 %v2404, %v2400
        %v2701 = vpack.c.b16 %v2409, %v2405
        %v2702 = vpack.c.b16 %v2410, %v2406
        %v2703 = vpack.c.b16 %v2411, %v2407
        %v2704 = vpack.c.b16 %v2412, %v2408
        %v2705 = vpack.c.b16 %v2417, %v2413
        %v2706 = vpack.c.b16 %v2418, %v2414
        %v2707 = vpack.c.b16 %v2419, %v2415
        %v2708 = vpack.c.b16 %v2420, %v2416
        %v2709 = vpack.c.b16 %v2425, %v2421
        %v2710 = vpack.c.b16 %v2426, %v2422
        %v2711 = vpack.c.b16 %v2427, %v2423
        %v2712 = vpack.c.b16 %v2428, %v2424
        %v2713 = vpack.c.b16 %v2433, %v2429
        %v2714 = vpack.c.b16 %v2434, %v2430
        %v2715 = vpack.c.b16 %v2435, %v2431
        %v2716 = vpack.c.b16 %v2436, %v2432
        %v2717 = vpack.c.b16 %v2441, %v2437
        %v2718 = vpack.c.b16 %v2442, %v2438
        %v2719 = vpack.c.b16 %v2443, %v2439
        %v2720 = vpack.c.b16 %v2444, %v2440
        %v2721 = vpack.c.b16 %v2449, %v2445
        %v2722 = vpack.c.b16 %v2450, %v2446
        %v2723 = vpack.c.b16 %v2451, %v2447
        %v2724 = vpack.c.b16 %v2452, %v2448
        %v2725 = vpack.c.b16 %v2457, %v2453
        %v2726 = vpack.c.b16 %v2458, %v2454
        %v2727 = vpack.c.b16 %v2459, %v2455
        %v2728 = vpack.c.b16 %v2460, %v2456
        %v2729 = vpack.c.b16 %v2465, %v2461
        %v2730 = vpack.c.b16 %v2466, %v2462
        %v2731 = vpack.c.b16 %v2467, %v2463
        %v2732 = vpack.c.b16 %v2468, %v2464
        %v2733 = vpack.c.b16 %v2473, %v2469
        %v2734 = vpack.c.b16 %v2474, %v2470
        %v2735 = vpack.c.b16 %v2475, %v2471
        %v2736 = vpack.c.b16 %v2476, %v2472
        %v2737 = vpack.c.b16 %v2481, %v2477
        %v2738 = vpack.c.b16 %v2482, %v2478
        %v2739 = vpack.c.b16 %v2483, %v2479
        %v2740 = vpack.c.b16 %v2484, %v2480
        %2997 = vmatpush.bf16.msra.mxu0 %v2513
        %2998 = vmatpush.bf16.msra.mxu0 %v2509
        %2999 = vmatpush.bf16.msra.mxu0 %v2505
        %3000 = vmatpush.bf16.msra.mxu0 %v2501
        %3001 = vmatpush.bf16.msra.mxu0 %v2497
        %3002 = vmatpush.bf16.msra.mxu0 %v2493
        %3003 = vmatpush.bf16.msra.mxu0 %v2489
        %3004 = vmatpush.bf16.msra.mxu0 %v2485
        %3005 = vmatmul.bf16.gmra.mxu0 %v1453
        %v3006 = vpop.f32.mrf.mxu0
        %v3007 = vadd.f32 0.0, %v3006
        %v3008 = vpop.f32.mrf.mxu0
        %v3009 = vadd.f32 0.0, %v3008
        %3010 = vdwg.mxu0
        %3011 = vmatpush.bf16.msra.mxu0 %v2545
        %3012 = vmatpush.bf16.msra.mxu0 %v2541
        %3013 = vmatpush.bf16.msra.mxu0 %v2537
        %3014 = vmatpush.bf16.msra.mxu0 %v2533
        %3015 = vmatpush.bf16.msra.mxu0 %v2529
        %3016 = vmatpush.bf16.msra.mxu0 %v2525
        %3017 = vmatpush.bf16.msra.mxu0 %v2521
        %3018 = vmatpush.bf16.msra.mxu0 %v2517
        %3019 = vmatmul.bf16.gmra.mxu0 %v1454
        %v3020 = vpop.f32.mrf.mxu0
        %v3021 = vadd.f32 %v3007, %v3020
        %v3022 = vpop.f32.mrf.mxu0
        %v3023 = vadd.f32 %v3009, %v3022
        %3024 = vdwg.mxu0
        %3025 = vmatpush.bf16.msra.mxu0 %v2577
        %3026 = vmatpush.bf16.msra.mxu0 %v2573
        %3027 = vmatpush.bf16.msra.mxu0 %v2569
        %3028 = vmatpush.bf16.msra.mxu0 %v2565
        %3029 = vmatpush.bf16.msra.mxu0 %v2561
        %3030 = vmatpush.bf16.msra.mxu0 %v2557
        %3031 = vmatpush.bf16.msra.mxu0 %v2553
        %3032 = vmatpush.bf16.msra.mxu0 %v2549
        %3033 = vmatmul.bf16.gmra.mxu0 %v1455
        %v3034 = vpop.f32.mrf.mxu0
        %v3035 = vadd.f32 %v3021, %v3034
        %v3036 = vpop.f32.mrf.mxu0
        %v3037 = vadd.f32 %v3023, %v3036
        %3038 = vdwg.mxu0
        %3039 = vmatpush.bf16.msra.mxu0 %v2609
        %3040 = vmatpush.bf16.msra.mxu0 %v2605
        %3041 = vmatpush.bf16.msra.mxu0 %v2601
        %3042 = vmatpush.bf16.msra.mxu0 %v2597
        %3043 = vmatpush.bf16.msra.mxu0 %v2593
        %3044 = vmatpush.bf16.msra.mxu0 %v2589
        %3045 = vmatpush.bf16.msra.mxu0 %v2585
        %3046 = vmatpush.bf16.msra.mxu0 %v2581
        %3047 = vmatmul.bf16.gmra.mxu0 %v1456
        %v3048 = vpop.f32.mrf.mxu0
        %v3049 = vadd.f32 %v3035, %v3048
        %v3050 = vpop.f32.mrf.mxu0
        %v3051 = vadd.f32 %v3037, %v3050
        %3052 = vdwg.mxu0
        %3053 = vmatpush.bf16.msra.mxu0 %v2641
        %3054 = vmatpush.bf16.msra.mxu0 %v2637
        %3055 = vmatpush.bf16.msra.mxu0 %v2633
        %3056 = vmatpush.bf16.msra.mxu0 %v2629
        %3057 = vmatpush.bf16.msra.mxu0 %v2625
        %3058 = vmatpush.bf16.msra.mxu0 %v2621
        %3059 = vmatpush.bf16.msra.mxu0 %v2617
        %3060 = vmatpush.bf16.msra.mxu0 %v2613
        %3061 = vmatmul.bf16.gmra.mxu0 %v1457
        %v3062 = vpop.f32.mrf.mxu0
        %v3063 = vadd.f32 %v3049, %v3062
        %v3064 = vpop.f32.mrf.mxu0
        %v3065 = vadd.f32 %v3051, %v3064
        %3066 = vdwg.mxu0
        %3067 = vmatpush.bf16.msra.mxu0 %v2673
        %3068 = vmatpush.bf16.msra.mxu0 %v2669
        %3069 = vmatpush.bf16.msra.mxu0 %v2665
        %3070 = vmatpush.bf16.msra.mxu0 %v2661
        %3071 = vmatpush.bf16.msra.mxu0 %v2657
        %3072 = vmatpush.bf16.msra.mxu0 %v2653
        %3073 = vmatpush.bf16.msra.mxu0 %v2649
        %3074 = vmatpush.bf16.msra.mxu0 %v2645
        %3075 = vmatmul.bf16.gmra.mxu0 %v1458
        %v3076 = vpop.f32.mrf.mxu0
        %v3077 = vadd.f32 %v3063, %v3076
        %v3078 = vpop.f32.mrf.mxu0
        %v3079 = vadd.f32 %v3065, %v3078
        %3080 = vdwg.mxu0
        %3081 = vmatpush.bf16.msra.mxu0 %v2705
        %3082 = vmatpush.bf16.msra.mxu0 %v2701
        %3083 = vmatpush.bf16.msra.mxu0 %v2697
        %3084 = vmatpush.bf16.msra.mxu0 %v2693
        %3085 = vmatpush.bf16.msra.mxu0 %v2689
        %3086 = vmatpush.bf16.msra.mxu0 %v2685
        %3087 = vmatpush.bf16.msra.mxu0 %v2681
        %3088 = vmatpush.bf16.msra.mxu0 %v2677
        %3089 = vmatmul.bf16.gmra.mxu0 %v1459
        %v3090 = vpop.f32.mrf.mxu0
        %v3091 = vadd.f32 %v3077, %v3090
        %v3092 = vpop.f32.mrf.mxu0
        %v3093 = vadd.f32 %v3079, %v3092
        %3094 = vdwg.mxu0
        %3095 = vmatpush.bf16.msra.mxu0 %v2737
        %3096 = vmatpush.bf16.msra.mxu0 %v2733
        %3097 = vmatpush.bf16.msra.mxu0 %v2729
        %3098 = vmatpush.bf16.msra.mxu0 %v2725
        %3099 = vmatpush.bf16.msra.mxu0 %v2721
        %3100 = vmatpush.bf16.msra.mxu0 %v2717
        %3101 = vmatpush.bf16.msra.mxu0 %v2713
        %3102 = vmatpush.bf16.msra.mxu0 %v2709
        %3103 = vmatmul.bf16.gmra.mxu0 %v1460
        %v3104 = vpop.f32.mrf.mxu0
        %v3105 = vadd.f32 %v3091, %v3104
        %v3106 = vpop.f32.mrf.mxu0
        %v3107 = vadd.f32 %v3093, %v3106
        %3108 = vdwg.mxu0
        %3109 = vmatpush.bf16.msra.mxu0 %v2514
        %3110 = vmatpush.bf16.msra.mxu0 %v2510
        %3111 = vmatpush.bf16.msra.mxu0 %v2506
        %3112 = vmatpush.bf16.msra.mxu0 %v2502
        %3113 = vmatpush.bf16.msra.mxu0 %v2498
        %3114 = vmatpush.bf16.msra.mxu0 %v2494
        %3115 = vmatpush.bf16.msra.mxu0 %v2490
        %3116 = vmatpush.bf16.msra.mxu0 %v2486
        %3117 = vmatmul.bf16.gmra.mxu0 %v1453
        %v3118 = vpop.f32.mrf.mxu0
        %v3119 = vadd.f32 0.0, %v3118
        %v3120 = vpop.f32.mrf.mxu0
        %v3121 = vadd.f32 0.0, %v3120
        %3122 = vdwg.mxu0
        %3123 = vmatpush.bf16.msra.mxu0 %v2546
        %3124 = vmatpush.bf16.msra.mxu0 %v2542
        %3125 = vmatpush.bf16.msra.mxu0 %v2538
        %3126 = vmatpush.bf16.msra.mxu0 %v2534
        %3127 = vmatpush.bf16.msra.mxu0 %v2530
        %3128 = vmatpush.bf16.msra.mxu0 %v2526
        %3129 = vmatpush.bf16.msra.mxu0 %v2522
        %3130 = vmatpush.bf16.msra.mxu0 %v2518
        %3131 = vmatmul.bf16.gmra.mxu0 %v1454
        %v3132 = vpop.f32.mrf.mxu0
        %v3133 = vadd.f32 %v3119, %v3132
        %v3134 = vpop.f32.mrf.mxu0
        %v3135 = vadd.f32 %v3121, %v3134
        %3136 = vdwg.mxu0
        %3137 = vmatpush.bf16.msra.mxu0 %v2578
        %3138 = vmatpush.bf16.msra.mxu0 %v2574
        %3139 = vmatpush.bf16.msra.mxu0 %v2570
        %3140 = vmatpush.bf16.msra.mxu0 %v2566
        %3141 = vmatpush.bf16.msra.mxu0 %v2562
        %3142 = vmatpush.bf16.msra.mxu0 %v2558
        %3143 = vmatpush.bf16.msra.mxu0 %v2554
        %3144 = vmatpush.bf16.msra.mxu0 %v2550
        %3145 = vmatmul.bf16.gmra.mxu0 %v1455
        %v3146 = vpop.f32.mrf.mxu0
        %v3147 = vadd.f32 %v3133, %v3146
        %v3148 = vpop.f32.mrf.mxu0
        %v3149 = vadd.f32 %v3135, %v3148
        %3150 = vdwg.mxu0
        %3151 = vmatpush.bf16.msra.mxu0 %v2610
        %3152 = vmatpush.bf16.msra.mxu0 %v2606
        %3153 = vmatpush.bf16.msra.mxu0 %v2602
        %3154 = vmatpush.bf16.msra.mxu0 %v2598
        %3155 = vmatpush.bf16.msra.mxu0 %v2594
        %3156 = vmatpush.bf16.msra.mxu0 %v2590
        %3157 = vmatpush.bf16.msra.mxu0 %v2586
        %3158 = vmatpush.bf16.msra.mxu0 %v2582
        %3159 = vmatmul.bf16.gmra.mxu0 %v1456
        %v3160 = vpop.f32.mrf.mxu0
        %v3161 = vadd.f32 %v3147, %v3160
        %v3162 = vpop.f32.mrf.mxu0
        %v3163 = vadd.f32 %v3149, %v3162
        %3164 = vdwg.mxu0
        %3165 = vmatpush.bf16.msra.mxu0 %v2642
        %3166 = vmatpush.bf16.msra.mxu0 %v2638
        %3167 = vmatpush.bf16.msra.mxu0 %v2634
        %3168 = vmatpush.bf16.msra.mxu0 %v2630
        %3169 = vmatpush.bf16.msra.mxu0 %v2626
        %3170 = vmatpush.bf16.msra.mxu0 %v2622
        %3171 = vmatpush.bf16.msra.mxu0 %v2618
        %3172 = vmatpush.bf16.msra.mxu0 %v2614
        %3173 = vmatmul.bf16.gmra.mxu0 %v1457
        %v3174 = vpop.f32.mrf.mxu0
        %v3175 = vadd.f32 %v3161, %v3174
        %v3176 = vpop.f32.mrf.mxu0
        %v3177 = vadd.f32 %v3163, %v3176
        %3178 = vdwg.mxu0
        %3179 = vmatpush.bf16.msra.mxu0 %v2674
        %3180 = vmatpush.bf16.msra.mxu0 %v2670
        %3181 = vmatpush.bf16.msra.mxu0 %v2666
        %3182 = vmatpush.bf16.msra.mxu0 %v2662
        %3183 = vmatpush.bf16.msra.mxu0 %v2658
        %3184 = vmatpush.bf16.msra.mxu0 %v2654
        %3185 = vmatpush.bf16.msra.mxu0 %v2650
        %3186 = vmatpush.bf16.msra.mxu0 %v2646
        %3187 = vmatmul.bf16.gmra.mxu0 %v1458
        %v3188 = vpop.f32.mrf.mxu0
        %v3189 = vadd.f32 %v3175, %v3188
        %v3190 = vpop.f32.mrf.mxu0
        %v3191 = vadd.f32 %v3177, %v3190
        %3192 = vdwg.mxu0
        %3193 = vmatpush.bf16.msra.mxu0 %v2706
        %3194 = vmatpush.bf16.msra.mxu0 %v2702
        %3195 = vmatpush.bf16.msra.mxu0 %v2698
        %3196 = vmatpush.bf16.msra.mxu0 %v2694
        %3197 = vmatpush.bf16.msra.mxu0 %v2690
        %3198 = vmatpush.bf16.msra.mxu0 %v2686
        %3199 = vmatpush.bf16.msra.mxu0 %v2682
        %3200 = vmatpush.bf16.msra.mxu0 %v2678
        %3201 = vmatmul.bf16.gmra.mxu0 %v1459
        %v3202 = vpop.f32.mrf.mxu0
        %v3203 = vadd.f32 %v3189, %v3202
        %v3204 = vpop.f32.mrf.mxu0
        %v3205 = vadd.f32 %v3191, %v3204
        %3206 = vdwg.mxu0
        %3207 = vmatpush.bf16.msra.mxu0 %v2738
        %3208 = vmatpush.bf16.msra.mxu0 %v2734
        %3209 = vmatpush.bf16.msra.mxu0 %v2730
        %3210 = vmatpush.bf16.msra.mxu0 %v2726
        %3211 = vmatpush.bf16.msra.mxu0 %v2722
        %3212 = vmatpush.bf16.msra.mxu0 %v2718
        %3213 = vmatpush.bf16.msra.mxu0 %v2714
        %3214 = vmatpush.bf16.msra.mxu0 %v2710
        %3215 = vmatmul.bf16.gmra.mxu0 %v1460
        %v3216 = vpop.f32.mrf.mxu0
        %v3217 = vadd.f32 %v3203, %v3216
        %v3218 = vpop.f32.mrf.mxu0
        %v3219 = vadd.f32 %v3205, %v3218
        %3220 = vdwg.mxu0
        %3221 = vmatpush.bf16.msra.mxu0 %v2515
        %3222 = vmatpush.bf16.msra.mxu0 %v2511
        %3223 = vmatpush.bf16.msra.mxu0 %v2507
        %3224 = vmatpush.bf16.msra.mxu0 %v2503
        %3225 = vmatpush.bf16.msra.mxu0 %v2499
        %3226 = vmatpush.bf16.msra.mxu0 %v2495
        %3227 = vmatpush.bf16.msra.mxu0 %v2491
        %3228 = vmatpush.bf16.msra.mxu0 %v2487
        %3229 = vmatmul.bf16.gmra.mxu0 %v1453
        %v3230 = vpop.f32.mrf.mxu0
        %v3231 = vadd.f32 0.0, %v3230
        %v3232 = vpop.f32.mrf.mxu0
        %v3233 = vadd.f32 0.0, %v3232
        %3234 = vdwg.mxu0
        %3235 = vmatpush.bf16.msra.mxu0 %v2547
        %3236 = vmatpush.bf16.msra.mxu0 %v2543
        %3237 = vmatpush.bf16.msra.mxu0 %v2539
        %3238 = vmatpush.bf16.msra.mxu0 %v2535
        %3239 = vmatpush.bf16.msra.mxu0 %v2531
        %3240 = vmatpush.bf16.msra.mxu0 %v2527
        %3241 = vmatpush.bf16.msra.mxu0 %v2523
        %3242 = vmatpush.bf16.msra.mxu0 %v2519
        %3243 = vmatmul.bf16.gmra.mxu0 %v1454
        %v3244 = vpop.f32.mrf.mxu0
        %v3245 = vadd.f32 %v3231, %v3244
        %v3246 = vpop.f32.mrf.mxu0
        %v3247 = vadd.f32 %v3233, %v3246
        %3248 = vdwg.mxu0
        %3249 = vmatpush.bf16.msra.mxu0 %v2579
        %3250 = vmatpush.bf16.msra.mxu0 %v2575
        %3251 = vmatpush.bf16.msra.mxu0 %v2571
        %3252 = vmatpush.bf16.msra.mxu0 %v2567
        %3253 = vmatpush.bf16.msra.mxu0 %v2563
        %3254 = vmatpush.bf16.msra.mxu0 %v2559
        %3255 = vmatpush.bf16.msra.mxu0 %v2555
        %3256 = vmatpush.bf16.msra.mxu0 %v2551
        %3257 = vmatmul.bf16.gmra.mxu0 %v1455
        %v3258 = vpop.f32.mrf.mxu0
        %v3259 = vadd.f32 %v3245, %v3258
        %v3260 = vpop.f32.mrf.mxu0
        %v3261 = vadd.f32 %v3247, %v3260
        %3262 = vdwg.mxu0
        %3263 = vmatpush.bf16.msra.mxu0 %v2611
        %3264 = vmatpush.bf16.msra.mxu0 %v2607
        %3265 = vmatpush.bf16.msra.mxu0 %v2603
        %3266 = vmatpush.bf16.msra.mxu0 %v2599
        %3267 = vmatpush.bf16.msra.mxu0 %v2595
        %3268 = vmatpush.bf16.msra.mxu0 %v2591
        %3269 = vmatpush.bf16.msra.mxu0 %v2587
        %3270 = vmatpush.bf16.msra.mxu0 %v2583
        %3271 = vmatmul.bf16.gmra.mxu0 %v1456
        %v3272 = vpop.f32.mrf.mxu0
        %v3273 = vadd.f32 %v3259, %v3272
        %v3274 = vpop.f32.mrf.mxu0
        %v3275 = vadd.f32 %v3261, %v3274
        %3276 = vdwg.mxu0
        %3277 = vmatpush.bf16.msra.mxu0 %v2643
        %3278 = vmatpush.bf16.msra.mxu0 %v2639
        %3279 = vmatpush.bf16.msra.mxu0 %v2635
        %3280 = vmatpush.bf16.msra.mxu0 %v2631
        %3281 = vmatpush.bf16.msra.mxu0 %v2627
        %3282 = vmatpush.bf16.msra.mxu0 %v2623
        %3283 = vmatpush.bf16.msra.mxu0 %v2619
        %3284 = vmatpush.bf16.msra.mxu0 %v2615
        %3285 = vmatmul.bf16.gmra.mxu0 %v1457
        %v3286 = vpop.f32.mrf.mxu0
        %v3287 = vadd.f32 %v3273, %v3286
        %v3288 = vpop.f32.mrf.mxu0
        %v3289 = vadd.f32 %v3275, %v3288
        %3290 = vdwg.mxu0
        %3291 = vmatpush.bf16.msra.mxu0 %v2675
        %3292 = vmatpush.bf16.msra.mxu0 %v2671
        %3293 = vmatpush.bf16.msra.mxu0 %v2667
        %3294 = vmatpush.bf16.msra.mxu0 %v2663
        %3295 = vmatpush.bf16.msra.mxu0 %v2659
        %3296 = vmatpush.bf16.msra.mxu0 %v2655
        %3297 = vmatpush.bf16.msra.mxu0 %v2651
        %3298 = vmatpush.bf16.msra.mxu0 %v2647
        %3299 = vmatmul.bf16.gmra.mxu0 %v1458
        %v3300 = vpop.f32.mrf.mxu0
        %v3301 = vadd.f32 %v3287, %v3300
        %v3302 = vpop.f32.mrf.mxu0
        %v3303 = vadd.f32 %v3289, %v3302
        %3304 = vdwg.mxu0
        %3305 = vmatpush.bf16.msra.mxu0 %v2707
        %3306 = vmatpush.bf16.msra.mxu0 %v2703
        %3307 = vmatpush.bf16.msra.mxu0 %v2699
        %3308 = vmatpush.bf16.msra.mxu0 %v2695
        %3309 = vmatpush.bf16.msra.mxu0 %v2691
        %3310 = vmatpush.bf16.msra.mxu0 %v2687
        %3311 = vmatpush.bf16.msra.mxu0 %v2683
        %3312 = vmatpush.bf16.msra.mxu0 %v2679
        %3313 = vmatmul.bf16.gmra.mxu0 %v1459
        %v3314 = vpop.f32.mrf.mxu0
        %v3315 = vadd.f32 %v3301, %v3314
        %v3316 = vpop.f32.mrf.mxu0
        %v3317 = vadd.f32 %v3303, %v3316
        %3318 = vdwg.mxu0
        %3319 = vmatpush.bf16.msra.mxu0 %v2739
        %3320 = vmatpush.bf16.msra.mxu0 %v2735
        %3321 = vmatpush.bf16.msra.mxu0 %v2731
        %3322 = vmatpush.bf16.msra.mxu0 %v2727
        %3323 = vmatpush.bf16.msra.mxu0 %v2723
        %3324 = vmatpush.bf16.msra.mxu0 %v2719
        %3325 = vmatpush.bf16.msra.mxu0 %v2715
        %3326 = vmatpush.bf16.msra.mxu0 %v2711
        %3327 = vmatmul.bf16.gmra.mxu0 %v1460
        %v3328 = vpop.f32.mrf.mxu0
        %v3329 = vadd.f32 %v3315, %v3328
        %v3330 = vpop.f32.mrf.mxu0
        %v3331 = vadd.f32 %v3317, %v3330
        %3332 = vdwg.mxu0
        %3333 = vmatpush.bf16.msra.mxu0 %v2516
        %3334 = vmatpush.bf16.msra.mxu0 %v2512
        %3335 = vmatpush.bf16.msra.mxu0 %v2508
        %3336 = vmatpush.bf16.msra.mxu0 %v2504
        %3337 = vmatpush.bf16.msra.mxu0 %v2500
        %3338 = vmatpush.bf16.msra.mxu0 %v2496
        %3339 = vmatpush.bf16.msra.mxu0 %v2492
        %3340 = vmatpush.bf16.msra.mxu0 %v2488
        %3341 = vmatmul.bf16.gmra.mxu0 %v1453
        %v3342 = vpop.f32.mrf.mxu0
        %v3343 = vadd.f32 0.0, %v3342
        %v3344 = vpop.f32.mrf.mxu0
        %v3345 = vadd.f32 0.0, %v3344
        %3346 = vdwg.mxu0
        %3347 = vmatpush.bf16.msra.mxu0 %v2548
        %3348 = vmatpush.bf16.msra.mxu0 %v2544
        %3349 = vmatpush.bf16.msra.mxu0 %v2540
        %3350 = vmatpush.bf16.msra.mxu0 %v2536
        %3351 = vmatpush.bf16.msra.mxu0 %v2532
        %3352 = vmatpush.bf16.msra.mxu0 %v2528
        %3353 = vmatpush.bf16.msra.mxu0 %v2524
        %3354 = vmatpush.bf16.msra.mxu0 %v2520
        %3355 = vmatmul.bf16.gmra.mxu0 %v1454
        %v3356 = vpop.f32.mrf.mxu0
        %v3357 = vadd.f32 %v3343, %v3356
        %v3358 = vpop.f32.mrf.mxu0
        %v3359 = vadd.f32 %v3345, %v3358
        %3360 = vdwg.mxu0
        %3361 = vmatpush.bf16.msra.mxu0 %v2580
        %3362 = vmatpush.bf16.msra.mxu0 %v2576
        %3363 = vmatpush.bf16.msra.mxu0 %v2572
        %3364 = vmatpush.bf16.msra.mxu0 %v2568
        %3365 = vmatpush.bf16.msra.mxu0 %v2564
        %3366 = vmatpush.bf16.msra.mxu0 %v2560
        %3367 = vmatpush.bf16.msra.mxu0 %v2556
        %3368 = vmatpush.bf16.msra.mxu0 %v2552
        %3369 = vmatmul.bf16.gmra.mxu0 %v1455
        %v3370 = vpop.f32.mrf.mxu0
        %v3371 = vadd.f32 %v3357, %v3370
        %v3372 = vpop.f32.mrf.mxu0
        %v3373 = vadd.f32 %v3359, %v3372
        %3374 = vdwg.mxu0
        %3375 = vmatpush.bf16.msra.mxu0 %v2612
        %3376 = vmatpush.bf16.msra.mxu0 %v2608
        %3377 = vmatpush.bf16.msra.mxu0 %v2604
        %3378 = vmatpush.bf16.msra.mxu0 %v2600
        %3379 = vmatpush.bf16.msra.mxu0 %v2596
        %3380 = vmatpush.bf16.msra.mxu0 %v2592
        %3381 = vmatpush.bf16.msra.mxu0 %v2588
        %3382 = vmatpush.bf16.msra.mxu0 %v2584
        %3383 = vmatmul.bf16.gmra.mxu0 %v1456
        %v3384 = vpop.f32.mrf.mxu0
        %v3385 = vadd.f32 %v3371, %v3384
        %v3386 = vpop.f32.mrf.mxu0
        %v3387 = vadd.f32 %v3373, %v3386
        %3388 = vdwg.mxu0
        %3389 = vmatpush.bf16.msra.mxu0 %v2644
        %3390 = vmatpush.bf16.msra.mxu0 %v2640
        %3391 = vmatpush.bf16.msra.mxu0 %v2636
        %3392 = vmatpush.bf16.msra.mxu0 %v2632
        %3393 = vmatpush.bf16.msra.mxu0 %v2628
        %3394 = vmatpush.bf16.msra.mxu0 %v2624
        %3395 = vmatpush.bf16.msra.mxu0 %v2620
        %3396 = vmatpush.bf16.msra.mxu0 %v2616
        %3397 = vmatmul.bf16.gmra.mxu0 %v1457
        %v3398 = vpop.f32.mrf.mxu0
        %v3399 = vadd.f32 %v3385, %v3398
        %v3400 = vpop.f32.mrf.mxu0
        %v3401 = vadd.f32 %v3387, %v3400
        %3402 = vdwg.mxu0
        %3403 = vmatpush.bf16.msra.mxu0 %v2676
        %3404 = vmatpush.bf16.msra.mxu0 %v2672
        %3405 = vmatpush.bf16.msra.mxu0 %v2668
        %3406 = vmatpush.bf16.msra.mxu0 %v2664
        %3407 = vmatpush.bf16.msra.mxu0 %v2660
        %3408 = vmatpush.bf16.msra.mxu0 %v2656
        %3409 = vmatpush.bf16.msra.mxu0 %v2652
        %3410 = vmatpush.bf16.msra.mxu0 %v2648
        %3411 = vmatmul.bf16.gmra.mxu0 %v1458
        %v3412 = vpop.f32.mrf.mxu0
        %v3413 = vadd.f32 %v3399, %v3412
        %v3414 = vpop.f32.mrf.mxu0
        %v3415 = vadd.f32 %v3401, %v3414
        %3416 = vdwg.mxu0
        %3417 = vmatpush.bf16.msra.mxu0 %v2708
        %3418 = vmatpush.bf16.msra.mxu0 %v2704
        %3419 = vmatpush.bf16.msra.mxu0 %v2700
        %3420 = vmatpush.bf16.msra.mxu0 %v2696
        %3421 = vmatpush.bf16.msra.mxu0 %v2692
        %3422 = vmatpush.bf16.msra.mxu0 %v2688
        %3423 = vmatpush.bf16.msra.mxu0 %v2684
        %3424 = vmatpush.bf16.msra.mxu0 %v2680
        %3425 = vmatmul.bf16.gmra.mxu0 %v1459
        %v3426 = vpop.f32.mrf.mxu0
        %v3427 = vadd.f32 %v3413, %v3426
        %v3428 = vpop.f32.mrf.mxu0
        %v3429 = vadd.f32 %v3415, %v3428
        %3430 = vdwg.mxu0
        %3431 = vmatpush.bf16.msra.mxu0 %v2740
        %3432 = vmatpush.bf16.msra.mxu0 %v2736
        %3433 = vmatpush.bf16.msra.mxu0 %v2732
        %3434 = vmatpush.bf16.msra.mxu0 %v2728
        %3435 = vmatpush.bf16.msra.mxu0 %v2724
        %3436 = vmatpush.bf16.msra.mxu0 %v2720
        %3437 = vmatpush.bf16.msra.mxu0 %v2716
        %3438 = vmatpush.bf16.msra.mxu0 %v2712
        %3439 = vmatmul.bf16.gmra.mxu0 %v1460
        %v3440 = vpop.f32.mrf.mxu0
        %v3441 = vadd.f32 %v3427, %v3440
        %v3442 = vpop.f32.mrf.mxu0
        %v3443 = vadd.f32 %v3429, %v3442
        %3444 = vdwg.mxu0
        %v3446 = vperm.slane %v1436, 0
        %v3447 = vperm.slane %v1436, 1
        %v3448 = vperm.slane %v1436, 2
        %v3449 = vperm.slane %v1436, 3
        %v3454 = vadd.f32 %v3446, %v3105
        %v3455 = vadd.f32 %v3447, %v3217
        %v3456 = vadd.f32 %v3448, %v3329
        %v3457 = vadd.f32 %v3449, %v3441
        %v3458 = vadd.f32 %v3446, %v3107
        %v3459 = vadd.f32 %v3447, %v3219
        %v3460 = vadd.f32 %v3448, %v3331
        %v3461 = vadd.f32 %v3449, %v3443
        %v3462 = vld [vmem:[#allocation3] sm:$0xfe]
        %v3463 = vld [vmem:[#allocation3 + $0x8] sm:$0xfe]
        %v3464 = vld [vmem:[#allocation3 + $0x10] sm:$0xfe]
        %v3465 = vld [vmem:[#allocation3 + $0x18] sm:$0xfe]
        %v3466 = vld [vmem:[#allocation3 + $0x20] sm:$0xfe]
        %v3467 = vld [vmem:[#allocation3 + $0x28] sm:$0xfe]
        %v3468 = vld [vmem:[#allocation3 + $0x30] sm:$0xfe]
        %v3469 = vld [vmem:[#allocation3 + $0x38] sm:$0xfe]
        %v3470 = vld [vmem:[#allocation3 + $0x40] sm:$0xff]
        %v3471 = vld [vmem:[#allocation3 + $0x48] sm:$0xff]
        %v3472 = vld [vmem:[#allocation3 + $0x50] sm:$0xff]
        %v3473 = vld [vmem:[#allocation3 + $0x58] sm:$0xff]
        %v3474 = vld [vmem:[#allocation3 + $0x60] sm:$0xff]
        %v3475 = vld [vmem:[#allocation3 + $0x68] sm:$0xff]
        %v3476 = vld [vmem:[#allocation3 + $0x70] sm:$0xff]
        %v3477 = vld [vmem:[#allocation3 + $0x78] sm:$0xff]
        %v3478 = vld [vmem:[#allocation3 + $0x80] sm:$0x1]
        %v3479 = vld [vmem:[#allocation3 + $0x88] sm:$0x1]
        %v3480 = vld [vmem:[#allocation3 + $0x90] sm:$0x1]
        %v3481 = vld [vmem:[#allocation3 + $0x98] sm:$0x1]
        %v3482 = vld [vmem:[#allocation3 + $0xa0] sm:$0x1]
        %v3483 = vld [vmem:[#allocation3 + $0xa8] sm:$0x1]
        %v3484 = vld [vmem:[#allocation3 + $0xb0] sm:$0x1]
        %v3485 = vld [vmem:[#allocation3 + $0xb8] sm:$0x1]
        %v3486 = vpack.c.bf16 %v3470, %v3462
        %v3487 = vpack.c.bf16 %v3471, %v3463
        %v3488 = vpack.c.bf16 %v3472, %v3464
        %v3489 = vpack.c.bf16 %v3473, %v3465
        %v3490 = vpack.c.bf16 %v3474, %v3466
        %v3491 = vpack.c.bf16 %v3475, %v3467
        %v3492 = vpack.c.bf16 %v3476, %v3468
        %v3493 = vpack.c.bf16 %v3477, %v3469
        %v3494 = vpack.c.bf16 %v3478, %v3478
        %v3495 = vpack.c.bf16 %v3479, %v3479
        %v3496 = vpack.c.bf16 %v3480, %v3480
        %v3497 = vpack.c.bf16 %v3481, %v3481
        %v3498 = vpack.c.bf16 %v3482, %v3482
        %v3499 = vpack.c.bf16 %v3483, %v3483
        %v3500 = vpack.c.bf16 %v3484, %v3484
        %v3501 = vpack.c.bf16 %v3485, %v3485
        %s3502 = scalar_lea.vmem [#allocation11], 2048
        %v3503 = vld [vmem:[%s3502] sm:$0xff]
        %v3504 = vld [vmem:[%s3502 + $0x8] sm:$0xff]
        %v3505 = vld [vmem:[%s3502 + $0x10] sm:$0xff]
        %v3506 = vld [vmem:[%s3502 + $0x18] sm:$0xff]
        %v3507 = vld [vmem:[%s3502 + $0x20] sm:$0xff]
        %v3508 = vld [vmem:[%s3502 + $0x28] sm:$0xff]
        %v3509 = vld [vmem:[%s3502 + $0x30] sm:$0xff]
        %v3510 = vld [vmem:[%s3502 + $0x38] sm:$0xff]
        %v3511 = vld [vmem:[%s3502 + $0x40] sm:$0xff]
        %v3512 = vld [vmem:[%s3502 + $0x48] sm:$0xff]
        %v3513 = vld [vmem:[%s3502 + $0x50] sm:$0xff]
        %v3514 = vld [vmem:[%s3502 + $0x58] sm:$0xff]
        %v3515 = vld [vmem:[%s3502 + $0x60] sm:$0xff]
        %v3516 = vld [vmem:[%s3502 + $0x68] sm:$0xff]
        %v3517 = vld [vmem:[%s3502 + $0x70] sm:$0xff]
        %v3518 = vld [vmem:[%s3502 + $0x78] sm:$0xff]
        %v3519 = vld [vmem:[%s3502 + $0x80] sm:$0xff]
        %v3520 = vld [vmem:[%s3502 + $0x88] sm:$0xff]
        %v3521 = vld [vmem:[%s3502 + $0x90] sm:$0xff]
        %v3522 = vld [vmem:[%s3502 + $0x98] sm:$0xff]
        %v3523 = vld [vmem:[%s3502 + $0xa0] sm:$0xff]
        %v3524 = vld [vmem:[%s3502 + $0xa8] sm:$0xff]
        %v3525 = vld [vmem:[%s3502 + $0xb0] sm:$0xff]
        %v3526 = vld [vmem:[%s3502 + $0xb8] sm:$0xff]
        %v3527 = vld [vmem:[%s3502 + $0xc0] sm:$0xff]
        %v3528 = vld [vmem:[%s3502 + $0xc8] sm:$0xff]
        %v3529 = vld [vmem:[%s3502 + $0xd0] sm:$0xff]
        %v3530 = vld [vmem:[%s3502 + $0xd8] sm:$0xff]
        %v3531 = vld [vmem:[%s3502 + $0xe0] sm:$0xff]
        %v3532 = vld [vmem:[%s3502 + $0xe8] sm:$0xff]
        %v3533 = vld [vmem:[%s3502 + $0xf0] sm:$0xff]
        %v3534 = vld [vmem:[%s3502 + $0xf8] sm:$0xff]
        %v3535 = vld [vmem:[%s3502 + $0x100] sm:$0xff]
        %v3536 = vld [vmem:[%s3502 + $0x108] sm:$0xff]
        %v3537 = vld [vmem:[%s3502 + $0x110] sm:$0xff]
        %v3538 = vld [vmem:[%s3502 + $0x118] sm:$0xff]
        %v3539 = vld [vmem:[%s3502 + $0x120] sm:$0xff]
        %v3540 = vld [vmem:[%s3502 + $0x128] sm:$0xff]
        %v3541 = vld [vmem:[%s3502 + $0x130] sm:$0xff]
        %v3542 = vld [vmem:[%s3502 + $0x138] sm:$0xff]
        %v3543 = vld [vmem:[%s3502 + $0x140] sm:$0xff]
        %v3544 = vld [vmem:[%s3502 + $0x148] sm:$0xff]
        %v3545 = vld [vmem:[%s3502 + $0x150] sm:$0xff]
        %v3546 = vld [vmem:[%s3502 + $0x158] sm:$0xff]
        %v3547 = vld [vmem:[%s3502 + $0x160] sm:$0xff]
        %v3548 = vld [vmem:[%s3502 + $0x168] sm:$0xff]
        %v3549 = vld [vmem:[%s3502 + $0x170] sm:$0xff]
        %v3550 = vld [vmem:[%s3502 + $0x178] sm:$0xff]
        %v3551 = vld [vmem:[%s3502 + $0x180] sm:$0xff]
        %v3552 = vld [vmem:[%s3502 + $0x188] sm:$0xff]
        %v3553 = vld [vmem:[%s3502 + $0x190] sm:$0xff]
        %v3554 = vld [vmem:[%s3502 + $0x198] sm:$0xff]
        %v3555 = vld [vmem:[%s3502 + $0x1a0] sm:$0xff]
        %v3556 = vld [vmem:[%s3502 + $0x1a8] sm:$0xff]
        %v3557 = vld [vmem:[%s3502 + $0x1b0] sm:$0xff]
        %v3558 = vld [vmem:[%s3502 + $0x1b8] sm:$0xff]
        %v3559 = vld [vmem:[%s3502 + $0x1c0] sm:$0xff]
        %v3560 = vld [vmem:[%s3502 + $0x1c8] sm:$0xff]
        %v3561 = vld [vmem:[%s3502 + $0x1d0] sm:$0xff]
        %v3562 = vld [vmem:[%s3502 + $0x1d8] sm:$0xff]
        %v3563 = vld [vmem:[%s3502 + $0x1e0] sm:$0xff]
        %v3564 = vld [vmem:[%s3502 + $0x1e8] sm:$0xff]
        %v3565 = vld [vmem:[%s3502 + $0x1f0] sm:$0xff]
        %v3566 = vld [vmem:[%s3502 + $0x1f8] sm:$0xff]
        %v3567 = vld [vmem:[%s3502 + $0x200] sm:$0xff]
        %v3568 = vld [vmem:[%s3502 + $0x208] sm:$0xff]
        %v3569 = vld [vmem:[%s3502 + $0x210] sm:$0xff]
        %v3570 = vld [vmem:[%s3502 + $0x218] sm:$0xff]
        %v3571 = vld [vmem:[%s3502 + $0x220] sm:$0xff]
        %v3572 = vld [vmem:[%s3502 + $0x228] sm:$0xff]
        %v3573 = vld [vmem:[%s3502 + $0x230] sm:$0xff]
        %v3574 = vld [vmem:[%s3502 + $0x238] sm:$0xff]
        %v3575 = vld [vmem:[%s3502 + $0x240] sm:$0xff]
        %v3576 = vld [vmem:[%s3502 + $0x248] sm:$0xff]
        %v3577 = vld [vmem:[%s3502 + $0x250] sm:$0xff]
        %v3578 = vld [vmem:[%s3502 + $0x258] sm:$0xff]
        %v3579 = vld [vmem:[%s3502 + $0x260] sm:$0xff]
        %v3580 = vld [vmem:[%s3502 + $0x268] sm:$0xff]
        %v3581 = vld [vmem:[%s3502 + $0x270] sm:$0xff]
        %v3582 = vld [vmem:[%s3502 + $0x278] sm:$0xff]
        %v3583 = vld [vmem:[%s3502 + $0x280] sm:$0xff]
        %v3584 = vld [vmem:[%s3502 + $0x288] sm:$0xff]
        %v3585 = vld [vmem:[%s3502 + $0x290] sm:$0xff]
        %v3586 = vld [vmem:[%s3502 + $0x298] sm:$0xff]
        %v3587 = vld [vmem:[%s3502 + $0x2a0] sm:$0xff]
        %v3588 = vld [vmem:[%s3502 + $0x2a8] sm:$0xff]
        %v3589 = vld [vmem:[%s3502 + $0x2b0] sm:$0xff]
        %v3590 = vld [vmem:[%s3502 + $0x2b8] sm:$0xff]
        %v3591 = vld [vmem:[%s3502 + $0x2c0] sm:$0xff]
        %v3592 = vld [vmem:[%s3502 + $0x2c8] sm:$0xff]
        %v3593 = vld [vmem:[%s3502 + $0x2d0] sm:$0xff]
        %v3594 = vld [vmem:[%s3502 + $0x2d8] sm:$0xff]
        %v3595 = vld [vmem:[%s3502 + $0x2e0] sm:$0xff]
        %v3596 = vld [vmem:[%s3502 + $0x2e8] sm:$0xff]
        %v3597 = vld [vmem:[%s3502 + $0x2f0] sm:$0xff]
        %v3598 = vld [vmem:[%s3502 + $0x2f8] sm:$0xff]
        %v3599 = vld [vmem:[%s3502 + $0x300] sm:$0xff]
        %v3600 = vld [vmem:[%s3502 + $0x308] sm:$0xff]
        %v3601 = vld [vmem:[%s3502 + $0x310] sm:$0xff]
        %v3602 = vld [vmem:[%s3502 + $0x318] sm:$0xff]
        %v3603 = vld [vmem:[%s3502 + $0x320] sm:$0xff]
        %v3604 = vld [vmem:[%s3502 + $0x328] sm:$0xff]
        %v3605 = vld [vmem:[%s3502 + $0x330] sm:$0xff]
        %v3606 = vld [vmem:[%s3502 + $0x338] sm:$0xff]
        %v3607 = vld [vmem:[%s3502 + $0x340] sm:$0xff]
        %v3608 = vld [vmem:[%s3502 + $0x348] sm:$0xff]
        %v3609 = vld [vmem:[%s3502 + $0x350] sm:$0xff]
        %v3610 = vld [vmem:[%s3502 + $0x358] sm:$0xff]
        %v3611 = vld [vmem:[%s3502 + $0x360] sm:$0xff]
        %v3612 = vld [vmem:[%s3502 + $0x368] sm:$0xff]
        %v3613 = vld [vmem:[%s3502 + $0x370] sm:$0xff]
        %v3614 = vld [vmem:[%s3502 + $0x378] sm:$0xff]
        %v3615 = vld [vmem:[%s3502 + $0x380] sm:$0xff]
        %v3616 = vld [vmem:[%s3502 + $0x388] sm:$0xff]
        %v3617 = vld [vmem:[%s3502 + $0x390] sm:$0xff]
        %v3618 = vld [vmem:[%s3502 + $0x398] sm:$0xff]
        %v3619 = vld [vmem:[%s3502 + $0x3a0] sm:$0xff]
        %v3620 = vld [vmem:[%s3502 + $0x3a8] sm:$0xff]
        %v3621 = vld [vmem:[%s3502 + $0x3b0] sm:$0xff]
        %v3622 = vld [vmem:[%s3502 + $0x3b8] sm:$0xff]
        %v3623 = vld [vmem:[%s3502 + $0x3c0] sm:$0xff]
        %v3624 = vld [vmem:[%s3502 + $0x3c8] sm:$0xff]
        %v3625 = vld [vmem:[%s3502 + $0x3d0] sm:$0xff]
        %v3626 = vld [vmem:[%s3502 + $0x3d8] sm:$0xff]
        %v3627 = vld [vmem:[%s3502 + $0x3e0] sm:$0xff]
        %v3628 = vld [vmem:[%s3502 + $0x3e8] sm:$0xff]
        %v3629 = vld [vmem:[%s3502 + $0x3f0] sm:$0xff]
        %v3630 = vld [vmem:[%s3502 + $0x3f8] sm:$0xff]
        %v3631 = vld [vmem:[%s3502 + $0x400] sm:$0xff]
        %v3632 = vld [vmem:[%s3502 + $0x408] sm:$0xff]
        %v3633 = vld [vmem:[%s3502 + $0x410] sm:$0xff]
        %v3634 = vld [vmem:[%s3502 + $0x418] sm:$0xff]
        %v3635 = vld [vmem:[%s3502 + $0x420] sm:$0xff]
        %v3636 = vld [vmem:[%s3502 + $0x428] sm:$0xff]
        %v3637 = vld [vmem:[%s3502 + $0x430] sm:$0xff]
        %v3638 = vld [vmem:[%s3502 + $0x438] sm:$0xff]
        %v3639 = vld [vmem:[%s3502 + $0x440] sm:$0xff]
        %v3640 = vld [vmem:[%s3502 + $0x448] sm:$0xff]
        %v3641 = vld [vmem:[%s3502 + $0x450] sm:$0xff]
        %v3642 = vld [vmem:[%s3502 + $0x458] sm:$0xff]
        %v3643 = vld [vmem:[%s3502 + $0x460] sm:$0xff]
        %v3644 = vld [vmem:[%s3502 + $0x468] sm:$0xff]
        %v3645 = vld [vmem:[%s3502 + $0x470] sm:$0xff]
        %v3646 = vld [vmem:[%s3502 + $0x478] sm:$0xff]
        %v3647 = vld [vmem:[%s3502 + $0x480] sm:$0xff]
        %v3648 = vld [vmem:[%s3502 + $0x488] sm:$0xff]
        %v3649 = vld [vmem:[%s3502 + $0x490] sm:$0xff]
        %v3650 = vld [vmem:[%s3502 + $0x498] sm:$0xff]
        %v3651 = vld [vmem:[%s3502 + $0x4a0] sm:$0xff]
        %v3652 = vld [vmem:[%s3502 + $0x4a8] sm:$0xff]
        %v3653 = vld [vmem:[%s3502 + $0x4b0] sm:$0xff]
        %v3654 = vld [vmem:[%s3502 + $0x4b8] sm:$0xff]
        %v3655 = vld [vmem:[%s3502 + $0x4c0] sm:$0xff]
        %v3656 = vld [vmem:[%s3502 + $0x4c8] sm:$0xff]
        %v3657 = vld [vmem:[%s3502 + $0x4d0] sm:$0xff]
        %v3658 = vld [vmem:[%s3502 + $0x4d8] sm:$0xff]
        %v3659 = vld [vmem:[%s3502 + $0x4e0] sm:$0xff]
        %v3660 = vld [vmem:[%s3502 + $0x4e8] sm:$0xff]
        %v3661 = vld [vmem:[%s3502 + $0x4f0] sm:$0xff]
        %v3662 = vld [vmem:[%s3502 + $0x4f8] sm:$0xff]
        %v3663 = vld [vmem:[%s3502 + $0x500] sm:$0xff]
        %v3664 = vld [vmem:[%s3502 + $0x508] sm:$0xff]
        %v3665 = vld [vmem:[%s3502 + $0x510] sm:$0xff]
        %v3666 = vld [vmem:[%s3502 + $0x518] sm:$0xff]
        %v3667 = vld [vmem:[%s3502 + $0x520] sm:$0xff]
        %v3668 = vld [vmem:[%s3502 + $0x528] sm:$0xff]
        %v3669 = vld [vmem:[%s3502 + $0x530] sm:$0xff]
        %v3670 = vld [vmem:[%s3502 + $0x538] sm:$0xff]
        %v3671 = vld [vmem:[%s3502 + $0x540] sm:$0xff]
        %v3672 = vld [vmem:[%s3502 + $0x548] sm:$0xff]
        %v3673 = vld [vmem:[%s3502 + $0x550] sm:$0xff]
        %v3674 = vld [vmem:[%s3502 + $0x558] sm:$0xff]
        %v3675 = vld [vmem:[%s3502 + $0x560] sm:$0xff]
        %v3676 = vld [vmem:[%s3502 + $0x568] sm:$0xff]
        %v3677 = vld [vmem:[%s3502 + $0x570] sm:$0xff]
        %v3678 = vld [vmem:[%s3502 + $0x578] sm:$0xff]
        %v3679 = vld [vmem:[%s3502 + $0x580] sm:$0xff]
        %v3680 = vld [vmem:[%s3502 + $0x588] sm:$0xff]
        %v3681 = vld [vmem:[%s3502 + $0x590] sm:$0xff]
        %v3682 = vld [vmem:[%s3502 + $0x598] sm:$0xff]
        %v3683 = vld [vmem:[%s3502 + $0x5a0] sm:$0xff]
        %v3684 = vld [vmem:[%s3502 + $0x5a8] sm:$0xff]
        %v3685 = vld [vmem:[%s3502 + $0x5b0] sm:$0xff]
        %v3686 = vld [vmem:[%s3502 + $0x5b8] sm:$0xff]
        %v3687 = vld [vmem:[%s3502 + $0x5c0] sm:$0xff]
        %v3688 = vld [vmem:[%s3502 + $0x5c8] sm:$0xff]
        %v3689 = vld [vmem:[%s3502 + $0x5d0] sm:$0xff]
        %v3690 = vld [vmem:[%s3502 + $0x5d8] sm:$0xff]
        %v3691 = vld [vmem:[%s3502 + $0x5e0] sm:$0xff]
        %v3692 = vld [vmem:[%s3502 + $0x5e8] sm:$0xff]
        %v3693 = vld [vmem:[%s3502 + $0x5f0] sm:$0xff]
        %v3694 = vld [vmem:[%s3502 + $0x5f8] sm:$0xff]
        %v3695 = vld [vmem:[%s3502 + $0x600] sm:$0xff]
        %v3696 = vld [vmem:[%s3502 + $0x608] sm:$0xff]
        %v3697 = vld [vmem:[%s3502 + $0x610] sm:$0xff]
        %v3698 = vld [vmem:[%s3502 + $0x618] sm:$0xff]
        %v3699 = vld [vmem:[%s3502 + $0x620] sm:$0xff]
        %v3700 = vld [vmem:[%s3502 + $0x628] sm:$0xff]
        %v3701 = vld [vmem:[%s3502 + $0x630] sm:$0xff]
        %v3702 = vld [vmem:[%s3502 + $0x638] sm:$0xff]
        %v3703 = vld [vmem:[%s3502 + $0x640] sm:$0xff]
        %v3704 = vld [vmem:[%s3502 + $0x648] sm:$0xff]
        %v3705 = vld [vmem:[%s3502 + $0x650] sm:$0xff]
        %v3706 = vld [vmem:[%s3502 + $0x658] sm:$0xff]
        %v3707 = vld [vmem:[%s3502 + $0x660] sm:$0xff]
        %v3708 = vld [vmem:[%s3502 + $0x668] sm:$0xff]
        %v3709 = vld [vmem:[%s3502 + $0x670] sm:$0xff]
        %v3710 = vld [vmem:[%s3502 + $0x678] sm:$0xff]
        %v3711 = vld [vmem:[%s3502 + $0x680] sm:$0xff]
        %v3712 = vld [vmem:[%s3502 + $0x688] sm:$0xff]
        %v3713 = vld [vmem:[%s3502 + $0x690] sm:$0xff]
        %v3714 = vld [vmem:[%s3502 + $0x698] sm:$0xff]
        %v3715 = vld [vmem:[%s3502 + $0x6a0] sm:$0xff]
        %v3716 = vld [vmem:[%s3502 + $0x6a8] sm:$0xff]
        %v3717 = vld [vmem:[%s3502 + $0x6b0] sm:$0xff]
        %v3718 = vld [vmem:[%s3502 + $0x6b8] sm:$0xff]
        %v3719 = vld [vmem:[%s3502 + $0x6c0] sm:$0xff]
        %v3720 = vld [vmem:[%s3502 + $0x6c8] sm:$0xff]
        %v3721 = vld [vmem:[%s3502 + $0x6d0] sm:$0xff]
        %v3722 = vld [vmem:[%s3502 + $0x6d8] sm:$0xff]
        %v3723 = vld [vmem:[%s3502 + $0x6e0] sm:$0xff]
        %v3724 = vld [vmem:[%s3502 + $0x6e8] sm:$0xff]
        %v3725 = vld [vmem:[%s3502 + $0x6f0] sm:$0xff]
        %v3726 = vld [vmem:[%s3502 + $0x6f8] sm:$0xff]
        %v3727 = vld [vmem:[%s3502 + $0x700] sm:$0xff]
        %v3728 = vld [vmem:[%s3502 + $0x708] sm:$0xff]
        %v3729 = vld [vmem:[%s3502 + $0x710] sm:$0xff]
        %v3730 = vld [vmem:[%s3502 + $0x718] sm:$0xff]
        %v3731 = vld [vmem:[%s3502 + $0x720] sm:$0xff]
        %v3732 = vld [vmem:[%s3502 + $0x728] sm:$0xff]
        %v3733 = vld [vmem:[%s3502 + $0x730] sm:$0xff]
        %v3734 = vld [vmem:[%s3502 + $0x738] sm:$0xff]
        %v3735 = vld [vmem:[%s3502 + $0x740] sm:$0xff]
        %v3736 = vld [vmem:[%s3502 + $0x748] sm:$0xff]
        %v3737 = vld [vmem:[%s3502 + $0x750] sm:$0xff]
        %v3738 = vld [vmem:[%s3502 + $0x758] sm:$0xff]
        %v3739 = vld [vmem:[%s3502 + $0x760] sm:$0xff]
        %v3740 = vld [vmem:[%s3502 + $0x768] sm:$0xff]
        %v3741 = vld [vmem:[%s3502 + $0x770] sm:$0xff]
        %v3742 = vld [vmem:[%s3502 + $0x778] sm:$0xff]
        %v3743 = vld [vmem:[%s3502 + $0x780] sm:$0xff]
        %v3744 = vld [vmem:[%s3502 + $0x788] sm:$0xff]
        %v3745 = vld [vmem:[%s3502 + $0x790] sm:$0xff]
        %v3746 = vld [vmem:[%s3502 + $0x798] sm:$0xff]
        %v3747 = vld [vmem:[%s3502 + $0x7a0] sm:$0xff]
        %v3748 = vld [vmem:[%s3502 + $0x7a8] sm:$0xff]
        %v3749 = vld [vmem:[%s3502 + $0x7b0] sm:$0xff]
        %v3750 = vld [vmem:[%s3502 + $0x7b8] sm:$0xff]
        %v3751 = vld [vmem:[%s3502 + $0x7c0] sm:$0xff]
        %v3752 = vld [vmem:[%s3502 + $0x7c8] sm:$0xff]
        %v3753 = vld [vmem:[%s3502 + $0x7d0] sm:$0xff]
        %v3754 = vld [vmem:[%s3502 + $0x7d8] sm:$0xff]
        %v3755 = vld [vmem:[%s3502 + $0x7e0] sm:$0xff]
        %v3756 = vld [vmem:[%s3502 + $0x7e8] sm:$0xff]
        %v3757 = vld [vmem:[%s3502 + $0x7f0] sm:$0xff]
        %v3758 = vld [vmem:[%s3502 + $0x7f8] sm:$0xff]
        %vm3759 = vsmask.f32 7424
        %v3761 = vshrl.u32 %v3486, 16
        %v3763 = vshll.u32 %v3486, 16
        %v3765 = vrot.slane %v3763, 1
        %v3766 = vor.u32 %v3761, %v3765
        %v3768 = vshll.u32 %v3494, 16
        %v3770 = vrot.slane %v3768, 1
        %v3771 = vsel %vm3759, %v3766, %v3770
        %v3773 = vshrl.u32 %v3487, 16
        %v3775 = vshll.u32 %v3487, 16
        %v3777 = vrot.slane %v3775, 1
        %v3778 = vor.u32 %v3773, %v3777
        %v3780 = vshll.u32 %v3495, 16
        %v3782 = vrot.slane %v3780, 1
        %v3783 = vsel %vm3759, %v3778, %v3782
        %v3785 = vshrl.u32 %v3488, 16
        %v3787 = vshll.u32 %v3488, 16
        %v3789 = vrot.slane %v3787, 1
        %v3790 = vor.u32 %v3785, %v3789
        %v3792 = vshll.u32 %v3496, 16
        %v3794 = vrot.slane %v3792, 1
        %v3795 = vsel %vm3759, %v3790, %v3794
        %v3797 = vshrl.u32 %v3489, 16
        %v3799 = vshll.u32 %v3489, 16
        %v3801 = vrot.slane %v3799, 1
        %v3802 = vor.u32 %v3797, %v3801
        %v3804 = vshll.u32 %v3497, 16
        %v3806 = vrot.slane %v3804, 1
        %v3807 = vsel %vm3759, %v3802, %v3806
        %v3809 = vshrl.u32 %v3490, 16
        %v3811 = vshll.u32 %v3490, 16
        %v3813 = vrot.slane %v3811, 1
        %v3814 = vor.u32 %v3809, %v3813
        %v3816 = vshll.u32 %v3498, 16
        %v3818 = vrot.slane %v3816, 1
        %v3819 = vsel %vm3759, %v3814, %v3818
        %v3821 = vshrl.u32 %v3491, 16
        %v3823 = vshll.u32 %v3491, 16
        %v3825 = vrot.slane %v3823, 1
        %v3826 = vor.u32 %v3821, %v3825
        %v3828 = vshll.u32 %v3499, 16
        %v3830 = vrot.slane %v3828, 1
        %v3831 = vsel %vm3759, %v3826, %v3830
        %v3833 = vshrl.u32 %v3492, 16
        %v3835 = vshll.u32 %v3492, 16
        %v3837 = vrot.slane %v3835, 1
        %v3838 = vor.u32 %v3833, %v3837
        %v3840 = vshll.u32 %v3500, 16
        %v3842 = vrot.slane %v3840, 1
        %v3843 = vsel %vm3759, %v3838, %v3842
        %v3845 = vshrl.u32 %v3493, 16
        %v3847 = vshll.u32 %v3493, 16
        %v3849 = vrot.slane %v3847, 1
        %v3850 = vor.u32 %v3845, %v3849
        %v3852 = vshll.u32 %v3501, 16
        %v3854 = vrot.slane %v3852, 1
        %v3855 = vsel %vm3759, %v3850, %v3854
        %v4120 = vunpack.c.l.b16 %v3503
        %v4121 = vunpack.c.h.b16 %v3503
        %v4122 = vunpack.c.l.b16 %v3504
        %v4123 = vunpack.c.h.b16 %v3504
        %v4124 = vunpack.c.l.b16 %v3505
        %v4125 = vunpack.c.h.b16 %v3505
        %v4126 = vunpack.c.l.b16 %v3506
        %v4127 = vunpack.c.h.b16 %v3506
        %v4128 = vunpack.c.l.b16 %v3507
        %v4129 = vunpack.c.h.b16 %v3507
        %v4130 = vunpack.c.l.b16 %v3508
        %v4131 = vunpack.c.h.b16 %v3508
        %v4132 = vunpack.c.l.b16 %v3509
        %v4133 = vunpack.c.h.b16 %v3509
        %v4134 = vunpack.c.l.b16 %v3510
        %v4135 = vunpack.c.h.b16 %v3510
        %v4136 = vunpack.c.l.b16 %v3511
        %v4137 = vunpack.c.h.b16 %v3511
        %v4138 = vunpack.c.l.b16 %v3512
        %v4139 = vunpack.c.h.b16 %v3512
        %v4140 = vunpack.c.l.b16 %v3513
        %v4141 = vunpack.c.h.b16 %v3513
        %v4142 = vunpack.c.l.b16 %v3514
        %v4143 = vunpack.c.h.b16 %v3514
        %v4144 = vunpack.c.l.b16 %v3515
        %v4145 = vunpack.c.h.b16 %v3515
        %v4146 = vunpack.c.l.b16 %v3516
        %v4147 = vunpack.c.h.b16 %v3516
        %v4148 = vunpack.c.l.b16 %v3517
        %v4149 = vunpack.c.h.b16 %v3517
        %v4150 = vunpack.c.l.b16 %v3518
        %v4151 = vunpack.c.h.b16 %v3518
        %v4152 = vunpack.c.l.b16 %v3519
        %v4153 = vunpack.c.h.b16 %v3519
        %v4154 = vunpack.c.l.b16 %v3520
        %v4155 = vunpack.c.h.b16 %v3520
        %v4156 = vunpack.c.l.b16 %v3521
        %v4157 = vunpack.c.h.b16 %v3521
        %v4158 = vunpack.c.l.b16 %v3522
        %v4159 = vunpack.c.h.b16 %v3522
        %v4160 = vunpack.c.l.b16 %v3523
        %v4161 = vunpack.c.h.b16 %v3523
        %v4162 = vunpack.c.l.b16 %v3524
        %v4163 = vunpack.c.h.b16 %v3524
        %v4164 = vunpack.c.l.b16 %v3525
        %v4165 = vunpack.c.h.b16 %v3525
        %v4166 = vunpack.c.l.b16 %v3526
        %v4167 = vunpack.c.h.b16 %v3526
        %v4168 = vunpack.c.l.b16 %v3527
        %v4169 = vunpack.c.h.b16 %v3527
        %v4170 = vunpack.c.l.b16 %v3528
        %v4171 = vunpack.c.h.b16 %v3528
        %v4172 = vunpack.c.l.b16 %v3529
        %v4173 = vunpack.c.h.b16 %v3529
        %v4174 = vunpack.c.l.b16 %v3530
        %v4175 = vunpack.c.h.b16 %v3530
        %v4176 = vunpack.c.l.b16 %v3531
        %v4177 = vunpack.c.h.b16 %v3531
        %v4178 = vunpack.c.l.b16 %v3532
        %v4179 = vunpack.c.h.b16 %v3532
        %v4180 = vunpack.c.l.b16 %v3533
        %v4181 = vunpack.c.h.b16 %v3533
        %v4182 = vunpack.c.l.b16 %v3534
        %v4183 = vunpack.c.h.b16 %v3534
        %v4184 = vunpack.c.l.b16 %v3535
        %v4185 = vunpack.c.h.b16 %v3535
        %v4186 = vunpack.c.l.b16 %v3536
        %v4187 = vunpack.c.h.b16 %v3536
        %v4188 = vunpack.c.l.b16 %v3537
        %v4189 = vunpack.c.h.b16 %v3537
        %v4190 = vunpack.c.l.b16 %v3538
        %v4191 = vunpack.c.h.b16 %v3538
        %v4192 = vunpack.c.l.b16 %v3539
        %v4193 = vunpack.c.h.b16 %v3539
        %v4194 = vunpack.c.l.b16 %v3540
        %v4195 = vunpack.c.h.b16 %v3540
        %v4196 = vunpack.c.l.b16 %v3541
        %v4197 = vunpack.c.h.b16 %v3541
        %v4198 = vunpack.c.l.b16 %v3542
        %v4199 = vunpack.c.h.b16 %v3542
        %v4200 = vunpack.c.l.b16 %v3543
        %v4201 = vunpack.c.h.b16 %v3543
        %v4202 = vunpack.c.l.b16 %v3544
        %v4203 = vunpack.c.h.b16 %v3544
        %v4204 = vunpack.c.l.b16 %v3545
        %v4205 = vunpack.c.h.b16 %v3545
        %v4206 = vunpack.c.l.b16 %v3546
        %v4207 = vunpack.c.h.b16 %v3546
        %v4208 = vunpack.c.l.b16 %v3547
        %v4209 = vunpack.c.h.b16 %v3547
        %v4210 = vunpack.c.l.b16 %v3548
        %v4211 = vunpack.c.h.b16 %v3548
        %v4212 = vunpack.c.l.b16 %v3549
        %v4213 = vunpack.c.h.b16 %v3549
        %v4214 = vunpack.c.l.b16 %v3550
        %v4215 = vunpack.c.h.b16 %v3550
        %v4216 = vunpack.c.l.b16 %v3551
        %v4217 = vunpack.c.h.b16 %v3551
        %v4218 = vunpack.c.l.b16 %v3552
        %v4219 = vunpack.c.h.b16 %v3552
        %v4220 = vunpack.c.l.b16 %v3553
        %v4221 = vunpack.c.h.b16 %v3553
        %v4222 = vunpack.c.l.b16 %v3554
        %v4223 = vunpack.c.h.b16 %v3554
        %v4224 = vunpack.c.l.b16 %v3555
        %v4225 = vunpack.c.h.b16 %v3555
        %v4226 = vunpack.c.l.b16 %v3556
        %v4227 = vunpack.c.h.b16 %v3556
        %v4228 = vunpack.c.l.b16 %v3557
        %v4229 = vunpack.c.h.b16 %v3557
        %v4230 = vunpack.c.l.b16 %v3558
        %v4231 = vunpack.c.h.b16 %v3558
        %v4232 = vunpack.c.l.b16 %v3559
        %v4233 = vunpack.c.h.b16 %v3559
        %v4234 = vunpack.c.l.b16 %v3560
        %v4235 = vunpack.c.h.b16 %v3560
        %v4236 = vunpack.c.l.b16 %v3561
        %v4237 = vunpack.c.h.b16 %v3561
        %v4238 = vunpack.c.l.b16 %v3562
        %v4239 = vunpack.c.h.b16 %v3562
        %v4240 = vunpack.c.l.b16 %v3563
        %v4241 = vunpack.c.h.b16 %v3563
        %v4242 = vunpack.c.l.b16 %v3564
        %v4243 = vunpack.c.h.b16 %v3564
        %v4244 = vunpack.c.l.b16 %v3565
        %v4245 = vunpack.c.h.b16 %v3565
        %v4246 = vunpack.c.l.b16 %v3566
        %v4247 = vunpack.c.h.b16 %v3566
        %v4248 = vunpack.c.l.b16 %v3567
        %v4249 = vunpack.c.h.b16 %v3567
        %v4250 = vunpack.c.l.b16 %v3568
        %v4251 = vunpack.c.h.b16 %v3568
        %v4252 = vunpack.c.l.b16 %v3569
        %v4253 = vunpack.c.h.b16 %v3569
        %v4254 = vunpack.c.l.b16 %v3570
        %v4255 = vunpack.c.h.b16 %v3570
        %v4256 = vunpack.c.l.b16 %v3571
        %v4257 = vunpack.c.h.b16 %v3571
        %v4258 = vunpack.c.l.b16 %v3572
        %v4259 = vunpack.c.h.b16 %v3572
        %v4260 = vunpack.c.l.b16 %v3573
        %v4261 = vunpack.c.h.b16 %v3573
        %v4262 = vunpack.c.l.b16 %v3574
        %v4263 = vunpack.c.h.b16 %v3574
        %v4264 = vunpack.c.l.b16 %v3575
        %v4265 = vunpack.c.h.b16 %v3575
        %v4266 = vunpack.c.l.b16 %v3576
        %v4267 = vunpack.c.h.b16 %v3576
        %v4268 = vunpack.c.l.b16 %v3577
        %v4269 = vunpack.c.h.b16 %v3577
        %v4270 = vunpack.c.l.b16 %v3578
        %v4271 = vunpack.c.h.b16 %v3578
        %v4272 = vunpack.c.l.b16 %v3579
        %v4273 = vunpack.c.h.b16 %v3579
        %v4274 = vunpack.c.l.b16 %v3580
        %v4275 = vunpack.c.h.b16 %v3580
        %v4276 = vunpack.c.l.b16 %v3581
        %v4277 = vunpack.c.h.b16 %v3581
        %v4278 = vunpack.c.l.b16 %v3582
        %v4279 = vunpack.c.h.b16 %v3582
        %v4280 = vunpack.c.l.b16 %v3583
        %v4281 = vunpack.c.h.b16 %v3583
        %v4282 = vunpack.c.l.b16 %v3584
        %v4283 = vunpack.c.h.b16 %v3584
        %v4284 = vunpack.c.l.b16 %v3585
        %v4285 = vunpack.c.h.b16 %v3585
        %v4286 = vunpack.c.l.b16 %v3586
        %v4287 = vunpack.c.h.b16 %v3586
        %v4288 = vunpack.c.l.b16 %v3587
        %v4289 = vunpack.c.h.b16 %v3587
        %v4290 = vunpack.c.l.b16 %v3588
        %v4291 = vunpack.c.h.b16 %v3588
        %v4292 = vunpack.c.l.b16 %v3589
        %v4293 = vunpack.c.h.b16 %v3589
        %v4294 = vunpack.c.l.b16 %v3590
        %v4295 = vunpack.c.h.b16 %v3590
        %v4296 = vunpack.c.l.b16 %v3591
        %v4297 = vunpack.c.h.b16 %v3591
        %v4298 = vunpack.c.l.b16 %v3592
        %v4299 = vunpack.c.h.b16 %v3592
        %v4300 = vunpack.c.l.b16 %v3593
        %v4301 = vunpack.c.h.b16 %v3593
        %v4302 = vunpack.c.l.b16 %v3594
        %v4303 = vunpack.c.h.b16 %v3594
        %v4304 = vunpack.c.l.b16 %v3595
        %v4305 = vunpack.c.h.b16 %v3595
        %v4306 = vunpack.c.l.b16 %v3596
        %v4307 = vunpack.c.h.b16 %v3596
        %v4308 = vunpack.c.l.b16 %v3597
        %v4309 = vunpack.c.h.b16 %v3597
        %v4310 = vunpack.c.l.b16 %v3598
        %v4311 = vunpack.c.h.b16 %v3598
        %v4312 = vunpack.c.l.b16 %v3599
        %v4313 = vunpack.c.h.b16 %v3599
        %v4314 = vunpack.c.l.b16 %v3600
        %v4315 = vunpack.c.h.b16 %v3600
        %v4316 = vunpack.c.l.b16 %v3601
        %v4317 = vunpack.c.h.b16 %v3601
        %v4318 = vunpack.c.l.b16 %v3602
        %v4319 = vunpack.c.h.b16 %v3602
        %v4320 = vunpack.c.l.b16 %v3603
        %v4321 = vunpack.c.h.b16 %v3603
        %v4322 = vunpack.c.l.b16 %v3604
        %v4323 = vunpack.c.h.b16 %v3604
        %v4324 = vunpack.c.l.b16 %v3605
        %v4325 = vunpack.c.h.b16 %v3605
        %v4326 = vunpack.c.l.b16 %v3606
        %v4327 = vunpack.c.h.b16 %v3606
        %v4328 = vunpack.c.l.b16 %v3607
        %v4329 = vunpack.c.h.b16 %v3607
        %v4330 = vunpack.c.l.b16 %v3608
        %v4331 = vunpack.c.h.b16 %v3608
        %v4332 = vunpack.c.l.b16 %v3609
        %v4333 = vunpack.c.h.b16 %v3609
        %v4334 = vunpack.c.l.b16 %v3610
        %v4335 = vunpack.c.h.b16 %v3610
        %v4336 = vunpack.c.l.b16 %v3611
        %v4337 = vunpack.c.h.b16 %v3611
        %v4338 = vunpack.c.l.b16 %v3612
        %v4339 = vunpack.c.h.b16 %v3612
        %v4340 = vunpack.c.l.b16 %v3613
        %v4341 = vunpack.c.h.b16 %v3613
        %v4342 = vunpack.c.l.b16 %v3614
        %v4343 = vunpack.c.h.b16 %v3614
        %v4344 = vunpack.c.l.b16 %v3615
        %v4345 = vunpack.c.h.b16 %v3615
        %v4346 = vunpack.c.l.b16 %v3616
        %v4347 = vunpack.c.h.b16 %v3616
        %v4348 = vunpack.c.l.b16 %v3617
        %v4349 = vunpack.c.h.b16 %v3617
        %v4350 = vunpack.c.l.b16 %v3618
        %v4351 = vunpack.c.h.b16 %v3618
        %v4352 = vunpack.c.l.b16 %v3619
        %v4353 = vunpack.c.h.b16 %v3619
        %v4354 = vunpack.c.l.b16 %v3620
        %v4355 = vunpack.c.h.b16 %v3620
        %v4356 = vunpack.c.l.b16 %v3621
        %v4357 = vunpack.c.h.b16 %v3621
        %v4358 = vunpack.c.l.b16 %v3622
        %v4359 = vunpack.c.h.b16 %v3622
        %v4360 = vunpack.c.l.b16 %v3623
        %v4361 = vunpack.c.h.b16 %v3623
        %v4362 = vunpack.c.l.b16 %v3624
        %v4363 = vunpack.c.h.b16 %v3624
        %v4364 = vunpack.c.l.b16 %v3625
        %v4365 = vunpack.c.h.b16 %v3625
        %v4366 = vunpack.c.l.b16 %v3626
        %v4367 = vunpack.c.h.b16 %v3626
        %v4368 = vunpack.c.l.b16 %v3627
        %v4369 = vunpack.c.h.b16 %v3627
        %v4370 = vunpack.c.l.b16 %v3628
        %v4371 = vunpack.c.h.b16 %v3628
        %v4372 = vunpack.c.l.b16 %v3629
        %v4373 = vunpack.c.h.b16 %v3629
        %v4374 = vunpack.c.l.b16 %v3630
        %v4375 = vunpack.c.h.b16 %v3630
        %v4376 = vunpack.c.l.b16 %v3631
        %v4377 = vunpack.c.h.b16 %v3631
        %v4378 = vunpack.c.l.b16 %v3632
        %v4379 = vunpack.c.h.b16 %v3632
        %v4380 = vunpack.c.l.b16 %v3633
        %v4381 = vunpack.c.h.b16 %v3633
        %v4382 = vunpack.c.l.b16 %v3634
        %v4383 = vunpack.c.h.b16 %v3634
        %v4384 = vunpack.c.l.b16 %v3635
        %v4385 = vunpack.c.h.b16 %v3635
        %v4386 = vunpack.c.l.b16 %v3636
        %v4387 = vunpack.c.h.b16 %v3636
        %v4388 = vunpack.c.l.b16 %v3637
        %v4389 = vunpack.c.h.b16 %v3637
        %v4390 = vunpack.c.l.b16 %v3638
        %v4391 = vunpack.c.h.b16 %v3638
        %v4392 = vunpack.c.l.b16 %v3639
        %v4393 = vunpack.c.h.b16 %v3639
        %v4394 = vunpack.c.l.b16 %v3640
        %v4395 = vunpack.c.h.b16 %v3640
        %v4396 = vunpack.c.l.b16 %v3641
        %v4397 = vunpack.c.h.b16 %v3641
        %v4398 = vunpack.c.l.b16 %v3642
        %v4399 = vunpack.c.h.b16 %v3642
        %v4400 = vunpack.c.l.b16 %v3643
        %v4401 = vunpack.c.h.b16 %v3643
        %v4402 = vunpack.c.l.b16 %v3644
        %v4403 = vunpack.c.h.b16 %v3644
        %v4404 = vunpack.c.l.b16 %v3645
        %v4405 = vunpack.c.h.b16 %v3645
        %v4406 = vunpack.c.l.b16 %v3646
        %v4407 = vunpack.c.h.b16 %v3646
        %v4408 = vunpack.c.l.b16 %v3647
        %v4409 = vunpack.c.h.b16 %v3647
        %v4410 = vunpack.c.l.b16 %v3648
        %v4411 = vunpack.c.h.b16 %v3648
        %v4412 = vunpack.c.l.b16 %v3649
        %v4413 = vunpack.c.h.b16 %v3649
        %v4414 = vunpack.c.l.b16 %v3650
        %v4415 = vunpack.c.h.b16 %v3650
        %v4416 = vunpack.c.l.b16 %v3651
        %v4417 = vunpack.c.h.b16 %v3651
        %v4418 = vunpack.c.l.b16 %v3652
        %v4419 = vunpack.c.h.b16 %v3652
        %v4420 = vunpack.c.l.b16 %v3653
        %v4421 = vunpack.c.h.b16 %v3653
        %v4422 = vunpack.c.l.b16 %v3654
        %v4423 = vunpack.c.h.b16 %v3654
        %v4424 = vunpack.c.l.b16 %v3655
        %v4425 = vunpack.c.h.b16 %v3655
        %v4426 = vunpack.c.l.b16 %v3656
        %v4427 = vunpack.c.h.b16 %v3656
        %v4428 = vunpack.c.l.b16 %v3657
        %v4429 = vunpack.c.h.b16 %v3657
        %v4430 = vunpack.c.l.b16 %v3658
        %v4431 = vunpack.c.h.b16 %v3658
        %v4432 = vunpack.c.l.b16 %v3659
        %v4433 = vunpack.c.h.b16 %v3659
        %v4434 = vunpack.c.l.b16 %v3660
        %v4435 = vunpack.c.h.b16 %v3660
        %v4436 = vunpack.c.l.b16 %v3661
        %v4437 = vunpack.c.h.b16 %v3661
        %v4438 = vunpack.c.l.b16 %v3662
        %v4439 = vunpack.c.h.b16 %v3662
        %v4440 = vunpack.c.l.b16 %v3663
        %v4441 = vunpack.c.h.b16 %v3663
        %v4442 = vunpack.c.l.b16 %v3664
        %v4443 = vunpack.c.h.b16 %v3664
        %v4444 = vunpack.c.l.b16 %v3665
        %v4445 = vunpack.c.h.b16 %v3665
        %v4446 = vunpack.c.l.b16 %v3666
        %v4447 = vunpack.c.h.b16 %v3666
        %v4448 = vunpack.c.l.b16 %v3667
        %v4449 = vunpack.c.h.b16 %v3667
        %v4450 = vunpack.c.l.b16 %v3668
        %v4451 = vunpack.c.h.b16 %v3668
        %v4452 = vunpack.c.l.b16 %v3669
        %v4453 = vunpack.c.h.b16 %v3669
        %v4454 = vunpack.c.l.b16 %v3670
        %v4455 = vunpack.c.h.b16 %v3670
        %v4456 = vunpack.c.l.b16 %v3671
        %v4457 = vunpack.c.h.b16 %v3671
        %v4458 = vunpack.c.l.b16 %v3672
        %v4459 = vunpack.c.h.b16 %v3672
        %v4460 = vunpack.c.l.b16 %v3673
        %v4461 = vunpack.c.h.b16 %v3673
        %v4462 = vunpack.c.l.b16 %v3674
        %v4463 = vunpack.c.h.b16 %v3674
        %v4464 = vunpack.c.l.b16 %v3675
        %v4465 = vunpack.c.h.b16 %v3675
        %v4466 = vunpack.c.l.b16 %v3676
        %v4467 = vunpack.c.h.b16 %v3676
        %v4468 = vunpack.c.l.b16 %v3677
        %v4469 = vunpack.c.h.b16 %v3677
        %v4470 = vunpack.c.l.b16 %v3678
        %v4471 = vunpack.c.h.b16 %v3678
        %v4472 = vunpack.c.l.b16 %v3679
        %v4473 = vunpack.c.h.b16 %v3679
        %v4474 = vunpack.c.l.b16 %v3680
        %v4475 = vunpack.c.h.b16 %v3680
        %v4476 = vunpack.c.l.b16 %v3681
        %v4477 = vunpack.c.h.b16 %v3681
        %v4478 = vunpack.c.l.b16 %v3682
        %v4479 = vunpack.c.h.b16 %v3682
        %v4480 = vunpack.c.l.b16 %v3683
        %v4481 = vunpack.c.h.b16 %v3683
        %v4482 = vunpack.c.l.b16 %v3684
        %v4483 = vunpack.c.h.b16 %v3684
        %v4484 = vunpack.c.l.b16 %v3685
        %v4485 = vunpack.c.h.b16 %v3685
        %v4486 = vunpack.c.l.b16 %v3686
        %v4487 = vunpack.c.h.b16 %v3686
        %v4488 = vunpack.c.l.b16 %v3687
        %v4489 = vunpack.c.h.b16 %v3687
        %v4490 = vunpack.c.l.b16 %v3688
        %v4491 = vunpack.c.h.b16 %v3688
        %v4492 = vunpack.c.l.b16 %v3689
        %v4493 = vunpack.c.h.b16 %v3689
        %v4494 = vunpack.c.l.b16 %v3690
        %v4495 = vunpack.c.h.b16 %v3690
        %v4496 = vunpack.c.l.b16 %v3691
        %v4497 = vunpack.c.h.b16 %v3691
        %v4498 = vunpack.c.l.b16 %v3692
        %v4499 = vunpack.c.h.b16 %v3692
        %v4500 = vunpack.c.l.b16 %v3693
        %v4501 = vunpack.c.h.b16 %v3693
        %v4502 = vunpack.c.l.b16 %v3694
        %v4503 = vunpack.c.h.b16 %v3694
        %v4504 = vunpack.c.l.b16 %v3695
        %v4505 = vunpack.c.h.b16 %v3695
        %v4506 = vunpack.c.l.b16 %v3696
        %v4507 = vunpack.c.h.b16 %v3696
        %v4508 = vunpack.c.l.b16 %v3697
        %v4509 = vunpack.c.h.b16 %v3697
        %v4510 = vunpack.c.l.b16 %v3698
        %v4511 = vunpack.c.h.b16 %v3698
        %v4512 = vunpack.c.l.b16 %v3699
        %v4513 = vunpack.c.h.b16 %v3699
        %v4514 = vunpack.c.l.b16 %v3700
        %v4515 = vunpack.c.h.b16 %v3700
        %v4516 = vunpack.c.l.b16 %v3701
        %v4517 = vunpack.c.h.b16 %v3701
        %v4518 = vunpack.c.l.b16 %v3702
        %v4519 = vunpack.c.h.b16 %v3702
        %v4520 = vunpack.c.l.b16 %v3703
        %v4521 = vunpack.c.h.b16 %v3703
        %v4522 = vunpack.c.l.b16 %v3704
        %v4523 = vunpack.c.h.b16 %v3704
        %v4524 = vunpack.c.l.b16 %v3705
        %v4525 = vunpack.c.h.b16 %v3705
        %v4526 = vunpack.c.l.b16 %v3706
        %v4527 = vunpack.c.h.b16 %v3706
        %v4528 = vunpack.c.l.b16 %v3707
        %v4529 = vunpack.c.h.b16 %v3707
        %v4530 = vunpack.c.l.b16 %v3708
        %v4531 = vunpack.c.h.b16 %v3708
        %v4532 = vunpack.c.l.b16 %v3709
        %v4533 = vunpack.c.h.b16 %v3709
        %v4534 = vunpack.c.l.b16 %v3710
        %v4535 = vunpack.c.h.b16 %v3710
        %v4536 = vunpack.c.l.b16 %v3711
        %v4537 = vunpack.c.h.b16 %v3711
        %v4538 = vunpack.c.l.b16 %v3712
        %v4539 = vunpack.c.h.b16 %v3712
        %v4540 = vunpack.c.l.b16 %v3713
        %v4541 = vunpack.c.h.b16 %v3713
        %v4542 = vunpack.c.l.b16 %v3714
        %v4543 = vunpack.c.h.b16 %v3714
        %v4544 = vunpack.c.l.b16 %v3715
        %v4545 = vunpack.c.h.b16 %v3715
        %v4546 = vunpack.c.l.b16 %v3716
        %v4547 = vunpack.c.h.b16 %v3716
        %v4548 = vunpack.c.l.b16 %v3717
        %v4549 = vunpack.c.h.b16 %v3717
        %v4550 = vunpack.c.l.b16 %v3718
        %v4551 = vunpack.c.h.b16 %v3718
        %v4552 = vunpack.c.l.b16 %v3719
        %v4553 = vunpack.c.h.b16 %v3719
        %v4554 = vunpack.c.l.b16 %v3720
        %v4555 = vunpack.c.h.b16 %v3720
        %v4556 = vunpack.c.l.b16 %v3721
        %v4557 = vunpack.c.h.b16 %v3721
        %v4558 = vunpack.c.l.b16 %v3722
        %v4559 = vunpack.c.h.b16 %v3722
        %v4560 = vunpack.c.l.b16 %v3723
        %v4561 = vunpack.c.h.b16 %v3723
        %v4562 = vunpack.c.l.b16 %v3724
        %v4563 = vunpack.c.h.b16 %v3724
        %v4564 = vunpack.c.l.b16 %v3725
        %v4565 = vunpack.c.h.b16 %v3725
        %v4566 = vunpack.c.l.b16 %v3726
        %v4567 = vunpack.c.h.b16 %v3726
        %v4568 = vunpack.c.l.b16 %v3727
        %v4569 = vunpack.c.h.b16 %v3727
        %v4570 = vunpack.c.l.b16 %v3728
        %v4571 = vunpack.c.h.b16 %v3728
        %v4572 = vunpack.c.l.b16 %v3729
        %v4573 = vunpack.c.h.b16 %v3729
        %v4574 = vunpack.c.l.b16 %v3730
        %v4575 = vunpack.c.h.b16 %v3730
        %v4576 = vunpack.c.l.b16 %v3731
        %v4577 = vunpack.c.h.b16 %v3731
        %v4578 = vunpack.c.l.b16 %v3732
        %v4579 = vunpack.c.h.b16 %v3732
        %v4580 = vunpack.c.l.b16 %v3733
        %v4581 = vunpack.c.h.b16 %v3733
        %v4582 = vunpack.c.l.b16 %v3734
        %v4583 = vunpack.c.h.b16 %v3734
        %v4584 = vunpack.c.l.b16 %v3735
        %v4585 = vunpack.c.h.b16 %v3735
        %v4586 = vunpack.c.l.b16 %v3736
        %v4587 = vunpack.c.h.b16 %v3736
        %v4588 = vunpack.c.l.b16 %v3737
        %v4589 = vunpack.c.h.b16 %v3737
        %v4590 = vunpack.c.l.b16 %v3738
        %v4591 = vunpack.c.h.b16 %v3738
        %v4592 = vunpack.c.l.b16 %v3739
        %v4593 = vunpack.c.h.b16 %v3739
        %v4594 = vunpack.c.l.b16 %v3740
        %v4595 = vunpack.c.h.b16 %v3740
        %v4596 = vunpack.c.l.b16 %v3741
        %v4597 = vunpack.c.h.b16 %v3741
        %v4598 = vunpack.c.l.b16 %v3742
        %v4599 = vunpack.c.h.b16 %v3742
        %v4600 = vunpack.c.l.b16 %v3743
        %v4601 = vunpack.c.h.b16 %v3743
        %v4602 = vunpack.c.l.b16 %v3744
        %v4603 = vunpack.c.h.b16 %v3744
        %v4604 = vunpack.c.l.b16 %v3745
        %v4605 = vunpack.c.h.b16 %v3745
        %v4606 = vunpack.c.l.b16 %v3746
        %v4607 = vunpack.c.h.b16 %v3746
        %v4608 = vunpack.c.l.b16 %v3747
        %v4609 = vunpack.c.h.b16 %v3747
        %v4610 = vunpack.c.l.b16 %v3748
        %v4611 = vunpack.c.h.b16 %v3748
        %v4612 = vunpack.c.l.b16 %v3749
        %v4613 = vunpack.c.h.b16 %v3749
        %v4614 = vunpack.c.l.b16 %v3750
        %v4615 = vunpack.c.h.b16 %v3750
        %v4616 = vunpack.c.l.b16 %v3751
        %v4617 = vunpack.c.h.b16 %v3751
        %v4618 = vunpack.c.l.b16 %v3752
        %v4619 = vunpack.c.h.b16 %v3752
        %v4620 = vunpack.c.l.b16 %v3753
        %v4621 = vunpack.c.h.b16 %v3753
        %v4622 = vunpack.c.l.b16 %v3754
        %v4623 = vunpack.c.h.b16 %v3754
        %v4624 = vunpack.c.l.b16 %v3755
        %v4625 = vunpack.c.h.b16 %v3755
        %v4626 = vunpack.c.l.b16 %v3756
        %v4627 = vunpack.c.h.b16 %v3756
        %v4628 = vunpack.c.l.b16 %v3757
        %v4629 = vunpack.c.h.b16 %v3757
        %v4630 = vunpack.c.l.b16 %v3758
        %v4631 = vunpack.c.h.b16 %v3758
        %v4632 = vpack.c.b16 %v4124, %v4120
        %v4633 = vpack.c.b16 %v4125, %v4121
        %v4634 = vpack.c.b16 %v4126, %v4122
        %v4635 = vpack.c.b16 %v4127, %v4123
        %v4636 = vpack.c.b16 %v4132, %v4128
        %v4637 = vpack.c.b16 %v4133, %v4129
        %v4638 = vpack.c.b16 %v4134, %v4130
        %v4639 = vpack.c.b16 %v4135, %v4131
        %v4640 = vpack.c.b16 %v4140, %v4136
        %v4641 = vpack.c.b16 %v4141, %v4137
        %v4642 = vpack.c.b16 %v4142, %v4138
        %v4643 = vpack.c.b16 %v4143, %v4139
        %v4644 = vpack.c.b16 %v4148, %v4144
        %v4645 = vpack.c.b16 %v4149, %v4145
        %v4646 = vpack.c.b16 %v4150, %v4146
        %v4647 = vpack.c.b16 %v4151, %v4147
        %v4648 = vpack.c.b16 %v4156, %v4152
        %v4649 = vpack.c.b16 %v4157, %v4153
        %v4650 = vpack.c.b16 %v4158, %v4154
        %v4651 = vpack.c.b16 %v4159, %v4155
        %v4652 = vpack.c.b16 %v4164, %v4160
        %v4653 = vpack.c.b16 %v4165, %v4161
        %v4654 = vpack.c.b16 %v4166, %v4162
        %v4655 = vpack.c.b16 %v4167, %v4163
        %v4656 = vpack.c.b16 %v4172, %v4168
        %v4657 = vpack.c.b16 %v4173, %v4169
        %v4658 = vpack.c.b16 %v4174, %v4170
        %v4659 = vpack.c.b16 %v4175, %v4171
        %v4660 = vpack.c.b16 %v4180, %v4176
        %v4661 = vpack.c.b16 %v4181, %v4177
        %v4662 = vpack.c.b16 %v4182, %v4178
        %v4663 = vpack.c.b16 %v4183, %v4179
        %v4664 = vpack.c.b16 %v4188, %v4184
        %v4665 = vpack.c.b16 %v4189, %v4185
        %v4666 = vpack.c.b16 %v4190, %v4186
        %v4667 = vpack.c.b16 %v4191, %v4187
        %v4668 = vpack.c.b16 %v4196, %v4192
        %v4669 = vpack.c.b16 %v4197, %v4193
        %v4670 = vpack.c.b16 %v4198, %v4194
        %v4671 = vpack.c.b16 %v4199, %v4195
        %v4672 = vpack.c.b16 %v4204, %v4200
        %v4673 = vpack.c.b16 %v4205, %v4201
        %v4674 = vpack.c.b16 %v4206, %v4202
        %v4675 = vpack.c.b16 %v4207, %v4203
        %v4676 = vpack.c.b16 %v4212, %v4208
        %v4677 = vpack.c.b16 %v4213, %v4209
        %v4678 = vpack.c.b16 %v4214, %v4210
        %v4679 = vpack.c.b16 %v4215, %v4211
        %v4680 = vpack.c.b16 %v4220, %v4216
        %v4681 = vpack.c.b16 %v4221, %v4217
        %v4682 = vpack.c.b16 %v4222, %v4218
        %v4683 = vpack.c.b16 %v4223, %v4219
        %v4684 = vpack.c.b16 %v4228, %v4224
        %v4685 = vpack.c.b16 %v4229, %v4225
        %v4686 = vpack.c.b16 %v4230, %v4226
        %v4687 = vpack.c.b16 %v4231, %v4227
        %v4688 = vpack.c.b16 %v4236, %v4232
        %v4689 = vpack.c.b16 %v4237, %v4233
        %v4690 = vpack.c.b16 %v4238, %v4234
        %v4691 = vpack.c.b16 %v4239, %v4235
        %v4692 = vpack.c.b16 %v4244, %v4240
        %v4693 = vpack.c.b16 %v4245, %v4241
        %v4694 = vpack.c.b16 %v4246, %v4242
        %v4695 = vpack.c.b16 %v4247, %v4243
        %v4696 = vpack.c.b16 %v4252, %v4248
        %v4697 = vpack.c.b16 %v4253, %v4249
        %v4698 = vpack.c.b16 %v4254, %v4250
        %v4699 = vpack.c.b16 %v4255, %v4251
        %v4700 = vpack.c.b16 %v4260, %v4256
        %v4701 = vpack.c.b16 %v4261, %v4257
        %v4702 = vpack.c.b16 %v4262, %v4258
        %v4703 = vpack.c.b16 %v4263, %v4259
        %v4704 = vpack.c.b16 %v4268, %v4264
        %v4705 = vpack.c.b16 %v4269, %v4265
        %v4706 = vpack.c.b16 %v4270, %v4266
        %v4707 = vpack.c.b16 %v4271, %v4267
        %v4708 = vpack.c.b16 %v4276, %v4272
        %v4709 = vpack.c.b16 %v4277, %v4273
        %v4710 = vpack.c.b16 %v4278, %v4274
        %v4711 = vpack.c.b16 %v4279, %v4275
        %v4712 = vpack.c.b16 %v4284, %v4280
        %v4713 = vpack.c.b16 %v4285, %v4281
        %v4714 = vpack.c.b16 %v4286, %v4282
        %v4715 = vpack.c.b16 %v4287, %v4283
        %v4716 = vpack.c.b16 %v4292, %v4288
        %v4717 = vpack.c.b16 %v4293, %v4289
        %v4718 = vpack.c.b16 %v4294, %v4290
        %v4719 = vpack.c.b16 %v4295, %v4291
        %v4720 = vpack.c.b16 %v4300, %v4296
        %v4721 = vpack.c.b16 %v4301, %v4297
        %v4722 = vpack.c.b16 %v4302, %v4298
        %v4723 = vpack.c.b16 %v4303, %v4299
        %v4724 = vpack.c.b16 %v4308, %v4304
        %v4725 = vpack.c.b16 %v4309, %v4305
        %v4726 = vpack.c.b16 %v4310, %v4306
        %v4727 = vpack.c.b16 %v4311, %v4307
        %v4728 = vpack.c.b16 %v4316, %v4312
        %v4729 = vpack.c.b16 %v4317, %v4313
        %v4730 = vpack.c.b16 %v4318, %v4314
        %v4731 = vpack.c.b16 %v4319, %v4315
        %v4732 = vpack.c.b16 %v4324, %v4320
        %v4733 = vpack.c.b16 %v4325, %v4321
        %v4734 = vpack.c.b16 %v4326, %v4322
        %v4735 = vpack.c.b16 %v4327, %v4323
        %v4736 = vpack.c.b16 %v4332, %v4328
        %v4737 = vpack.c.b16 %v4333, %v4329
        %v4738 = vpack.c.b16 %v4334, %v4330
        %v4739 = vpack.c.b16 %v4335, %v4331
        %v4740 = vpack.c.b16 %v4340, %v4336
        %v4741 = vpack.c.b16 %v4341, %v4337
        %v4742 = vpack.c.b16 %v4342, %v4338
        %v4743 = vpack.c.b16 %v4343, %v4339
        %v4744 = vpack.c.b16 %v4348, %v4344
        %v4745 = vpack.c.b16 %v4349, %v4345
        %v4746 = vpack.c.b16 %v4350, %v4346
        %v4747 = vpack.c.b16 %v4351, %v4347
        %v4748 = vpack.c.b16 %v4356, %v4352
        %v4749 = vpack.c.b16 %v4357, %v4353
        %v4750 = vpack.c.b16 %v4358, %v4354
        %v4751 = vpack.c.b16 %v4359, %v4355
        %v4752 = vpack.c.b16 %v4364, %v4360
        %v4753 = vpack.c.b16 %v4365, %v4361
        %v4754 = vpack.c.b16 %v4366, %v4362
        %v4755 = vpack.c.b16 %v4367, %v4363
        %v4756 = vpack.c.b16 %v4372, %v4368
        %v4757 = vpack.c.b16 %v4373, %v4369
        %v4758 = vpack.c.b16 %v4374, %v4370
        %v4759 = vpack.c.b16 %v4375, %v4371
        %v4760 = vpack.c.b16 %v4380, %v4376
        %v4761 = vpack.c.b16 %v4381, %v4377
        %v4762 = vpack.c.b16 %v4382, %v4378
        %v4763 = vpack.c.b16 %v4383, %v4379
        %v4764 = vpack.c.b16 %v4388, %v4384
        %v4765 = vpack.c.b16 %v4389, %v4385
        %v4766 = vpack.c.b16 %v4390, %v4386
        %v4767 = vpack.c.b16 %v4391, %v4387
        %v4768 = vpack.c.b16 %v4396, %v4392
        %v4769 = vpack.c.b16 %v4397, %v4393
        %v4770 = vpack.c.b16 %v4398, %v4394
        %v4771 = vpack.c.b16 %v4399, %v4395
        %v4772 = vpack.c.b16 %v4404, %v4400
        %v4773 = vpack.c.b16 %v4405, %v4401
        %v4774 = vpack.c.b16 %v4406, %v4402
        %v4775 = vpack.c.b16 %v4407, %v4403
        %v4776 = vpack.c.b16 %v4412, %v4408
        %v4777 = vpack.c.b16 %v4413, %v4409
        %v4778 = vpack.c.b16 %v4414, %v4410
        %v4779 = vpack.c.b16 %v4415, %v4411
        %v4780 = vpack.c.b16 %v4420, %v4416
        %v4781 = vpack.c.b16 %v4421, %v4417
        %v4782 = vpack.c.b16 %v4422, %v4418
        %v4783 = vpack.c.b16 %v4423, %v4419
        %v4784 = vpack.c.b16 %v4428, %v4424
        %v4785 = vpack.c.b16 %v4429, %v4425
        %v4786 = vpack.c.b16 %v4430, %v4426
        %v4787 = vpack.c.b16 %v4431, %v4427
        %v4788 = vpack.c.b16 %v4436, %v4432
        %v4789 = vpack.c.b16 %v4437, %v4433
        %v4790 = vpack.c.b16 %v4438, %v4434
        %v4791 = vpack.c.b16 %v4439, %v4435
        %v4792 = vpack.c.b16 %v4444, %v4440
        %v4793 = vpack.c.b16 %v4445, %v4441
        %v4794 = vpack.c.b16 %v4446, %v4442
        %v4795 = vpack.c.b16 %v4447, %v4443
        %v4796 = vpack.c.b16 %v4452, %v4448
        %v4797 = vpack.c.b16 %v4453, %v4449
        %v4798 = vpack.c.b16 %v4454, %v4450
        %v4799 = vpack.c.b16 %v4455, %v4451
        %v4800 = vpack.c.b16 %v4460, %v4456
        %v4801 = vpack.c.b16 %v4461, %v4457
        %v4802 = vpack.c.b16 %v4462, %v4458
        %v4803 = vpack.c.b16 %v4463, %v4459
        %v4804 = vpack.c.b16 %v4468, %v4464
        %v4805 = vpack.c.b16 %v4469, %v4465
        %v4806 = vpack.c.b16 %v4470, %v4466
        %v4807 = vpack.c.b16 %v4471, %v4467
        %v4808 = vpack.c.b16 %v4476, %v4472
        %v4809 = vpack.c.b16 %v4477, %v4473
        %v4810 = vpack.c.b16 %v4478, %v4474
        %v4811 = vpack.c.b16 %v4479, %v4475
        %v4812 = vpack.c.b16 %v4484, %v4480
        %v4813 = vpack.c.b16 %v4485, %v4481
        %v4814 = vpack.c.b16 %v4486, %v4482
        %v4815 = vpack.c.b16 %v4487, %v4483
        %v4816 = vpack.c.b16 %v4492, %v4488
        %v4817 = vpack.c.b16 %v4493, %v4489
        %v4818 = vpack.c.b16 %v4494, %v4490
        %v4819 = vpack.c.b16 %v4495, %v4491
        %v4820 = vpack.c.b16 %v4500, %v4496
        %v4821 = vpack.c.b16 %v4501, %v4497
        %v4822 = vpack.c.b16 %v4502, %v4498
        %v4823 = vpack.c.b16 %v4503, %v4499
        %v4824 = vpack.c.b16 %v4508, %v4504
        %v4825 = vpack.c.b16 %v4509, %v4505
        %v4826 = vpack.c.b16 %v4510, %v4506
        %v4827 = vpack.c.b16 %v4511, %v4507
        %v4828 = vpack.c.b16 %v4516, %v4512
        %v4829 = vpack.c.b16 %v4517, %v4513
        %v4830 = vpack.c.b16 %v4518, %v4514
        %v4831 = vpack.c.b16 %v4519, %v4515
        %v4832 = vpack.c.b16 %v4524, %v4520
        %v4833 = vpack.c.b16 %v4525, %v4521
        %v4834 = vpack.c.b16 %v4526, %v4522
        %v4835 = vpack.c.b16 %v4527, %v4523
        %v4836 = vpack.c.b16 %v4532, %v4528
        %v4837 = vpack.c.b16 %v4533, %v4529
        %v4838 = vpack.c.b16 %v4534, %v4530
        %v4839 = vpack.c.b16 %v4535, %v4531
        %v4840 = vpack.c.b16 %v4540, %v4536
        %v4841 = vpack.c.b16 %v4541, %v4537
        %v4842 = vpack.c.b16 %v4542, %v4538
        %v4843 = vpack.c.b16 %v4543, %v4539
        %v4844 = vpack.c.b16 %v4548, %v4544
        %v4845 = vpack.c.b16 %v4549, %v4545
        %v4846 = vpack.c.b16 %v4550, %v4546
        %v4847 = vpack.c.b16 %v4551, %v4547
        %v4848 = vpack.c.b16 %v4556, %v4552
        %v4849 = vpack.c.b16 %v4557, %v4553
        %v4850 = vpack.c.b16 %v4558, %v4554
        %v4851 = vpack.c.b16 %v4559, %v4555
        %v4852 = vpack.c.b16 %v4564, %v4560
        %v4853 = vpack.c.b16 %v4565, %v4561
        %v4854 = vpack.c.b16 %v4566, %v4562
        %v4855 = vpack.c.b16 %v4567, %v4563
        %v4856 = vpack.c.b16 %v4572, %v4568
        %v4857 = vpack.c.b16 %v4573, %v4569
        %v4858 = vpack.c.b16 %v4574, %v4570
        %v4859 = vpack.c.b16 %v4575, %v4571
        %v4860 = vpack.c.b16 %v4580, %v4576
        %v4861 = vpack.c.b16 %v4581, %v4577
        %v4862 = vpack.c.b16 %v4582, %v4578
        %v4863 = vpack.c.b16 %v4583, %v4579
        %v4864 = vpack.c.b16 %v4588, %v4584
        %v4865 = vpack.c.b16 %v4589, %v4585
        %v4866 = vpack.c.b16 %v4590, %v4586
        %v4867 = vpack.c.b16 %v4591, %v4587
        %v4868 = vpack.c.b16 %v4596, %v4592
        %v4869 = vpack.c.b16 %v4597, %v4593
        %v4870 = vpack.c.b16 %v4598, %v4594
        %v4871 = vpack.c.b16 %v4599, %v4595
        %v4872 = vpack.c.b16 %v4604, %v4600
        %v4873 = vpack.c.b16 %v4605, %v4601
        %v4874 = vpack.c.b16 %v4606, %v4602
        %v4875 = vpack.c.b16 %v4607, %v4603
        %v4876 = vpack.c.b16 %v4612, %v4608
        %v4877 = vpack.c.b16 %v4613, %v4609
        %v4878 = vpack.c.b16 %v4614, %v4610
        %v4879 = vpack.c.b16 %v4615, %v4611
        %v4880 = vpack.c.b16 %v4620, %v4616
        %v4881 = vpack.c.b16 %v4621, %v4617
        %v4882 = vpack.c.b16 %v4622, %v4618
        %v4883 = vpack.c.b16 %v4623, %v4619
        %v4884 = vpack.c.b16 %v4628, %v4624
        %v4885 = vpack.c.b16 %v4629, %v4625
        %v4886 = vpack.c.b16 %v4630, %v4626
        %v4887 = vpack.c.b16 %v4631, %v4627
        %5144 = vmatpush.bf16.msra.mxu0 %v4660
        %5145 = vmatpush.bf16.msra.mxu0 %v4656
        %5146 = vmatpush.bf16.msra.mxu0 %v4652
        %5147 = vmatpush.bf16.msra.mxu0 %v4648
        %5148 = vmatpush.bf16.msra.mxu0 %v4644
        %5149 = vmatpush.bf16.msra.mxu0 %v4640
        %5150 = vmatpush.bf16.msra.mxu0 %v4636
        %5151 = vmatpush.bf16.msra.mxu0 %v4632
        %5152 = vmatmul.bf16.gmra.mxu0 %v3771
        %v5153 = vpop.f32.mrf.mxu0
        %v5154 = vadd.f32 0.0, %v5153
        %v5155 = vpop.f32.mrf.mxu0
        %v5156 = vadd.f32 0.0, %v5155
        %5157 = vdwg.mxu0
        %5158 = vmatpush.bf16.msra.mxu0 %v4692
        %5159 = vmatpush.bf16.msra.mxu0 %v4688
        %5160 = vmatpush.bf16.msra.mxu0 %v4684
        %5161 = vmatpush.bf16.msra.mxu0 %v4680
        %5162 = vmatpush.bf16.msra.mxu0 %v4676
        %5163 = vmatpush.bf16.msra.mxu0 %v4672
        %5164 = vmatpush.bf16.msra.mxu0 %v4668
        %5165 = vmatpush.bf16.msra.mxu0 %v4664
        %5166 = vmatmul.bf16.gmra.mxu0 %v3783
        %v5167 = vpop.f32.mrf.mxu0
        %v5168 = vadd.f32 %v5154, %v5167
        %v5169 = vpop.f32.mrf.mxu0
        %v5170 = vadd.f32 %v5156, %v5169
        %5171 = vdwg.mxu0
        %5172 = vmatpush.bf16.msra.mxu0 %v4724
        %5173 = vmatpush.bf16.msra.mxu0 %v4720
        %5174 = vmatpush.bf16.msra.mxu0 %v4716
        %5175 = vmatpush.bf16.msra.mxu0 %v4712
        %5176 = vmatpush.bf16.msra.mxu0 %v4708
        %5177 = vmatpush.bf16.msra.mxu0 %v4704
        %5178 = vmatpush.bf16.msra.mxu0 %v4700
        %5179 = vmatpush.bf16.msra.mxu0 %v4696
        %5180 = vmatmul.bf16.gmra.mxu0 %v3795
        %v5181 = vpop.f32.mrf.mxu0
        %v5182 = vadd.f32 %v5168, %v5181
        %v5183 = vpop.f32.mrf.mxu0
        %v5184 = vadd.f32 %v5170, %v5183
        %5185 = vdwg.mxu0
        %5186 = vmatpush.bf16.msra.mxu0 %v4756
        %5187 = vmatpush.bf16.msra.mxu0 %v4752
        %5188 = vmatpush.bf16.msra.mxu0 %v4748
        %5189 = vmatpush.bf16.msra.mxu0 %v4744
        %5190 = vmatpush.bf16.msra.mxu0 %v4740
        %5191 = vmatpush.bf16.msra.mxu0 %v4736
        %5192 = vmatpush.bf16.msra.mxu0 %v4732
        %5193 = vmatpush.bf16.msra.mxu0 %v4728
        %5194 = vmatmul.bf16.gmra.mxu0 %v3807
        %v5195 = vpop.f32.mrf.mxu0
        %v5196 = vadd.f32 %v5182, %v5195
        %v5197 = vpop.f32.mrf.mxu0
        %v5198 = vadd.f32 %v5184, %v5197
        %5199 = vdwg.mxu0
        %5200 = vmatpush.bf16.msra.mxu0 %v4788
        %5201 = vmatpush.bf16.msra.mxu0 %v4784
        %5202 = vmatpush.bf16.msra.mxu0 %v4780
        %5203 = vmatpush.bf16.msra.mxu0 %v4776
        %5204 = vmatpush.bf16.msra.mxu0 %v4772
        %5205 = vmatpush.bf16.msra.mxu0 %v4768
        %5206 = vmatpush.bf16.msra.mxu0 %v4764
        %5207 = vmatpush.bf16.msra.mxu0 %v4760
        %5208 = vmatmul.bf16.gmra.mxu0 %v3819
        %v5209 = vpop.f32.mrf.mxu0
        %v5210 = vadd.f32 %v5196, %v5209
        %v5211 = vpop.f32.mrf.mxu0
        %v5212 = vadd.f32 %v5198, %v5211
        %5213 = vdwg.mxu0
        %5214 = vmatpush.bf16.msra.mxu0 %v4820
        %5215 = vmatpush.bf16.msra.mxu0 %v4816
        %5216 = vmatpush.bf16.msra.mxu0 %v4812
        %5217 = vmatpush.bf16.msra.mxu0 %v4808
        %5218 = vmatpush.bf16.msra.mxu0 %v4804
        %5219 = vmatpush.bf16.msra.mxu0 %v4800
        %5220 = vmatpush.bf16.msra.mxu0 %v4796
        %5221 = vmatpush.bf16.msra.mxu0 %v4792
        %5222 = vmatmul.bf16.gmra.mxu0 %v3831
        %v5223 = vpop.f32.mrf.mxu0
        %v5224 = vadd.f32 %v5210, %v5223
        %v5225 = vpop.f32.mrf.mxu0
        %v5226 = vadd.f32 %v5212, %v5225
        %5227 = vdwg.mxu0
        %5228 = vmatpush.bf16.msra.mxu0 %v4852
        %5229 = vmatpush.bf16.msra.mxu0 %v4848
        %5230 = vmatpush.bf16.msra.mxu0 %v4844
        %5231 = vmatpush.bf16.msra.mxu0 %v4840
        %5232 = vmatpush.bf16.msra.mxu0 %v4836
        %5233 = vmatpush.bf16.msra.mxu0 %v4832
        %5234 = vmatpush.bf16.msra.mxu0 %v4828
        %5235 = vmatpush.bf16.msra.mxu0 %v4824
        %5236 = vmatmul.bf16.gmra.mxu0 %v3843
        %v5237 = vpop.f32.mrf.mxu0
        %v5238 = vadd.f32 %v5224, %v5237
        %v5239 = vpop.f32.mrf.mxu0
        %v5240 = vadd.f32 %v5226, %v5239
        %5241 = vdwg.mxu0
        %5242 = vmatpush.bf16.msra.mxu0 %v4884
        %5243 = vmatpush.bf16.msra.mxu0 %v4880
        %5244 = vmatpush.bf16.msra.mxu0 %v4876
        %5245 = vmatpush.bf16.msra.mxu0 %v4872
        %5246 = vmatpush.bf16.msra.mxu0 %v4868
        %5247 = vmatpush.bf16.msra.mxu0 %v4864
        %5248 = vmatpush.bf16.msra.mxu0 %v4860
        %5249 = vmatpush.bf16.msra.mxu0 %v4856
        %5250 = vmatmul.bf16.gmra.mxu0 %v3855
        %v5251 = vpop.f32.mrf.mxu0
        %v5252 = vadd.f32 %v5238, %v5251
        %v5253 = vpop.f32.mrf.mxu0
        %v5254 = vadd.f32 %v5240, %v5253
        %5255 = vdwg.mxu0
        %5256 = vmatpush.bf16.msra.mxu0 %v4661
        %5257 = vmatpush.bf16.msra.mxu0 %v4657
        %5258 = vmatpush.bf16.msra.mxu0 %v4653
        %5259 = vmatpush.bf16.msra.mxu0 %v4649
        %5260 = vmatpush.bf16.msra.mxu0 %v4645
        %5261 = vmatpush.bf16.msra.mxu0 %v4641
        %5262 = vmatpush.bf16.msra.mxu0 %v4637
        %5263 = vmatpush.bf16.msra.mxu0 %v4633
        %5264 = vmatmul.bf16.gmra.mxu0 %v3771
        %v5265 = vpop.f32.mrf.mxu0
        %v5266 = vadd.f32 0.0, %v5265
        %v5267 = vpop.f32.mrf.mxu0
        %v5268 = vadd.f32 0.0, %v5267
        %5269 = vdwg.mxu0
        %5270 = vmatpush.bf16.msra.mxu0 %v4693
        %5271 = vmatpush.bf16.msra.mxu0 %v4689
        %5272 = vmatpush.bf16.msra.mxu0 %v4685
        %5273 = vmatpush.bf16.msra.mxu0 %v4681
        %5274 = vmatpush.bf16.msra.mxu0 %v4677
        %5275 = vmatpush.bf16.msra.mxu0 %v4673
        %5276 = vmatpush.bf16.msra.mxu0 %v4669
        %5277 = vmatpush.bf16.msra.mxu0 %v4665
        %5278 = vmatmul.bf16.gmra.mxu0 %v3783
        %v5279 = vpop.f32.mrf.mxu0
        %v5280 = vadd.f32 %v5266, %v5279
        %v5281 = vpop.f32.mrf.mxu0
        %v5282 = vadd.f32 %v5268, %v5281
        %5283 = vdwg.mxu0
        %5284 = vmatpush.bf16.msra.mxu0 %v4725
        %5285 = vmatpush.bf16.msra.mxu0 %v4721
        %5286 = vmatpush.bf16.msra.mxu0 %v4717
        %5287 = vmatpush.bf16.msra.mxu0 %v4713
        %5288 = vmatpush.bf16.msra.mxu0 %v4709
        %5289 = vmatpush.bf16.msra.mxu0 %v4705
        %5290 = vmatpush.bf16.msra.mxu0 %v4701
        %5291 = vmatpush.bf16.msra.mxu0 %v4697
        %5292 = vmatmul.bf16.gmra.mxu0 %v3795
        %v5293 = vpop.f32.mrf.mxu0
        %v5294 = vadd.f32 %v5280, %v5293
        %v5295 = vpop.f32.mrf.mxu0
        %v5296 = vadd.f32 %v5282, %v5295
        %5297 = vdwg.mxu0
        %5298 = vmatpush.bf16.msra.mxu0 %v4757
        %5299 = vmatpush.bf16.msra.mxu0 %v4753
        %5300 = vmatpush.bf16.msra.mxu0 %v4749
        %5301 = vmatpush.bf16.msra.mxu0 %v4745
        %5302 = vmatpush.bf16.msra.mxu0 %v4741
        %5303 = vmatpush.bf16.msra.mxu0 %v4737
        %5304 = vmatpush.bf16.msra.mxu0 %v4733
        %5305 = vmatpush.bf16.msra.mxu0 %v4729
        %5306 = vmatmul.bf16.gmra.mxu0 %v3807
        %v5307 = vpop.f32.mrf.mxu0
        %v5308 = vadd.f32 %v5294, %v5307
        %v5309 = vpop.f32.mrf.mxu0
        %v5310 = vadd.f32 %v5296, %v5309
        %5311 = vdwg.mxu0
        %5312 = vmatpush.bf16.msra.mxu0 %v4789
        %5313 = vmatpush.bf16.msra.mxu0 %v4785
        %5314 = vmatpush.bf16.msra.mxu0 %v4781
        %5315 = vmatpush.bf16.msra.mxu0 %v4777
        %5316 = vmatpush.bf16.msra.mxu0 %v4773
        %5317 = vmatpush.bf16.msra.mxu0 %v4769
        %5318 = vmatpush.bf16.msra.mxu0 %v4765
        %5319 = vmatpush.bf16.msra.mxu0 %v4761
        %5320 = vmatmul.bf16.gmra.mxu0 %v3819
        %v5321 = vpop.f32.mrf.mxu0
        %v5322 = vadd.f32 %v5308, %v5321
        %v5323 = vpop.f32.mrf.mxu0
        %v5324 = vadd.f32 %v5310, %v5323
        %5325 = vdwg.mxu0
        %5326 = vmatpush.bf16.msra.mxu0 %v4821
        %5327 = vmatpush.bf16.msra.mxu0 %v4817
        %5328 = vmatpush.bf16.msra.mxu0 %v4813
        %5329 = vmatpush.bf16.msra.mxu0 %v4809
        %5330 = vmatpush.bf16.msra.mxu0 %v4805
        %5331 = vmatpush.bf16.msra.mxu0 %v4801
        %5332 = vmatpush.bf16.msra.mxu0 %v4797
        %5333 = vmatpush.bf16.msra.mxu0 %v4793
        %5334 = vmatmul.bf16.gmra.mxu0 %v3831
        %v5335 = vpop.f32.mrf.mxu0
        %v5336 = vadd.f32 %v5322, %v5335
        %v5337 = vpop.f32.mrf.mxu0
        %v5338 = vadd.f32 %v5324, %v5337
        %5339 = vdwg.mxu0
        %5340 = vmatpush.bf16.msra.mxu0 %v4853
        %5341 = vmatpush.bf16.msra.mxu0 %v4849
        %5342 = vmatpush.bf16.msra.mxu0 %v4845
        %5343 = vmatpush.bf16.msra.mxu0 %v4841
        %5344 = vmatpush.bf16.msra.mxu0 %v4837
        %5345 = vmatpush.bf16.msra.mxu0 %v4833
        %5346 = vmatpush.bf16.msra.mxu0 %v4829
        %5347 = vmatpush.bf16.msra.mxu0 %v4825
        %5348 = vmatmul.bf16.gmra.mxu0 %v3843
        %v5349 = vpop.f32.mrf.mxu0
        %v5350 = vadd.f32 %v5336, %v5349
        %v5351 = vpop.f32.mrf.mxu0
        %v5352 = vadd.f32 %v5338, %v5351
        %5353 = vdwg.mxu0
        %5354 = vmatpush.bf16.msra.mxu0 %v4885
        %5355 = vmatpush.bf16.msra.mxu0 %v4881
        %5356 = vmatpush.bf16.msra.mxu0 %v4877
        %5357 = vmatpush.bf16.msra.mxu0 %v4873
        %5358 = vmatpush.bf16.msra.mxu0 %v4869
        %5359 = vmatpush.bf16.msra.mxu0 %v4865
        %5360 = vmatpush.bf16.msra.mxu0 %v4861
        %5361 = vmatpush.bf16.msra.mxu0 %v4857
        %5362 = vmatmul.bf16.gmra.mxu0 %v3855
        %v5363 = vpop.f32.mrf.mxu0
        %v5364 = vadd.f32 %v5350, %v5363
        %v5365 = vpop.f32.mrf.mxu0
        %v5366 = vadd.f32 %v5352, %v5365
        %5367 = vdwg.mxu0
        %5368 = vmatpush.bf16.msra.mxu0 %v4662
        %5369 = vmatpush.bf16.msra.mxu0 %v4658
        %5370 = vmatpush.bf16.msra.mxu0 %v4654
        %5371 = vmatpush.bf16.msra.mxu0 %v4650
        %5372 = vmatpush.bf16.msra.mxu0 %v4646
        %5373 = vmatpush.bf16.msra.mxu0 %v4642
        %5374 = vmatpush.bf16.msra.mxu0 %v4638
        %5375 = vmatpush.bf16.msra.mxu0 %v4634
        %5376 = vmatmul.bf16.gmra.mxu0 %v3771
        %v5377 = vpop.f32.mrf.mxu0
        %v5378 = vadd.f32 0.0, %v5377
        %v5379 = vpop.f32.mrf.mxu0
        %v5380 = vadd.f32 0.0, %v5379
        %5381 = vdwg.mxu0
        %5382 = vmatpush.bf16.msra.mxu0 %v4694
        %5383 = vmatpush.bf16.msra.mxu0 %v4690
        %5384 = vmatpush.bf16.msra.mxu0 %v4686
        %5385 = vmatpush.bf16.msra.mxu0 %v4682
        %5386 = vmatpush.bf16.msra.mxu0 %v4678
        %5387 = vmatpush.bf16.msra.mxu0 %v4674
        %5388 = vmatpush.bf16.msra.mxu0 %v4670
        %5389 = vmatpush.bf16.msra.mxu0 %v4666
        %5390 = vmatmul.bf16.gmra.mxu0 %v3783
        %v5391 = vpop.f32.mrf.mxu0
        %v5392 = vadd.f32 %v5378, %v5391
        %v5393 = vpop.f32.mrf.mxu0
        %v5394 = vadd.f32 %v5380, %v5393
        %5395 = vdwg.mxu0
        %5396 = vmatpush.bf16.msra.mxu0 %v4726
        %5397 = vmatpush.bf16.msra.mxu0 %v4722
        %5398 = vmatpush.bf16.msra.mxu0 %v4718
        %5399 = vmatpush.bf16.msra.mxu0 %v4714
        %5400 = vmatpush.bf16.msra.mxu0 %v4710
        %5401 = vmatpush.bf16.msra.mxu0 %v4706
        %5402 = vmatpush.bf16.msra.mxu0 %v4702
        %5403 = vmatpush.bf16.msra.mxu0 %v4698
        %5404 = vmatmul.bf16.gmra.mxu0 %v3795
        %v5405 = vpop.f32.mrf.mxu0
        %v5406 = vadd.f32 %v5392, %v5405
        %v5407 = vpop.f32.mrf.mxu0
        %v5408 = vadd.f32 %v5394, %v5407
        %5409 = vdwg.mxu0
        %5410 = vmatpush.bf16.msra.mxu0 %v4758
        %5411 = vmatpush.bf16.msra.mxu0 %v4754
        %5412 = vmatpush.bf16.msra.mxu0 %v4750
        %5413 = vmatpush.bf16.msra.mxu0 %v4746
        %5414 = vmatpush.bf16.msra.mxu0 %v4742
        %5415 = vmatpush.bf16.msra.mxu0 %v4738
        %5416 = vmatpush.bf16.msra.mxu0 %v4734
        %5417 = vmatpush.bf16.msra.mxu0 %v4730
        %5418 = vmatmul.bf16.gmra.mxu0 %v3807
        %v5419 = vpop.f32.mrf.mxu0
        %v5420 = vadd.f32 %v5406, %v5419
        %v5421 = vpop.f32.mrf.mxu0
        %v5422 = vadd.f32 %v5408, %v5421
        %5423 = vdwg.mxu0
        %5424 = vmatpush.bf16.msra.mxu0 %v4790
        %5425 = vmatpush.bf16.msra.mxu0 %v4786
        %5426 = vmatpush.bf16.msra.mxu0 %v4782
        %5427 = vmatpush.bf16.msra.mxu0 %v4778
        %5428 = vmatpush.bf16.msra.mxu0 %v4774
        %5429 = vmatpush.bf16.msra.mxu0 %v4770
        %5430 = vmatpush.bf16.msra.mxu0 %v4766
        %5431 = vmatpush.bf16.msra.mxu0 %v4762
        %5432 = vmatmul.bf16.gmra.mxu0 %v3819
        %v5433 = vpop.f32.mrf.mxu0
        %v5434 = vadd.f32 %v5420, %v5433
        %v5435 = vpop.f32.mrf.mxu0
        %v5436 = vadd.f32 %v5422, %v5435
        %5437 = vdwg.mxu0
        %5438 = vmatpush.bf16.msra.mxu0 %v4822
        %5439 = vmatpush.bf16.msra.mxu0 %v4818
        %5440 = vmatpush.bf16.msra.mxu0 %v4814
        %5441 = vmatpush.bf16.msra.mxu0 %v4810
        %5442 = vmatpush.bf16.msra.mxu0 %v4806
        %5443 = vmatpush.bf16.msra.mxu0 %v4802
        %5444 = vmatpush.bf16.msra.mxu0 %v4798
        %5445 = vmatpush.bf16.msra.mxu0 %v4794
        %5446 = vmatmul.bf16.gmra.mxu0 %v3831
        %v5447 = vpop.f32.mrf.mxu0
        %v5448 = vadd.f32 %v5434, %v5447
        %v5449 = vpop.f32.mrf.mxu0
        %v5450 = vadd.f32 %v5436, %v5449
        %5451 = vdwg.mxu0
        %5452 = vmatpush.bf16.msra.mxu0 %v4854
        %5453 = vmatpush.bf16.msra.mxu0 %v4850
        %5454 = vmatpush.bf16.msra.mxu0 %v4846
        %5455 = vmatpush.bf16.msra.mxu0 %v4842
        %5456 = vmatpush.bf16.msra.mxu0 %v4838
        %5457 = vmatpush.bf16.msra.mxu0 %v4834
        %5458 = vmatpush.bf16.msra.mxu0 %v4830
        %5459 = vmatpush.bf16.msra.mxu0 %v4826
        %5460 = vmatmul.bf16.gmra.mxu0 %v3843
        %v5461 = vpop.f32.mrf.mxu0
        %v5462 = vadd.f32 %v5448, %v5461
        %v5463 = vpop.f32.mrf.mxu0
        %v5464 = vadd.f32 %v5450, %v5463
        %5465 = vdwg.mxu0
        %5466 = vmatpush.bf16.msra.mxu0 %v4886
        %5467 = vmatpush.bf16.msra.mxu0 %v4882
        %5468 = vmatpush.bf16.msra.mxu0 %v4878
        %5469 = vmatpush.bf16.msra.mxu0 %v4874
        %5470 = vmatpush.bf16.msra.mxu0 %v4870
        %5471 = vmatpush.bf16.msra.mxu0 %v4866
        %5472 = vmatpush.bf16.msra.mxu0 %v4862
        %5473 = vmatpush.bf16.msra.mxu0 %v4858
        %5474 = vmatmul.bf16.gmra.mxu0 %v3855
        %v5475 = vpop.f32.mrf.mxu0
        %v5476 = vadd.f32 %v5462, %v5475
        %v5477 = vpop.f32.mrf.mxu0
        %v5478 = vadd.f32 %v5464, %v5477
        %5479 = vdwg.mxu0
        %5480 = vmatpush.bf16.msra.mxu0 %v4663
        %5481 = vmatpush.bf16.msra.mxu0 %v4659
        %5482 = vmatpush.bf16.msra.mxu0 %v4655
        %5483 = vmatpush.bf16.msra.mxu0 %v4651
        %5484 = vmatpush.bf16.msra.mxu0 %v4647
        %5485 = vmatpush.bf16.msra.mxu0 %v4643
        %5486 = vmatpush.bf16.msra.mxu0 %v4639
        %5487 = vmatpush.bf16.msra.mxu0 %v4635
        %5488 = vmatmul.bf16.gmra.mxu0 %v3771
        %v5489 = vpop.f32.mrf.mxu0
        %v5490 = vadd.f32 0.0, %v5489
        %v5491 = vpop.f32.mrf.mxu0
        %v5492 = vadd.f32 0.0, %v5491
        %5493 = vdwg.mxu0
        %5494 = vmatpush.bf16.msra.mxu0 %v4695
        %5495 = vmatpush.bf16.msra.mxu0 %v4691
        %5496 = vmatpush.bf16.msra.mxu0 %v4687
        %5497 = vmatpush.bf16.msra.mxu0 %v4683
        %5498 = vmatpush.bf16.msra.mxu0 %v4679
        %5499 = vmatpush.bf16.msra.mxu0 %v4675
        %5500 = vmatpush.bf16.msra.mxu0 %v4671
        %5501 = vmatpush.bf16.msra.mxu0 %v4667
        %5502 = vmatmul.bf16.gmra.mxu0 %v3783
        %v5503 = vpop.f32.mrf.mxu0
        %v5504 = vadd.f32 %v5490, %v5503
        %v5505 = vpop.f32.mrf.mxu0
        %v5506 = vadd.f32 %v5492, %v5505
        %5507 = vdwg.mxu0
        %5508 = vmatpush.bf16.msra.mxu0 %v4727
        %5509 = vmatpush.bf16.msra.mxu0 %v4723
        %5510 = vmatpush.bf16.msra.mxu0 %v4719
        %5511 = vmatpush.bf16.msra.mxu0 %v4715
        %5512 = vmatpush.bf16.msra.mxu0 %v4711
        %5513 = vmatpush.bf16.msra.mxu0 %v4707
        %5514 = vmatpush.bf16.msra.mxu0 %v4703
        %5515 = vmatpush.bf16.msra.mxu0 %v4699
        %5516 = vmatmul.bf16.gmra.mxu0 %v3795
        %v5517 = vpop.f32.mrf.mxu0
        %v5518 = vadd.f32 %v5504, %v5517
        %v5519 = vpop.f32.mrf.mxu0
        %v5520 = vadd.f32 %v5506, %v5519
        %5521 = vdwg.mxu0
        %5522 = vmatpush.bf16.msra.mxu0 %v4759
        %5523 = vmatpush.bf16.msra.mxu0 %v4755
        %5524 = vmatpush.bf16.msra.mxu0 %v4751
        %5525 = vmatpush.bf16.msra.mxu0 %v4747
        %5526 = vmatpush.bf16.msra.mxu0 %v4743
        %5527 = vmatpush.bf16.msra.mxu0 %v4739
        %5528 = vmatpush.bf16.msra.mxu0 %v4735
        %5529 = vmatpush.bf16.msra.mxu0 %v4731
        %5530 = vmatmul.bf16.gmra.mxu0 %v3807
        %v5531 = vpop.f32.mrf.mxu0
        %v5532 = vadd.f32 %v5518, %v5531
        %v5533 = vpop.f32.mrf.mxu0
        %v5534 = vadd.f32 %v5520, %v5533
        %5535 = vdwg.mxu0
        %5536 = vmatpush.bf16.msra.mxu0 %v4791
        %5537 = vmatpush.bf16.msra.mxu0 %v4787
        %5538 = vmatpush.bf16.msra.mxu0 %v4783
        %5539 = vmatpush.bf16.msra.mxu0 %v4779
        %5540 = vmatpush.bf16.msra.mxu0 %v4775
        %5541 = vmatpush.bf16.msra.mxu0 %v4771
        %5542 = vmatpush.bf16.msra.mxu0 %v4767
        %5543 = vmatpush.bf16.msra.mxu0 %v4763
        %5544 = vmatmul.bf16.gmra.mxu0 %v3819
        %v5545 = vpop.f32.mrf.mxu0
        %v5546 = vadd.f32 %v5532, %v5545
        %v5547 = vpop.f32.mrf.mxu0
        %v5548 = vadd.f32 %v5534, %v5547
        %5549 = vdwg.mxu0
        %5550 = vmatpush.bf16.msra.mxu0 %v4823
        %5551 = vmatpush.bf16.msra.mxu0 %v4819
        %5552 = vmatpush.bf16.msra.mxu0 %v4815
        %5553 = vmatpush.bf16.msra.mxu0 %v4811
        %5554 = vmatpush.bf16.msra.mxu0 %v4807
        %5555 = vmatpush.bf16.msra.mxu0 %v4803
        %5556 = vmatpush.bf16.msra.mxu0 %v4799
        %5557 = vmatpush.bf16.msra.mxu0 %v4795
        %5558 = vmatmul.bf16.gmra.mxu0 %v3831
        %v5559 = vpop.f32.mrf.mxu0
        %v5560 = vadd.f32 %v5546, %v5559
        %v5561 = vpop.f32.mrf.mxu0
        %v5562 = vadd.f32 %v5548, %v5561
        %5563 = vdwg.mxu0
        %5564 = vmatpush.bf16.msra.mxu0 %v4855
        %5565 = vmatpush.bf16.msra.mxu0 %v4851
        %5566 = vmatpush.bf16.msra.mxu0 %v4847
        %5567 = vmatpush.bf16.msra.mxu0 %v4843
        %5568 = vmatpush.bf16.msra.mxu0 %v4839
        %5569 = vmatpush.bf16.msra.mxu0 %v4835
        %5570 = vmatpush.bf16.msra.mxu0 %v4831
        %5571 = vmatpush.bf16.msra.mxu0 %v4827
        %5572 = vmatmul.bf16.gmra.mxu0 %v3843
        %v5573 = vpop.f32.mrf.mxu0
        %v5574 = vadd.f32 %v5560, %v5573
        %v5575 = vpop.f32.mrf.mxu0
        %v5576 = vadd.f32 %v5562, %v5575
        %5577 = vdwg.mxu0
        %5578 = vmatpush.bf16.msra.mxu0 %v4887
        %5579 = vmatpush.bf16.msra.mxu0 %v4883
        %5580 = vmatpush.bf16.msra.mxu0 %v4879
        %5581 = vmatpush.bf16.msra.mxu0 %v4875
        %5582 = vmatpush.bf16.msra.mxu0 %v4871
        %5583 = vmatpush.bf16.msra.mxu0 %v4867
        %5584 = vmatpush.bf16.msra.mxu0 %v4863
        %5585 = vmatpush.bf16.msra.mxu0 %v4859
        %5586 = vmatmul.bf16.gmra.mxu0 %v3855
        %v5587 = vpop.f32.mrf.mxu0
        %v5588 = vadd.f32 %v5574, %v5587
        %v5589 = vpop.f32.mrf.mxu0
        %v5590 = vadd.f32 %v5576, %v5589
        %5591 = vdwg.mxu0
        %v5592 = vadd.f32 %v3454, %v5252
        %v5593 = vadd.f32 %v3455, %v5364
        %v5594 = vadd.f32 %v3456, %v5476
        %v5595 = vadd.f32 %v3457, %v5588
        %v5596 = vadd.f32 %v3458, %v5254
        %v5597 = vadd.f32 %v3459, %v5366
        %v5598 = vadd.f32 %v3460, %v5478
        %v5599 = vadd.f32 %v3461, %v5590
        %v5600 = vld [vmem:[#allocation3] sm:$0xfc]
        %v5601 = vld [vmem:[#allocation3 + $0x8] sm:$0xfc]
        %v5602 = vld [vmem:[#allocation3 + $0x10] sm:$0xfc]
        %v5603 = vld [vmem:[#allocation3 + $0x18] sm:$0xfc]
        %v5604 = vld [vmem:[#allocation3 + $0x20] sm:$0xfc]
        %v5605 = vld [vmem:[#allocation3 + $0x28] sm:$0xfc]
        %v5606 = vld [vmem:[#allocation3 + $0x30] sm:$0xfc]
        %v5607 = vld [vmem:[#allocation3 + $0x38] sm:$0xfc]
        %v5608 = vld [vmem:[#allocation3 + $0x80] sm:$0x3]
        %v5609 = vld [vmem:[#allocation3 + $0x88] sm:$0x3]
        %v5610 = vld [vmem:[#allocation3 + $0x90] sm:$0x3]
        %v5611 = vld [vmem:[#allocation3 + $0x98] sm:$0x3]
        %v5612 = vld [vmem:[#allocation3 + $0xa0] sm:$0x3]
        %v5613 = vld [vmem:[#allocation3 + $0xa8] sm:$0x3]
        %v5614 = vld [vmem:[#allocation3 + $0xb0] sm:$0x3]
        %v5615 = vld [vmem:[#allocation3 + $0xb8] sm:$0x3]
        %v5616 = vpack.c.bf16 %v3470, %v5600
        %v5617 = vpack.c.bf16 %v3471, %v5601
        %v5618 = vpack.c.bf16 %v3472, %v5602
        %v5619 = vpack.c.bf16 %v3473, %v5603
        %v5620 = vpack.c.bf16 %v3474, %v5604
        %v5621 = vpack.c.bf16 %v3475, %v5605
        %v5622 = vpack.c.bf16 %v3476, %v5606
        %v5623 = vpack.c.bf16 %v3477, %v5607
        %v5624 = vpack.c.bf16 %v5608, %v5608
        %v5625 = vpack.c.bf16 %v5609, %v5609
        %v5626 = vpack.c.bf16 %v5610, %v5610
        %v5627 = vpack.c.bf16 %v5611, %v5611
        %v5628 = vpack.c.bf16 %v5612, %v5612
        %v5629 = vpack.c.bf16 %v5613, %v5613
        %v5630 = vpack.c.bf16 %v5614, %v5614
        %v5631 = vpack.c.bf16 %v5615, %v5615
        %s5632 = scalar_lea.vmem [#allocation11], 4096
        %v5633 = vld [vmem:[%s5632] sm:$0xff]
        %v5634 = vld [vmem:[%s5632 + $0x8] sm:$0xff]
        %v5635 = vld [vmem:[%s5632 + $0x10] sm:$0xff]
        %v5636 = vld [vmem:[%s5632 + $0x18] sm:$0xff]
        %v5637 = vld [vmem:[%s5632 + $0x20] sm:$0xff]
        %v5638 = vld [vmem:[%s5632 + $0x28] sm:$0xff]
        %v5639 = vld [vmem:[%s5632 + $0x30] sm:$0xff]
        %v5640 = vld [vmem:[%s5632 + $0x38] sm:$0xff]
        %v5641 = vld [vmem:[%s5632 + $0x40] sm:$0xff]
        %v5642 = vld [vmem:[%s5632 + $0x48] sm:$0xff]
        %v5643 = vld [vmem:[%s5632 + $0x50] sm:$0xff]
        %v5644 = vld [vmem:[%s5632 + $0x58] sm:$0xff]
        %v5645 = vld [vmem:[%s5632 + $0x60] sm:$0xff]
        %v5646 = vld [vmem:[%s5632 + $0x68] sm:$0xff]
        %v5647 = vld [vmem:[%s5632 + $0x70] sm:$0xff]
        %v5648 = vld [vmem:[%s5632 + $0x78] sm:$0xff]
        %v5649 = vld [vmem:[%s5632 + $0x80] sm:$0xff]
        %v5650 = vld [vmem:[%s5632 + $0x88] sm:$0xff]
        %v5651 = vld [vmem:[%s5632 + $0x90] sm:$0xff]
        %v5652 = vld [vmem:[%s5632 + $0x98] sm:$0xff]
        %v5653 = vld [vmem:[%s5632 + $0xa0] sm:$0xff]
        %v5654 = vld [vmem:[%s5632 + $0xa8] sm:$0xff]
        %v5655 = vld [vmem:[%s5632 + $0xb0] sm:$0xff]
        %v5656 = vld [vmem:[%s5632 + $0xb8] sm:$0xff]
        %v5657 = vld [vmem:[%s5632 + $0xc0] sm:$0xff]
        %v5658 = vld [vmem:[%s5632 + $0xc8] sm:$0xff]
        %v5659 = vld [vmem:[%s5632 + $0xd0] sm:$0xff]
        %v5660 = vld [vmem:[%s5632 + $0xd8] sm:$0xff]
        %v5661 = vld [vmem:[%s5632 + $0xe0] sm:$0xff]
        %v5662 = vld [vmem:[%s5632 + $0xe8] sm:$0xff]
        %v5663 = vld [vmem:[%s5632 + $0xf0] sm:$0xff]
        %v5664 = vld [vmem:[%s5632 + $0xf8] sm:$0xff]
        %v5665 = vld [vmem:[%s5632 + $0x100] sm:$0xff]
        %v5666 = vld [vmem:[%s5632 + $0x108] sm:$0xff]
        %v5667 = vld [vmem:[%s5632 + $0x110] sm:$0xff]
        %v5668 = vld [vmem:[%s5632 + $0x118] sm:$0xff]
        %v5669 = vld [vmem:[%s5632 + $0x120] sm:$0xff]
        %v5670 = vld [vmem:[%s5632 + $0x128] sm:$0xff]
        %v5671 = vld [vmem:[%s5632 + $0x130] sm:$0xff]
        %v5672 = vld [vmem:[%s5632 + $0x138] sm:$0xff]
        %v5673 = vld [vmem:[%s5632 + $0x140] sm:$0xff]
        %v5674 = vld [vmem:[%s5632 + $0x148] sm:$0xff]
        %v5675 = vld [vmem:[%s5632 + $0x150] sm:$0xff]
        %v5676 = vld [vmem:[%s5632 + $0x158] sm:$0xff]
        %v5677 = vld [vmem:[%s5632 + $0x160] sm:$0xff]
        %v5678 = vld [vmem:[%s5632 + $0x168] sm:$0xff]
        %v5679 = vld [vmem:[%s5632 + $0x170] sm:$0xff]
        %v5680 = vld [vmem:[%s5632 + $0x178] sm:$0xff]
        %v5681 = vld [vmem:[%s5632 + $0x180] sm:$0xff]
        %v5682 = vld [vmem:[%s5632 + $0x188] sm:$0xff]
        %v5683 = vld [vmem:[%s5632 + $0x190] sm:$0xff]
        %v5684 = vld [vmem:[%s5632 + $0x198] sm:$0xff]
        %v5685 = vld [vmem:[%s5632 + $0x1a0] sm:$0xff]
        %v5686 = vld [vmem:[%s5632 + $0x1a8] sm:$0xff]
        %v5687 = vld [vmem:[%s5632 + $0x1b0] sm:$0xff]
        %v5688 = vld [vmem:[%s5632 + $0x1b8] sm:$0xff]
        %v5689 = vld [vmem:[%s5632 + $0x1c0] sm:$0xff]
        %v5690 = vld [vmem:[%s5632 + $0x1c8] sm:$0xff]
        %v5691 = vld [vmem:[%s5632 + $0x1d0] sm:$0xff]
        %v5692 = vld [vmem:[%s5632 + $0x1d8] sm:$0xff]
        %v5693 = vld [vmem:[%s5632 + $0x1e0] sm:$0xff]
        %v5694 = vld [vmem:[%s5632 + $0x1e8] sm:$0xff]
        %v5695 = vld [vmem:[%s5632 + $0x1f0] sm:$0xff]
        %v5696 = vld [vmem:[%s5632 + $0x1f8] sm:$0xff]
        %v5697 = vld [vmem:[%s5632 + $0x200] sm:$0xff]
        %v5698 = vld [vmem:[%s5632 + $0x208] sm:$0xff]
        %v5699 = vld [vmem:[%s5632 + $0x210] sm:$0xff]
        %v5700 = vld [vmem:[%s5632 + $0x218] sm:$0xff]
        %v5701 = vld [vmem:[%s5632 + $0x220] sm:$0xff]
        %v5702 = vld [vmem:[%s5632 + $0x228] sm:$0xff]
        %v5703 = vld [vmem:[%s5632 + $0x230] sm:$0xff]
        %v5704 = vld [vmem:[%s5632 + $0x238] sm:$0xff]
        %v5705 = vld [vmem:[%s5632 + $0x240] sm:$0xff]
        %v5706 = vld [vmem:[%s5632 + $0x248] sm:$0xff]
        %v5707 = vld [vmem:[%s5632 + $0x250] sm:$0xff]
        %v5708 = vld [vmem:[%s5632 + $0x258] sm:$0xff]
        %v5709 = vld [vmem:[%s5632 + $0x260] sm:$0xff]
        %v5710 = vld [vmem:[%s5632 + $0x268] sm:$0xff]
        %v5711 = vld [vmem:[%s5632 + $0x270] sm:$0xff]
        %v5712 = vld [vmem:[%s5632 + $0x278] sm:$0xff]
        %v5713 = vld [vmem:[%s5632 + $0x280] sm:$0xff]
        %v5714 = vld [vmem:[%s5632 + $0x288] sm:$0xff]
        %v5715 = vld [vmem:[%s5632 + $0x290] sm:$0xff]
        %v5716 = vld [vmem:[%s5632 + $0x298] sm:$0xff]
        %v5717 = vld [vmem:[%s5632 + $0x2a0] sm:$0xff]
        %v5718 = vld [vmem:[%s5632 + $0x2a8] sm:$0xff]
        %v5719 = vld [vmem:[%s5632 + $0x2b0] sm:$0xff]
        %v5720 = vld [vmem:[%s5632 + $0x2b8] sm:$0xff]
        %v5721 = vld [vmem:[%s5632 + $0x2c0] sm:$0xff]
        %v5722 = vld [vmem:[%s5632 + $0x2c8] sm:$0xff]
        %v5723 = vld [vmem:[%s5632 + $0x2d0] sm:$0xff]
        %v5724 = vld [vmem:[%s5632 + $0x2d8] sm:$0xff]
        %v5725 = vld [vmem:[%s5632 + $0x2e0] sm:$0xff]
        %v5726 = vld [vmem:[%s5632 + $0x2e8] sm:$0xff]
        %v5727 = vld [vmem:[%s5632 + $0x2f0] sm:$0xff]
        %v5728 = vld [vmem:[%s5632 + $0x2f8] sm:$0xff]
        %v5729 = vld [vmem:[%s5632 + $0x300] sm:$0xff]
        %v5730 = vld [vmem:[%s5632 + $0x308] sm:$0xff]
        %v5731 = vld [vmem:[%s5632 + $0x310] sm:$0xff]
        %v5732 = vld [vmem:[%s5632 + $0x318] sm:$0xff]
        %v5733 = vld [vmem:[%s5632 + $0x320] sm:$0xff]
        %v5734 = vld [vmem:[%s5632 + $0x328] sm:$0xff]
        %v5735 = vld [vmem:[%s5632 + $0x330] sm:$0xff]
        %v5736 = vld [vmem:[%s5632 + $0x338] sm:$0xff]
        %v5737 = vld [vmem:[%s5632 + $0x340] sm:$0xff]
        %v5738 = vld [vmem:[%s5632 + $0x348] sm:$0xff]
        %v5739 = vld [vmem:[%s5632 + $0x350] sm:$0xff]
        %v5740 = vld [vmem:[%s5632 + $0x358] sm:$0xff]
        %v5741 = vld [vmem:[%s5632 + $0x360] sm:$0xff]
        %v5742 = vld [vmem:[%s5632 + $0x368] sm:$0xff]
        %v5743 = vld [vmem:[%s5632 + $0x370] sm:$0xff]
        %v5744 = vld [vmem:[%s5632 + $0x378] sm:$0xff]
        %v5745 = vld [vmem:[%s5632 + $0x380] sm:$0xff]
        %v5746 = vld [vmem:[%s5632 + $0x388] sm:$0xff]
        %v5747 = vld [vmem:[%s5632 + $0x390] sm:$0xff]
        %v5748 = vld [vmem:[%s5632 + $0x398] sm:$0xff]
        %v5749 = vld [vmem:[%s5632 + $0x3a0] sm:$0xff]
        %v5750 = vld [vmem:[%s5632 + $0x3a8] sm:$0xff]
        %v5751 = vld [vmem:[%s5632 + $0x3b0] sm:$0xff]
        %v5752 = vld [vmem:[%s5632 + $0x3b8] sm:$0xff]
        %v5753 = vld [vmem:[%s5632 + $0x3c0] sm:$0xff]
        %v5754 = vld [vmem:[%s5632 + $0x3c8] sm:$0xff]
        %v5755 = vld [vmem:[%s5632 + $0x3d0] sm:$0xff]
        %v5756 = vld [vmem:[%s5632 + $0x3d8] sm:$0xff]
        %v5757 = vld [vmem:[%s5632 + $0x3e0] sm:$0xff]
        %v5758 = vld [vmem:[%s5632 + $0x3e8] sm:$0xff]
        %v5759 = vld [vmem:[%s5632 + $0x3f0] sm:$0xff]
        %v5760 = vld [vmem:[%s5632 + $0x3f8] sm:$0xff]
        %v5761 = vld [vmem:[%s5632 + $0x400] sm:$0xff]
        %v5762 = vld [vmem:[%s5632 + $0x408] sm:$0xff]
        %v5763 = vld [vmem:[%s5632 + $0x410] sm:$0xff]
        %v5764 = vld [vmem:[%s5632 + $0x418] sm:$0xff]
        %v5765 = vld [vmem:[%s5632 + $0x420] sm:$0xff]
        %v5766 = vld [vmem:[%s5632 + $0x428] sm:$0xff]
        %v5767 = vld [vmem:[%s5632 + $0x430] sm:$0xff]
        %v5768 = vld [vmem:[%s5632 + $0x438] sm:$0xff]
        %v5769 = vld [vmem:[%s5632 + $0x440] sm:$0xff]
        %v5770 = vld [vmem:[%s5632 + $0x448] sm:$0xff]
        %v5771 = vld [vmem:[%s5632 + $0x450] sm:$0xff]
        %v5772 = vld [vmem:[%s5632 + $0x458] sm:$0xff]
        %v5773 = vld [vmem:[%s5632 + $0x460] sm:$0xff]
        %v5774 = vld [vmem:[%s5632 + $0x468] sm:$0xff]
        %v5775 = vld [vmem:[%s5632 + $0x470] sm:$0xff]
        %v5776 = vld [vmem:[%s5632 + $0x478] sm:$0xff]
        %v5777 = vld [vmem:[%s5632 + $0x480] sm:$0xff]
        %v5778 = vld [vmem:[%s5632 + $0x488] sm:$0xff]
        %v5779 = vld [vmem:[%s5632 + $0x490] sm:$0xff]
        %v5780 = vld [vmem:[%s5632 + $0x498] sm:$0xff]
        %v5781 = vld [vmem:[%s5632 + $0x4a0] sm:$0xff]
        %v5782 = vld [vmem:[%s5632 + $0x4a8] sm:$0xff]
        %v5783 = vld [vmem:[%s5632 + $0x4b0] sm:$0xff]
        %v5784 = vld [vmem:[%s5632 + $0x4b8] sm:$0xff]
        %v5785 = vld [vmem:[%s5632 + $0x4c0] sm:$0xff]
        %v5786 = vld [vmem:[%s5632 + $0x4c8] sm:$0xff]
        %v5787 = vld [vmem:[%s5632 + $0x4d0] sm:$0xff]
        %v5788 = vld [vmem:[%s5632 + $0x4d8] sm:$0xff]
        %v5789 = vld [vmem:[%s5632 + $0x4e0] sm:$0xff]
        %v5790 = vld [vmem:[%s5632 + $0x4e8] sm:$0xff]
        %v5791 = vld [vmem:[%s5632 + $0x4f0] sm:$0xff]
        %v5792 = vld [vmem:[%s5632 + $0x4f8] sm:$0xff]
        %v5793 = vld [vmem:[%s5632 + $0x500] sm:$0xff]
        %v5794 = vld [vmem:[%s5632 + $0x508] sm:$0xff]
        %v5795 = vld [vmem:[%s5632 + $0x510] sm:$0xff]
        %v5796 = vld [vmem:[%s5632 + $0x518] sm:$0xff]
        %v5797 = vld [vmem:[%s5632 + $0x520] sm:$0xff]
        %v5798 = vld [vmem:[%s5632 + $0x528] sm:$0xff]
        %v5799 = vld [vmem:[%s5632 + $0x530] sm:$0xff]
        %v5800 = vld [vmem:[%s5632 + $0x538] sm:$0xff]
        %v5801 = vld [vmem:[%s5632 + $0x540] sm:$0xff]
        %v5802 = vld [vmem:[%s5632 + $0x548] sm:$0xff]
        %v5803 = vld [vmem:[%s5632 + $0x550] sm:$0xff]
        %v5804 = vld [vmem:[%s5632 + $0x558] sm:$0xff]
        %v5805 = vld [vmem:[%s5632 + $0x560] sm:$0xff]
        %v5806 = vld [vmem:[%s5632 + $0x568] sm:$0xff]
        %v5807 = vld [vmem:[%s5632 + $0x570] sm:$0xff]
        %v5808 = vld [vmem:[%s5632 + $0x578] sm:$0xff]
        %v5809 = vld [vmem:[%s5632 + $0x580] sm:$0xff]
        %v5810 = vld [vmem:[%s5632 + $0x588] sm:$0xff]
        %v5811 = vld [vmem:[%s5632 + $0x590] sm:$0xff]
        %v5812 = vld [vmem:[%s5632 + $0x598] sm:$0xff]
        %v5813 = vld [vmem:[%s5632 + $0x5a0] sm:$0xff]
        %v5814 = vld [vmem:[%s5632 + $0x5a8] sm:$0xff]
        %v5815 = vld [vmem:[%s5632 + $0x5b0] sm:$0xff]
        %v5816 = vld [vmem:[%s5632 + $0x5b8] sm:$0xff]
        %v5817 = vld [vmem:[%s5632 + $0x5c0] sm:$0xff]
        %v5818 = vld [vmem:[%s5632 + $0x5c8] sm:$0xff]
        %v5819 = vld [vmem:[%s5632 + $0x5d0] sm:$0xff]
        %v5820 = vld [vmem:[%s5632 + $0x5d8] sm:$0xff]
        %v5821 = vld [vmem:[%s5632 + $0x5e0] sm:$0xff]
        %v5822 = vld [vmem:[%s5632 + $0x5e8] sm:$0xff]
        %v5823 = vld [vmem:[%s5632 + $0x5f0] sm:$0xff]
        %v5824 = vld [vmem:[%s5632 + $0x5f8] sm:$0xff]
        %v5825 = vld [vmem:[%s5632 + $0x600] sm:$0xff]
        %v5826 = vld [vmem:[%s5632 + $0x608] sm:$0xff]
        %v5827 = vld [vmem:[%s5632 + $0x610] sm:$0xff]
        %v5828 = vld [vmem:[%s5632 + $0x618] sm:$0xff]
        %v5829 = vld [vmem:[%s5632 + $0x620] sm:$0xff]
        %v5830 = vld [vmem:[%s5632 + $0x628] sm:$0xff]
        %v5831 = vld [vmem:[%s5632 + $0x630] sm:$0xff]
        %v5832 = vld [vmem:[%s5632 + $0x638] sm:$0xff]
        %v5833 = vld [vmem:[%s5632 + $0x640] sm:$0xff]
        %v5834 = vld [vmem:[%s5632 + $0x648] sm:$0xff]
        %v5835 = vld [vmem:[%s5632 + $0x650] sm:$0xff]
        %v5836 = vld [vmem:[%s5632 + $0x658] sm:$0xff]
        %v5837 = vld [vmem:[%s5632 + $0x660] sm:$0xff]
        %v5838 = vld [vmem:[%s5632 + $0x668] sm:$0xff]
        %v5839 = vld [vmem:[%s5632 + $0x670] sm:$0xff]
        %v5840 = vld [vmem:[%s5632 + $0x678] sm:$0xff]
        %v5841 = vld [vmem:[%s5632 + $0x680] sm:$0xff]
        %v5842 = vld [vmem:[%s5632 + $0x688] sm:$0xff]
        %v5843 = vld [vmem:[%s5632 + $0x690] sm:$0xff]
        %v5844 = vld [vmem:[%s5632 + $0x698] sm:$0xff]
        %v5845 = vld [vmem:[%s5632 + $0x6a0] sm:$0xff]
        %v5846 = vld [vmem:[%s5632 + $0x6a8] sm:$0xff]
        %v5847 = vld [vmem:[%s5632 + $0x6b0] sm:$0xff]
        %v5848 = vld [vmem:[%s5632 + $0x6b8] sm:$0xff]
        %v5849 = vld [vmem:[%s5632 + $0x6c0] sm:$0xff]
        %v5850 = vld [vmem:[%s5632 + $0x6c8] sm:$0xff]
        %v5851 = vld [vmem:[%s5632 + $0x6d0] sm:$0xff]
        %v5852 = vld [vmem:[%s5632 + $0x6d8] sm:$0xff]
        %v5853 = vld [vmem:[%s5632 + $0x6e0] sm:$0xff]
        %v5854 = vld [vmem:[%s5632 + $0x6e8] sm:$0xff]
        %v5855 = vld [vmem:[%s5632 + $0x6f0] sm:$0xff]
        %v5856 = vld [vmem:[%s5632 + $0x6f8] sm:$0xff]
        %v5857 = vld [vmem:[%s5632 + $0x700] sm:$0xff]
        %v5858 = vld [vmem:[%s5632 + $0x708] sm:$0xff]
        %v5859 = vld [vmem:[%s5632 + $0x710] sm:$0xff]
        %v5860 = vld [vmem:[%s5632 + $0x718] sm:$0xff]
        %v5861 = vld [vmem:[%s5632 + $0x720] sm:$0xff]
        %v5862 = vld [vmem:[%s5632 + $0x728] sm:$0xff]
        %v5863 = vld [vmem:[%s5632 + $0x730] sm:$0xff]
        %v5864 = vld [vmem:[%s5632 + $0x738] sm:$0xff]
        %v5865 = vld [vmem:[%s5632 + $0x740] sm:$0xff]
        %v5866 = vld [vmem:[%s5632 + $0x748] sm:$0xff]
        %v5867 = vld [vmem:[%s5632 + $0x750] sm:$0xff]
        %v5868 = vld [vmem:[%s5632 + $0x758] sm:$0xff]
        %v5869 = vld [vmem:[%s5632 + $0x760] sm:$0xff]
        %v5870 = vld [vmem:[%s5632 + $0x768] sm:$0xff]
        %v5871 = vld [vmem:[%s5632 + $0x770] sm:$0xff]
        %v5872 = vld [vmem:[%s5632 + $0x778] sm:$0xff]
        %v5873 = vld [vmem:[%s5632 + $0x780] sm:$0xff]
        %v5874 = vld [vmem:[%s5632 + $0x788] sm:$0xff]
        %v5875 = vld [vmem:[%s5632 + $0x790] sm:$0xff]
        %v5876 = vld [vmem:[%s5632 + $0x798] sm:$0xff]
        %v5877 = vld [vmem:[%s5632 + $0x7a0] sm:$0xff]
        %v5878 = vld [vmem:[%s5632 + $0x7a8] sm:$0xff]
        %v5879 = vld [vmem:[%s5632 + $0x7b0] sm:$0xff]
        %v5880 = vld [vmem:[%s5632 + $0x7b8] sm:$0xff]
        %v5881 = vld [vmem:[%s5632 + $0x7c0] sm:$0xff]
        %v5882 = vld [vmem:[%s5632 + $0x7c8] sm:$0xff]
        %v5883 = vld [vmem:[%s5632 + $0x7d0] sm:$0xff]
        %v5884 = vld [vmem:[%s5632 + $0x7d8] sm:$0xff]
        %v5885 = vld [vmem:[%s5632 + $0x7e0] sm:$0xff]
        %v5886 = vld [vmem:[%s5632 + $0x7e8] sm:$0xff]
        %v5887 = vld [vmem:[%s5632 + $0x7f0] sm:$0xff]
        %v5888 = vld [vmem:[%s5632 + $0x7f8] sm:$0xff]
        %vm5905 = vcmask 1046528
        %v5906 = vrot.slane %v5616, 1
        %v5907 = vrot.slane %v5624, 1
        %v5908 = vsel %vm5905, %v5906, %v5907
        %v5909 = vrot.slane %v5617, 1
        %v5910 = vrot.slane %v5625, 1
        %v5911 = vsel %vm5905, %v5909, %v5910
        %v5912 = vrot.slane %v5618, 1
        %v5913 = vrot.slane %v5626, 1
        %v5914 = vsel %vm5905, %v5912, %v5913
        %v5915 = vrot.slane %v5619, 1
        %v5916 = vrot.slane %v5627, 1
        %v5917 = vsel %vm5905, %v5915, %v5916
        %v5918 = vrot.slane %v5620, 1
        %v5919 = vrot.slane %v5628, 1
        %v5920 = vsel %vm5905, %v5918, %v5919
        %v5921 = vrot.slane %v5621, 1
        %v5922 = vrot.slane %v5629, 1
        %v5923 = vsel %vm5905, %v5921, %v5922
        %v5924 = vrot.slane %v5622, 1
        %v5925 = vrot.slane %v5630, 1
        %v5926 = vsel %vm5905, %v5924, %v5925
        %v5927 = vrot.slane %v5623, 1
        %v5928 = vrot.slane %v5631, 1
        %v5929 = vsel %vm5905, %v5927, %v5928
        %v6194 = vunpack.c.l.b16 %v5633
        %v6195 = vunpack.c.h.b16 %v5633
        %v6196 = vunpack.c.l.b16 %v5634
        %v6197 = vunpack.c.h.b16 %v5634
        %v6198 = vunpack.c.l.b16 %v5635
        %v6199 = vunpack.c.h.b16 %v5635
        %v6200 = vunpack.c.l.b16 %v5636
        %v6201 = vunpack.c.h.b16 %v5636
        %v6202 = vunpack.c.l.b16 %v5637
        %v6203 = vunpack.c.h.b16 %v5637
        %v6204 = vunpack.c.l.b16 %v5638
        %v6205 = vunpack.c.h.b16 %v5638
        %v6206 = vunpack.c.l.b16 %v5639
        %v6207 = vunpack.c.h.b16 %v5639
        %v6208 = vunpack.c.l.b16 %v5640
        %v6209 = vunpack.c.h.b16 %v5640
        %v6210 = vunpack.c.l.b16 %v5641
        %v6211 = vunpack.c.h.b16 %v5641
        %v6212 = vunpack.c.l.b16 %v5642
        %v6213 = vunpack.c.h.b16 %v5642
        %v6214 = vunpack.c.l.b16 %v5643
        %v6215 = vunpack.c.h.b16 %v5643
        %v6216 = vunpack.c.l.b16 %v5644
        %v6217 = vunpack.c.h.b16 %v5644
        %v6218 = vunpack.c.l.b16 %v5645
        %v6219 = vunpack.c.h.b16 %v5645
        %v6220 = vunpack.c.l.b16 %v5646
        %v6221 = vunpack.c.h.b16 %v5646
        %v6222 = vunpack.c.l.b16 %v5647
        %v6223 = vunpack.c.h.b16 %v5647
        %v6224 = vunpack.c.l.b16 %v5648
        %v6225 = vunpack.c.h.b16 %v5648
        %v6226 = vunpack.c.l.b16 %v5649
        %v6227 = vunpack.c.h.b16 %v5649
        %v6228 = vunpack.c.l.b16 %v5650
        %v6229 = vunpack.c.h.b16 %v5650
        %v6230 = vunpack.c.l.b16 %v5651
        %v6231 = vunpack.c.h.b16 %v5651
        %v6232 = vunpack.c.l.b16 %v5652
        %v6233 = vunpack.c.h.b16 %v5652
        %v6234 = vunpack.c.l.b16 %v5653
        %v6235 = vunpack.c.h.b16 %v5653
        %v6236 = vunpack.c.l.b16 %v5654
        %v6237 = vunpack.c.h.b16 %v5654
        %v6238 = vunpack.c.l.b16 %v5655
        %v6239 = vunpack.c.h.b16 %v5655
        %v6240 = vunpack.c.l.b16 %v5656
        %v6241 = vunpack.c.h.b16 %v5656
        %v6242 = vunpack.c.l.b16 %v5657
        %v6243 = vunpack.c.h.b16 %v5657
        %v6244 = vunpack.c.l.b16 %v5658
        %v6245 = vunpack.c.h.b16 %v5658
        %v6246 = vunpack.c.l.b16 %v5659
        %v6247 = vunpack.c.h.b16 %v5659
        %v6248 = vunpack.c.l.b16 %v5660
        %v6249 = vunpack.c.h.b16 %v5660
        %v6250 = vunpack.c.l.b16 %v5661
        %v6251 = vunpack.c.h.b16 %v5661
        %v6252 = vunpack.c.l.b16 %v5662
        %v6253 = vunpack.c.h.b16 %v5662
        %v6254 = vunpack.c.l.b16 %v5663
        %v6255 = vunpack.c.h.b16 %v5663
        %v6256 = vunpack.c.l.b16 %v5664
        %v6257 = vunpack.c.h.b16 %v5664
        %v6258 = vunpack.c.l.b16 %v5665
        %v6259 = vunpack.c.h.b16 %v5665
        %v6260 = vunpack.c.l.b16 %v5666
        %v6261 = vunpack.c.h.b16 %v5666
        %v6262 = vunpack.c.l.b16 %v5667
        %v6263 = vunpack.c.h.b16 %v5667
        %v6264 = vunpack.c.l.b16 %v5668
        %v6265 = vunpack.c.h.b16 %v5668
        %v6266 = vunpack.c.l.b16 %v5669
        %v6267 = vunpack.c.h.b16 %v5669
        %v6268 = vunpack.c.l.b16 %v5670
        %v6269 = vunpack.c.h.b16 %v5670
        %v6270 = vunpack.c.l.b16 %v5671
        %v6271 = vunpack.c.h.b16 %v5671
        %v6272 = vunpack.c.l.b16 %v5672
        %v6273 = vunpack.c.h.b16 %v5672
        %v6274 = vunpack.c.l.b16 %v5673
        %v6275 = vunpack.c.h.b16 %v5673
        %v6276 = vunpack.c.l.b16 %v5674
        %v6277 = vunpack.c.h.b16 %v5674
        %v6278 = vunpack.c.l.b16 %v5675
        %v6279 = vunpack.c.h.b16 %v5675
        %v6280 = vunpack.c.l.b16 %v5676
        %v6281 = vunpack.c.h.b16 %v5676
        %v6282 = vunpack.c.l.b16 %v5677
        %v6283 = vunpack.c.h.b16 %v5677
        %v6284 = vunpack.c.l.b16 %v5678
        %v6285 = vunpack.c.h.b16 %v5678
        %v6286 = vunpack.c.l.b16 %v5679
        %v6287 = vunpack.c.h.b16 %v5679
        %v6288 = vunpack.c.l.b16 %v5680
        %v6289 = vunpack.c.h.b16 %v5680
        %v6290 = vunpack.c.l.b16 %v5681
        %v6291 = vunpack.c.h.b16 %v5681
        %v6292 = vunpack.c.l.b16 %v5682
        %v6293 = vunpack.c.h.b16 %v5682
        %v6294 = vunpack.c.l.b16 %v5683
        %v6295 = vunpack.c.h.b16 %v5683
        %v6296 = vunpack.c.l.b16 %v5684
        %v6297 = vunpack.c.h.b16 %v5684
        %v6298 = vunpack.c.l.b16 %v5685
        %v6299 = vunpack.c.h.b16 %v5685
        %v6300 = vunpack.c.l.b16 %v5686
        %v6301 = vunpack.c.h.b16 %v5686
        %v6302 = vunpack.c.l.b16 %v5687
        %v6303 = vunpack.c.h.b16 %v5687
        %v6304 = vunpack.c.l.b16 %v5688
        %v6305 = vunpack.c.h.b16 %v5688
        %v6306 = vunpack.c.l.b16 %v5689
        %v6307 = vunpack.c.h.b16 %v5689
        %v6308 = vunpack.c.l.b16 %v5690
        %v6309 = vunpack.c.h.b16 %v5690
        %v6310 = vunpack.c.l.b16 %v5691
        %v6311 = vunpack.c.h.b16 %v5691
        %v6312 = vunpack.c.l.b16 %v5692
        %v6313 = vunpack.c.h.b16 %v5692
        %v6314 = vunpack.c.l.b16 %v5693
        %v6315 = vunpack.c.h.b16 %v5693
        %v6316 = vunpack.c.l.b16 %v5694
        %v6317 = vunpack.c.h.b16 %v5694
        %v6318 = vunpack.c.l.b16 %v5695
        %v6319 = vunpack.c.h.b16 %v5695
        %v6320 = vunpack.c.l.b16 %v5696
        %v6321 = vunpack.c.h.b16 %v5696
        %v6322 = vunpack.c.l.b16 %v5697
        %v6323 = vunpack.c.h.b16 %v5697
        %v6324 = vunpack.c.l.b16 %v5698
        %v6325 = vunpack.c.h.b16 %v5698
        %v6326 = vunpack.c.l.b16 %v5699
        %v6327 = vunpack.c.h.b16 %v5699
        %v6328 = vunpack.c.l.b16 %v5700
        %v6329 = vunpack.c.h.b16 %v5700
        %v6330 = vunpack.c.l.b16 %v5701
        %v6331 = vunpack.c.h.b16 %v5701
        %v6332 = vunpack.c.l.b16 %v5702
        %v6333 = vunpack.c.h.b16 %v5702
        %v6334 = vunpack.c.l.b16 %v5703
        %v6335 = vunpack.c.h.b16 %v5703
        %v6336 = vunpack.c.l.b16 %v5704
        %v6337 = vunpack.c.h.b16 %v5704
        %v6338 = vunpack.c.l.b16 %v5705
        %v6339 = vunpack.c.h.b16 %v5705
        %v6340 = vunpack.c.l.b16 %v5706
        %v6341 = vunpack.c.h.b16 %v5706
        %v6342 = vunpack.c.l.b16 %v5707
        %v6343 = vunpack.c.h.b16 %v5707
        %v6344 = vunpack.c.l.b16 %v5708
        %v6345 = vunpack.c.h.b16 %v5708
        %v6346 = vunpack.c.l.b16 %v5709
        %v6347 = vunpack.c.h.b16 %v5709
        %v6348 = vunpack.c.l.b16 %v5710
        %v6349 = vunpack.c.h.b16 %v5710
        %v6350 = vunpack.c.l.b16 %v5711
        %v6351 = vunpack.c.h.b16 %v5711
        %v6352 = vunpack.c.l.b16 %v5712
        %v6353 = vunpack.c.h.b16 %v5712
        %v6354 = vunpack.c.l.b16 %v5713
        %v6355 = vunpack.c.h.b16 %v5713
        %v6356 = vunpack.c.l.b16 %v5714
        %v6357 = vunpack.c.h.b16 %v5714
        %v6358 = vunpack.c.l.b16 %v5715
        %v6359 = vunpack.c.h.b16 %v5715
        %v6360 = vunpack.c.l.b16 %v5716
        %v6361 = vunpack.c.h.b16 %v5716
        %v6362 = vunpack.c.l.b16 %v5717
        %v6363 = vunpack.c.h.b16 %v5717
        %v6364 = vunpack.c.l.b16 %v5718
        %v6365 = vunpack.c.h.b16 %v5718
        %v6366 = vunpack.c.l.b16 %v5719
        %v6367 = vunpack.c.h.b16 %v5719
        %v6368 = vunpack.c.l.b16 %v5720
        %v6369 = vunpack.c.h.b16 %v5720
        %v6370 = vunpack.c.l.b16 %v5721
        %v6371 = vunpack.c.h.b16 %v5721
        %v6372 = vunpack.c.l.b16 %v5722
        %v6373 = vunpack.c.h.b16 %v5722
        %v6374 = vunpack.c.l.b16 %v5723
        %v6375 = vunpack.c.h.b16 %v5723
        %v6376 = vunpack.c.l.b16 %v5724
        %v6377 = vunpack.c.h.b16 %v5724
        %v6378 = vunpack.c.l.b16 %v5725
        %v6379 = vunpack.c.h.b16 %v5725
        %v6380 = vunpack.c.l.b16 %v5726
        %v6381 = vunpack.c.h.b16 %v5726
        %v6382 = vunpack.c.l.b16 %v5727
        %v6383 = vunpack.c.h.b16 %v5727
        %v6384 = vunpack.c.l.b16 %v5728
        %v6385 = vunpack.c.h.b16 %v5728
        %v6386 = vunpack.c.l.b16 %v5729
        %v6387 = vunpack.c.h.b16 %v5729
        %v6388 = vunpack.c.l.b16 %v5730
        %v6389 = vunpack.c.h.b16 %v5730
        %v6390 = vunpack.c.l.b16 %v5731
        %v6391 = vunpack.c.h.b16 %v5731
        %v6392 = vunpack.c.l.b16 %v5732
        %v6393 = vunpack.c.h.b16 %v5732
        %v6394 = vunpack.c.l.b16 %v5733
        %v6395 = vunpack.c.h.b16 %v5733
        %v6396 = vunpack.c.l.b16 %v5734
        %v6397 = vunpack.c.h.b16 %v5734
        %v6398 = vunpack.c.l.b16 %v5735
        %v6399 = vunpack.c.h.b16 %v5735
        %v6400 = vunpack.c.l.b16 %v5736
        %v6401 = vunpack.c.h.b16 %v5736
        %v6402 = vunpack.c.l.b16 %v5737
        %v6403 = vunpack.c.h.b16 %v5737
        %v6404 = vunpack.c.l.b16 %v5738
        %v6405 = vunpack.c.h.b16 %v5738
        %v6406 = vunpack.c.l.b16 %v5739
        %v6407 = vunpack.c.h.b16 %v5739
        %v6408 = vunpack.c.l.b16 %v5740
        %v6409 = vunpack.c.h.b16 %v5740
        %v6410 = vunpack.c.l.b16 %v5741
        %v6411 = vunpack.c.h.b16 %v5741
        %v6412 = vunpack.c.l.b16 %v5742
        %v6413 = vunpack.c.h.b16 %v5742
        %v6414 = vunpack.c.l.b16 %v5743
        %v6415 = vunpack.c.h.b16 %v5743
        %v6416 = vunpack.c.l.b16 %v5744
        %v6417 = vunpack.c.h.b16 %v5744
        %v6418 = vunpack.c.l.b16 %v5745
        %v6419 = vunpack.c.h.b16 %v5745
        %v6420 = vunpack.c.l.b16 %v5746
        %v6421 = vunpack.c.h.b16 %v5746
        %v6422 = vunpack.c.l.b16 %v5747
        %v6423 = vunpack.c.h.b16 %v5747
        %v6424 = vunpack.c.l.b16 %v5748
        %v6425 = vunpack.c.h.b16 %v5748
        %v6426 = vunpack.c.l.b16 %v5749
        %v6427 = vunpack.c.h.b16 %v5749
        %v6428 = vunpack.c.l.b16 %v5750
        %v6429 = vunpack.c.h.b16 %v5750
        %v6430 = vunpack.c.l.b16 %v5751
        %v6431 = vunpack.c.h.b16 %v5751
        %v6432 = vunpack.c.l.b16 %v5752
        %v6433 = vunpack.c.h.b16 %v5752
        %v6434 = vunpack.c.l.b16 %v5753
        %v6435 = vunpack.c.h.b16 %v5753
        %v6436 = vunpack.c.l.b16 %v5754
        %v6437 = vunpack.c.h.b16 %v5754
        %v6438 = vunpack.c.l.b16 %v5755
        %v6439 = vunpack.c.h.b16 %v5755
        %v6440 = vunpack.c.l.b16 %v5756
        %v6441 = vunpack.c.h.b16 %v5756
        %v6442 = vunpack.c.l.b16 %v5757
        %v6443 = vunpack.c.h.b16 %v5757
        %v6444 = vunpack.c.l.b16 %v5758
        %v6445 = vunpack.c.h.b16 %v5758
        %v6446 = vunpack.c.l.b16 %v5759
        %v6447 = vunpack.c.h.b16 %v5759
        %v6448 = vunpack.c.l.b16 %v5760
        %v6449 = vunpack.c.h.b16 %v5760
        %v6450 = vunpack.c.l.b16 %v5761
        %v6451 = vunpack.c.h.b16 %v5761
        %v6452 = vunpack.c.l.b16 %v5762
        %v6453 = vunpack.c.h.b16 %v5762
        %v6454 = vunpack.c.l.b16 %v5763
        %v6455 = vunpack.c.h.b16 %v5763
        %v6456 = vunpack.c.l.b16 %v5764
        %v6457 = vunpack.c.h.b16 %v5764
        %v6458 = vunpack.c.l.b16 %v5765
        %v6459 = vunpack.c.h.b16 %v5765
        %v6460 = vunpack.c.l.b16 %v5766
        %v6461 = vunpack.c.h.b16 %v5766
        %v6462 = vunpack.c.l.b16 %v5767
        %v6463 = vunpack.c.h.b16 %v5767
        %v6464 = vunpack.c.l.b16 %v5768
        %v6465 = vunpack.c.h.b16 %v5768
        %v6466 = vunpack.c.l.b16 %v5769
        %v6467 = vunpack.c.h.b16 %v5769
        %v6468 = vunpack.c.l.b16 %v5770
        %v6469 = vunpack.c.h.b16 %v5770
        %v6470 = vunpack.c.l.b16 %v5771
        %v6471 = vunpack.c.h.b16 %v5771
        %v6472 = vunpack.c.l.b16 %v5772
        %v6473 = vunpack.c.h.b16 %v5772
        %v6474 = vunpack.c.l.b16 %v5773
        %v6475 = vunpack.c.h.b16 %v5773
        %v6476 = vunpack.c.l.b16 %v5774
        %v6477 = vunpack.c.h.b16 %v5774
        %v6478 = vunpack.c.l.b16 %v5775
        %v6479 = vunpack.c.h.b16 %v5775
        %v6480 = vunpack.c.l.b16 %v5776
        %v6481 = vunpack.c.h.b16 %v5776
        %v6482 = vunpack.c.l.b16 %v5777
        %v6483 = vunpack.c.h.b16 %v5777
        %v6484 = vunpack.c.l.b16 %v5778
        %v6485 = vunpack.c.h.b16 %v5778
        %v6486 = vunpack.c.l.b16 %v5779
        %v6487 = vunpack.c.h.b16 %v5779
        %v6488 = vunpack.c.l.b16 %v5780
        %v6489 = vunpack.c.h.b16 %v5780
        %v6490 = vunpack.c.l.b16 %v5781
        %v6491 = vunpack.c.h.b16 %v5781
        %v6492 = vunpack.c.l.b16 %v5782
        %v6493 = vunpack.c.h.b16 %v5782
        %v6494 = vunpack.c.l.b16 %v5783
        %v6495 = vunpack.c.h.b16 %v5783
        %v6496 = vunpack.c.l.b16 %v5784
        %v6497 = vunpack.c.h.b16 %v5784
        %v6498 = vunpack.c.l.b16 %v5785
        %v6499 = vunpack.c.h.b16 %v5785
        %v6500 = vunpack.c.l.b16 %v5786
        %v6501 = vunpack.c.h.b16 %v5786
        %v6502 = vunpack.c.l.b16 %v5787
        %v6503 = vunpack.c.h.b16 %v5787
        %v6504 = vunpack.c.l.b16 %v5788
        %v6505 = vunpack.c.h.b16 %v5788
        %v6506 = vunpack.c.l.b16 %v5789
        %v6507 = vunpack.c.h.b16 %v5789
        %v6508 = vunpack.c.l.b16 %v5790
        %v6509 = vunpack.c.h.b16 %v5790
        %v6510 = vunpack.c.l.b16 %v5791
        %v6511 = vunpack.c.h.b16 %v5791
        %v6512 = vunpack.c.l.b16 %v5792
        %v6513 = vunpack.c.h.b16 %v5792
        %v6514 = vunpack.c.l.b16 %v5793
        %v6515 = vunpack.c.h.b16 %v5793
        %v6516 = vunpack.c.l.b16 %v5794
        %v6517 = vunpack.c.h.b16 %v5794
        %v6518 = vunpack.c.l.b16 %v5795
        %v6519 = vunpack.c.h.b16 %v5795
        %v6520 = vunpack.c.l.b16 %v5796
        %v6521 = vunpack.c.h.b16 %v5796
        %v6522 = vunpack.c.l.b16 %v5797
        %v6523 = vunpack.c.h.b16 %v5797
        %v6524 = vunpack.c.l.b16 %v5798
        %v6525 = vunpack.c.h.b16 %v5798
        %v6526 = vunpack.c.l.b16 %v5799
        %v6527 = vunpack.c.h.b16 %v5799
        %v6528 = vunpack.c.l.b16 %v5800
        %v6529 = vunpack.c.h.b16 %v5800
        %v6530 = vunpack.c.l.b16 %v5801
        %v6531 = vunpack.c.h.b16 %v5801
        %v6532 = vunpack.c.l.b16 %v5802
        %v6533 = vunpack.c.h.b16 %v5802
        %v6534 = vunpack.c.l.b16 %v5803
        %v6535 = vunpack.c.h.b16 %v5803
        %v6536 = vunpack.c.l.b16 %v5804
        %v6537 = vunpack.c.h.b16 %v5804
        %v6538 = vunpack.c.l.b16 %v5805
        %v6539 = vunpack.c.h.b16 %v5805
        %v6540 = vunpack.c.l.b16 %v5806
        %v6541 = vunpack.c.h.b16 %v5806
        %v6542 = vunpack.c.l.b16 %v5807
        %v6543 = vunpack.c.h.b16 %v5807
        %v6544 = vunpack.c.l.b16 %v5808
        %v6545 = vunpack.c.h.b16 %v5808
        %v6546 = vunpack.c.l.b16 %v5809
        %v6547 = vunpack.c.h.b16 %v5809
        %v6548 = vunpack.c.l.b16 %v5810
        %v6549 = vunpack.c.h.b16 %v5810
        %v6550 = vunpack.c.l.b16 %v5811
        %v6551 = vunpack.c.h.b16 %v5811
        %v6552 = vunpack.c.l.b16 %v5812
        %v6553 = vunpack.c.h.b16 %v5812
        %v6554 = vunpack.c.l.b16 %v5813
        %v6555 = vunpack.c.h.b16 %v5813
        %v6556 = vunpack.c.l.b16 %v5814
        %v6557 = vunpack.c.h.b16 %v5814
        %v6558 = vunpack.c.l.b16 %v5815
        %v6559 = vunpack.c.h.b16 %v5815
        %v6560 = vunpack.c.l.b16 %v5816
        %v6561 = vunpack.c.h.b16 %v5816
        %v6562 = vunpack.c.l.b16 %v5817
        %v6563 = vunpack.c.h.b16 %v5817
        %v6564 = vunpack.c.l.b16 %v5818
        %v6565 = vunpack.c.h.b16 %v5818
        %v6566 = vunpack.c.l.b16 %v5819
        %v6567 = vunpack.c.h.b16 %v5819
        %v6568 = vunpack.c.l.b16 %v5820
        %v6569 = vunpack.c.h.b16 %v5820
        %v6570 = vunpack.c.l.b16 %v5821
        %v6571 = vunpack.c.h.b16 %v5821
        %v6572 = vunpack.c.l.b16 %v5822
        %v6573 = vunpack.c.h.b16 %v5822
        %v6574 = vunpack.c.l.b16 %v5823
        %v6575 = vunpack.c.h.b16 %v5823
        %v6576 = vunpack.c.l.b16 %v5824
        %v6577 = vunpack.c.h.b16 %v5824
        %v6578 = vunpack.c.l.b16 %v5825
        %v6579 = vunpack.c.h.b16 %v5825
        %v6580 = vunpack.c.l.b16 %v5826
        %v6581 = vunpack.c.h.b16 %v5826
        %v6582 = vunpack.c.l.b16 %v5827
        %v6583 = vunpack.c.h.b16 %v5827
        %v6584 = vunpack.c.l.b16 %v5828
        %v6585 = vunpack.c.h.b16 %v5828
        %v6586 = vunpack.c.l.b16 %v5829
        %v6587 = vunpack.c.h.b16 %v5829
        %v6588 = vunpack.c.l.b16 %v5830
        %v6589 = vunpack.c.h.b16 %v5830
        %v6590 = vunpack.c.l.b16 %v5831
        %v6591 = vunpack.c.h.b16 %v5831
        %v6592 = vunpack.c.l.b16 %v5832
        %v6593 = vunpack.c.h.b16 %v5832
        %v6594 = vunpack.c.l.b16 %v5833
        %v6595 = vunpack.c.h.b16 %v5833
        %v6596 = vunpack.c.l.b16 %v5834
        %v6597 = vunpack.c.h.b16 %v5834
        %v6598 = vunpack.c.l.b16 %v5835
        %v6599 = vunpack.c.h.b16 %v5835
        %v6600 = vunpack.c.l.b16 %v5836
        %v6601 = vunpack.c.h.b16 %v5836
        %v6602 = vunpack.c.l.b16 %v5837
        %v6603 = vunpack.c.h.b16 %v5837
        %v6604 = vunpack.c.l.b16 %v5838
        %v6605 = vunpack.c.h.b16 %v5838
        %v6606 = vunpack.c.l.b16 %v5839
        %v6607 = vunpack.c.h.b16 %v5839
        %v6608 = vunpack.c.l.b16 %v5840
        %v6609 = vunpack.c.h.b16 %v5840
        %v6610 = vunpack.c.l.b16 %v5841
        %v6611 = vunpack.c.h.b16 %v5841
        %v6612 = vunpack.c.l.b16 %v5842
        %v6613 = vunpack.c.h.b16 %v5842
        %v6614 = vunpack.c.l.b16 %v5843
        %v6615 = vunpack.c.h.b16 %v5843
        %v6616 = vunpack.c.l.b16 %v5844
        %v6617 = vunpack.c.h.b16 %v5844
        %v6618 = vunpack.c.l.b16 %v5845
        %v6619 = vunpack.c.h.b16 %v5845
        %v6620 = vunpack.c.l.b16 %v5846
        %v6621 = vunpack.c.h.b16 %v5846
        %v6622 = vunpack.c.l.b16 %v5847
        %v6623 = vunpack.c.h.b16 %v5847
        %v6624 = vunpack.c.l.b16 %v5848
        %v6625 = vunpack.c.h.b16 %v5848
        %v6626 = vunpack.c.l.b16 %v5849
        %v6627 = vunpack.c.h.b16 %v5849
        %v6628 = vunpack.c.l.b16 %v5850
        %v6629 = vunpack.c.h.b16 %v5850
        %v6630 = vunpack.c.l.b16 %v5851
        %v6631 = vunpack.c.h.b16 %v5851
        %v6632 = vunpack.c.l.b16 %v5852
        %v6633 = vunpack.c.h.b16 %v5852
        %v6634 = vunpack.c.l.b16 %v5853
        %v6635 = vunpack.c.h.b16 %v5853
        %v6636 = vunpack.c.l.b16 %v5854
        %v6637 = vunpack.c.h.b16 %v5854
        %v6638 = vunpack.c.l.b16 %v5855
        %v6639 = vunpack.c.h.b16 %v5855
        %v6640 = vunpack.c.l.b16 %v5856
        %v6641 = vunpack.c.h.b16 %v5856
        %v6642 = vunpack.c.l.b16 %v5857
        %v6643 = vunpack.c.h.b16 %v5857
        %v6644 = vunpack.c.l.b16 %v5858
        %v6645 = vunpack.c.h.b16 %v5858
        %v6646 = vunpack.c.l.b16 %v5859
        %v6647 = vunpack.c.h.b16 %v5859
        %v6648 = vunpack.c.l.b16 %v5860
        %v6649 = vunpack.c.h.b16 %v5860
        %v6650 = vunpack.c.l.b16 %v5861
        %v6651 = vunpack.c.h.b16 %v5861
        %v6652 = vunpack.c.l.b16 %v5862
        %v6653 = vunpack.c.h.b16 %v5862
        %v6654 = vunpack.c.l.b16 %v5863
        %v6655 = vunpack.c.h.b16 %v5863
        %v6656 = vunpack.c.l.b16 %v5864
        %v6657 = vunpack.c.h.b16 %v5864
        %v6658 = vunpack.c.l.b16 %v5865
        %v6659 = vunpack.c.h.b16 %v5865
        %v6660 = vunpack.c.l.b16 %v5866
        %v6661 = vunpack.c.h.b16 %v5866
        %v6662 = vunpack.c.l.b16 %v5867
        %v6663 = vunpack.c.h.b16 %v5867
        %v6664 = vunpack.c.l.b16 %v5868
        %v6665 = vunpack.c.h.b16 %v5868
        %v6666 = vunpack.c.l.b16 %v5869
        %v6667 = vunpack.c.h.b16 %v5869
        %v6668 = vunpack.c.l.b16 %v5870
        %v6669 = vunpack.c.h.b16 %v5870
        %v6670 = vunpack.c.l.b16 %v5871
        %v6671 = vunpack.c.h.b16 %v5871
        %v6672 = vunpack.c.l.b16 %v5872
        %v6673 = vunpack.c.h.b16 %v5872
        %v6674 = vunpack.c.l.b16 %v5873
        %v6675 = vunpack.c.h.b16 %v5873
        %v6676 = vunpack.c.l.b16 %v5874
        %v6677 = vunpack.c.h.b16 %v5874
        %v6678 = vunpack.c.l.b16 %v5875
        %v6679 = vunpack.c.h.b16 %v5875
        %v6680 = vunpack.c.l.b16 %v5876
        %v6681 = vunpack.c.h.b16 %v5876
        %v6682 = vunpack.c.l.b16 %v5877
        %v6683 = vunpack.c.h.b16 %v5877
        %v6684 = vunpack.c.l.b16 %v5878
        %v6685 = vunpack.c.h.b16 %v5878
        %v6686 = vunpack.c.l.b16 %v5879
        %v6687 = vunpack.c.h.b16 %v5879
        %v6688 = vunpack.c.l.b16 %v5880
        %v6689 = vunpack.c.h.b16 %v5880
        %v6690 = vunpack.c.l.b16 %v5881
        %v6691 = vunpack.c.h.b16 %v5881
        %v6692 = vunpack.c.l.b16 %v5882
        %v6693 = vunpack.c.h.b16 %v5882
        %v6694 = vunpack.c.l.b16 %v5883
        %v6695 = vunpack.c.h.b16 %v5883
        %v6696 = vunpack.c.l.b16 %v5884
        %v6697 = vunpack.c.h.b16 %v5884
        %v6698 = vunpack.c.l.b16 %v5885
        %v6699 = vunpack.c.h.b16 %v5885
        %v6700 = vunpack.c.l.b16 %v5886
        %v6701 = vunpack.c.h.b16 %v5886
        %v6702 = vunpack.c.l.b16 %v5887
        %v6703 = vunpack.c.h.b16 %v5887
        %v6704 = vunpack.c.l.b16 %v5888
        %v6705 = vunpack.c.h.b16 %v5888
        %v6706 = vpack.c.b16 %v6198, %v6194
        %v6707 = vpack.c.b16 %v6199, %v6195
        %v6708 = vpack.c.b16 %v6200, %v6196
        %v6709 = vpack.c.b16 %v6201, %v6197
        %v6710 = vpack.c.b16 %v6206, %v6202
        %v6711 = vpack.c.b16 %v6207, %v6203
        %v6712 = vpack.c.b16 %v6208, %v6204
        %v6713 = vpack.c.b16 %v6209, %v6205
        %v6714 = vpack.c.b16 %v6214, %v6210
        %v6715 = vpack.c.b16 %v6215, %v6211
        %v6716 = vpack.c.b16 %v6216, %v6212
        %v6717 = vpack.c.b16 %v6217, %v6213
        %v6718 = vpack.c.b16 %v6222, %v6218
        %v6719 = vpack.c.b16 %v6223, %v6219
        %v6720 = vpack.c.b16 %v6224, %v6220
        %v6721 = vpack.c.b16 %v6225, %v6221
        %v6722 = vpack.c.b16 %v6230, %v6226
        %v6723 = vpack.c.b16 %v6231, %v6227
        %v6724 = vpack.c.b16 %v6232, %v6228
        %v6725 = vpack.c.b16 %v6233, %v6229
        %v6726 = vpack.c.b16 %v6238, %v6234
        %v6727 = vpack.c.b16 %v6239, %v6235
        %v6728 = vpack.c.b16 %v6240, %v6236
        %v6729 = vpack.c.b16 %v6241, %v6237
        %v6730 = vpack.c.b16 %v6246, %v6242
        %v6731 = vpack.c.b16 %v6247, %v6243
        %v6732 = vpack.c.b16 %v6248, %v6244
        %v6733 = vpack.c.b16 %v6249, %v6245
        %v6734 = vpack.c.b16 %v6254, %v6250
        %v6735 = vpack.c.b16 %v6255, %v6251
        %v6736 = vpack.c.b16 %v6256, %v6252
        %v6737 = vpack.c.b16 %v6257, %v6253
        %v6738 = vpack.c.b16 %v6262, %v6258
        %v6739 = vpack.c.b16 %v6263, %v6259
        %v6740 = vpack.c.b16 %v6264, %v6260
        %v6741 = vpack.c.b16 %v6265, %v6261
        %v6742 = vpack.c.b16 %v6270, %v6266
        %v6743 = vpack.c.b16 %v6271, %v6267
        %v6744 = vpack.c.b16 %v6272, %v6268
        %v6745 = vpack.c.b16 %v6273, %v6269
        %v6746 = vpack.c.b16 %v6278, %v6274
        %v6747 = vpack.c.b16 %v6279, %v6275
        %v6748 = vpack.c.b16 %v6280, %v6276
        %v6749 = vpack.c.b16 %v6281, %v6277
        %v6750 = vpack.c.b16 %v6286, %v6282
        %v6751 = vpack.c.b16 %v6287, %v6283
        %v6752 = vpack.c.b16 %v6288, %v6284
        %v6753 = vpack.c.b16 %v6289, %v6285
        %v6754 = vpack.c.b16 %v6294, %v6290
        %v6755 = vpack.c.b16 %v6295, %v6291
        %v6756 = vpack.c.b16 %v6296, %v6292
        %v6757 = vpack.c.b16 %v6297, %v6293
        %v6758 = vpack.c.b16 %v6302, %v6298
        %v6759 = vpack.c.b16 %v6303, %v6299
        %v6760 = vpack.c.b16 %v6304, %v6300
        %v6761 = vpack.c.b16 %v6305, %v6301
        %v6762 = vpack.c.b16 %v6310, %v6306
        %v6763 = vpack.c.b16 %v6311, %v6307
        %v6764 = vpack.c.b16 %v6312, %v6308
        %v6765 = vpack.c.b16 %v6313, %v6309
        %v6766 = vpack.c.b16 %v6318, %v6314
        %v6767 = vpack.c.b16 %v6319, %v6315
        %v6768 = vpack.c.b16 %v6320, %v6316
        %v6769 = vpack.c.b16 %v6321, %v6317
        %v6770 = vpack.c.b16 %v6326, %v6322
        %v6771 = vpack.c.b16 %v6327, %v6323
        %v6772 = vpack.c.b16 %v6328, %v6324
        %v6773 = vpack.c.b16 %v6329, %v6325
        %v6774 = vpack.c.b16 %v6334, %v6330
        %v6775 = vpack.c.b16 %v6335, %v6331
        %v6776 = vpack.c.b16 %v6336, %v6332
        %v6777 = vpack.c.b16 %v6337, %v6333
        %v6778 = vpack.c.b16 %v6342, %v6338
        %v6779 = vpack.c.b16 %v6343, %v6339
        %v6780 = vpack.c.b16 %v6344, %v6340
        %v6781 = vpack.c.b16 %v6345, %v6341
        %v6782 = vpack.c.b16 %v6350, %v6346
        %v6783 = vpack.c.b16 %v6351, %v6347
        %v6784 = vpack.c.b16 %v6352, %v6348
        %v6785 = vpack.c.b16 %v6353, %v6349
        %v6786 = vpack.c.b16 %v6358, %v6354
        %v6787 = vpack.c.b16 %v6359, %v6355
        %v6788 = vpack.c.b16 %v6360, %v6356
        %v6789 = vpack.c.b16 %v6361, %v6357
        %v6790 = vpack.c.b16 %v6366, %v6362
        %v6791 = vpack.c.b16 %v6367, %v6363
        %v6792 = vpack.c.b16 %v6368, %v6364
        %v6793 = vpack.c.b16 %v6369, %v6365
        %v6794 = vpack.c.b16 %v6374, %v6370
        %v6795 = vpack.c.b16 %v6375, %v6371
        %v6796 = vpack.c.b16 %v6376, %v6372
        %v6797 = vpack.c.b16 %v6377, %v6373
        %v6798 = vpack.c.b16 %v6382, %v6378
        %v6799 = vpack.c.b16 %v6383, %v6379
        %v6800 = vpack.c.b16 %v6384, %v6380
        %v6801 = vpack.c.b16 %v6385, %v6381
        %v6802 = vpack.c.b16 %v6390, %v6386
        %v6803 = vpack.c.b16 %v6391, %v6387
        %v6804 = vpack.c.b16 %v6392, %v6388
        %v6805 = vpack.c.b16 %v6393, %v6389
        %v6806 = vpack.c.b16 %v6398, %v6394
        %v6807 = vpack.c.b16 %v6399, %v6395
        %v6808 = vpack.c.b16 %v6400, %v6396
        %v6809 = vpack.c.b16 %v6401, %v6397
        %v6810 = vpack.c.b16 %v6406, %v6402
        %v6811 = vpack.c.b16 %v6407, %v6403
        %v6812 = vpack.c.b16 %v6408, %v6404
        %v6813 = vpack.c.b16 %v6409, %v6405
        %v6814 = vpack.c.b16 %v6414, %v6410
        %v6815 = vpack.c.b16 %v6415, %v6411
        %v6816 = vpack.c.b16 %v6416, %v6412
        %v6817 = vpack.c.b16 %v6417, %v6413
        %v6818 = vpack.c.b16 %v6422, %v6418
        %v6819 = vpack.c.b16 %v6423, %v6419
        %v6820 = vpack.c.b16 %v6424, %v6420
        %v6821 = vpack.c.b16 %v6425, %v6421
        %v6822 = vpack.c.b16 %v6430, %v6426
        %v6823 = vpack.c.b16 %v6431, %v6427
        %v6824 = vpack.c.b16 %v6432, %v6428
        %v6825 = vpack.c.b16 %v6433, %v6429
        %v6826 = vpack.c.b16 %v6438, %v6434
        %v6827 = vpack.c.b16 %v6439, %v6435
        %v6828 = vpack.c.b16 %v6440, %v6436
        %v6829 = vpack.c.b16 %v6441, %v6437
        %v6830 = vpack.c.b16 %v6446, %v6442
        %v6831 = vpack.c.b16 %v6447, %v6443
        %v6832 = vpack.c.b16 %v6448, %v6444
        %v6833 = vpack.c.b16 %v6449, %v6445
        %v6834 = vpack.c.b16 %v6454, %v6450
        %v6835 = vpack.c.b16 %v6455, %v6451
        %v6836 = vpack.c.b16 %v6456, %v6452
        %v6837 = vpack.c.b16 %v6457, %v6453
        %v6838 = vpack.c.b16 %v6462, %v6458
        %v6839 = vpack.c.b16 %v6463, %v6459
        %v6840 = vpack.c.b16 %v6464, %v6460
        %v6841 = vpack.c.b16 %v6465, %v6461
        %v6842 = vpack.c.b16 %v6470, %v6466
        %v6843 = vpack.c.b16 %v6471, %v6467
        %v6844 = vpack.c.b16 %v6472, %v6468
        %v6845 = vpack.c.b16 %v6473, %v6469
        %v6846 = vpack.c.b16 %v6478, %v6474
        %v6847 = vpack.c.b16 %v6479, %v6475
        %v6848 = vpack.c.b16 %v6480, %v6476
        %v6849 = vpack.c.b16 %v6481, %v6477
        %v6850 = vpack.c.b16 %v6486, %v6482
        %v6851 = vpack.c.b16 %v6487, %v6483
        %v6852 = vpack.c.b16 %v6488, %v6484
        %v6853 = vpack.c.b16 %v6489, %v6485
        %v6854 = vpack.c.b16 %v6494, %v6490
        %v6855 = vpack.c.b16 %v6495, %v6491
        %v6856 = vpack.c.b16 %v6496, %v6492
        %v6857 = vpack.c.b16 %v6497, %v6493
        %v6858 = vpack.c.b16 %v6502, %v6498
        %v6859 = vpack.c.b16 %v6503, %v6499
        %v6860 = vpack.c.b16 %v6504, %v6500
        %v6861 = vpack.c.b16 %v6505, %v6501
        %v6862 = vpack.c.b16 %v6510, %v6506
        %v6863 = vpack.c.b16 %v6511, %v6507
        %v6864 = vpack.c.b16 %v6512, %v6508
        %v6865 = vpack.c.b16 %v6513, %v6509
        %v6866 = vpack.c.b16 %v6518, %v6514
        %v6867 = vpack.c.b16 %v6519, %v6515
        %v6868 = vpack.c.b16 %v6520, %v6516
        %v6869 = vpack.c.b16 %v6521, %v6517
        %v6870 = vpack.c.b16 %v6526, %v6522
        %v6871 = vpack.c.b16 %v6527, %v6523
        %v6872 = vpack.c.b16 %v6528, %v6524
        %v6873 = vpack.c.b16 %v6529, %v6525
        %v6874 = vpack.c.b16 %v6534, %v6530
        %v6875 = vpack.c.b16 %v6535, %v6531
        %v6876 = vpack.c.b16 %v6536, %v6532
        %v6877 = vpack.c.b16 %v6537, %v6533
        %v6878 = vpack.c.b16 %v6542, %v6538
        %v6879 = vpack.c.b16 %v6543, %v6539
        %v6880 = vpack.c.b16 %v6544, %v6540
        %v6881 = vpack.c.b16 %v6545, %v6541
        %v6882 = vpack.c.b16 %v6550, %v6546
        %v6883 = vpack.c.b16 %v6551, %v6547
        %v6884 = vpack.c.b16 %v6552, %v6548
        %v6885 = vpack.c.b16 %v6553, %v6549
        %v6886 = vpack.c.b16 %v6558, %v6554
        %v6887 = vpack.c.b16 %v6559, %v6555
        %v6888 = vpack.c.b16 %v6560, %v6556
        %v6889 = vpack.c.b16 %v6561, %v6557
        %v6890 = vpack.c.b16 %v6566, %v6562
        %v6891 = vpack.c.b16 %v6567, %v6563
        %v6892 = vpack.c.b16 %v6568, %v6564
        %v6893 = vpack.c.b16 %v6569, %v6565
        %v6894 = vpack.c.b16 %v6574, %v6570
        %v6895 = vpack.c.b16 %v6575, %v6571
        %v6896 = vpack.c.b16 %v6576, %v6572
        %v6897 = vpack.c.b16 %v6577, %v6573
        %v6898 = vpack.c.b16 %v6582, %v6578
        %v6899 = vpack.c.b16 %v6583, %v6579
        %v6900 = vpack.c.b16 %v6584, %v6580
        %v6901 = vpack.c.b16 %v6585, %v6581
        %v6902 = vpack.c.b16 %v6590, %v6586
        %v6903 = vpack.c.b16 %v6591, %v6587
        %v6904 = vpack.c.b16 %v6592, %v6588
        %v6905 = vpack.c.b16 %v6593, %v6589
        %v6906 = vpack.c.b16 %v6598, %v6594
        %v6907 = vpack.c.b16 %v6599, %v6595
        %v6908 = vpack.c.b16 %v6600, %v6596
        %v6909 = vpack.c.b16 %v6601, %v6597
        %v6910 = vpack.c.b16 %v6606, %v6602
        %v6911 = vpack.c.b16 %v6607, %v6603
        %v6912 = vpack.c.b16 %v6608, %v6604
        %v6913 = vpack.c.b16 %v6609, %v6605
        %v6914 = vpack.c.b16 %v6614, %v6610
        %v6915 = vpack.c.b16 %v6615, %v6611
        %v6916 = vpack.c.b16 %v6616, %v6612
        %v6917 = vpack.c.b16 %v6617, %v6613
        %v6918 = vpack.c.b16 %v6622, %v6618
        %v6919 = vpack.c.b16 %v6623, %v6619
        %v6920 = vpack.c.b16 %v6624, %v6620
        %v6921 = vpack.c.b16 %v6625, %v6621
        %v6922 = vpack.c.b16 %v6630, %v6626
        %v6923 = vpack.c.b16 %v6631, %v6627
        %v6924 = vpack.c.b16 %v6632, %v6628
        %v6925 = vpack.c.b16 %v6633, %v6629
        %v6926 = vpack.c.b16 %v6638, %v6634
        %v6927 = vpack.c.b16 %v6639, %v6635
        %v6928 = vpack.c.b16 %v6640, %v6636
        %v6929 = vpack.c.b16 %v6641, %v6637
        %v6930 = vpack.c.b16 %v6646, %v6642
        %v6931 = vpack.c.b16 %v6647, %v6643
        %v6932 = vpack.c.b16 %v6648, %v6644
        %v6933 = vpack.c.b16 %v6649, %v6645
        %v6934 = vpack.c.b16 %v6654, %v6650
        %v6935 = vpack.c.b16 %v6655, %v6651
        %v6936 = vpack.c.b16 %v6656, %v6652
        %v6937 = vpack.c.b16 %v6657, %v6653
        %v6938 = vpack.c.b16 %v6662, %v6658
        %v6939 = vpack.c.b16 %v6663, %v6659
        %v6940 = vpack.c.b16 %v6664, %v6660
        %v6941 = vpack.c.b16 %v6665, %v6661
        %v6942 = vpack.c.b16 %v6670, %v6666
        %v6943 = vpack.c.b16 %v6671, %v6667
        %v6944 = vpack.c.b16 %v6672, %v6668
        %v6945 = vpack.c.b16 %v6673, %v6669
        %v6946 = vpack.c.b16 %v6678, %v6674
        %v6947 = vpack.c.b16 %v6679, %v6675
        %v6948 = vpack.c.b16 %v6680, %v6676
        %v6949 = vpack.c.b16 %v6681, %v6677
        %v6950 = vpack.c.b16 %v6686, %v6682
        %v6951 = vpack.c.b16 %v6687, %v6683
        %v6952 = vpack.c.b16 %v6688, %v6684
        %v6953 = vpack.c.b16 %v6689, %v6685
        %v6954 = vpack.c.b16 %v6694, %v6690
        %v6955 = vpack.c.b16 %v6695, %v6691
        %v6956 = vpack.c.b16 %v6696, %v6692
        %v6957 = vpack.c.b16 %v6697, %v6693
        %v6958 = vpack.c.b16 %v6702, %v6698
        %v6959 = vpack.c.b16 %v6703, %v6699
        %v6960 = vpack.c.b16 %v6704, %v6700
        %v6961 = vpack.c.b16 %v6705, %v6701
        %7218 = vmatpush.bf16.msra.mxu0 %v6734
        %7219 = vmatpush.bf16.msra.mxu0 %v6730
        %7220 = vmatpush.bf16.msra.mxu0 %v6726
        %7221 = vmatpush.bf16.msra.mxu0 %v6722
        %7222 = vmatpush.bf16.msra.mxu0 %v6718
        %7223 = vmatpush.bf16.msra.mxu0 %v6714
        %7224 = vmatpush.bf16.msra.mxu0 %v6710
        %7225 = vmatpush.bf16.msra.mxu0 %v6706
        %7226 = vmatmul.bf16.gmra.mxu0 %v5908
        %v7227 = vpop.f32.mrf.mxu0
        %v7228 = vadd.f32 0.0, %v7227
        %v7229 = vpop.f32.mrf.mxu0
        %v7230 = vadd.f32 0.0, %v7229
        %7231 = vdwg.mxu0
        %7232 = vmatpush.bf16.msra.mxu0 %v6766
        %7233 = vmatpush.bf16.msra.mxu0 %v6762
        %7234 = vmatpush.bf16.msra.mxu0 %v6758
        %7235 = vmatpush.bf16.msra.mxu0 %v6754
        %7236 = vmatpush.bf16.msra.mxu0 %v6750
        %7237 = vmatpush.bf16.msra.mxu0 %v6746
        %7238 = vmatpush.bf16.msra.mxu0 %v6742
        %7239 = vmatpush.bf16.msra.mxu0 %v6738
        %7240 = vmatmul.bf16.gmra.mxu0 %v5911
        %v7241 = vpop.f32.mrf.mxu0
        %v7242 = vadd.f32 %v7228, %v7241
        %v7243 = vpop.f32.mrf.mxu0
        %v7244 = vadd.f32 %v7230, %v7243
        %7245 = vdwg.mxu0
        %7246 = vmatpush.bf16.msra.mxu0 %v6798
        %7247 = vmatpush.bf16.msra.mxu0 %v6794
        %7248 = vmatpush.bf16.msra.mxu0 %v6790
        %7249 = vmatpush.bf16.msra.mxu0 %v6786
        %7250 = vmatpush.bf16.msra.mxu0 %v6782
        %7251 = vmatpush.bf16.msra.mxu0 %v6778
        %7252 = vmatpush.bf16.msra.mxu0 %v6774
        %7253 = vmatpush.bf16.msra.mxu0 %v6770
        %7254 = vmatmul.bf16.gmra.mxu0 %v5914
        %v7255 = vpop.f32.mrf.mxu0
        %v7256 = vadd.f32 %v7242, %v7255
        %v7257 = vpop.f32.mrf.mxu0
        %v7258 = vadd.f32 %v7244, %v7257
        %7259 = vdwg.mxu0
        %7260 = vmatpush.bf16.msra.mxu0 %v6830
        %7261 = vmatpush.bf16.msra.mxu0 %v6826
        %7262 = vmatpush.bf16.msra.mxu0 %v6822
        %7263 = vmatpush.bf16.msra.mxu0 %v6818
        %7264 = vmatpush.bf16.msra.mxu0 %v6814
        %7265 = vmatpush.bf16.msra.mxu0 %v6810
        %7266 = vmatpush.bf16.msra.mxu0 %v6806
        %7267 = vmatpush.bf16.msra.mxu0 %v6802
        %7268 = vmatmul.bf16.gmra.mxu0 %v5917
        %v7269 = vpop.f32.mrf.mxu0
        %v7270 = vadd.f32 %v7256, %v7269
        %v7271 = vpop.f32.mrf.mxu0
        %v7272 = vadd.f32 %v7258, %v7271
        %7273 = vdwg.mxu0
        %7274 = vmatpush.bf16.msra.mxu0 %v6862
        %7275 = vmatpush.bf16.msra.mxu0 %v6858
        %7276 = vmatpush.bf16.msra.mxu0 %v6854
        %7277 = vmatpush.bf16.msra.mxu0 %v6850
        %7278 = vmatpush.bf16.msra.mxu0 %v6846
        %7279 = vmatpush.bf16.msra.mxu0 %v6842
        %7280 = vmatpush.bf16.msra.mxu0 %v6838
        %7281 = vmatpush.bf16.msra.mxu0 %v6834
        %7282 = vmatmul.bf16.gmra.mxu0 %v5920
        %v7283 = vpop.f32.mrf.mxu0
        %v7284 = vadd.f32 %v7270, %v7283
        %v7285 = vpop.f32.mrf.mxu0
        %v7286 = vadd.f32 %v7272, %v7285
        %7287 = vdwg.mxu0
        %7288 = vmatpush.bf16.msra.mxu0 %v6894
        %7289 = vmatpush.bf16.msra.mxu0 %v6890
        %7290 = vmatpush.bf16.msra.mxu0 %v6886
        %7291 = vmatpush.bf16.msra.mxu0 %v6882
        %7292 = vmatpush.bf16.msra.mxu0 %v6878
        %7293 = vmatpush.bf16.msra.mxu0 %v6874
        %7294 = vmatpush.bf16.msra.mxu0 %v6870
        %7295 = vmatpush.bf16.msra.mxu0 %v6866
        %7296 = vmatmul.bf16.gmra.mxu0 %v5923
        %v7297 = vpop.f32.mrf.mxu0
        %v7298 = vadd.f32 %v7284, %v7297
        %v7299 = vpop.f32.mrf.mxu0
        %v7300 = vadd.f32 %v7286, %v7299
        %7301 = vdwg.mxu0
        %7302 = vmatpush.bf16.msra.mxu0 %v6926
        %7303 = vmatpush.bf16.msra.mxu0 %v6922
        %7304 = vmatpush.bf16.msra.mxu0 %v6918
        %7305 = vmatpush.bf16.msra.mxu0 %v6914
        %7306 = vmatpush.bf16.msra.mxu0 %v6910
        %7307 = vmatpush.bf16.msra.mxu0 %v6906
        %7308 = vmatpush.bf16.msra.mxu0 %v6902
        %7309 = vmatpush.bf16.msra.mxu0 %v6898
        %7310 = vmatmul.bf16.gmra.mxu0 %v5926
        %v7311 = vpop.f32.mrf.mxu0
        %v7312 = vadd.f32 %v7298, %v7311
        %v7313 = vpop.f32.mrf.mxu0
        %v7314 = vadd.f32 %v7300, %v7313
        %7315 = vdwg.mxu0
        %7316 = vmatpush.bf16.msra.mxu0 %v6958
        %7317 = vmatpush.bf16.msra.mxu0 %v6954
        %7318 = vmatpush.bf16.msra.mxu0 %v6950
        %7319 = vmatpush.bf16.msra.mxu0 %v6946
        %7320 = vmatpush.bf16.msra.mxu0 %v6942
        %7321 = vmatpush.bf16.msra.mxu0 %v6938
        %7322 = vmatpush.bf16.msra.mxu0 %v6934
        %7323 = vmatpush.bf16.msra.mxu0 %v6930
        %7324 = vmatmul.bf16.gmra.mxu0 %v5929
        %v7325 = vpop.f32.mrf.mxu0
        %v7326 = vadd.f32 %v7312, %v7325
        %v7327 = vpop.f32.mrf.mxu0
        %v7328 = vadd.f32 %v7314, %v7327
        %7329 = vdwg.mxu0
        %7330 = vmatpush.bf16.msra.mxu0 %v6735
        %7331 = vmatpush.bf16.msra.mxu0 %v6731
        %7332 = vmatpush.bf16.msra.mxu0 %v6727
        %7333 = vmatpush.bf16.msra.mxu0 %v6723
        %7334 = vmatpush.bf16.msra.mxu0 %v6719
        %7335 = vmatpush.bf16.msra.mxu0 %v6715
        %7336 = vmatpush.bf16.msra.mxu0 %v6711
        %7337 = vmatpush.bf16.msra.mxu0 %v6707
        %7338 = vmatmul.bf16.gmra.mxu0 %v5908
        %v7339 = vpop.f32.mrf.mxu0
        %v7340 = vadd.f32 0.0, %v7339
        %v7341 = vpop.f32.mrf.mxu0
        %v7342 = vadd.f32 0.0, %v7341
        %7343 = vdwg.mxu0
        %7344 = vmatpush.bf16.msra.mxu0 %v6767
        %7345 = vmatpush.bf16.msra.mxu0 %v6763
        %7346 = vmatpush.bf16.msra.mxu0 %v6759
        %7347 = vmatpush.bf16.msra.mxu0 %v6755
        %7348 = vmatpush.bf16.msra.mxu0 %v6751
        %7349 = vmatpush.bf16.msra.mxu0 %v6747
        %7350 = vmatpush.bf16.msra.mxu0 %v6743
        %7351 = vmatpush.bf16.msra.mxu0 %v6739
        %7352 = vmatmul.bf16.gmra.mxu0 %v5911
        %v7353 = vpop.f32.mrf.mxu0
        %v7354 = vadd.f32 %v7340, %v7353
        %v7355 = vpop.f32.mrf.mxu0
        %v7356 = vadd.f32 %v7342, %v7355
        %7357 = vdwg.mxu0
        %7358 = vmatpush.bf16.msra.mxu0 %v6799
        %7359 = vmatpush.bf16.msra.mxu0 %v6795
        %7360 = vmatpush.bf16.msra.mxu0 %v6791
        %7361 = vmatpush.bf16.msra.mxu0 %v6787
        %7362 = vmatpush.bf16.msra.mxu0 %v6783
        %7363 = vmatpush.bf16.msra.mxu0 %v6779
        %7364 = vmatpush.bf16.msra.mxu0 %v6775
        %7365 = vmatpush.bf16.msra.mxu0 %v6771
        %7366 = vmatmul.bf16.gmra.mxu0 %v5914
        %v7367 = vpop.f32.mrf.mxu0
        %v7368 = vadd.f32 %v7354, %v7367
        %v7369 = vpop.f32.mrf.mxu0
        %v7370 = vadd.f32 %v7356, %v7369
        %7371 = vdwg.mxu0
        %7372 = vmatpush.bf16.msra.mxu0 %v6831
        %7373 = vmatpush.bf16.msra.mxu0 %v6827
        %7374 = vmatpush.bf16.msra.mxu0 %v6823
        %7375 = vmatpush.bf16.msra.mxu0 %v6819
        %7376 = vmatpush.bf16.msra.mxu0 %v6815
        %7377 = vmatpush.bf16.msra.mxu0 %v6811
        %7378 = vmatpush.bf16.msra.mxu0 %v6807
        %7379 = vmatpush.bf16.msra.mxu0 %v6803
        %7380 = vmatmul.bf16.gmra.mxu0 %v5917
        %v7381 = vpop.f32.mrf.mxu0
        %v7382 = vadd.f32 %v7368, %v7381
        %v7383 = vpop.f32.mrf.mxu0
        %v7384 = vadd.f32 %v7370, %v7383
        %7385 = vdwg.mxu0
        %7386 = vmatpush.bf16.msra.mxu0 %v6863
        %7387 = vmatpush.bf16.msra.mxu0 %v6859
        %7388 = vmatpush.bf16.msra.mxu0 %v6855
        %7389 = vmatpush.bf16.msra.mxu0 %v6851
        %7390 = vmatpush.bf16.msra.mxu0 %v6847
        %7391 = vmatpush.bf16.msra.mxu0 %v6843
        %7392 = vmatpush.bf16.msra.mxu0 %v6839
        %7393 = vmatpush.bf16.msra.mxu0 %v6835
        %7394 = vmatmul.bf16.gmra.mxu0 %v5920
        %v7395 = vpop.f32.mrf.mxu0
        %v7396 = vadd.f32 %v7382, %v7395
        %v7397 = vpop.f32.mrf.mxu0
        %v7398 = vadd.f32 %v7384, %v7397
        %7399 = vdwg.mxu0
        %7400 = vmatpush.bf16.msra.mxu0 %v6895
        %7401 = vmatpush.bf16.msra.mxu0 %v6891
        %7402 = vmatpush.bf16.msra.mxu0 %v6887
        %7403 = vmatpush.bf16.msra.mxu0 %v6883
        %7404 = vmatpush.bf16.msra.mxu0 %v6879
        %7405 = vmatpush.bf16.msra.mxu0 %v6875
        %7406 = vmatpush.bf16.msra.mxu0 %v6871
        %7407 = vmatpush.bf16.msra.mxu0 %v6867
        %7408 = vmatmul.bf16.gmra.mxu0 %v5923
        %v7409 = vpop.f32.mrf.mxu0
        %v7410 = vadd.f32 %v7396, %v7409
        %v7411 = vpop.f32.mrf.mxu0
        %v7412 = vadd.f32 %v7398, %v7411
        %7413 = vdwg.mxu0
        %7414 = vmatpush.bf16.msra.mxu0 %v6927
        %7415 = vmatpush.bf16.msra.mxu0 %v6923
        %7416 = vmatpush.bf16.msra.mxu0 %v6919
        %7417 = vmatpush.bf16.msra.mxu0 %v6915
        %7418 = vmatpush.bf16.msra.mxu0 %v6911
        %7419 = vmatpush.bf16.msra.mxu0 %v6907
        %7420 = vmatpush.bf16.msra.mxu0 %v6903
        %7421 = vmatpush.bf16.msra.mxu0 %v6899
        %7422 = vmatmul.bf16.gmra.mxu0 %v5926
        %v7423 = vpop.f32.mrf.mxu0
        %v7424 = vadd.f32 %v7410, %v7423
        %v7425 = vpop.f32.mrf.mxu0
        %v7426 = vadd.f32 %v7412, %v7425
        %7427 = vdwg.mxu0
        %7428 = vmatpush.bf16.msra.mxu0 %v6959
        %7429 = vmatpush.bf16.msra.mxu0 %v6955
        %7430 = vmatpush.bf16.msra.mxu0 %v6951
        %7431 = vmatpush.bf16.msra.mxu0 %v6947
        %7432 = vmatpush.bf16.msra.mxu0 %v6943
        %7433 = vmatpush.bf16.msra.mxu0 %v6939
        %7434 = vmatpush.bf16.msra.mxu0 %v6935
        %7435 = vmatpush.bf16.msra.mxu0 %v6931
        %7436 = vmatmul.bf16.gmra.mxu0 %v5929
        %v7437 = vpop.f32.mrf.mxu0
        %v7438 = vadd.f32 %v7424, %v7437
        %v7439 = vpop.f32.mrf.mxu0
        %v7440 = vadd.f32 %v7426, %v7439
        %7441 = vdwg.mxu0
        %7442 = vmatpush.bf16.msra.mxu0 %v6736
        %7443 = vmatpush.bf16.msra.mxu0 %v6732
        %7444 = vmatpush.bf16.msra.mxu0 %v6728
        %7445 = vmatpush.bf16.msra.mxu0 %v6724
        %7446 = vmatpush.bf16.msra.mxu0 %v6720
        %7447 = vmatpush.bf16.msra.mxu0 %v6716
        %7448 = vmatpush.bf16.msra.mxu0 %v6712
        %7449 = vmatpush.bf16.msra.mxu0 %v6708
        %7450 = vmatmul.bf16.gmra.mxu0 %v5908
        %v7451 = vpop.f32.mrf.mxu0
        %v7452 = vadd.f32 0.0, %v7451
        %v7453 = vpop.f32.mrf.mxu0
        %v7454 = vadd.f32 0.0, %v7453
        %7455 = vdwg.mxu0
        %7456 = vmatpush.bf16.msra.mxu0 %v6768
        %7457 = vmatpush.bf16.msra.mxu0 %v6764
        %7458 = vmatpush.bf16.msra.mxu0 %v6760
        %7459 = vmatpush.bf16.msra.mxu0 %v6756
        %7460 = vmatpush.bf16.msra.mxu0 %v6752
        %7461 = vmatpush.bf16.msra.mxu0 %v6748
        %7462 = vmatpush.bf16.msra.mxu0 %v6744
        %7463 = vmatpush.bf16.msra.mxu0 %v6740
        %7464 = vmatmul.bf16.gmra.mxu0 %v5911
        %v7465 = vpop.f32.mrf.mxu0
        %v7466 = vadd.f32 %v7452, %v7465
        %v7467 = vpop.f32.mrf.mxu0
        %v7468 = vadd.f32 %v7454, %v7467
        %7469 = vdwg.mxu0
        %7470 = vmatpush.bf16.msra.mxu0 %v6800
        %7471 = vmatpush.bf16.msra.mxu0 %v6796
        %7472 = vmatpush.bf16.msra.mxu0 %v6792
        %7473 = vmatpush.bf16.msra.mxu0 %v6788
        %7474 = vmatpush.bf16.msra.mxu0 %v6784
        %7475 = vmatpush.bf16.msra.mxu0 %v6780
        %7476 = vmatpush.bf16.msra.mxu0 %v6776
        %7477 = vmatpush.bf16.msra.mxu0 %v6772
        %7478 = vmatmul.bf16.gmra.mxu0 %v5914
        %v7479 = vpop.f32.mrf.mxu0
        %v7480 = vadd.f32 %v7466, %v7479
        %v7481 = vpop.f32.mrf.mxu0
        %v7482 = vadd.f32 %v7468, %v7481
        %7483 = vdwg.mxu0
        %7484 = vmatpush.bf16.msra.mxu0 %v6832
        %7485 = vmatpush.bf16.msra.mxu0 %v6828
        %7486 = vmatpush.bf16.msra.mxu0 %v6824
        %7487 = vmatpush.bf16.msra.mxu0 %v6820
        %7488 = vmatpush.bf16.msra.mxu0 %v6816
        %7489 = vmatpush.bf16.msra.mxu0 %v6812
        %7490 = vmatpush.bf16.msra.mxu0 %v6808
        %7491 = vmatpush.bf16.msra.mxu0 %v6804
        %7492 = vmatmul.bf16.gmra.mxu0 %v5917
        %v7493 = vpop.f32.mrf.mxu0
        %v7494 = vadd.f32 %v7480, %v7493
        %v7495 = vpop.f32.mrf.mxu0
        %v7496 = vadd.f32 %v7482, %v7495
        %7497 = vdwg.mxu0
        %7498 = vmatpush.bf16.msra.mxu0 %v6864
        %7499 = vmatpush.bf16.msra.mxu0 %v6860
        %7500 = vmatpush.bf16.msra.mxu0 %v6856
        %7501 = vmatpush.bf16.msra.mxu0 %v6852
        %7502 = vmatpush.bf16.msra.mxu0 %v6848
        %7503 = vmatpush.bf16.msra.mxu0 %v6844
        %7504 = vmatpush.bf16.msra.mxu0 %v6840
        %7505 = vmatpush.bf16.msra.mxu0 %v6836
        %7506 = vmatmul.bf16.gmra.mxu0 %v5920
        %v7507 = vpop.f32.mrf.mxu0
        %v7508 = vadd.f32 %v7494, %v7507
        %v7509 = vpop.f32.mrf.mxu0
        %v7510 = vadd.f32 %v7496, %v7509
        %7511 = vdwg.mxu0
        %7512 = vmatpush.bf16.msra.mxu0 %v6896
        %7513 = vmatpush.bf16.msra.mxu0 %v6892
        %7514 = vmatpush.bf16.msra.mxu0 %v6888
        %7515 = vmatpush.bf16.msra.mxu0 %v6884
        %7516 = vmatpush.bf16.msra.mxu0 %v6880
        %7517 = vmatpush.bf16.msra.mxu0 %v6876
        %7518 = vmatpush.bf16.msra.mxu0 %v6872
        %7519 = vmatpush.bf16.msra.mxu0 %v6868
        %7520 = vmatmul.bf16.gmra.mxu0 %v5923
        %v7521 = vpop.f32.mrf.mxu0
        %v7522 = vadd.f32 %v7508, %v7521
        %v7523 = vpop.f32.mrf.mxu0
        %v7524 = vadd.f32 %v7510, %v7523
        %7525 = vdwg.mxu0
        %7526 = vmatpush.bf16.msra.mxu0 %v6928
        %7527 = vmatpush.bf16.msra.mxu0 %v6924
        %7528 = vmatpush.bf16.msra.mxu0 %v6920
        %7529 = vmatpush.bf16.msra.mxu0 %v6916
        %7530 = vmatpush.bf16.msra.mxu0 %v6912
        %7531 = vmatpush.bf16.msra.mxu0 %v6908
        %7532 = vmatpush.bf16.msra.mxu0 %v6904
        %7533 = vmatpush.bf16.msra.mxu0 %v6900
        %7534 = vmatmul.bf16.gmra.mxu0 %v5926
        %v7535 = vpop.f32.mrf.mxu0
        %v7536 = vadd.f32 %v7522, %v7535
        %v7537 = vpop.f32.mrf.mxu0
        %v7538 = vadd.f32 %v7524, %v7537
        %7539 = vdwg.mxu0
        %7540 = vmatpush.bf16.msra.mxu0 %v6960
        %7541 = vmatpush.bf16.msra.mxu0 %v6956
        %7542 = vmatpush.bf16.msra.mxu0 %v6952
        %7543 = vmatpush.bf16.msra.mxu0 %v6948
        %7544 = vmatpush.bf16.msra.mxu0 %v6944
        %7545 = vmatpush.bf16.msra.mxu0 %v6940
        %7546 = vmatpush.bf16.msra.mxu0 %v6936
        %7547 = vmatpush.bf16.msra.mxu0 %v6932
        %7548 = vmatmul.bf16.gmra.mxu0 %v5929
        %v7549 = vpop.f32.mrf.mxu0
        %v7550 = vadd.f32 %v7536, %v7549
        %v7551 = vpop.f32.mrf.mxu0
        %v7552 = vadd.f32 %v7538, %v7551
        %7553 = vdwg.mxu0
        %7554 = vmatpush.bf16.msra.mxu0 %v6737
        %7555 = vmatpush.bf16.msra.mxu0 %v6733
        %7556 = vmatpush.bf16.msra.mxu0 %v6729
        %7557 = vmatpush.bf16.msra.mxu0 %v6725
        %7558 = vmatpush.bf16.msra.mxu0 %v6721
        %7559 = vmatpush.bf16.msra.mxu0 %v6717
        %7560 = vmatpush.bf16.msra.mxu0 %v6713
        %7561 = vmatpush.bf16.msra.mxu0 %v6709
        %7562 = vmatmul.bf16.gmra.mxu0 %v5908
        %v7563 = vpop.f32.mrf.mxu0
        %v7564 = vadd.f32 0.0, %v7563
        %v7565 = vpop.f32.mrf.mxu0
        %v7566 = vadd.f32 0.0, %v7565
        %7567 = vdwg.mxu0
        %7568 = vmatpush.bf16.msra.mxu0 %v6769
        %7569 = vmatpush.bf16.msra.mxu0 %v6765
        %7570 = vmatpush.bf16.msra.mxu0 %v6761
        %7571 = vmatpush.bf16.msra.mxu0 %v6757
        %7572 = vmatpush.bf16.msra.mxu0 %v6753
        %7573 = vmatpush.bf16.msra.mxu0 %v6749
        %7574 = vmatpush.bf16.msra.mxu0 %v6745
        %7575 = vmatpush.bf16.msra.mxu0 %v6741
        %7576 = vmatmul.bf16.gmra.mxu0 %v5911
        %v7577 = vpop.f32.mrf.mxu0
        %v7578 = vadd.f32 %v7564, %v7577
        %v7579 = vpop.f32.mrf.mxu0
        %v7580 = vadd.f32 %v7566, %v7579
        %7581 = vdwg.mxu0
        %7582 = vmatpush.bf16.msra.mxu0 %v6801
        %7583 = vmatpush.bf16.msra.mxu0 %v6797
        %7584 = vmatpush.bf16.msra.mxu0 %v6793
        %7585 = vmatpush.bf16.msra.mxu0 %v6789
        %7586 = vmatpush.bf16.msra.mxu0 %v6785
        %7587 = vmatpush.bf16.msra.mxu0 %v6781
        %7588 = vmatpush.bf16.msra.mxu0 %v6777
        %7589 = vmatpush.bf16.msra.mxu0 %v6773
        %7590 = vmatmul.bf16.gmra.mxu0 %v5914
        %v7591 = vpop.f32.mrf.mxu0
        %v7592 = vadd.f32 %v7578, %v7591
        %v7593 = vpop.f32.mrf.mxu0
        %v7594 = vadd.f32 %v7580, %v7593
        %7595 = vdwg.mxu0
        %7596 = vmatpush.bf16.msra.mxu0 %v6833
        %7597 = vmatpush.bf16.msra.mxu0 %v6829
        %7598 = vmatpush.bf16.msra.mxu0 %v6825
        %7599 = vmatpush.bf16.msra.mxu0 %v6821
        %7600 = vmatpush.bf16.msra.mxu0 %v6817
        %7601 = vmatpush.bf16.msra.mxu0 %v6813
        %7602 = vmatpush.bf16.msra.mxu0 %v6809
        %7603 = vmatpush.bf16.msra.mxu0 %v6805
        %7604 = vmatmul.bf16.gmra.mxu0 %v5917
        %v7605 = vpop.f32.mrf.mxu0
        %v7606 = vadd.f32 %v7592, %v7605
        %v7607 = vpop.f32.mrf.mxu0
        %v7608 = vadd.f32 %v7594, %v7607
        %7609 = vdwg.mxu0
        %7610 = vmatpush.bf16.msra.mxu0 %v6865
        %7611 = vmatpush.bf16.msra.mxu0 %v6861
        %7612 = vmatpush.bf16.msra.mxu0 %v6857
        %7613 = vmatpush.bf16.msra.mxu0 %v6853
        %7614 = vmatpush.bf16.msra.mxu0 %v6849
        %7615 = vmatpush.bf16.msra.mxu0 %v6845
        %7616 = vmatpush.bf16.msra.mxu0 %v6841
        %7617 = vmatpush.bf16.msra.mxu0 %v6837
        %7618 = vmatmul.bf16.gmra.mxu0 %v5920
        %v7619 = vpop.f32.mrf.mxu0
        %v7620 = vadd.f32 %v7606, %v7619
        %v7621 = vpop.f32.mrf.mxu0
        %v7622 = vadd.f32 %v7608, %v7621
        %7623 = vdwg.mxu0
        %7624 = vmatpush.bf16.msra.mxu0 %v6897
        %7625 = vmatpush.bf16.msra.mxu0 %v6893
        %7626 = vmatpush.bf16.msra.mxu0 %v6889
        %7627 = vmatpush.bf16.msra.mxu0 %v6885
        %7628 = vmatpush.bf16.msra.mxu0 %v6881
        %7629 = vmatpush.bf16.msra.mxu0 %v6877
        %7630 = vmatpush.bf16.msra.mxu0 %v6873
        %7631 = vmatpush.bf16.msra.mxu0 %v6869
        %7632 = vmatmul.bf16.gmra.mxu0 %v5923
        %v7633 = vpop.f32.mrf.mxu0
        %v7634 = vadd.f32 %v7620, %v7633
        %v7635 = vpop.f32.mrf.mxu0
        %v7636 = vadd.f32 %v7622, %v7635
        %7637 = vdwg.mxu0
        %7638 = vmatpush.bf16.msra.mxu0 %v6929
        %7639 = vmatpush.bf16.msra.mxu0 %v6925
        %7640 = vmatpush.bf16.msra.mxu0 %v6921
        %7641 = vmatpush.bf16.msra.mxu0 %v6917
        %7642 = vmatpush.bf16.msra.mxu0 %v6913
        %7643 = vmatpush.bf16.msra.mxu0 %v6909
        %7644 = vmatpush.bf16.msra.mxu0 %v6905
        %7645 = vmatpush.bf16.msra.mxu0 %v6901
        %7646 = vmatmul.bf16.gmra.mxu0 %v5926
        %v7647 = vpop.f32.mrf.mxu0
        %v7648 = vadd.f32 %v7634, %v7647
        %v7649 = vpop.f32.mrf.mxu0
        %v7650 = vadd.f32 %v7636, %v7649
        %7651 = vdwg.mxu0
        %7652 = vmatpush.bf16.msra.mxu0 %v6961
        %7653 = vmatpush.bf16.msra.mxu0 %v6957
        %7654 = vmatpush.bf16.msra.mxu0 %v6953
        %7655 = vmatpush.bf16.msra.mxu0 %v6949
        %7656 = vmatpush.bf16.msra.mxu0 %v6945
        %7657 = vmatpush.bf16.msra.mxu0 %v6941
        %7658 = vmatpush.bf16.msra.mxu0 %v6937
        %7659 = vmatpush.bf16.msra.mxu0 %v6933
        %7660 = vmatmul.bf16.gmra.mxu0 %v5929
        %v7661 = vpop.f32.mrf.mxu0
        %v7662 = vadd.f32 %v7648, %v7661
        %v7663 = vpop.f32.mrf.mxu0
        %v7664 = vadd.f32 %v7650, %v7663
        %7665 = vdwg.mxu0
        %v7666 = vadd.f32 %v5592, %v7326
        %v7667 = vadd.f32 %v5593, %v7438
        %v7668 = vadd.f32 %v5594, %v7550
        %v7669 = vadd.f32 %v5595, %v7662
        %v7670 = vadd.f32 %v5596, %v7328
        %v7671 = vadd.f32 %v5597, %v7440
        %v7672 = vadd.f32 %v5598, %v7552
        %v7673 = vadd.f32 %v5599, %v7664
        %v7674 = vtanh.pop %v7666
        %v7675 = vtanh.pop %v7667
        %v7676 = vtanh.pop %v7668
        %v7677 = vtanh.pop %v7669
        %v7678 = vtanh.pop %v7670
        %v7679 = vtanh.pop %v7671
        %v7680 = vtanh.pop %v7672
        %v7681 = vtanh.pop %v7673
        %v7690 = vrot.slane %v7674, 7
        %v7691 = vrot.slane %v7675, 7
        %v7692 = vrot.slane %v7676, 7
        %v7693 = vrot.slane %v7677, 7
        %v7694 = vrot.slane %v7678, 7
        %v7695 = vsel %vm1363, %v7690, %v7694
        %v7696 = vrot.slane %v7679, 7
        %v7697 = vsel %vm1363, %v7691, %v7696
        %v7698 = vrot.slane %v7680, 7
        %v7699 = vsel %vm1363, %v7692, %v7698
        %v7700 = vrot.slane %v7681, 7
        %v7701 = vsel %vm1363, %v7693, %v7700
        %7714 = vst [vmem:[#allocation4] sm:$0xfe] %v7690
        %7715 = vst [vmem:[#allocation4 + $0x8] sm:$0xfe] %v7691
        %7716 = vst [vmem:[#allocation4 + $0x10] sm:$0xfe] %v7692
        %7717 = vst [vmem:[#allocation4 + $0x18] sm:$0xfe] %v7693
        %7718 = vst [vmem:[#allocation4 + $0x20] sm:$0xff] %v7695
        %7719 = vst [vmem:[#allocation4 + $0x28] sm:$0xff] %v7697
        %7720 = vst [vmem:[#allocation4 + $0x30] sm:$0xff] %v7699
        %7721 = vst [vmem:[#allocation4 + $0x38] sm:$0xff] %v7701
        %7722 = vst [vmem:[#allocation4 + $0x40] sm:$0x1] %v7694
        %7723 = vst [vmem:[#allocation4 + $0x48] sm:$0x1] %v7696
        %7724 = vst [vmem:[#allocation4 + $0x50] sm:$0x1] %v7698
        %7725 = vst [vmem:[#allocation4 + $0x58] sm:$0x1] %v7700
        %v7726 = vld [vmem:[#allocation14] sm:$0x3]
        %v7727 = vld [vmem:[#allocation4] sm:$0xff]
        %v7728 = vld [vmem:[#allocation4 + $0x8] sm:$0xff]
        %v7729 = vld [vmem:[#allocation4 + $0x10] sm:$0xff]
        %v7730 = vld [vmem:[#allocation4 + $0x18] sm:$0xff]
        %v7731 = vld [vmem:[#allocation4 + $0x20] sm:$0xff]
        %v7732 = vld [vmem:[#allocation4 + $0x28] sm:$0xff]
        %v7733 = vld [vmem:[#allocation4 + $0x30] sm:$0xff]
        %v7734 = vld [vmem:[#allocation4 + $0x38] sm:$0xff]
        %v7735 = vpack.c.bf16 %v7731, %v7727
        %v7736 = vpack.c.bf16 %v7732, %v7728
        %v7737 = vpack.c.bf16 %v7733, %v7729
        %v7738 = vpack.c.bf16 %v7734, %v7730
        %v7739 = vld [vmem:[%s5] sm:$0xff]
        %v7740 = vld [vmem:[%s5 + $0x8] sm:$0xff]
        %v7741 = vld [vmem:[%s5 + $0x10] sm:$0xff]
        %v7742 = vld [vmem:[%s5 + $0x18] sm:$0xff]
        %v7743 = vld [vmem:[%s5 + $0x20] sm:$0xff]
        %v7744 = vld [vmem:[%s5 + $0x28] sm:$0xff]
        %v7745 = vld [vmem:[%s5 + $0x30] sm:$0xff]
        %v7746 = vld [vmem:[%s5 + $0x38] sm:$0xff]
        %v7747 = vld [vmem:[%s5 + $0x40] sm:$0xff]
        %v7748 = vld [vmem:[%s5 + $0x48] sm:$0xff]
        %v7749 = vld [vmem:[%s5 + $0x50] sm:$0xff]
        %v7750 = vld [vmem:[%s5 + $0x58] sm:$0xff]
        %v7751 = vld [vmem:[%s5 + $0x60] sm:$0xff]
        %v7752 = vld [vmem:[%s5 + $0x68] sm:$0xff]
        %v7753 = vld [vmem:[%s5 + $0x70] sm:$0xff]
        %v7754 = vld [vmem:[%s5 + $0x78] sm:$0xff]
        %v7755 = vld [vmem:[%s5 + $0x80] sm:$0xff]
        %v7756 = vld [vmem:[%s5 + $0x88] sm:$0xff]
        %v7757 = vld [vmem:[%s5 + $0x90] sm:$0xff]
        %v7758 = vld [vmem:[%s5 + $0x98] sm:$0xff]
        %v7759 = vld [vmem:[%s5 + $0xa0] sm:$0xff]
        %v7760 = vld [vmem:[%s5 + $0xa8] sm:$0xff]
        %v7761 = vld [vmem:[%s5 + $0xb0] sm:$0xff]
        %v7762 = vld [vmem:[%s5 + $0xb8] sm:$0xff]
        %v7763 = vld [vmem:[%s5 + $0xc0] sm:$0xff]
        %v7764 = vld [vmem:[%s5 + $0xc8] sm:$0xff]
        %v7765 = vld [vmem:[%s5 + $0xd0] sm:$0xff]
        %v7766 = vld [vmem:[%s5 + $0xd8] sm:$0xff]
        %v7767 = vld [vmem:[%s5 + $0xe0] sm:$0xff]
        %v7768 = vld [vmem:[%s5 + $0xe8] sm:$0xff]
        %v7769 = vld [vmem:[%s5 + $0xf0] sm:$0xff]
        %v7770 = vld [vmem:[%s5 + $0xf8] sm:$0xff]
        %v7771 = vld [vmem:[%s5 + $0x100] sm:$0xff]
        %v7772 = vld [vmem:[%s5 + $0x108] sm:$0xff]
        %v7773 = vld [vmem:[%s5 + $0x110] sm:$0xff]
        %v7774 = vld [vmem:[%s5 + $0x118] sm:$0xff]
        %v7775 = vld [vmem:[%s5 + $0x120] sm:$0xff]
        %v7776 = vld [vmem:[%s5 + $0x128] sm:$0xff]
        %v7777 = vld [vmem:[%s5 + $0x130] sm:$0xff]
        %v7778 = vld [vmem:[%s5 + $0x138] sm:$0xff]
        %v7779 = vld [vmem:[%s5 + $0x140] sm:$0xff]
        %v7780 = vld [vmem:[%s5 + $0x148] sm:$0xff]
        %v7781 = vld [vmem:[%s5 + $0x150] sm:$0xff]
        %v7782 = vld [vmem:[%s5 + $0x158] sm:$0xff]
        %v7783 = vld [vmem:[%s5 + $0x160] sm:$0xff]
        %v7784 = vld [vmem:[%s5 + $0x168] sm:$0xff]
        %v7785 = vld [vmem:[%s5 + $0x170] sm:$0xff]
        %v7786 = vld [vmem:[%s5 + $0x178] sm:$0xff]
        %v7787 = vld [vmem:[%s5 + $0x180] sm:$0xff]
        %v7788 = vld [vmem:[%s5 + $0x188] sm:$0xff]
        %v7789 = vld [vmem:[%s5 + $0x190] sm:$0xff]
        %v7790 = vld [vmem:[%s5 + $0x198] sm:$0xff]
        %v7791 = vld [vmem:[%s5 + $0x1a0] sm:$0xff]
        %v7792 = vld [vmem:[%s5 + $0x1a8] sm:$0xff]
        %v7793 = vld [vmem:[%s5 + $0x1b0] sm:$0xff]
        %v7794 = vld [vmem:[%s5 + $0x1b8] sm:$0xff]
        %v7795 = vld [vmem:[%s5 + $0x1c0] sm:$0xff]
        %v7796 = vld [vmem:[%s5 + $0x1c8] sm:$0xff]
        %v7797 = vld [vmem:[%s5 + $0x1d0] sm:$0xff]
        %v7798 = vld [vmem:[%s5 + $0x1d8] sm:$0xff]
        %v7799 = vld [vmem:[%s5 + $0x1e0] sm:$0xff]
        %v7800 = vld [vmem:[%s5 + $0x1e8] sm:$0xff]
        %v7801 = vld [vmem:[%s5 + $0x1f0] sm:$0xff]
        %v7802 = vld [vmem:[%s5 + $0x1f8] sm:$0xff]
        %v7867 = vunpack.c.l.b16 %v7739
        %v7868 = vunpack.c.h.b16 %v7739
        %v7869 = vunpack.c.l.b16 %v7740
        %v7870 = vunpack.c.h.b16 %v7740
        %v7871 = vunpack.c.l.b16 %v7741
        %v7872 = vunpack.c.h.b16 %v7741
        %v7873 = vunpack.c.l.b16 %v7742
        %v7874 = vunpack.c.h.b16 %v7742
        %v7875 = vunpack.c.l.b16 %v7743
        %v7876 = vunpack.c.h.b16 %v7743
        %v7877 = vunpack.c.l.b16 %v7744
        %v7878 = vunpack.c.h.b16 %v7744
        %v7879 = vunpack.c.l.b16 %v7745
        %v7880 = vunpack.c.h.b16 %v7745
        %v7881 = vunpack.c.l.b16 %v7746
        %v7882 = vunpack.c.h.b16 %v7746
        %v7883 = vunpack.c.l.b16 %v7747
        %v7884 = vunpack.c.h.b16 %v7747
        %v7885 = vunpack.c.l.b16 %v7748
        %v7886 = vunpack.c.h.b16 %v7748
        %v7887 = vunpack.c.l.b16 %v7749
        %v7888 = vunpack.c.h.b16 %v7749
        %v7889 = vunpack.c.l.b16 %v7750
        %v7890 = vunpack.c.h.b16 %v7750
        %v7891 = vunpack.c.l.b16 %v7751
        %v7892 = vunpack.c.h.b16 %v7751
        %v7893 = vunpack.c.l.b16 %v7752
        %v7894 = vunpack.c.h.b16 %v7752
        %v7895 = vunpack.c.l.b16 %v7753
        %v7896 = vunpack.c.h.b16 %v7753
        %v7897 = vunpack.c.l.b16 %v7754
        %v7898 = vunpack.c.h.b16 %v7754
        %v7899 = vunpack.c.l.b16 %v7755
        %v7900 = vunpack.c.h.b16 %v7755
        %v7901 = vunpack.c.l.b16 %v7756
        %v7902 = vunpack.c.h.b16 %v7756
        %v7903 = vunpack.c.l.b16 %v7757
        %v7904 = vunpack.c.h.b16 %v7757
        %v7905 = vunpack.c.l.b16 %v7758
        %v7906 = vunpack.c.h.b16 %v7758
        %v7907 = vunpack.c.l.b16 %v7759
        %v7908 = vunpack.c.h.b16 %v7759
        %v7909 = vunpack.c.l.b16 %v7760
        %v7910 = vunpack.c.h.b16 %v7760
        %v7911 = vunpack.c.l.b16 %v7761
        %v7912 = vunpack.c.h.b16 %v7761
        %v7913 = vunpack.c.l.b16 %v7762
        %v7914 = vunpack.c.h.b16 %v7762
        %v7915 = vunpack.c.l.b16 %v7763
        %v7916 = vunpack.c.h.b16 %v7763
        %v7917 = vunpack.c.l.b16 %v7764
        %v7918 = vunpack.c.h.b16 %v7764
        %v7919 = vunpack.c.l.b16 %v7765
        %v7920 = vunpack.c.h.b16 %v7765
        %v7921 = vunpack.c.l.b16 %v7766
        %v7922 = vunpack.c.h.b16 %v7766
        %v7923 = vunpack.c.l.b16 %v7767
        %v7924 = vunpack.c.h.b16 %v7767
        %v7925 = vunpack.c.l.b16 %v7768
        %v7926 = vunpack.c.h.b16 %v7768
        %v7927 = vunpack.c.l.b16 %v7769
        %v7928 = vunpack.c.h.b16 %v7769
        %v7929 = vunpack.c.l.b16 %v7770
        %v7930 = vunpack.c.h.b16 %v7770
        %v7931 = vunpack.c.l.b16 %v7771
        %v7932 = vunpack.c.h.b16 %v7771
        %v7933 = vunpack.c.l.b16 %v7772
        %v7934 = vunpack.c.h.b16 %v7772
        %v7935 = vunpack.c.l.b16 %v7773
        %v7936 = vunpack.c.h.b16 %v7773
        %v7937 = vunpack.c.l.b16 %v7774
        %v7938 = vunpack.c.h.b16 %v7774
        %v7939 = vunpack.c.l.b16 %v7775
        %v7940 = vunpack.c.h.b16 %v7775
        %v7941 = vunpack.c.l.b16 %v7776
        %v7942 = vunpack.c.h.b16 %v7776
        %v7943 = vunpack.c.l.b16 %v7777
        %v7944 = vunpack.c.h.b16 %v7777
        %v7945 = vunpack.c.l.b16 %v7778
        %v7946 = vunpack.c.h.b16 %v7778
        %v7947 = vunpack.c.l.b16 %v7779
        %v7948 = vunpack.c.h.b16 %v7779
        %v7949 = vunpack.c.l.b16 %v7780
        %v7950 = vunpack.c.h.b16 %v7780
        %v7951 = vunpack.c.l.b16 %v7781
        %v7952 = vunpack.c.h.b16 %v7781
        %v7953 = vunpack.c.l.b16 %v7782
        %v7954 = vunpack.c.h.b16 %v7782
        %v7955 = vunpack.c.l.b16 %v7783
        %v7956 = vunpack.c.h.b16 %v7783
        %v7957 = vunpack.c.l.b16 %v7784
        %v7958 = vunpack.c.h.b16 %v7784
        %v7959 = vunpack.c.l.b16 %v7785
        %v7960 = vunpack.c.h.b16 %v7785
        %v7961 = vunpack.c.l.b16 %v7786
        %v7962 = vunpack.c.h.b16 %v7786
        %v7963 = vunpack.c.l.b16 %v7787
        %v7964 = vunpack.c.h.b16 %v7787
        %v7965 = vunpack.c.l.b16 %v7788
        %v7966 = vunpack.c.h.b16 %v7788
        %v7967 = vunpack.c.l.b16 %v7789
        %v7968 = vunpack.c.h.b16 %v7789
        %v7969 = vunpack.c.l.b16 %v7790
        %v7970 = vunpack.c.h.b16 %v7790
        %v7971 = vunpack.c.l.b16 %v7791
        %v7972 = vunpack.c.h.b16 %v7791
        %v7973 = vunpack.c.l.b16 %v7792
        %v7974 = vunpack.c.h.b16 %v7792
        %v7975 = vunpack.c.l.b16 %v7793
        %v7976 = vunpack.c.h.b16 %v7793
        %v7977 = vunpack.c.l.b16 %v7794
        %v7978 = vunpack.c.h.b16 %v7794
        %v7979 = vunpack.c.l.b16 %v7795
        %v7980 = vunpack.c.h.b16 %v7795
        %v7981 = vunpack.c.l.b16 %v7796
        %v7982 = vunpack.c.h.b16 %v7796
        %v7983 = vunpack.c.l.b16 %v7797
        %v7984 = vunpack.c.h.b16 %v7797
        %v7985 = vunpack.c.l.b16 %v7798
        %v7986 = vunpack.c.h.b16 %v7798
        %v7987 = vunpack.c.l.b16 %v7799
        %v7988 = vunpack.c.h.b16 %v7799
        %v7989 = vunpack.c.l.b16 %v7800
        %v7990 = vunpack.c.h.b16 %v7800
        %v7991 = vunpack.c.l.b16 %v7801
        %v7992 = vunpack.c.h.b16 %v7801
        %v7993 = vunpack.c.l.b16 %v7802
        %v7994 = vunpack.c.h.b16 %v7802
        %v7995 = vpack.c.b16 %v7869, %v7867
        %v7996 = vpack.c.b16 %v7870, %v7868
        %v7997 = vpack.c.b16 %v7873, %v7871
        %v7998 = vpack.c.b16 %v7874, %v7872
        %v7999 = vpack.c.b16 %v7877, %v7875
        %v8000 = vpack.c.b16 %v7878, %v7876
        %v8001 = vpack.c.b16 %v7881, %v7879
        %v8002 = vpack.c.b16 %v7882, %v7880
        %v8003 = vpack.c.b16 %v7885, %v7883
        %v8004 = vpack.c.b16 %v7886, %v7884
        %v8005 = vpack.c.b16 %v7889, %v7887
        %v8006 = vpack.c.b16 %v7890, %v7888
        %v8007 = vpack.c.b16 %v7893, %v7891
        %v8008 = vpack.c.b16 %v7894, %v7892
        %v8009 = vpack.c.b16 %v7897, %v7895
        %v8010 = vpack.c.b16 %v7898, %v7896
        %v8011 = vpack.c.b16 %v7901, %v7899
        %v8012 = vpack.c.b16 %v7902, %v7900
        %v8013 = vpack.c.b16 %v7905, %v7903
        %v8014 = vpack.c.b16 %v7906, %v7904
        %v8015 = vpack.c.b16 %v7909, %v7907
        %v8016 = vpack.c.b16 %v7910, %v7908
        %v8017 = vpack.c.b16 %v7913, %v7911
        %v8018 = vpack.c.b16 %v7914, %v7912
        %v8019 = vpack.c.b16 %v7917, %v7915
        %v8020 = vpack.c.b16 %v7918, %v7916
        %v8021 = vpack.c.b16 %v7921, %v7919
        %v8022 = vpack.c.b16 %v7922, %v7920
        %v8023 = vpack.c.b16 %v7925, %v7923
        %v8024 = vpack.c.b16 %v7926, %v7924
        %v8025 = vpack.c.b16 %v7929, %v7927
        %v8026 = vpack.c.b16 %v7930, %v7928
        %v8027 = vpack.c.b16 %v7933, %v7931
        %v8028 = vpack.c.b16 %v7934, %v7932
        %v8029 = vpack.c.b16 %v7937, %v7935
        %v8030 = vpack.c.b16 %v7938, %v7936
        %v8031 = vpack.c.b16 %v7941, %v7939
        %v8032 = vpack.c.b16 %v7942, %v7940
        %v8033 = vpack.c.b16 %v7945, %v7943
        %v8034 = vpack.c.b16 %v7946, %v7944
        %v8035 = vpack.c.b16 %v7949, %v7947
        %v8036 = vpack.c.b16 %v7950, %v7948
        %v8037 = vpack.c.b16 %v7953, %v7951
        %v8038 = vpack.c.b16 %v7954, %v7952
        %v8039 = vpack.c.b16 %v7957, %v7955
        %v8040 = vpack.c.b16 %v7958, %v7956
        %v8041 = vpack.c.b16 %v7961, %v7959
        %v8042 = vpack.c.b16 %v7962, %v7960
        %v8043 = vpack.c.b16 %v7965, %v7963
        %v8044 = vpack.c.b16 %v7966, %v7964
        %v8045 = vpack.c.b16 %v7969, %v7967
        %v8046 = vpack.c.b16 %v7970, %v7968
        %v8047 = vpack.c.b16 %v7973, %v7971
        %v8048 = vpack.c.b16 %v7974, %v7972
        %v8049 = vpack.c.b16 %v7977, %v7975
        %v8050 = vpack.c.b16 %v7978, %v7976
        %v8051 = vpack.c.b16 %v7981, %v7979
        %v8052 = vpack.c.b16 %v7982, %v7980
        %v8053 = vpack.c.b16 %v7985, %v7983
        %v8054 = vpack.c.b16 %v7986, %v7984
        %v8055 = vpack.c.b16 %v7989, %v7987
        %v8056 = vpack.c.b16 %v7990, %v7988
        %v8057 = vpack.c.b16 %v7993, %v7991
        %v8058 = vpack.c.b16 %v7994, %v7992
        %8123 = vmatpush.bf16.msra.mxu0 %v8009
        %8124 = vmatpush.bf16.msra.mxu0 %v8007
        %8125 = vmatpush.bf16.msra.mxu0 %v8005
        %8126 = vmatpush.bf16.msra.mxu0 %v8003
        %8127 = vmatpush.bf16.msra.mxu0 %v8001
        %8128 = vmatpush.bf16.msra.mxu0 %v7999
        %8129 = vmatpush.bf16.msra.mxu0 %v7997
        %8130 = vmatpush.bf16.msra.mxu0 %v7995
        %8131 = vmatmul.bf16.gmra.mxu0 %v7735
        %v8132 = vpop.f32.mrf.mxu0
        %v8133 = vadd.f32 0.0, %v8132
        %v8134 = vpop.f32.mrf.mxu0
        %v8135 = vadd.f32 0.0, %v8134
        %8136 = vdwg.mxu0
        %8137 = vmatpush.bf16.msra.mxu0 %v8025
        %8138 = vmatpush.bf16.msra.mxu0 %v8023
        %8139 = vmatpush.bf16.msra.mxu0 %v8021
        %8140 = vmatpush.bf16.msra.mxu0 %v8019
        %8141 = vmatpush.bf16.msra.mxu0 %v8017
        %8142 = vmatpush.bf16.msra.mxu0 %v8015
        %8143 = vmatpush.bf16.msra.mxu0 %v8013
        %8144 = vmatpush.bf16.msra.mxu0 %v8011
        %8145 = vmatmul.bf16.gmra.mxu0 %v7736
        %v8146 = vpop.f32.mrf.mxu0
        %v8147 = vadd.f32 %v8133, %v8146
        %v8148 = vpop.f32.mrf.mxu0
        %v8149 = vadd.f32 %v8135, %v8148
        %8150 = vdwg.mxu0
        %8151 = vmatpush.bf16.msra.mxu0 %v8041
        %8152 = vmatpush.bf16.msra.mxu0 %v8039
        %8153 = vmatpush.bf16.msra.mxu0 %v8037
        %8154 = vmatpush.bf16.msra.mxu0 %v8035
        %8155 = vmatpush.bf16.msra.mxu0 %v8033
        %8156 = vmatpush.bf16.msra.mxu0 %v8031
        %8157 = vmatpush.bf16.msra.mxu0 %v8029
        %8158 = vmatpush.bf16.msra.mxu0 %v8027
        %8159 = vmatmul.bf16.gmra.mxu0 %v7737
        %v8160 = vpop.f32.mrf.mxu0
        %v8161 = vadd.f32 %v8147, %v8160
        %v8162 = vpop.f32.mrf.mxu0
        %v8163 = vadd.f32 %v8149, %v8162
        %8164 = vdwg.mxu0
        %8165 = vmatpush.bf16.msra.mxu0 %v8057
        %8166 = vmatpush.bf16.msra.mxu0 %v8055
        %8167 = vmatpush.bf16.msra.mxu0 %v8053
        %8168 = vmatpush.bf16.msra.mxu0 %v8051
        %8169 = vmatpush.bf16.msra.mxu0 %v8049
        %8170 = vmatpush.bf16.msra.mxu0 %v8047
        %8171 = vmatpush.bf16.msra.mxu0 %v8045
        %8172 = vmatpush.bf16.msra.mxu0 %v8043
        %8173 = vmatmul.bf16.gmra.mxu0 %v7738
        %v8174 = vpop.f32.mrf.mxu0
        %v8175 = vadd.f32 %v8161, %v8174
        %v8176 = vpop.f32.mrf.mxu0
        %v8177 = vadd.f32 %v8163, %v8176
        %8178 = vdwg.mxu0
        %8179 = vmatpush.bf16.msra.mxu0 %v8010
        %8180 = vmatpush.bf16.msra.mxu0 %v8008
        %8181 = vmatpush.bf16.msra.mxu0 %v8006
        %8182 = vmatpush.bf16.msra.mxu0 %v8004
        %8183 = vmatpush.bf16.msra.mxu0 %v8002
        %8184 = vmatpush.bf16.msra.mxu0 %v8000
        %8185 = vmatpush.bf16.msra.mxu0 %v7998
        %8186 = vmatpush.bf16.msra.mxu0 %v7996
        %8187 = vmatmul.bf16.gmra.mxu0 %v7735
        %v8188 = vpop.f32.mrf.mxu0
        %v8189 = vadd.f32 0.0, %v8188
        %v8190 = vpop.f32.mrf.mxu0
        %v8191 = vadd.f32 0.0, %v8190
        %8192 = vdwg.mxu0
        %8193 = vmatpush.bf16.msra.mxu0 %v8026
        %8194 = vmatpush.bf16.msra.mxu0 %v8024
        %8195 = vmatpush.bf16.msra.mxu0 %v8022
        %8196 = vmatpush.bf16.msra.mxu0 %v8020
        %8197 = vmatpush.bf16.msra.mxu0 %v8018
        %8198 = vmatpush.bf16.msra.mxu0 %v8016
        %8199 = vmatpush.bf16.msra.mxu0 %v8014
        %8200 = vmatpush.bf16.msra.mxu0 %v8012
        %8201 = vmatmul.bf16.gmra.mxu0 %v7736
        %v8202 = vpop.f32.mrf.mxu0
        %v8203 = vadd.f32 %v8189, %v8202
        %v8204 = vpop.f32.mrf.mxu0
        %v8205 = vadd.f32 %v8191, %v8204
        %8206 = vdwg.mxu0
        %8207 = vmatpush.bf16.msra.mxu0 %v8042
        %8208 = vmatpush.bf16.msra.mxu0 %v8040
        %8209 = vmatpush.bf16.msra.mxu0 %v8038
        %8210 = vmatpush.bf16.msra.mxu0 %v8036
        %8211 = vmatpush.bf16.msra.mxu0 %v8034
        %8212 = vmatpush.bf16.msra.mxu0 %v8032
        %8213 = vmatpush.bf16.msra.mxu0 %v8030
        %8214 = vmatpush.bf16.msra.mxu0 %v8028
        %8215 = vmatmul.bf16.gmra.mxu0 %v7737
        %v8216 = vpop.f32.mrf.mxu0
        %v8217 = vadd.f32 %v8203, %v8216
        %v8218 = vpop.f32.mrf.mxu0
        %v8219 = vadd.f32 %v8205, %v8218
        %8220 = vdwg.mxu0
        %8221 = vmatpush.bf16.msra.mxu0 %v8058
        %8222 = vmatpush.bf16.msra.mxu0 %v8056
        %8223 = vmatpush.bf16.msra.mxu0 %v8054
        %8224 = vmatpush.bf16.msra.mxu0 %v8052
        %8225 = vmatpush.bf16.msra.mxu0 %v8050
        %8226 = vmatpush.bf16.msra.mxu0 %v8048
        %8227 = vmatpush.bf16.msra.mxu0 %v8046
        %8228 = vmatpush.bf16.msra.mxu0 %v8044
        %8229 = vmatmul.bf16.gmra.mxu0 %v7738
        %v8230 = vpop.f32.mrf.mxu0
        %v8231 = vadd.f32 %v8217, %v8230
        %v8232 = vpop.f32.mrf.mxu0
        %v8233 = vadd.f32 %v8219, %v8232
        %8234 = vdwg.mxu0
        %v8236 = vperm.slane %v7726, 0
        %v8237 = vperm.slane %v7726, 1
        %v8240 = vadd.f32 %v8236, %v8175
        %v8241 = vadd.f32 %v8237, %v8231
        %v8242 = vadd.f32 %v8236, %v8177
        %v8243 = vadd.f32 %v8237, %v8233
        %v8244 = vld [vmem:[#allocation4] sm:$0xfe]
        %v8245 = vld [vmem:[#allocation4 + $0x8] sm:$0xfe]
        %v8246 = vld [vmem:[#allocation4 + $0x10] sm:$0xfe]
        %v8247 = vld [vmem:[#allocation4 + $0x18] sm:$0xfe]
        %v8248 = vld [vmem:[#allocation4 + $0x20] sm:$0xff]
        %v8249 = vld [vmem:[#allocation4 + $0x28] sm:$0xff]
        %v8250 = vld [vmem:[#allocation4 + $0x30] sm:$0xff]
        %v8251 = vld [vmem:[#allocation4 + $0x38] sm:$0xff]
        %v8252 = vld [vmem:[#allocation4 + $0x40] sm:$0x1]
        %v8253 = vld [vmem:[#allocation4 + $0x48] sm:$0x1]
        %v8254 = vld [vmem:[#allocation4 + $0x50] sm:$0x1]
        %v8255 = vld [vmem:[#allocation4 + $0x58] sm:$0x1]
        %v8256 = vpack.c.bf16 %v8248, %v8244
        %v8257 = vpack.c.bf16 %v8249, %v8245
        %v8258 = vpack.c.bf16 %v8250, %v8246
        %v8259 = vpack.c.bf16 %v8251, %v8247
        %v8260 = vpack.c.bf16 %v8252, %v8252
        %v8261 = vpack.c.bf16 %v8253, %v8253
        %v8262 = vpack.c.bf16 %v8254, %v8254
        %v8263 = vpack.c.bf16 %v8255, %v8255
        %s8264 = scalar_lea.vmem %s5, 512
        %v8265 = vld [vmem:[%s8264] sm:$0xff]
        %v8266 = vld [vmem:[%s8264 + $0x8] sm:$0xff]
        %v8267 = vld [vmem:[%s8264 + $0x10] sm:$0xff]
        %v8268 = vld [vmem:[%s8264 + $0x18] sm:$0xff]
        %v8269 = vld [vmem:[%s8264 + $0x20] sm:$0xff]
        %v8270 = vld [vmem:[%s8264 + $0x28] sm:$0xff]
        %v8271 = vld [vmem:[%s8264 + $0x30] sm:$0xff]
        %v8272 = vld [vmem:[%s8264 + $0x38] sm:$0xff]
        %v8273 = vld [vmem:[%s8264 + $0x40] sm:$0xff]
        %v8274 = vld [vmem:[%s8264 + $0x48] sm:$0xff]
        %v8275 = vld [vmem:[%s8264 + $0x50] sm:$0xff]
        %v8276 = vld [vmem:[%s8264 + $0x58] sm:$0xff]
        %v8277 = vld [vmem:[%s8264 + $0x60] sm:$0xff]
        %v8278 = vld [vmem:[%s8264 + $0x68] sm:$0xff]
        %v8279 = vld [vmem:[%s8264 + $0x70] sm:$0xff]
        %v8280 = vld [vmem:[%s8264 + $0x78] sm:$0xff]
        %v8281 = vld [vmem:[%s8264 + $0x80] sm:$0xff]
        %v8282 = vld [vmem:[%s8264 + $0x88] sm:$0xff]
        %v8283 = vld [vmem:[%s8264 + $0x90] sm:$0xff]
        %v8284 = vld [vmem:[%s8264 + $0x98] sm:$0xff]
        %v8285 = vld [vmem:[%s8264 + $0xa0] sm:$0xff]
        %v8286 = vld [vmem:[%s8264 + $0xa8] sm:$0xff]
        %v8287 = vld [vmem:[%s8264 + $0xb0] sm:$0xff]
        %v8288 = vld [vmem:[%s8264 + $0xb8] sm:$0xff]
        %v8289 = vld [vmem:[%s8264 + $0xc0] sm:$0xff]
        %v8290 = vld [vmem:[%s8264 + $0xc8] sm:$0xff]
        %v8291 = vld [vmem:[%s8264 + $0xd0] sm:$0xff]
        %v8292 = vld [vmem:[%s8264 + $0xd8] sm:$0xff]
        %v8293 = vld [vmem:[%s8264 + $0xe0] sm:$0xff]
        %v8294 = vld [vmem:[%s8264 + $0xe8] sm:$0xff]
        %v8295 = vld [vmem:[%s8264 + $0xf0] sm:$0xff]
        %v8296 = vld [vmem:[%s8264 + $0xf8] sm:$0xff]
        %v8297 = vld [vmem:[%s8264 + $0x100] sm:$0xff]
        %v8298 = vld [vmem:[%s8264 + $0x108] sm:$0xff]
        %v8299 = vld [vmem:[%s8264 + $0x110] sm:$0xff]
        %v8300 = vld [vmem:[%s8264 + $0x118] sm:$0xff]
        %v8301 = vld [vmem:[%s8264 + $0x120] sm:$0xff]
        %v8302 = vld [vmem:[%s8264 + $0x128] sm:$0xff]
        %v8303 = vld [vmem:[%s8264 + $0x130] sm:$0xff]
        %v8304 = vld [vmem:[%s8264 + $0x138] sm:$0xff]
        %v8305 = vld [vmem:[%s8264 + $0x140] sm:$0xff]
        %v8306 = vld [vmem:[%s8264 + $0x148] sm:$0xff]
        %v8307 = vld [vmem:[%s8264 + $0x150] sm:$0xff]
        %v8308 = vld [vmem:[%s8264 + $0x158] sm:$0xff]
        %v8309 = vld [vmem:[%s8264 + $0x160] sm:$0xff]
        %v8310 = vld [vmem:[%s8264 + $0x168] sm:$0xff]
        %v8311 = vld [vmem:[%s8264 + $0x170] sm:$0xff]
        %v8312 = vld [vmem:[%s8264 + $0x178] sm:$0xff]
        %v8313 = vld [vmem:[%s8264 + $0x180] sm:$0xff]
        %v8314 = vld [vmem:[%s8264 + $0x188] sm:$0xff]
        %v8315 = vld [vmem:[%s8264 + $0x190] sm:$0xff]
        %v8316 = vld [vmem:[%s8264 + $0x198] sm:$0xff]
        %v8317 = vld [vmem:[%s8264 + $0x1a0] sm:$0xff]
        %v8318 = vld [vmem:[%s8264 + $0x1a8] sm:$0xff]
        %v8319 = vld [vmem:[%s8264 + $0x1b0] sm:$0xff]
        %v8320 = vld [vmem:[%s8264 + $0x1b8] sm:$0xff]
        %v8321 = vld [vmem:[%s8264 + $0x1c0] sm:$0xff]
        %v8322 = vld [vmem:[%s8264 + $0x1c8] sm:$0xff]
        %v8323 = vld [vmem:[%s8264 + $0x1d0] sm:$0xff]
        %v8324 = vld [vmem:[%s8264 + $0x1d8] sm:$0xff]
        %v8325 = vld [vmem:[%s8264 + $0x1e0] sm:$0xff]
        %v8326 = vld [vmem:[%s8264 + $0x1e8] sm:$0xff]
        %v8327 = vld [vmem:[%s8264 + $0x1f0] sm:$0xff]
        %v8328 = vld [vmem:[%s8264 + $0x1f8] sm:$0xff]
        %v8330 = vshrl.u32 %v8256, 16
        %v8332 = vshll.u32 %v8256, 16
        %v8334 = vrot.slane %v8332, 1
        %v8335 = vor.u32 %v8330, %v8334
        %v8337 = vshll.u32 %v8260, 16
        %v8339 = vrot.slane %v8337, 1
        %v8340 = vsel %vm3759, %v8335, %v8339
        %v8342 = vshrl.u32 %v8257, 16
        %v8344 = vshll.u32 %v8257, 16
        %v8346 = vrot.slane %v8344, 1
        %v8347 = vor.u32 %v8342, %v8346
        %v8349 = vshll.u32 %v8261, 16
        %v8351 = vrot.slane %v8349, 1
        %v8352 = vsel %vm3759, %v8347, %v8351
        %v8354 = vshrl.u32 %v8258, 16
        %v8356 = vshll.u32 %v8258, 16
        %v8358 = vrot.slane %v8356, 1
        %v8359 = vor.u32 %v8354, %v8358
        %v8361 = vshll.u32 %v8262, 16
        %v8363 = vrot.slane %v8361, 1
        %v8364 = vsel %vm3759, %v8359, %v8363
        %v8366 = vshrl.u32 %v8259, 16
        %v8368 = vshll.u32 %v8259, 16
        %v8370 = vrot.slane %v8368, 1
        %v8371 = vor.u32 %v8366, %v8370
        %v8373 = vshll.u32 %v8263, 16
        %v8375 = vrot.slane %v8373, 1
        %v8376 = vsel %vm3759, %v8371, %v8375
        %v8445 = vunpack.c.l.b16 %v8265
        %v8446 = vunpack.c.h.b16 %v8265
        %v8447 = vunpack.c.l.b16 %v8266
        %v8448 = vunpack.c.h.b16 %v8266
        %v8449 = vunpack.c.l.b16 %v8267
        %v8450 = vunpack.c.h.b16 %v8267
        %v8451 = vunpack.c.l.b16 %v8268
        %v8452 = vunpack.c.h.b16 %v8268
        %v8453 = vunpack.c.l.b16 %v8269
        %v8454 = vunpack.c.h.b16 %v8269
        %v8455 = vunpack.c.l.b16 %v8270
        %v8456 = vunpack.c.h.b16 %v8270
        %v8457 = vunpack.c.l.b16 %v8271
        %v8458 = vunpack.c.h.b16 %v8271
        %v8459 = vunpack.c.l.b16 %v8272
        %v8460 = vunpack.c.h.b16 %v8272
        %v8461 = vunpack.c.l.b16 %v8273
        %v8462 = vunpack.c.h.b16 %v8273
        %v8463 = vunpack.c.l.b16 %v8274
        %v8464 = vunpack.c.h.b16 %v8274
        %v8465 = vunpack.c.l.b16 %v8275
        %v8466 = vunpack.c.h.b16 %v8275
        %v8467 = vunpack.c.l.b16 %v8276
        %v8468 = vunpack.c.h.b16 %v8276
        %v8469 = vunpack.c.l.b16 %v8277
        %v8470 = vunpack.c.h.b16 %v8277
        %v8471 = vunpack.c.l.b16 %v8278
        %v8472 = vunpack.c.h.b16 %v8278
        %v8473 = vunpack.c.l.b16 %v8279
        %v8474 = vunpack.c.h.b16 %v8279
        %v8475 = vunpack.c.l.b16 %v8280
        %v8476 = vunpack.c.h.b16 %v8280
        %v8477 = vunpack.c.l.b16 %v8281
        %v8478 = vunpack.c.h.b16 %v8281
        %v8479 = vunpack.c.l.b16 %v8282
        %v8480 = vunpack.c.h.b16 %v8282
        %v8481 = vunpack.c.l.b16 %v8283
        %v8482 = vunpack.c.h.b16 %v8283
        %v8483 = vunpack.c.l.b16 %v8284
        %v8484 = vunpack.c.h.b16 %v8284
        %v8485 = vunpack.c.l.b16 %v8285
        %v8486 = vunpack.c.h.b16 %v8285
        %v8487 = vunpack.c.l.b16 %v8286
        %v8488 = vunpack.c.h.b16 %v8286
        %v8489 = vunpack.c.l.b16 %v8287
        %v8490 = vunpack.c.h.b16 %v8287
        %v8491 = vunpack.c.l.b16 %v8288
        %v8492 = vunpack.c.h.b16 %v8288
        %v8493 = vunpack.c.l.b16 %v8289
        %v8494 = vunpack.c.h.b16 %v8289
        %v8495 = vunpack.c.l.b16 %v8290
        %v8496 = vunpack.c.h.b16 %v8290
        %v8497 = vunpack.c.l.b16 %v8291
        %v8498 = vunpack.c.h.b16 %v8291
        %v8499 = vunpack.c.l.b16 %v8292
        %v8500 = vunpack.c.h.b16 %v8292
        %v8501 = vunpack.c.l.b16 %v8293
        %v8502 = vunpack.c.h.b16 %v8293
        %v8503 = vunpack.c.l.b16 %v8294
        %v8504 = vunpack.c.h.b16 %v8294
        %v8505 = vunpack.c.l.b16 %v8295
        %v8506 = vunpack.c.h.b16 %v8295
        %v8507 = vunpack.c.l.b16 %v8296
        %v8508 = vunpack.c.h.b16 %v8296
        %v8509 = vunpack.c.l.b16 %v8297
        %v8510 = vunpack.c.h.b16 %v8297
        %v8511 = vunpack.c.l.b16 %v8298
        %v8512 = vunpack.c.h.b16 %v8298
        %v8513 = vunpack.c.l.b16 %v8299
        %v8514 = vunpack.c.h.b16 %v8299
        %v8515 = vunpack.c.l.b16 %v8300
        %v8516 = vunpack.c.h.b16 %v8300
        %v8517 = vunpack.c.l.b16 %v8301
        %v8518 = vunpack.c.h.b16 %v8301
        %v8519 = vunpack.c.l.b16 %v8302
        %v8520 = vunpack.c.h.b16 %v8302
        %v8521 = vunpack.c.l.b16 %v8303
        %v8522 = vunpack.c.h.b16 %v8303
        %v8523 = vunpack.c.l.b16 %v8304
        %v8524 = vunpack.c.h.b16 %v8304
        %v8525 = vunpack.c.l.b16 %v8305
        %v8526 = vunpack.c.h.b16 %v8305
        %v8527 = vunpack.c.l.b16 %v8306
        %v8528 = vunpack.c.h.b16 %v8306
        %v8529 = vunpack.c.l.b16 %v8307
        %v8530 = vunpack.c.h.b16 %v8307
        %v8531 = vunpack.c.l.b16 %v8308
        %v8532 = vunpack.c.h.b16 %v8308
        %v8533 = vunpack.c.l.b16 %v8309
        %v8534 = vunpack.c.h.b16 %v8309
        %v8535 = vunpack.c.l.b16 %v8310
        %v8536 = vunpack.c.h.b16 %v8310
        %v8537 = vunpack.c.l.b16 %v8311
        %v8538 = vunpack.c.h.b16 %v8311
        %v8539 = vunpack.c.l.b16 %v8312
        %v8540 = vunpack.c.h.b16 %v8312
        %v8541 = vunpack.c.l.b16 %v8313
        %v8542 = vunpack.c.h.b16 %v8313
        %v8543 = vunpack.c.l.b16 %v8314
        %v8544 = vunpack.c.h.b16 %v8314
        %v8545 = vunpack.c.l.b16 %v8315
        %v8546 = vunpack.c.h.b16 %v8315
        %v8547 = vunpack.c.l.b16 %v8316
        %v8548 = vunpack.c.h.b16 %v8316
        %v8549 = vunpack.c.l.b16 %v8317
        %v8550 = vunpack.c.h.b16 %v8317
        %v8551 = vunpack.c.l.b16 %v8318
        %v8552 = vunpack.c.h.b16 %v8318
        %v8553 = vunpack.c.l.b16 %v8319
        %v8554 = vunpack.c.h.b16 %v8319
        %v8555 = vunpack.c.l.b16 %v8320
        %v8556 = vunpack.c.h.b16 %v8320
        %v8557 = vunpack.c.l.b16 %v8321
        %v8558 = vunpack.c.h.b16 %v8321
        %v8559 = vunpack.c.l.b16 %v8322
        %v8560 = vunpack.c.h.b16 %v8322
        %v8561 = vunpack.c.l.b16 %v8323
        %v8562 = vunpack.c.h.b16 %v8323
        %v8563 = vunpack.c.l.b16 %v8324
        %v8564 = vunpack.c.h.b16 %v8324
        %v8565 = vunpack.c.l.b16 %v8325
        %v8566 = vunpack.c.h.b16 %v8325
        %v8567 = vunpack.c.l.b16 %v8326
        %v8568 = vunpack.c.h.b16 %v8326
        %v8569 = vunpack.c.l.b16 %v8327
        %v8570 = vunpack.c.h.b16 %v8327
        %v8571 = vunpack.c.l.b16 %v8328
        %v8572 = vunpack.c.h.b16 %v8328
        %v8573 = vpack.c.b16 %v8447, %v8445
        %v8574 = vpack.c.b16 %v8448, %v8446
        %v8575 = vpack.c.b16 %v8451, %v8449
        %v8576 = vpack.c.b16 %v8452, %v8450
        %v8577 = vpack.c.b16 %v8455, %v8453
        %v8578 = vpack.c.b16 %v8456, %v8454
        %v8579 = vpack.c.b16 %v8459, %v8457
        %v8580 = vpack.c.b16 %v8460, %v8458
        %v8581 = vpack.c.b16 %v8463, %v8461
        %v8582 = vpack.c.b16 %v8464, %v8462
        %v8583 = vpack.c.b16 %v8467, %v8465
        %v8584 = vpack.c.b16 %v8468, %v8466
        %v8585 = vpack.c.b16 %v8471, %v8469
        %v8586 = vpack.c.b16 %v8472, %v8470
        %v8587 = vpack.c.b16 %v8475, %v8473
        %v8588 = vpack.c.b16 %v8476, %v8474
        %v8589 = vpack.c.b16 %v8479, %v8477
        %v8590 = vpack.c.b16 %v8480, %v8478
        %v8591 = vpack.c.b16 %v8483, %v8481
        %v8592 = vpack.c.b16 %v8484, %v8482
        %v8593 = vpack.c.b16 %v8487, %v8485
        %v8594 = vpack.c.b16 %v8488, %v8486
        %v8595 = vpack.c.b16 %v8491, %v8489
        %v8596 = vpack.c.b16 %v8492, %v8490
        %v8597 = vpack.c.b16 %v8495, %v8493
        %v8598 = vpack.c.b16 %v8496, %v8494
        %v8599 = vpack.c.b16 %v8499, %v8497
        %v8600 = vpack.c.b16 %v8500, %v8498
        %v8601 = vpack.c.b16 %v8503, %v8501
        %v8602 = vpack.c.b16 %v8504, %v8502
        %v8603 = vpack.c.b16 %v8507, %v8505
        %v8604 = vpack.c.b16 %v8508, %v8506
        %v8605 = vpack.c.b16 %v8511, %v8509
        %v8606 = vpack.c.b16 %v8512, %v8510
        %v8607 = vpack.c.b16 %v8515, %v8513
        %v8608 = vpack.c.b16 %v8516, %v8514
        %v8609 = vpack.c.b16 %v8519, %v8517
        %v8610 = vpack.c.b16 %v8520, %v8518
        %v8611 = vpack.c.b16 %v8523, %v8521
        %v8612 = vpack.c.b16 %v8524, %v8522
        %v8613 = vpack.c.b16 %v8527, %v8525
        %v8614 = vpack.c.b16 %v8528, %v8526
        %v8615 = vpack.c.b16 %v8531, %v8529
        %v8616 = vpack.c.b16 %v8532, %v8530
        %v8617 = vpack.c.b16 %v8535, %v8533
        %v8618 = vpack.c.b16 %v8536, %v8534
        %v8619 = vpack.c.b16 %v8539, %v8537
        %v8620 = vpack.c.b16 %v8540, %v8538
        %v8621 = vpack.c.b16 %v8543, %v8541
        %v8622 = vpack.c.b16 %v8544, %v8542
        %v8623 = vpack.c.b16 %v8547, %v8545
        %v8624 = vpack.c.b16 %v8548, %v8546
        %v8625 = vpack.c.b16 %v8551, %v8549
        %v8626 = vpack.c.b16 %v8552, %v8550
        %v8627 = vpack.c.b16 %v8555, %v8553
        %v8628 = vpack.c.b16 %v8556, %v8554
        %v8629 = vpack.c.b16 %v8559, %v8557
        %v8630 = vpack.c.b16 %v8560, %v8558
        %v8631 = vpack.c.b16 %v8563, %v8561
        %v8632 = vpack.c.b16 %v8564, %v8562
        %v8633 = vpack.c.b16 %v8567, %v8565
        %v8634 = vpack.c.b16 %v8568, %v8566
        %v8635 = vpack.c.b16 %v8571, %v8569
        %v8636 = vpack.c.b16 %v8572, %v8570
        %8701 = vmatpush.bf16.msra.mxu0 %v8587
        %8702 = vmatpush.bf16.msra.mxu0 %v8585
        %8703 = vmatpush.bf16.msra.mxu0 %v8583
        %8704 = vmatpush.bf16.msra.mxu0 %v8581
        %8705 = vmatpush.bf16.msra.mxu0 %v8579
        %8706 = vmatpush.bf16.msra.mxu0 %v8577
        %8707 = vmatpush.bf16.msra.mxu0 %v8575
        %8708 = vmatpush.bf16.msra.mxu0 %v8573
        %8709 = vmatmul.bf16.gmra.mxu0 %v8340
        %v8710 = vpop.f32.mrf.mxu0
        %v8711 = vadd.f32 0.0, %v8710
        %v8712 = vpop.f32.mrf.mxu0
        %v8713 = vadd.f32 0.0, %v8712
        %8714 = vdwg.mxu0
        %8715 = vmatpush.bf16.msra.mxu0 %v8603
        %8716 = vmatpush.bf16.msra.mxu0 %v8601
        %8717 = vmatpush.bf16.msra.mxu0 %v8599
        %8718 = vmatpush.bf16.msra.mxu0 %v8597
        %8719 = vmatpush.bf16.msra.mxu0 %v8595
        %8720 = vmatpush.bf16.msra.mxu0 %v8593
        %8721 = vmatpush.bf16.msra.mxu0 %v8591
        %8722 = vmatpush.bf16.msra.mxu0 %v8589
        %8723 = vmatmul.bf16.gmra.mxu0 %v8352
        %v8724 = vpop.f32.mrf.mxu0
        %v8725 = vadd.f32 %v8711, %v8724
        %v8726 = vpop.f32.mrf.mxu0
        %v8727 = vadd.f32 %v8713, %v8726
        %8728 = vdwg.mxu0
        %8729 = vmatpush.bf16.msra.mxu0 %v8619
        %8730 = vmatpush.bf16.msra.mxu0 %v8617
        %8731 = vmatpush.bf16.msra.mxu0 %v8615
        %8732 = vmatpush.bf16.msra.mxu0 %v8613
        %8733 = vmatpush.bf16.msra.mxu0 %v8611
        %8734 = vmatpush.bf16.msra.mxu0 %v8609
        %8735 = vmatpush.bf16.msra.mxu0 %v8607
        %8736 = vmatpush.bf16.msra.mxu0 %v8605
        %8737 = vmatmul.bf16.gmra.mxu0 %v8364
        %v8738 = vpop.f32.mrf.mxu0
        %v8739 = vadd.f32 %v8725, %v8738
        %v8740 = vpop.f32.mrf.mxu0
        %v8741 = vadd.f32 %v8727, %v8740
        %8742 = vdwg.mxu0
        %8743 = vmatpush.bf16.msra.mxu0 %v8635
        %8744 = vmatpush.bf16.msra.mxu0 %v8633
        %8745 = vmatpush.bf16.msra.mxu0 %v8631
        %8746 = vmatpush.bf16.msra.mxu0 %v8629
        %8747 = vmatpush.bf16.msra.mxu0 %v8627
        %8748 = vmatpush.bf16.msra.mxu0 %v8625
        %8749 = vmatpush.bf16.msra.mxu0 %v8623
        %8750 = vmatpush.bf16.msra.mxu0 %v8621
        %8751 = vmatmul.bf16.gmra.mxu0 %v8376
        %v8752 = vpop.f32.mrf.mxu0
        %v8753 = vadd.f32 %v8739, %v8752
        %v8754 = vpop.f32.mrf.mxu0
        %v8755 = vadd.f32 %v8741, %v8754
        %8756 = vdwg.mxu0
        %8757 = vmatpush.bf16.msra.mxu0 %v8588
        %8758 = vmatpush.bf16.msra.mxu0 %v8586
        %8759 = vmatpush.bf16.msra.mxu0 %v8584
        %8760 = vmatpush.bf16.msra.mxu0 %v8582
        %8761 = vmatpush.bf16.msra.mxu0 %v8580
        %8762 = vmatpush.bf16.msra.mxu0 %v8578
        %8763 = vmatpush.bf16.msra.mxu0 %v8576
        %8764 = vmatpush.bf16.msra.mxu0 %v8574
        %8765 = vmatmul.bf16.gmra.mxu0 %v8340
        %v8766 = vpop.f32.mrf.mxu0
        %v8767 = vadd.f32 0.0, %v8766
        %v8768 = vpop.f32.mrf.mxu0
        %v8769 = vadd.f32 0.0, %v8768
        %8770 = vdwg.mxu0
        %8771 = vmatpush.bf16.msra.mxu0 %v8604
        %8772 = vmatpush.bf16.msra.mxu0 %v8602
        %8773 = vmatpush.bf16.msra.mxu0 %v8600
        %8774 = vmatpush.bf16.msra.mxu0 %v8598
        %8775 = vmatpush.bf16.msra.mxu0 %v8596
        %8776 = vmatpush.bf16.msra.mxu0 %v8594
        %8777 = vmatpush.bf16.msra.mxu0 %v8592
        %8778 = vmatpush.bf16.msra.mxu0 %v8590
        %8779 = vmatmul.bf16.gmra.mxu0 %v8352
        %v8780 = vpop.f32.mrf.mxu0
        %v8781 = vadd.f32 %v8767, %v8780
        %v8782 = vpop.f32.mrf.mxu0
        %v8783 = vadd.f32 %v8769, %v8782
        %8784 = vdwg.mxu0
        %8785 = vmatpush.bf16.msra.mxu0 %v8620
        %8786 = vmatpush.bf16.msra.mxu0 %v8618
        %8787 = vmatpush.bf16.msra.mxu0 %v8616
        %8788 = vmatpush.bf16.msra.mxu0 %v8614
        %8789 = vmatpush.bf16.msra.mxu0 %v8612
        %8790 = vmatpush.bf16.msra.mxu0 %v8610
        %8791 = vmatpush.bf16.msra.mxu0 %v8608
        %8792 = vmatpush.bf16.msra.mxu0 %v8606
        %8793 = vmatmul.bf16.gmra.mxu0 %v8364
        %v8794 = vpop.f32.mrf.mxu0
        %v8795 = vadd.f32 %v8781, %v8794
        %v8796 = vpop.f32.mrf.mxu0
        %v8797 = vadd.f32 %v8783, %v8796
        %8798 = vdwg.mxu0
        %8799 = vmatpush.bf16.msra.mxu0 %v8636
        %8800 = vmatpush.bf16.msra.mxu0 %v8634
        %8801 = vmatpush.bf16.msra.mxu0 %v8632
        %8802 = vmatpush.bf16.msra.mxu0 %v8630
        %8803 = vmatpush.bf16.msra.mxu0 %v8628
        %8804 = vmatpush.bf16.msra.mxu0 %v8626
        %8805 = vmatpush.bf16.msra.mxu0 %v8624
        %8806 = vmatpush.bf16.msra.mxu0 %v8622
        %8807 = vmatmul.bf16.gmra.mxu0 %v8376
        %v8808 = vpop.f32.mrf.mxu0
        %v8809 = vadd.f32 %v8795, %v8808
        %v8810 = vpop.f32.mrf.mxu0
        %v8811 = vadd.f32 %v8797, %v8810
        %8812 = vdwg.mxu0
        %v8813 = vadd.f32 %v8240, %v8753
        %v8814 = vadd.f32 %v8241, %v8809
        %v8815 = vadd.f32 %v8242, %v8755
        %v8816 = vadd.f32 %v8243, %v8811
        %v8817 = vld [vmem:[#allocation4] sm:$0xfc]
        %v8818 = vld [vmem:[#allocation4 + $0x8] sm:$0xfc]
        %v8819 = vld [vmem:[#allocation4 + $0x10] sm:$0xfc]
        %v8820 = vld [vmem:[#allocation4 + $0x18] sm:$0xfc]
        %v8821 = vld [vmem:[#allocation4 + $0x40] sm:$0x3]
        %v8822 = vld [vmem:[#allocation4 + $0x48] sm:$0x3]
        %v8823 = vld [vmem:[#allocation4 + $0x50] sm:$0x3]
        %v8824 = vld [vmem:[#allocation4 + $0x58] sm:$0x3]
        %v8825 = vpack.c.bf16 %v8248, %v8817
        %v8826 = vpack.c.bf16 %v8249, %v8818
        %v8827 = vpack.c.bf16 %v8250, %v8819
        %v8828 = vpack.c.bf16 %v8251, %v8820
        %v8829 = vpack.c.bf16 %v8821, %v8821
        %v8830 = vpack.c.bf16 %v8822, %v8822
        %v8831 = vpack.c.bf16 %v8823, %v8823
        %v8832 = vpack.c.bf16 %v8824, %v8824
        %s8833 = scalar_lea.vmem %s5, 1024
        %v8834 = vld [vmem:[%s8833] sm:$0xff]
        %v8835 = vld [vmem:[%s8833 + $0x8] sm:$0xff]
        %v8836 = vld [vmem:[%s8833 + $0x10] sm:$0xff]
        %v8837 = vld [vmem:[%s8833 + $0x18] sm:$0xff]
        %v8838 = vld [vmem:[%s8833 + $0x20] sm:$0xff]
        %v8839 = vld [vmem:[%s8833 + $0x28] sm:$0xff]
        %v8840 = vld [vmem:[%s8833 + $0x30] sm:$0xff]
        %v8841 = vld [vmem:[%s8833 + $0x38] sm:$0xff]
        %v8842 = vld [vmem:[%s8833 + $0x40] sm:$0xff]
        %v8843 = vld [vmem:[%s8833 + $0x48] sm:$0xff]
        %v8844 = vld [vmem:[%s8833 + $0x50] sm:$0xff]
        %v8845 = vld [vmem:[%s8833 + $0x58] sm:$0xff]
        %v8846 = vld [vmem:[%s8833 + $0x60] sm:$0xff]
        %v8847 = vld [vmem:[%s8833 + $0x68] sm:$0xff]
        %v8848 = vld [vmem:[%s8833 + $0x70] sm:$0xff]
        %v8849 = vld [vmem:[%s8833 + $0x78] sm:$0xff]
        %v8850 = vld [vmem:[%s8833 + $0x80] sm:$0xff]
        %v8851 = vld [vmem:[%s8833 + $0x88] sm:$0xff]
        %v8852 = vld [vmem:[%s8833 + $0x90] sm:$0xff]
        %v8853 = vld [vmem:[%s8833 + $0x98] sm:$0xff]
        %v8854 = vld [vmem:[%s8833 + $0xa0] sm:$0xff]
        %v8855 = vld [vmem:[%s8833 + $0xa8] sm:$0xff]
        %v8856 = vld [vmem:[%s8833 + $0xb0] sm:$0xff]
        %v8857 = vld [vmem:[%s8833 + $0xb8] sm:$0xff]
        %v8858 = vld [vmem:[%s8833 + $0xc0] sm:$0xff]
        %v8859 = vld [vmem:[%s8833 + $0xc8] sm:$0xff]
        %v8860 = vld [vmem:[%s8833 + $0xd0] sm:$0xff]
        %v8861 = vld [vmem:[%s8833 + $0xd8] sm:$0xff]
        %v8862 = vld [vmem:[%s8833 + $0xe0] sm:$0xff]
        %v8863 = vld [vmem:[%s8833 + $0xe8] sm:$0xff]
        %v8864 = vld [vmem:[%s8833 + $0xf0] sm:$0xff]
        %v8865 = vld [vmem:[%s8833 + $0xf8] sm:$0xff]
        %v8866 = vld [vmem:[%s8833 + $0x100] sm:$0xff]
        %v8867 = vld [vmem:[%s8833 + $0x108] sm:$0xff]
        %v8868 = vld [vmem:[%s8833 + $0x110] sm:$0xff]
        %v8869 = vld [vmem:[%s8833 + $0x118] sm:$0xff]
        %v8870 = vld [vmem:[%s8833 + $0x120] sm:$0xff]
        %v8871 = vld [vmem:[%s8833 + $0x128] sm:$0xff]
        %v8872 = vld [vmem:[%s8833 + $0x130] sm:$0xff]
        %v8873 = vld [vmem:[%s8833 + $0x138] sm:$0xff]
        %v8874 = vld [vmem:[%s8833 + $0x140] sm:$0xff]
        %v8875 = vld [vmem:[%s8833 + $0x148] sm:$0xff]
        %v8876 = vld [vmem:[%s8833 + $0x150] sm:$0xff]
        %v8877 = vld [vmem:[%s8833 + $0x158] sm:$0xff]
        %v8878 = vld [vmem:[%s8833 + $0x160] sm:$0xff]
        %v8879 = vld [vmem:[%s8833 + $0x168] sm:$0xff]
        %v8880 = vld [vmem:[%s8833 + $0x170] sm:$0xff]
        %v8881 = vld [vmem:[%s8833 + $0x178] sm:$0xff]
        %v8882 = vld [vmem:[%s8833 + $0x180] sm:$0xff]
        %v8883 = vld [vmem:[%s8833 + $0x188] sm:$0xff]
        %v8884 = vld [vmem:[%s8833 + $0x190] sm:$0xff]
        %v8885 = vld [vmem:[%s8833 + $0x198] sm:$0xff]
        %v8886 = vld [vmem:[%s8833 + $0x1a0] sm:$0xff]
        %v8887 = vld [vmem:[%s8833 + $0x1a8] sm:$0xff]
        %v8888 = vld [vmem:[%s8833 + $0x1b0] sm:$0xff]
        %v8889 = vld [vmem:[%s8833 + $0x1b8] sm:$0xff]
        %v8890 = vld [vmem:[%s8833 + $0x1c0] sm:$0xff]
        %v8891 = vld [vmem:[%s8833 + $0x1c8] sm:$0xff]
        %v8892 = vld [vmem:[%s8833 + $0x1d0] sm:$0xff]
        %v8893 = vld [vmem:[%s8833 + $0x1d8] sm:$0xff]
        %v8894 = vld [vmem:[%s8833 + $0x1e0] sm:$0xff]
        %v8895 = vld [vmem:[%s8833 + $0x1e8] sm:$0xff]
        %v8896 = vld [vmem:[%s8833 + $0x1f0] sm:$0xff]
        %v8897 = vld [vmem:[%s8833 + $0x1f8] sm:$0xff]
        %v8906 = vrot.slane %v8825, 1
        %v8907 = vrot.slane %v8829, 1
        %v8908 = vsel %vm5905, %v8906, %v8907
        %v8909 = vrot.slane %v8826, 1
        %v8910 = vrot.slane %v8830, 1
        %v8911 = vsel %vm5905, %v8909, %v8910
        %v8912 = vrot.slane %v8827, 1
        %v8913 = vrot.slane %v8831, 1
        %v8914 = vsel %vm5905, %v8912, %v8913
        %v8915 = vrot.slane %v8828, 1
        %v8916 = vrot.slane %v8832, 1
        %v8917 = vsel %vm5905, %v8915, %v8916
        %v8986 = vunpack.c.l.b16 %v8834
        %v8987 = vunpack.c.h.b16 %v8834
        %v8988 = vunpack.c.l.b16 %v8835
        %v8989 = vunpack.c.h.b16 %v8835
        %v8990 = vunpack.c.l.b16 %v8836
        %v8991 = vunpack.c.h.b16 %v8836
        %v8992 = vunpack.c.l.b16 %v8837
        %v8993 = vunpack.c.h.b16 %v8837
        %v8994 = vunpack.c.l.b16 %v8838
        %v8995 = vunpack.c.h.b16 %v8838
        %v8996 = vunpack.c.l.b16 %v8839
        %v8997 = vunpack.c.h.b16 %v8839
        %v8998 = vunpack.c.l.b16 %v8840
        %v8999 = vunpack.c.h.b16 %v8840
        %v9000 = vunpack.c.l.b16 %v8841
        %v9001 = vunpack.c.h.b16 %v8841
        %v9002 = vunpack.c.l.b16 %v8842
        %v9003 = vunpack.c.h.b16 %v8842
        %v9004 = vunpack.c.l.b16 %v8843
        %v9005 = vunpack.c.h.b16 %v8843
        %v9006 = vunpack.c.l.b16 %v8844
        %v9007 = vunpack.c.h.b16 %v8844
        %v9008 = vunpack.c.l.b16 %v8845
        %v9009 = vunpack.c.h.b16 %v8845
        %v9010 = vunpack.c.l.b16 %v8846
        %v9011 = vunpack.c.h.b16 %v8846
        %v9012 = vunpack.c.l.b16 %v8847
        %v9013 = vunpack.c.h.b16 %v8847
        %v9014 = vunpack.c.l.b16 %v8848
        %v9015 = vunpack.c.h.b16 %v8848
        %v9016 = vunpack.c.l.b16 %v8849
        %v9017 = vunpack.c.h.b16 %v8849
        %v9018 = vunpack.c.l.b16 %v8850
        %v9019 = vunpack.c.h.b16 %v8850
        %v9020 = vunpack.c.l.b16 %v8851
        %v9021 = vunpack.c.h.b16 %v8851
        %v9022 = vunpack.c.l.b16 %v8852
        %v9023 = vunpack.c.h.b16 %v8852
        %v9024 = vunpack.c.l.b16 %v8853
        %v9025 = vunpack.c.h.b16 %v8853
        %v9026 = vunpack.c.l.b16 %v8854
        %v9027 = vunpack.c.h.b16 %v8854
        %v9028 = vunpack.c.l.b16 %v8855
        %v9029 = vunpack.c.h.b16 %v8855
        %v9030 = vunpack.c.l.b16 %v8856
        %v9031 = vunpack.c.h.b16 %v8856
        %v9032 = vunpack.c.l.b16 %v8857
        %v9033 = vunpack.c.h.b16 %v8857
        %v9034 = vunpack.c.l.b16 %v8858
        %v9035 = vunpack.c.h.b16 %v8858
        %v9036 = vunpack.c.l.b16 %v8859
        %v9037 = vunpack.c.h.b16 %v8859
        %v9038 = vunpack.c.l.b16 %v8860
        %v9039 = vunpack.c.h.b16 %v8860
        %v9040 = vunpack.c.l.b16 %v8861
        %v9041 = vunpack.c.h.b16 %v8861
        %v9042 = vunpack.c.l.b16 %v8862
        %v9043 = vunpack.c.h.b16 %v8862
        %v9044 = vunpack.c.l.b16 %v8863
        %v9045 = vunpack.c.h.b16 %v8863
        %v9046 = vunpack.c.l.b16 %v8864
        %v9047 = vunpack.c.h.b16 %v8864
        %v9048 = vunpack.c.l.b16 %v8865
        %v9049 = vunpack.c.h.b16 %v8865
        %v9050 = vunpack.c.l.b16 %v8866
        %v9051 = vunpack.c.h.b16 %v8866
        %v9052 = vunpack.c.l.b16 %v8867
        %v9053 = vunpack.c.h.b16 %v8867
        %v9054 = vunpack.c.l.b16 %v8868
        %v9055 = vunpack.c.h.b16 %v8868
        %v9056 = vunpack.c.l.b16 %v8869
        %v9057 = vunpack.c.h.b16 %v8869
        %v9058 = vunpack.c.l.b16 %v8870
        %v9059 = vunpack.c.h.b16 %v8870
        %v9060 = vunpack.c.l.b16 %v8871
        %v9061 = vunpack.c.h.b16 %v8871
        %v9062 = vunpack.c.l.b16 %v8872
        %v9063 = vunpack.c.h.b16 %v8872
        %v9064 = vunpack.c.l.b16 %v8873
        %v9065 = vunpack.c.h.b16 %v8873
        %v9066 = vunpack.c.l.b16 %v8874
        %v9067 = vunpack.c.h.b16 %v8874
        %v9068 = vunpack.c.l.b16 %v8875
        %v9069 = vunpack.c.h.b16 %v8875
        %v9070 = vunpack.c.l.b16 %v8876
        %v9071 = vunpack.c.h.b16 %v8876
        %v9072 = vunpack.c.l.b16 %v8877
        %v9073 = vunpack.c.h.b16 %v8877
        %v9074 = vunpack.c.l.b16 %v8878
        %v9075 = vunpack.c.h.b16 %v8878
        %v9076 = vunpack.c.l.b16 %v8879
        %v9077 = vunpack.c.h.b16 %v8879
        %v9078 = vunpack.c.l.b16 %v8880
        %v9079 = vunpack.c.h.b16 %v8880
        %v9080 = vunpack.c.l.b16 %v8881
        %v9081 = vunpack.c.h.b16 %v8881
        %v9082 = vunpack.c.l.b16 %v8882
        %v9083 = vunpack.c.h.b16 %v8882
        %v9084 = vunpack.c.l.b16 %v8883
        %v9085 = vunpack.c.h.b16 %v8883
        %v9086 = vunpack.c.l.b16 %v8884
        %v9087 = vunpack.c.h.b16 %v8884
        %v9088 = vunpack.c.l.b16 %v8885
        %v9089 = vunpack.c.h.b16 %v8885
        %v9090 = vunpack.c.l.b16 %v8886
        %v9091 = vunpack.c.h.b16 %v8886
        %v9092 = vunpack.c.l.b16 %v8887
        %v9093 = vunpack.c.h.b16 %v8887
        %v9094 = vunpack.c.l.b16 %v8888
        %v9095 = vunpack.c.h.b16 %v8888
        %v9096 = vunpack.c.l.b16 %v8889
        %v9097 = vunpack.c.h.b16 %v8889
        %v9098 = vunpack.c.l.b16 %v8890
        %v9099 = vunpack.c.h.b16 %v8890
        %v9100 = vunpack.c.l.b16 %v8891
        %v9101 = vunpack.c.h.b16 %v8891
        %v9102 = vunpack.c.l.b16 %v8892
        %v9103 = vunpack.c.h.b16 %v8892
        %v9104 = vunpack.c.l.b16 %v8893
        %v9105 = vunpack.c.h.b16 %v8893
        %v9106 = vunpack.c.l.b16 %v8894
        %v9107 = vunpack.c.h.b16 %v8894
        %v9108 = vunpack.c.l.b16 %v8895
        %v9109 = vunpack.c.h.b16 %v8895
        %v9110 = vunpack.c.l.b16 %v8896
        %v9111 = vunpack.c.h.b16 %v8896
        %v9112 = vunpack.c.l.b16 %v8897
        %v9113 = vunpack.c.h.b16 %v8897
        %v9114 = vpack.c.b16 %v8988, %v8986
        %v9115 = vpack.c.b16 %v8989, %v8987
        %v9116 = vpack.c.b16 %v8992, %v8990
        %v9117 = vpack.c.b16 %v8993, %v8991
        %v9118 = vpack.c.b16 %v8996, %v8994
        %v9119 = vpack.c.b16 %v8997, %v8995
        %v9120 = vpack.c.b16 %v9000, %v8998
        %v9121 = vpack.c.b16 %v9001, %v8999
        %v9122 = vpack.c.b16 %v9004, %v9002
        %v9123 = vpack.c.b16 %v9005, %v9003
        %v9124 = vpack.c.b16 %v9008, %v9006
        %v9125 = vpack.c.b16 %v9009, %v9007
        %v9126 = vpack.c.b16 %v9012, %v9010
        %v9127 = vpack.c.b16 %v9013, %v9011
        %v9128 = vpack.c.b16 %v9016, %v9014
        %v9129 = vpack.c.b16 %v9017, %v9015
        %v9130 = vpack.c.b16 %v9020, %v9018
        %v9131 = vpack.c.b16 %v9021, %v9019
        %v9132 = vpack.c.b16 %v9024, %v9022
        %v9133 = vpack.c.b16 %v9025, %v9023
        %v9134 = vpack.c.b16 %v9028, %v9026
        %v9135 = vpack.c.b16 %v9029, %v9027
        %v9136 = vpack.c.b16 %v9032, %v9030
        %v9137 = vpack.c.b16 %v9033, %v9031
        %v9138 = vpack.c.b16 %v9036, %v9034
        %v9139 = vpack.c.b16 %v9037, %v9035
        %v9140 = vpack.c.b16 %v9040, %v9038
        %v9141 = vpack.c.b16 %v9041, %v9039
        %v9142 = vpack.c.b16 %v9044, %v9042
        %v9143 = vpack.c.b16 %v9045, %v9043
        %v9144 = vpack.c.b16 %v9048, %v9046
        %v9145 = vpack.c.b16 %v9049, %v9047
        %v9146 = vpack.c.b16 %v9052, %v9050
        %v9147 = vpack.c.b16 %v9053, %v9051
        %v9148 = vpack.c.b16 %v9056, %v9054
        %v9149 = vpack.c.b16 %v9057, %v9055
        %v9150 = vpack.c.b16 %v9060, %v9058
        %v9151 = vpack.c.b16 %v9061, %v9059
        %v9152 = vpack.c.b16 %v9064, %v9062
        %v9153 = vpack.c.b16 %v9065, %v9063
        %v9154 = vpack.c.b16 %v9068, %v9066
        %v9155 = vpack.c.b16 %v9069, %v9067
        %v9156 = vpack.c.b16 %v9072, %v9070
        %v9157 = vpack.c.b16 %v9073, %v9071
        %v9158 = vpack.c.b16 %v9076, %v9074
        %v9159 = vpack.c.b16 %v9077, %v9075
        %v9160 = vpack.c.b16 %v9080, %v9078
        %v9161 = vpack.c.b16 %v9081, %v9079
        %v9162 = vpack.c.b16 %v9084, %v9082
        %v9163 = vpack.c.b16 %v9085, %v9083
        %v9164 = vpack.c.b16 %v9088, %v9086
        %v9165 = vpack.c.b16 %v9089, %v9087
        %v9166 = vpack.c.b16 %v9092, %v9090
        %v9167 = vpack.c.b16 %v9093, %v9091
        %v9168 = vpack.c.b16 %v9096, %v9094
        %v9169 = vpack.c.b16 %v9097, %v9095
        %v9170 = vpack.c.b16 %v9100, %v9098
        %v9171 = vpack.c.b16 %v9101, %v9099
        %v9172 = vpack.c.b16 %v9104, %v9102
        %v9173 = vpack.c.b16 %v9105, %v9103
        %v9174 = vpack.c.b16 %v9108, %v9106
        %v9175 = vpack.c.b16 %v9109, %v9107
        %v9176 = vpack.c.b16 %v9112, %v9110
        %v9177 = vpack.c.b16 %v9113, %v9111
        %9242 = vmatpush.bf16.msra.mxu0 %v9128
        %9243 = vmatpush.bf16.msra.mxu0 %v9126
        %9244 = vmatpush.bf16.msra.mxu0 %v9124
        %9245 = vmatpush.bf16.msra.mxu0 %v9122
        %9246 = vmatpush.bf16.msra.mxu0 %v9120
        %9247 = vmatpush.bf16.msra.mxu0 %v9118
        %9248 = vmatpush.bf16.msra.mxu0 %v9116
        %9249 = vmatpush.bf16.msra.mxu0 %v9114
        %9250 = vmatmul.bf16.gmra.mxu0 %v8908
        %v9251 = vpop.f32.mrf.mxu0
        %v9252 = vadd.f32 0.0, %v9251
        %v9253 = vpop.f32.mrf.mxu0
        %v9254 = vadd.f32 0.0, %v9253
        %9255 = vdwg.mxu0
        %9256 = vmatpush.bf16.msra.mxu0 %v9144
        %9257 = vmatpush.bf16.msra.mxu0 %v9142
        %9258 = vmatpush.bf16.msra.mxu0 %v9140
        %9259 = vmatpush.bf16.msra.mxu0 %v9138
        %9260 = vmatpush.bf16.msra.mxu0 %v9136
        %9261 = vmatpush.bf16.msra.mxu0 %v9134
        %9262 = vmatpush.bf16.msra.mxu0 %v9132
        %9263 = vmatpush.bf16.msra.mxu0 %v9130
        %9264 = vmatmul.bf16.gmra.mxu0 %v8911
        %v9265 = vpop.f32.mrf.mxu0
        %v9266 = vadd.f32 %v9252, %v9265
        %v9267 = vpop.f32.mrf.mxu0
        %v9268 = vadd.f32 %v9254, %v9267
        %9269 = vdwg.mxu0
        %9270 = vmatpush.bf16.msra.mxu0 %v9160
        %9271 = vmatpush.bf16.msra.mxu0 %v9158
        %9272 = vmatpush.bf16.msra.mxu0 %v9156
        %9273 = vmatpush.bf16.msra.mxu0 %v9154
        %9274 = vmatpush.bf16.msra.mxu0 %v9152
        %9275 = vmatpush.bf16.msra.mxu0 %v9150
        %9276 = vmatpush.bf16.msra.mxu0 %v9148
        %9277 = vmatpush.bf16.msra.mxu0 %v9146
        %9278 = vmatmul.bf16.gmra.mxu0 %v8914
        %v9279 = vpop.f32.mrf.mxu0
        %v9280 = vadd.f32 %v9266, %v9279
        %v9281 = vpop.f32.mrf.mxu0
        %v9282 = vadd.f32 %v9268, %v9281
        %9283 = vdwg.mxu0
        %9284 = vmatpush.bf16.msra.mxu0 %v9176
        %9285 = vmatpush.bf16.msra.mxu0 %v9174
        %9286 = vmatpush.bf16.msra.mxu0 %v9172
        %9287 = vmatpush.bf16.msra.mxu0 %v9170
        %9288 = vmatpush.bf16.msra.mxu0 %v9168
        %9289 = vmatpush.bf16.msra.mxu0 %v9166
        %9290 = vmatpush.bf16.msra.mxu0 %v9164
        %9291 = vmatpush.bf16.msra.mxu0 %v9162
        %9292 = vmatmul.bf16.gmra.mxu0 %v8917
        %v9293 = vpop.f32.mrf.mxu0
        %v9294 = vadd.f32 %v9280, %v9293
        %v9295 = vpop.f32.mrf.mxu0
        %v9296 = vadd.f32 %v9282, %v9295
        %9297 = vdwg.mxu0
        %9298 = vmatpush.bf16.msra.mxu0 %v9129
        %9299 = vmatpush.bf16.msra.mxu0 %v9127
        %9300 = vmatpush.bf16.msra.mxu0 %v9125
        %9301 = vmatpush.bf16.msra.mxu0 %v9123
        %9302 = vmatpush.bf16.msra.mxu0 %v9121
        %9303 = vmatpush.bf16.msra.mxu0 %v9119
        %9304 = vmatpush.bf16.msra.mxu0 %v9117
        %9305 = vmatpush.bf16.msra.mxu0 %v9115
        %9306 = vmatmul.bf16.gmra.mxu0 %v8908
        %v9307 = vpop.f32.mrf.mxu0
        %v9308 = vadd.f32 0.0, %v9307
        %v9309 = vpop.f32.mrf.mxu0
        %v9310 = vadd.f32 0.0, %v9309
        %9311 = vdwg.mxu0
        %9312 = vmatpush.bf16.msra.mxu0 %v9145
        %9313 = vmatpush.bf16.msra.mxu0 %v9143
        %9314 = vmatpush.bf16.msra.mxu0 %v9141
        %9315 = vmatpush.bf16.msra.mxu0 %v9139
        %9316 = vmatpush.bf16.msra.mxu0 %v9137
        %9317 = vmatpush.bf16.msra.mxu0 %v9135
        %9318 = vmatpush.bf16.msra.mxu0 %v9133
        %9319 = vmatpush.bf16.msra.mxu0 %v9131
        %9320 = vmatmul.bf16.gmra.mxu0 %v8911
        %v9321 = vpop.f32.mrf.mxu0
        %v9322 = vadd.f32 %v9308, %v9321
        %v9323 = vpop.f32.mrf.mxu0
        %v9324 = vadd.f32 %v9310, %v9323
        %9325 = vdwg.mxu0
        %9326 = vmatpush.bf16.msra.mxu0 %v9161
        %9327 = vmatpush.bf16.msra.mxu0 %v9159
        %9328 = vmatpush.bf16.msra.mxu0 %v9157
        %9329 = vmatpush.bf16.msra.mxu0 %v9155
        %9330 = vmatpush.bf16.msra.mxu0 %v9153
        %9331 = vmatpush.bf16.msra.mxu0 %v9151
        %9332 = vmatpush.bf16.msra.mxu0 %v9149
        %9333 = vmatpush.bf16.msra.mxu0 %v9147
        %9334 = vmatmul.bf16.gmra.mxu0 %v8914
        %v9335 = vpop.f32.mrf.mxu0
        %v9336 = vadd.f32 %v9322, %v9335
        %v9337 = vpop.f32.mrf.mxu0
        %v9338 = vadd.f32 %v9324, %v9337
        %9339 = vdwg.mxu0
        %9340 = vmatpush.bf16.msra.mxu0 %v9177
        %9341 = vmatpush.bf16.msra.mxu0 %v9175
        %9342 = vmatpush.bf16.msra.mxu0 %v9173
        %9343 = vmatpush.bf16.msra.mxu0 %v9171
        %9344 = vmatpush.bf16.msra.mxu0 %v9169
        %9345 = vmatpush.bf16.msra.mxu0 %v9167
        %9346 = vmatpush.bf16.msra.mxu0 %v9165
        %9347 = vmatpush.bf16.msra.mxu0 %v9163
        %9348 = vmatmul.bf16.gmra.mxu0 %v8917
        %v9349 = vpop.f32.mrf.mxu0
        %v9350 = vadd.f32 %v9336, %v9349
        %v9351 = vpop.f32.mrf.mxu0
        %v9352 = vadd.f32 %v9338, %v9351
        %9353 = vdwg.mxu0
        %v9354 = vadd.f32 %v8813, %v9294
        %v9355 = vadd.f32 %v8814, %v9350
        %v9356 = vadd.f32 %v8815, %v9296
        %v9357 = vadd.f32 %v8816, %v9352
        %9358 = vst [vmem:[%s375] sm:$0xff] %v9354
        %9359 = vst.msk [vmem:[%s375 + $0x8] sm:$0xff] %vm396, %v9355
        %9360 = vst [vmem:[%s375 + $0x10] sm:$0xff] %v9356
        %9361 = vst.msk [vmem:[%s375 + $0x18] sm:$0xff] %vm396, %v9357
        %s9362 = sand.u32 %s187, 1
        %s9363 = scalar_lea.sflag [#allocation7], %s9362
        %s9364 = sand.u32 %s187, 1
        %s9365 = smul.addr %s9364, 32
        %s9366 = scalar_lea.vmem [#allocation16], %s9365
        // Predicated region
        $region73: #{tpu_custom_call.1} parent=47 // pred_check
          %p9367 = pneg %p197
        $region74: #{tpu_custom_call.1} parent=47 // pred_check_branch
          %9369 = sbr.rel (%p9367) target = $region76
        $region75: #{tpu_custom_call.1} parent=47 // pred_region
          %9371 = vsyncadd %s9363, 0
          %s9372 = smul.addr %s27, 4
          %s9373 = smul.addr %s9372, 8
          %s9374 = scalar_lea.hbm %s7, %s9373
          %s9375 = sshll.u32 %s9366, 4
          %s9376 = int_to_ptr.vmem [resolvable:$true] %s9375
          %s9377 = sshll.u32 %s9374, 4
          %s9378 = int_to_ptr.hbm [resolvable:$true] %s9377
          %9383 = dma.vmem_to_hbm [thread:$0]  %s9376, 512, %s9378, %s9363, 256, 256, 16
        $region76: #{tpu_custom_call.1} parent=47 // pred_fallthru
          _
      $region48: #{tpu_custom_call.1} parent=5 // pred_fallthru
        _
      %p9384 = scmp.le.s32.totalorder 2, %s22
      // Predicated region
      $region77: #{tpu_custom_call.1} parent=5 // pred_check
        %p9385 = pneg %p9384
      $region78: #{tpu_custom_call.1} parent=5 // pred_check_branch
        %9387 = sbr.rel (%p9385) target = $region80
      $region79: #{tpu_custom_call.1} parent=5 // pred_region
        %s9388 = ssub.s32 %s22, 2
        // Predicated region
        $region81: #{tpu_custom_call.1} parent=79 // pred_check
          %p9389 = pneg %p203
        $region82: #{tpu_custom_call.1} parent=79 // pred_check_branch
          %9391 = sbr.rel (%p9389) target = $region84
        $region83: #{tpu_custom_call.1} parent=79 // pred_region
          %s9392 = sand.u32 %s188, 1
          %s9393 = scalar_lea.sflag [#allocation7], %s9392
          %s9394 = sand.u32 %s188, 1
          %s9395 = smul.addr %s9394, 32
          %s9396 = scalar_lea.vmem [#allocation16], %s9395
          %9398 = dma.done %s9393, 512
        $region84: #{tpu_custom_call.1} parent=79 // pred_fallthru
          _
      $region80: #{tpu_custom_call.1} parent=5 // pred_fallthru
        _
    $region6: #{tpu_custom_call.1} parent=1 // loop_footer
      %s26 = sadd.s32 1, %s22
    $region7: #{tpu_custom_call.1} parent=1 // loop_footer_branch
      %21 = sbr.rel target = $region3
    $region8: #{tpu_custom_call.1} parent=1 // loop_exit
      _
    %9399 = vsyncpa [#allocation6], 1
    %s9400 = scalar_lea.sflag [#allocation6], 1
    %9401 = vsyncpa %s9400, 1
    %9402 = vsyncpa [#allocation9], 1
    %9403 = vsyncpa [#allocation12], 1
    %9404 = vsyncpa [#allocation15], 1
    %9405 = vsyncpa [#allocation7], 1
    %s9406 = scalar_lea.sflag [#allocation7], 1
    %9407 = vsyncpa %s9406, 1

</llo_original>
